<compile_context>
chip_gen: v7x
topology: tpu7x:2x2x1
jax: 0.10.0
libtpu: 0.0.40
codegen_flags: <defaults>
</compile_context>

<pallas_src>
import functools

import jax
import jax.numpy as jnp
import numpy as np
from jax.experimental import pallas as pl
from jax.experimental.pallas import tpu as pltpu

EPS = 1e-5


def _round_up(x, m):
    return (x + m - 1) // m * m


def _pick_vmem_limit_bytes():
    """~3/4 of physical VMEM: ~48 MiB on v7x (64 MiB/TC), ~96 MiB on v5e/v6e (128 MiB)."""
    cap = None
    try:
        cap = getattr(pltpu.get_tpu_info(), "vmem_capacity_bytes", None)
    except Exception:
        cap = None
    if not cap:
        return 48 * 1024 * 1024
    return int(min(cap * 3 // 4, 112 * 1024 * 1024))


# ---------------------------------------------------------------------------
# In-kernel helpers
# ---------------------------------------------------------------------------

def _fill_padded_plane(pad_ref, interior, wp_pad):
    """Write `interior` (Hp, Wp, C) into the flat zero-padded plane pad_ref
    ((Hp+2)*Wp_pad + slack, C).  Only the 1-pixel halo strips are (re)zeroed;
    the interior rows are plain per-row stores (stride Wp_pad in the flat index)."""
    hp, wp, c = interior.shape
    dt = pad_ref.dtype
    gap = wp_pad - wp  # right halo col + unused cols + next row's left halo col

    # Top halo row plus the left halo column of the first data row.
    pad_ref[0:wp_pad + 1, :] = jnp.zeros((wp_pad + 1, c), dt)
    # Bottom halo row plus the slack rows at the end of the buffer.
    nbot = pad_ref.shape[0] - (hp + 1) * wp_pad
    pad_ref[(hp + 1) * wp_pad:, :] = jnp.zeros((nbot, c), dt)

    zgap = jnp.zeros((gap, c), dt)  # hoisted: reused by every data row
    for y in range(hp):
        base = (y + 1) * wp_pad
        pad_ref[base + 1:base + 1 + wp, :] = interior[y]
        # Right halo col of this row, unused cols, and left halo col of the next row.
        pad_ref[base + 1 + wp:base + 1 + wp + gap, :] = zgap


def _conv3x3_accumulate(pad_ref, w_ref, acc_ref, wp_pad):
    """3x3 conv as 9 accumulating MXU dots.  Tap (ky,kx)'s LHS is a contiguous
    sublane-offset view of the flat padded plane; wrap columns only ever feed the
    discarded garbage output columns."""
    rows_out = acc_ref.shape[0]
    for k in range(9):
        ky, kx = divmod(k, 3)
        off = ky * wp_pad + kx
        contrib = jnp.dot(pad_ref[off:off + rows_out, :], w_ref[k],
                          preferred_element_type=jnp.float32)
        if k == 0:
            acc_ref[...] = contrib
        else:
            acc_ref[...] += contrib


def _finish_conv(acc_ref, st_ref, out_ref, wp_pad):
    """Slice the valid columns out of the flat accumulator, emit per-image BN partial
    stats (sum, sum-of-squares) and the bf16 pre-BN activation plane."""
    hp, wp, cout = out_ref.shape
    h = acc_ref[...].reshape(hp, wp_pad, cout)[:, :wp, :]       # (hp, wp, cout) f32
    h2d = h.reshape(hp * wp, cout)
    st_ref[0:1, :] = jnp.sum(h2d, axis=0, keepdims=True)
    st_ref[1:2, :] = jnp.sum(h2d * h2d, axis=0, keepdims=True)
    out_ref[...] = h.astype(out_ref.dtype)


# ---------------------------------------------------------------------------
# Kernels
# ---------------------------------------------------------------------------

def pool_conv1_kernel(x_ref, w_ref, h1_ref, st1_ref, pad_ref, acc_ref, *, wp_pad):
    cin = x_ref.shape[-1] // 2
    xv = x_ref[...]                                        # (Hp, 2, Wp, 2*Cin)
    rows = jnp.maximum(xv[:, 0], xv[:, 1])                 # 2x2 pool: reduce row pair
    pooled = jnp.maximum(rows[..., :cin], rows[..., cin:])  # ... then column pair (lanes)
    _fill_padded_plane(pad_ref, pooled.astype(pad_ref.dtype), wp_pad)
    _conv3x3_accumulate(pad_ref, w_ref, acc_ref, wp_pad)
    _finish_conv(acc_ref, st1_ref, h1_ref, wp_pad)


def bn1_relu_conv2_kernel(h1_ref, sc_ref, sh_ref, w_ref, h2_ref, st2_ref,
                          pad_ref, acc_ref, *, wp_pad):
    c1 = h1_ref.shape[-1]
    a = jnp.maximum(
        h1_ref[...].astype(jnp.float32) * sc_ref[...].reshape(1, 1, c1)
        + sh_ref[...].reshape(1, 1, c1), 0.0)
    _fill_padded_plane(pad_ref, a.astype(pad_ref.dtype), wp_pad)
    _conv3x3_accumulate(pad_ref, w_ref, acc_ref, wp_pad)
    _finish_conv(acc_ref, st2_ref, h2_ref, wp_pad)


def bn2_relu_kernel(h2_ref, sc_ref, sh_ref, o_ref):
    c = h2_ref.shape[-1]
    o_ref[...] = jnp.maximum(
        h2_ref[...].astype(jnp.float32) * sc_ref[...].reshape(1, 1, c)
        + sh_ref[...].reshape(1, 1, c), 0.0)


# ---------------------------------------------------------------------------
# Wrapper
# ---------------------------------------------------------------------------

def _fold_bn_stats(stats, gamma, beta, count):
    """(N, 2, C) per-image (sum, sumsq) partials -> (1, C) scale/shift.
    Biased variance, eps=1e-5: PyTorch training-mode BatchNorm2d."""
    tot = jnp.sum(stats.astype(jnp.float32), axis=0)       # (2, C)
    mean = tot[0:1, :] / count
    var = tot[1:2, :] / count - mean * mean
    scale = gamma * jax.lax.rsqrt(var + EPS)
    shift = beta - mean * scale
    return scale, shift


def init_params(key, in_ch, out_ch):
    ks = jax.random.split(key, 4)
    fan1 = float(in_ch * 9)
    fan2 = float(out_ch * 9)
    w1 = jax.random.uniform(ks[0], (9, in_ch, out_ch), jnp.float32, -1.0, 1.0) / np.sqrt(fan1)
    b1 = jax.random.uniform(ks[1], (1, out_ch), jnp.float32, -1.0, 1.0) / np.sqrt(fan1)
    w2 = jax.random.uniform(ks[2], (9, out_ch, out_ch), jnp.float32, -1.0, 1.0) / np.sqrt(fan2)
    b2 = jax.random.uniform(ks[3], (1, out_ch), jnp.float32, -1.0, 1.0) / np.sqrt(fan2)
    g1 = jnp.ones((1, out_ch), jnp.float32)    # BatchNorm2d defaults: gamma=1
    be1 = jnp.zeros((1, out_ch), jnp.float32)  # beta=0
    g2 = jnp.ones((1, out_ch), jnp.float32)
    be2 = jnp.zeros((1, out_ch), jnp.float32)
    return dict(w1=w1, b1=b1, g1=g1, be1=be1, w2=w2, b2=b2, g2=g2, be2=be2)


def down_forward(x_nchw, params):
    """Forward of PyTorch `down(in_ch, out_ch)`: (N, Cin, H, W) -> (N, Cout, H/2, W/2)."""
    N, Cin, H, W = x_nchw.shape
    assert H % 2 == 0 and W % 2 == 0, "MaxPool2d(2) path assumes even spatial dims"
    Cout = params["w1"].shape[-1]
    Hp, Wp = H // 2, W // 2
    f32, bf16 = jnp.float32, jnp.bfloat16

    wp_pad = _round_up(Wp + 2, 8)
    rows_out = Hp * wp_pad                  # flat conv-output rows (incl. garbage cols)
    pad_rows = (Hp + 2) * wp_pad + 8        # +8 slack rows for the (ky=2,kx=2) tap view

    x = jnp.transpose(x_nchw, (0, 2, 3, 1)).astype(f32)   # NCHW -> NHWC (layout glue)
    x6 = x.reshape(N, Hp, 2, Wp, 2 * Cin)                 # free view packing the 2x2 pool phases
    w1b = params["w1"].astype(bf16)                       # (9, Cin,  Cout) per-tap weights
    w2b = params["w2"].astype(bf16)                       # (9, Cout, Cout)
    count = float(N * Hp * Wp)

    cparams = pltpu.CompilerParams(dimension_semantics=("parallel",),
                                   vmem_limit_bytes=_pick_vmem_limit_bytes())

    # Pass 1: fused maxpool + conv1 (bias dropped: training-mode BN cancels it),
    #         per-image BN1 partial stats in the conv epilogue.
    h1, st1 = pl.pallas_call(
        functools.partial(pool_conv1_kernel, wp_pad=wp_pad),
        grid=(N,),
        in_specs=[
            pl.BlockSpec((None, Hp, 2, Wp, 2 * Cin), lambda n: (n, 0, 0, 0, 0)),
            pl.BlockSpec((9, Cin, Cout), lambda n: (0, 0, 0)),
        ],
        out_specs=[
            pl.BlockSpec((None, Hp, Wp, Cout), lambda n: (n, 0, 0, 0)),
            pl.BlockSpec((None, 2, Cout), lambda n: (n, 0, 0)),
        ],
        out_shape=[
            jax.ShapeDtypeStruct((N, Hp, Wp, Cout), bf16),  # pre-BN activations: bf16 in HBM
            jax.ShapeDtypeStruct((N, 2, Cout), f32),
        ],
        scratch_shapes=[
            pltpu.VMEM((pad_rows, Cin), bf16),              # flat zero-padded plane
            pltpu.VMEM((rows_out, Cout), f32),              # conv accumulator
        ],
        compiler_params=cparams,
    )(x6, w1b)

    # Hoisted BN1 fold: tiny cross-batch reduce + rsqrt in plain JAX (exact).
    scale1, shift1 = _fold_bn_stats(st1, params["g1"], params["be1"], count)

    # Pass 2: BN1 (global stats) + ReLU + conv2, per-image BN2 partial stats.
    h2, st2 = pl.pallas_call(
        functools.partial(bn1_relu_conv2_kernel, wp_pad=wp_pad),
        grid=(N,),
        in_specs=[
            pl.BlockSpec((None, Hp, Wp, Cout), lambda n: (n, 0, 0, 0)),
            pl.BlockSpec((1, Cout), lambda n: (0, 0)),
            pl.BlockSpec((1, Cout), lambda n: (0, 0)),
            pl.BlockSpec((9, Cout, Cout), lambda n: (0, 0, 0)),
        ],
        out_specs=[
            pl.BlockSpec((None, Hp, Wp, Cout), lambda n: (n, 0, 0, 0)),
            pl.BlockSpec((None, 2, Cout), lambda n: (n, 0, 0)),
        ],
        out_shape=[
            jax.ShapeDtypeStruct((N, Hp, Wp, Cout), bf16),
            jax.ShapeDtypeStruct((N, 2, Cout), f32),
        ],
        scratch_shapes=[
            pltpu.VMEM((pad_rows, Cout), bf16),
            pltpu.VMEM((rows_out, Cout), f32),
        ],
        compiler_params=cparams,
    )(h1, scale1, shift1, w2b)

    scale2, shift2 = _fold_bn_stats(st2, params["g2"], params["be2"], count)

    # Pass 3: BN2 (global stats) + ReLU — pure elementwise, bandwidth-bound (h2 is bf16).
    out_nhwc = pl.pallas_call(
        bn2_relu_kernel,
        grid=(N,),
        in_specs=[
            pl.BlockSpec((None, Hp, Wp, Cout), lambda n: (n, 0, 0, 0)),
            pl.BlockSpec((1, Cout), lambda n: (0, 0)),
            pl.BlockSpec((1, Cout), lambda n: (0, 0)),
        ],
        out_specs=pl.BlockSpec((None, Hp, Wp, Cout), lambda n: (n, 0, 0, 0)),
        out_shape=jax.ShapeDtypeStruct((N, Hp, Wp, Cout), f32),
        compiler_params=cparams,
    )(h2, scale2, shift2)

    return jnp.transpose(out_nhwc, (0, 3, 1, 2))           # NHWC -> NCHW (PyTorch boundary)


# ---------------------------------------------------------------------------
# Pure-JAX reference (PyTorch semantics, f32, with conv biases) + test
# ---------------------------------------------------------------------------

def down_reference(x_nchw, params):
    x = jnp.transpose(x_nchw, (0, 2, 3, 1)).astype(jnp.float32)
    p = jax.lax.reduce_window(x, -jnp.inf, jax.lax.max,
                              (1, 2, 2, 1), (1, 2, 2, 1), "VALID")

    def conv(h, w, b):
        w4 = w.reshape(3, 3, w.shape[1], w.shape[2])
        y = jax.lax.conv_general_dilated(h, w4, (1, 1), "SAME",
                                         dimension_numbers=("NHWC", "HWIO", "NHWC"))
        return y + b.reshape(1, 1, 1, -1)

    def bn_relu(h, g, be):
        m = jnp.mean(h, axis=(0, 1, 2), keepdims=True)
        v = jnp.mean((h - m) ** 2, axis=(0, 1, 2), keepdims=True)
        y = (h - m) / jnp.sqrt(v + EPS) * g.reshape(1, 1, 1, -1) + be.reshape(1, 1, 1, -1)
        return jnp.maximum(y, 0.0)

    h = bn_relu(conv(p, params["w1"], params["b1"]), params["g1"], params["be1"])
    h = bn_relu(conv(h, params["w2"], params["b2"]), params["g2"], params["be2"])
    return jnp.transpose(h, (0, 3, 1, 2))


if __name__ == "__main__":
    key = jax.random.PRNGKey(0)
    kx_, kp = jax.random.split(key)
    in_ch, out_ch = 4, 8
    x = jax.random.normal(kx_, (2, in_ch, 16, 16), jnp.float32)  # NCHW, like PyTorch
    params = init_params(kp, in_ch, out_ch)

    fwd = jax.jit(down_forward)
    out = jax.block_until_ready(fwd(x, params))
    ref = jax.block_until_ready(down_reference(x, params))

    assert out.shape == (2, out_ch, 8, 8), out.shape
    out_np, ref_np = np.asarray(out, np.float32), np.asarray(ref, np.float32)
    err = np.abs(out_np - ref_np)
    # Tolerance sized for bf16 MXU operands + bf16 HBM intermediates (per perf review):
    # ~2^-8 operand rounding propagated through two convs and two batch normalizations
    # of unit-variance outputs.  The mean-error check keeps the comparison honest.
    assert float(err.mean()) < 1.5e-2, float(err.mean())
    np.testing.assert_allclose(out_np, ref_np, rtol=8e-2, atol=8e-2)
    print("KERNEL_OK")
</pallas_src>

<mosaic_0001>
module attributes {stable_mosaic.version = 11 : i64} {
  func.func @pool_conv1_kernel(%arg0: i32, %arg1: memref<1x8x2x8x8xf32, #tpu.memory_space<vmem>>, %arg2: memref<9x4x8xbf16, #tpu.memory_space<vmem>>, %arg3: memref<1x8x8x8xbf16, #tpu.memory_space<vmem>>, %arg4: memref<1x2x8xf32, #tpu.memory_space<vmem>>, %arg5: memref<168x4xbf16, #tpu.memory_space<vmem>>, %arg6: memref<128x8xf32, #tpu.memory_space<vmem>>) attributes {dimension_semantics = [#tpu.dimension_semantics<parallel>], iteration_bounds = array<i64: 2>, scalar_prefetch = 0 : i64, scratch_operands = 2 : i64, tpu.core_type = #tpu.core_type<tc>, window_params = [{transform_indices = @transform_0, window_bounds = array<i64: 1, 8, 2, 8, 8>}, {pipeline_mode = #tpu.pipeline_mode<synchronous>, transform_indices = @transform_1, window_bounds = array<i64: 9, 4, 8>}, {transform_indices = @transform_2, window_bounds = array<i64: 1, 8, 8, 8>}, {transform_indices = @transform_3, window_bounds = array<i64: 1, 2, 8>}]} {
    %c0 = arith.constant 0 : index
    %c0_0 = arith.constant 0 : index
    %c0_1 = arith.constant 0 : index
    %c0_2 = arith.constant 0 : index
    %c0_3 = arith.constant 0 : index
    %0 = vector.load %arg1[%c0, %c0_0, %c0_1, %c0_2, %c0_3] : memref<1x8x2x8x8xf32, #tpu.memory_space<vmem>>, vector<1x8x2x8x8xf32>
    %1 = vector.shape_cast %0 : vector<1x8x2x8x8xf32> to vector<8x2x8x8xf32>
    %2 = vector.extract_strided_slice %1 {offsets = [0, 0, 0, 0], sizes = [8, 1, 8, 8], strides = [1, 1, 1, 1]} : vector<8x2x8x8xf32> to vector<8x1x8x8xf32>
    %3 = vector.shape_cast %2 : vector<8x1x8x8xf32> to vector<8x8x8xf32>
    %4 = vector.extract_strided_slice %1 {offsets = [0, 1, 0, 0], sizes = [8, 1, 8, 8], strides = [1, 1, 1, 1]} : vector<8x2x8x8xf32> to vector<8x1x8x8xf32>
    %5 = vector.shape_cast %4 : vector<8x1x8x8xf32> to vector<8x8x8xf32>
    %6 = arith.maximumf %3, %5 : vector<8x8x8xf32>
    %7 = vector.extract_strided_slice %6 {offsets = [0, 0, 0], sizes = [8, 8, 4], strides = [1, 1, 1]} : vector<8x8x8xf32> to vector<8x8x4xf32>
    %8 = vector.extract_strided_slice %6 {offsets = [0, 0, 4], sizes = [8, 8, 4], strides = [1, 1, 1]} : vector<8x8x8xf32> to vector<8x8x4xf32>
    %9 = arith.maximumf %7, %8 : vector<8x8x4xf32>
    %10 = arith.truncf %9 : vector<8x8x4xf32> to vector<8x8x4xbf16>
    %cst = arith.constant 0.000000e+00 : bf16
    %11 = vector.broadcast %cst : bf16 to vector<17x4xbf16>
    %c0_4 = arith.constant 0 : index
    %c0_5 = arith.constant 0 : index
    %12 = vector.load %arg5[%c0_4, %c0_5] : memref<168x4xbf16, #tpu.memory_space<vmem>>, vector<17x4xbf16>
    tpu.vector_store %arg5[%c0_4, %c0_5], %11 {strides = array<i32>} : memref<168x4xbf16, #tpu.memory_space<vmem>>, vector<17x4xbf16>,
    %cst_6 = arith.constant 0.000000e+00 : bf16
    %13 = vector.broadcast %cst_6 : bf16 to vector<24x4xbf16>
    %c144 = arith.constant 144 : index
    %c0_7 = arith.constant 0 : index
    %14 = vector.load %arg5[%c144, %c0_7] : memref<168x4xbf16, #tpu.memory_space<vmem>>, vector<24x4xbf16>
    tpu.vector_store %arg5[%c144, %c0_7], %13 {strides = array<i32>} : memref<168x4xbf16, #tpu.memory_space<vmem>>, vector<24x4xbf16>,
    %cst_8 = arith.constant 0.000000e+00 : bf16
    %15 = vector.broadcast %cst_8 : bf16 to vector<8x4xbf16>
    %16 = vector.extract_strided_slice %10 {offsets = [0, 0, 0], sizes = [1, 8, 4], strides = [1, 1, 1]} : vector<8x8x4xbf16> to vector<1x8x4xbf16>
    %17 = vector.shape_cast %16 : vector<1x8x4xbf16> to vector<8x4xbf16>
    %c17 = arith.constant 17 : index
    %c0_9 = arith.constant 0 : index
    %18 = vector.load %arg5[%c17, %c0_9] : memref<168x4xbf16, #tpu.memory_space<vmem>>, vector<8x4xbf16>
    tpu.vector_store %arg5[%c17, %c0_9], %17 {strides = array<i32>} : memref<168x4xbf16, #tpu.memory_space<vmem>>, vector<8x4xbf16>,
    %c25 = arith.constant 25 : index
    %c0_10 = arith.constant 0 : index
    %19 = vector.load %arg5[%c25, %c0_10] : memref<168x4xbf16, #tpu.memory_space<vmem>>, vector<8x4xbf16>
    tpu.vector_store %arg5[%c25, %c0_10], %15 {strides = array<i32>} : memref<168x4xbf16, #tpu.memory_space<vmem>>, vector<8x4xbf16>,
    %20 = vector.extract_strided_slice %10 {offsets = [1, 0, 0], sizes = [1, 8, 4], strides = [1, 1, 1]} : vector<8x8x4xbf16> to vector<1x8x4xbf16>
    %21 = vector.shape_cast %20 : vector<1x8x4xbf16> to vector<8x4xbf16>
    %c33 = arith.constant 33 : index
    %c0_11 = arith.constant 0 : index
    %22 = vector.load %arg5[%c33, %c0_11] : memref<168x4xbf16, #tpu.memory_space<vmem>>, vector<8x4xbf16>
    tpu.vector_store %arg5[%c33, %c0_11], %21 {strides = array<i32>} : memref<168x4xbf16, #tpu.memory_space<vmem>>, vector<8x4xbf16>,
    %c41 = arith.constant 41 : index
    %c0_12 = arith.constant 0 : index
    %23 = vector.load %arg5[%c41, %c0_12] : memref<168x4xbf16, #tpu.memory_space<vmem>>, vector<8x4xbf16>
    tpu.vector_store %arg5[%c41, %c0_12], %15 {strides = array<i32>} : memref<168x4xbf16, #tpu.memory_space<vmem>>, vector<8x4xbf16>,
    %24 = vector.extract_strided_slice %10 {offsets = [2, 0, 0], sizes = [1, 8, 4], strides = [1, 1, 1]} : vector<8x8x4xbf16> to vector<1x8x4xbf16>
    %25 = vector.shape_cast %24 : vector<1x8x4xbf16> to vector<8x4xbf16>
    %c49 = arith.constant 49 : index
    %c0_13 = arith.constant 0 : index
    %26 = vector.load %arg5[%c49, %c0_13] : memref<168x4xbf16, #tpu.memory_space<vmem>>, vector<8x4xbf16>
    tpu.vector_store %arg5[%c49, %c0_13], %25 {strides = array<i32>} : memref<168x4xbf16, #tpu.memory_space<vmem>>, vector<8x4xbf16>,
    %c57 = arith.constant 57 : index
    %c0_14 = arith.constant 0 : index
    %27 = vector.load %arg5[%c57, %c0_14] : memref<168x4xbf16, #tpu.memory_space<vmem>>, vector<8x4xbf16>
    tpu.vector_store %arg5[%c57, %c0_14], %15 {strides = array<i32>} : memref<168x4xbf16, #tpu.memory_space<vmem>>, vector<8x4xbf16>,
    %28 = vector.extract_strided_slice %10 {offsets = [3, 0, 0], sizes = [1, 8, 4], strides = [1, 1, 1]} : vector<8x8x4xbf16> to vector<1x8x4xbf16>
    %29 = vector.shape_cast %28 : vector<1x8x4xbf16> to vector<8x4xbf16>
    %c65 = arith.constant 65 : index
    %c0_15 = arith.constant 0 : index
    %30 = vector.load %arg5[%c65, %c0_15] : memref<168x4xbf16, #tpu.memory_space<vmem>>, vector<8x4xbf16>
    tpu.vector_store %arg5[%c65, %c0_15], %29 {strides = array<i32>} : memref<168x4xbf16, #tpu.memory_space<vmem>>, vector<8x4xbf16>,
    %c73 = arith.constant 73 : index
    %c0_16 = arith.constant 0 : index
    %31 = vector.load %arg5[%c73, %c0_16] : memref<168x4xbf16, #tpu.memory_space<vmem>>, vector<8x4xbf16>
    tpu.vector_store %arg5[%c73, %c0_16], %15 {strides = array<i32>} : memref<168x4xbf16, #tpu.memory_space<vmem>>, vector<8x4xbf16>,
    %32 = vector.extract_strided_slice %10 {offsets = [4, 0, 0], sizes = [1, 8, 4], strides = [1, 1, 1]} : vector<8x8x4xbf16> to vector<1x8x4xbf16>
    %33 = vector.shape_cast %32 : vector<1x8x4xbf16> to vector<8x4xbf16>
    %c81 = arith.constant 81 : index
    %c0_17 = arith.constant 0 : index
    %34 = vector.load %arg5[%c81, %c0_17] : memref<168x4xbf16, #tpu.memory_space<vmem>>, vector<8x4xbf16>
    tpu.vector_store %arg5[%c81, %c0_17], %33 {strides = array<i32>} : memref<168x4xbf16, #tpu.memory_space<vmem>>, vector<8x4xbf16>,
    %c89 = arith.constant 89 : index
    %c0_18 = arith.constant 0 : index
    %35 = vector.load %arg5[%c89, %c0_18] : memref<168x4xbf16, #tpu.memory_space<vmem>>, vector<8x4xbf16>
    tpu.vector_store %arg5[%c89, %c0_18], %15 {strides = array<i32>} : memref<168x4xbf16, #tpu.memory_space<vmem>>, vector<8x4xbf16>,
    %36 = vector.extract_strided_slice %10 {offsets = [5, 0, 0], sizes = [1, 8, 4], strides = [1, 1, 1]} : vector<8x8x4xbf16> to vector<1x8x4xbf16>
    %37 = vector.shape_cast %36 : vector<1x8x4xbf16> to vector<8x4xbf16>
    %c97 = arith.constant 97 : index
    %c0_19 = arith.constant 0 : index
    %38 = vector.load %arg5[%c97, %c0_19] : memref<168x4xbf16, #tpu.memory_space<vmem>>, vector<8x4xbf16>
    tpu.vector_store %arg5[%c97, %c0_19], %37 {strides = array<i32>} : memref<168x4xbf16, #tpu.memory_space<vmem>>, vector<8x4xbf16>,
    %c105 = arith.constant 105 : index
    %c0_20 = arith.constant 0 : index
    %39 = vector.load %arg5[%c105, %c0_20] : memref<168x4xbf16, #tpu.memory_space<vmem>>, vector<8x4xbf16>
    tpu.vector_store %arg5[%c105, %c0_20], %15 {strides = array<i32>} : memref<168x4xbf16, #tpu.memory_space<vmem>>, vector<8x4xbf16>,
    %40 = vector.extract_strided_slice %10 {offsets = [6, 0, 0], sizes = [1, 8, 4], strides = [1, 1, 1]} : vector<8x8x4xbf16> to vector<1x8x4xbf16>
    %41 = vector.shape_cast %40 : vector<1x8x4xbf16> to vector<8x4xbf16>
    %c113 = arith.constant 113 : index
    %c0_21 = arith.constant 0 : index
    %42 = vector.load %arg5[%c113, %c0_21] : memref<168x4xbf16, #tpu.memory_space<vmem>>, vector<8x4xbf16>
    tpu.vector_store %arg5[%c113, %c0_21], %41 {strides = array<i32>} : memref<168x4xbf16, #tpu.memory_space<vmem>>, vector<8x4xbf16>,
    %c121 = arith.constant 121 : index
    %c0_22 = arith.constant 0 : index
    %43 = vector.load %arg5[%c121, %c0_22] : memref<168x4xbf16, #tpu.memory_space<vmem>>, vector<8x4xbf16>
    tpu.vector_store %arg5[%c121, %c0_22], %15 {strides = array<i32>} : memref<168x4xbf16, #tpu.memory_space<vmem>>, vector<8x4xbf16>,
    %44 = vector.extract_strided_slice %10 {offsets = [7, 0, 0], sizes = [1, 8, 4], strides = [1, 1, 1]} : vector<8x8x4xbf16> to vector<1x8x4xbf16>
    %45 = vector.shape_cast %44 : vector<1x8x4xbf16> to vector<8x4xbf16>
    %c129 = arith.constant 129 : index
    %c0_23 = arith.constant 0 : index
    %46 = vector.load %arg5[%c129, %c0_23] : memref<168x4xbf16, #tpu.memory_space<vmem>>, vector<8x4xbf16>
    tpu.vector_store %arg5[%c129, %c0_23], %45 {strides = array<i32>} : memref<168x4xbf16, #tpu.memory_space<vmem>>, vector<8x4xbf16>,
    %c137 = arith.constant 137 : index
    %c0_24 = arith.constant 0 : index
    %47 = vector.load %arg5[%c137, %c0_24] : memref<168x4xbf16, #tpu.memory_space<vmem>>, vector<8x4xbf16>
    tpu.vector_store %arg5[%c137, %c0_24], %15 {strides = array<i32>} : memref<168x4xbf16, #tpu.memory_space<vmem>>, vector<8x4xbf16>,
    %c0_25 = arith.constant 0 : index
    %c0_26 = arith.constant 0 : index
    %48 = vector.load %arg5[%c0_25, %c0_26] : memref<168x4xbf16, #tpu.memory_space<vmem>>, vector<128x4xbf16>
    %c0_27 = arith.constant 0 : index
    %c0_28 = arith.constant 0 : index
    %c0_29 = arith.constant 0 : index
    %49 = vector.load %arg2[%c0_27, %c0_28, %c0_29] : memref<9x4x8xbf16, #tpu.memory_space<vmem>>, vector<1x4x8xbf16>
    %50 = vector.shape_cast %49 : vector<1x4x8xbf16> to vector<4x8xbf16>
    %cst_30 = arith.constant dense<0.000000e+00> : vector<128x8xf32>
    %51 = tpu.matmul %48, %50, %cst_30 {dimension_numbers = #tpu.dot_dimension_numbers<[1], [0], [0], [1], [0, 0, 1, 1], [], []>} : vector<128x4xbf16>, vector<4x8xbf16>, vector<128x8xf32> -> vector<128x8xf32>
    %c0_31 = arith.constant 0 : index
    %c0_32 = arith.constant 0 : index
    %52 = vector.load %arg6[%c0_31, %c0_32] : memref<128x8xf32, #tpu.memory_space<vmem>>, vector<128x8xf32>
    tpu.vector_store %arg6[%c0_31, %c0_32], %51 {strides = array<i32>} : memref<128x8xf32, #tpu.memory_space<vmem>>, vector<128x8xf32>,
    %c1 = arith.constant 1 : index
    %c0_33 = arith.constant 0 : index
    %53 = vector.load %arg5[%c1, %c0_33] : memref<168x4xbf16, #tpu.memory_space<vmem>>, vector<128x4xbf16>
    %c1_34 = arith.constant 1 : index
    %c0_35 = arith.constant 0 : index
    %c0_36 = arith.constant 0 : index
    %54 = vector.load %arg2[%c1_34, %c0_35, %c0_36] : memref<9x4x8xbf16, #tpu.memory_space<vmem>>, vector<1x4x8xbf16>
    %55 = vector.shape_cast %54 : vector<1x4x8xbf16> to vector<4x8xbf16>
    %cst_37 = arith.constant dense<0.000000e+00> : vector<128x8xf32>
    %56 = tpu.matmul %53, %55, %cst_37 {dimension_numbers = #tpu.dot_dimension_numbers<[1], [0], [0], [1], [0, 0, 1, 1], [], []>} : vector<128x4xbf16>, vector<4x8xbf16>, vector<128x8xf32> -> vector<128x8xf32>
    %c0_38 = arith.constant 0 : index
    %c0_39 = arith.constant 0 : index
    %57 = vector.load %arg6[%c0_38, %c0_39] : memref<128x8xf32, #tpu.memory_space<vmem>>, vector<128x8xf32>
    %58 = arith.addf %57, %56 : vector<128x8xf32>
    %c0_40 = arith.constant 0 : index
    %c0_41 = arith.constant 0 : index
    %59 = vector.load %arg6[%c0_40, %c0_41] : memref<128x8xf32, #tpu.memory_space<vmem>>, vector<128x8xf32>
    tpu.vector_store %arg6[%c0_40, %c0_41], %58 {strides = array<i32>} : memref<128x8xf32, #tpu.memory_space<vmem>>, vector<128x8xf32>,
    %c2 = arith.constant 2 : index
    %c0_42 = arith.constant 0 : index
    %60 = vector.load %arg5[%c2, %c0_42] : memref<168x4xbf16, #tpu.memory_space<vmem>>, vector<128x4xbf16>
    %c2_43 = arith.constant 2 : index
    %c0_44 = arith.constant 0 : index
    %c0_45 = arith.constant 0 : index
    %61 = vector.load %arg2[%c2_43, %c0_44, %c0_45] : memref<9x4x8xbf16, #tpu.memory_space<vmem>>, vector<1x4x8xbf16>
    %62 = vector.shape_cast %61 : vector<1x4x8xbf16> to vector<4x8xbf16>
    %cst_46 = arith.constant dense<0.000000e+00> : vector<128x8xf32>
    %63 = tpu.matmul %60, %62, %cst_46 {dimension_numbers = #tpu.dot_dimension_numbers<[1], [0], [0], [1], [0, 0, 1, 1], [], []>} : vector<128x4xbf16>, vector<4x8xbf16>, vector<128x8xf32> -> vector<128x8xf32>
    %c0_47 = arith.constant 0 : index
    %c0_48 = arith.constant 0 : index
    %64 = vector.load %arg6[%c0_47, %c0_48] : memref<128x8xf32, #tpu.memory_space<vmem>>, vector<128x8xf32>
    %65 = arith.addf %64, %63 : vector<128x8xf32>
    %c0_49 = arith.constant 0 : index
    %c0_50 = arith.constant 0 : index
    %66 = vector.load %arg6[%c0_49, %c0_50] : memref<128x8xf32, #tpu.memory_space<vmem>>, vector<128x8xf32>
    tpu.vector_store %arg6[%c0_49, %c0_50], %65 {strides = array<i32>} : memref<128x8xf32, #tpu.memory_space<vmem>>, vector<128x8xf32>,
    %c16 = arith.constant 16 : index
    %c0_51 = arith.constant 0 : index
    %67 = vector.load %arg5[%c16, %c0_51] : memref<168x4xbf16, #tpu.memory_space<vmem>>, vector<128x4xbf16>
    %c3 = arith.constant 3 : index
    %c0_52 = arith.constant 0 : index
    %c0_53 = arith.constant 0 : index
    %68 = vector.load %arg2[%c3, %c0_52, %c0_53] : memref<9x4x8xbf16, #tpu.memory_space<vmem>>, vector<1x4x8xbf16>
    %69 = vector.shape_cast %68 : vector<1x4x8xbf16> to vector<4x8xbf16>
    %cst_54 = arith.constant dense<0.000000e+00> : vector<128x8xf32>
    %70 = tpu.matmul %67, %69, %cst_54 {dimension_numbers = #tpu.dot_dimension_numbers<[1], [0], [0], [1], [0, 0, 1, 1], [], []>} : vector<128x4xbf16>, vector<4x8xbf16>, vector<128x8xf32> -> vector<128x8xf32>
    %c0_55 = arith.constant 0 : index
    %c0_56 = arith.constant 0 : index
    %71 = vector.load %arg6[%c0_55, %c0_56] : memref<128x8xf32, #tpu.memory_space<vmem>>, vector<128x8xf32>
    %72 = arith.addf %71, %70 : vector<128x8xf32>
    %c0_57 = arith.constant 0 : index
    %c0_58 = arith.constant 0 : index
    %73 = vector.load %arg6[%c0_57, %c0_58] : memref<128x8xf32, #tpu.memory_space<vmem>>, vector<128x8xf32>
    tpu.vector_store %arg6[%c0_57, %c0_58], %72 {strides = array<i32>} : memref<128x8xf32, #tpu.memory_space<vmem>>, vector<128x8xf32>,
    %c17_59 = arith.constant 17 : index
    %c0_60 = arith.constant 0 : index
    %74 = vector.load %arg5[%c17_59, %c0_60] : memref<168x4xbf16, #tpu.memory_space<vmem>>, vector<128x4xbf16>
    %c4 = arith.constant 4 : index
    %c0_61 = arith.constant 0 : index
    %c0_62 = arith.constant 0 : index
    %75 = vector.load %arg2[%c4, %c0_61, %c0_62] : memref<9x4x8xbf16, #tpu.memory_space<vmem>>, vector<1x4x8xbf16>
    %76 = vector.shape_cast %75 : vector<1x4x8xbf16> to vector<4x8xbf16>
    %cst_63 = arith.constant dense<0.000000e+00> : vector<128x8xf32>
    %77 = tpu.matmul %74, %76, %cst_63 {dimension_numbers = #tpu.dot_dimension_numbers<[1], [0], [0], [1], [0, 0, 1, 1], [], []>} : vector<128x4xbf16>, vector<4x8xbf16>, vector<128x8xf32> -> vector<128x8xf32>
    %c0_64 = arith.constant 0 : index
    %c0_65 = arith.constant 0 : index
    %78 = vector.load %arg6[%c0_64, %c0_65] : memref<128x8xf32, #tpu.memory_space<vmem>>, vector<128x8xf32>
    %79 = arith.addf %78, %77 : vector<128x8xf32>
    %c0_66 = arith.constant 0 : index
    %c0_67 = arith.constant 0 : index
    %80 = vector.load %arg6[%c0_66, %c0_67] : memref<128x8xf32, #tpu.memory_space<vmem>>, vector<128x8xf32>
    tpu.vector_store %arg6[%c0_66, %c0_67], %79 {strides = array<i32>} : memref<128x8xf32, #tpu.memory_space<vmem>>, vector<128x8xf32>,
    %c18 = arith.constant 18 : index
    %c0_68 = arith.constant 0 : index
    %81 = vector.load %arg5[%c18, %c0_68] : memref<168x4xbf16, #tpu.memory_space<vmem>>, vector<128x4xbf16>
    %c5 = arith.constant 5 : index
    %c0_69 = arith.constant 0 : index
    %c0_70 = arith.constant 0 : index
    %82 = vector.load %arg2[%c5, %c0_69, %c0_70] : memref<9x4x8xbf16, #tpu.memory_space<vmem>>, vector<1x4x8xbf16>
    %83 = vector.shape_cast %82 : vector<1x4x8xbf16> to vector<4x8xbf16>
    %cst_71 = arith.constant dense<0.000000e+00> : vector<128x8xf32>
    %84 = tpu.matmul %81, %83, %cst_71 {dimension_numbers = #tpu.dot_dimension_numbers<[1], [0], [0], [1], [0, 0, 1, 1], [], []>} : vector<128x4xbf16>, vector<4x8xbf16>, vector<128x8xf32> -> vector<128x8xf32>
    %c0_72 = arith.constant 0 : index
    %c0_73 = arith.constant 0 : index
    %85 = vector.load %arg6[%c0_72, %c0_73] : memref<128x8xf32, #tpu.memory_space<vmem>>, vector<128x8xf32>
    %86 = arith.addf %85, %84 : vector<128x8xf32>
    %c0_74 = arith.constant 0 : index
    %c0_75 = arith.constant 0 : index
    %87 = vector.load %arg6[%c0_74, %c0_75] : memref<128x8xf32, #tpu.memory_space<vmem>>, vector<128x8xf32>
    tpu.vector_store %arg6[%c0_74, %c0_75], %86 {strides = array<i32>} : memref<128x8xf32, #tpu.memory_space<vmem>>, vector<128x8xf32>,
    %c32 = arith.constant 32 : index
    %c0_76 = arith.constant 0 : index
    %88 = vector.load %arg5[%c32, %c0_76] : memref<168x4xbf16, #tpu.memory_space<vmem>>, vector<128x4xbf16>
    %c6 = arith.constant 6 : index
    %c0_77 = arith.constant 0 : index
    %c0_78 = arith.constant 0 : index
    %89 = vector.load %arg2[%c6, %c0_77, %c0_78] : memref<9x4x8xbf16, #tpu.memory_space<vmem>>, vector<1x4x8xbf16>
    %90 = vector.shape_cast %89 : vector<1x4x8xbf16> to vector<4x8xbf16>
    %cst_79 = arith.constant dense<0.000000e+00> : vector<128x8xf32>
    %91 = tpu.matmul %88, %90, %cst_79 {dimension_numbers = #tpu.dot_dimension_numbers<[1], [0], [0], [1], [0, 0, 1, 1], [], []>} : vector<128x4xbf16>, vector<4x8xbf16>, vector<128x8xf32> -> vector<128x8xf32>
    %c0_80 = arith.constant 0 : index
    %c0_81 = arith.constant 0 : index
    %92 = vector.load %arg6[%c0_80, %c0_81] : memref<128x8xf32, #tpu.memory_space<vmem>>, vector<128x8xf32>
    %93 = arith.addf %92, %91 : vector<128x8xf32>
    %c0_82 = arith.constant 0 : index
    %c0_83 = arith.constant 0 : index
    %94 = vector.load %arg6[%c0_82, %c0_83] : memref<128x8xf32, #tpu.memory_space<vmem>>, vector<128x8xf32>
    tpu.vector_store %arg6[%c0_82, %c0_83], %93 {strides = array<i32>} : memref<128x8xf32, #tpu.memory_space<vmem>>, vector<128x8xf32>,
    %c33_84 = arith.constant 33 : index
    %c0_85 = arith.constant 0 : index
    %95 = vector.load %arg5[%c33_84, %c0_85] : memref<168x4xbf16, #tpu.memory_space<vmem>>, vector<128x4xbf16>
    %c7 = arith.constant 7 : index
    %c0_86 = arith.constant 0 : index
    %c0_87 = arith.constant 0 : index
    %96 = vector.load %arg2[%c7, %c0_86, %c0_87] : memref<9x4x8xbf16, #tpu.memory_space<vmem>>, vector<1x4x8xbf16>
    %97 = vector.shape_cast %96 : vector<1x4x8xbf16> to vector<4x8xbf16>
    %cst_88 = arith.constant dense<0.000000e+00> : vector<128x8xf32>
    %98 = tpu.matmul %95, %97, %cst_88 {dimension_numbers = #tpu.dot_dimension_numbers<[1], [0], [0], [1], [0, 0, 1, 1], [], []>} : vector<128x4xbf16>, vector<4x8xbf16>, vector<128x8xf32> -> vector<128x8xf32>
    %c0_89 = arith.constant 0 : index
    %c0_90 = arith.constant 0 : index
    %99 = vector.load %arg6[%c0_89, %c0_90] : memref<128x8xf32, #tpu.memory_space<vmem>>, vector<128x8xf32>
    %100 = arith.addf %99, %98 : vector<128x8xf32>
    %c0_91 = arith.constant 0 : index
    %c0_92 = arith.constant 0 : index
    %101 = vector.load %arg6[%c0_91, %c0_92] : memref<128x8xf32, #tpu.memory_space<vmem>>, vector<128x8xf32>
    tpu.vector_store %arg6[%c0_91, %c0_92], %100 {strides = array<i32>} : memref<128x8xf32, #tpu.memory_space<vmem>>, vector<128x8xf32>,
    %c34 = arith.constant 34 : index
    %c0_93 = arith.constant 0 : index
    %102 = vector.load %arg5[%c34, %c0_93] : memref<168x4xbf16, #tpu.memory_space<vmem>>, vector<128x4xbf16>
    %c8 = arith.constant 8 : index
    %c0_94 = arith.constant 0 : index
    %c0_95 = arith.constant 0 : index
    %103 = vector.load %arg2[%c8, %c0_94, %c0_95] : memref<9x4x8xbf16, #tpu.memory_space<vmem>>, vector<1x4x8xbf16>
    %104 = vector.shape_cast %103 : vector<1x4x8xbf16> to vector<4x8xbf16>
    %cst_96 = arith.constant dense<0.000000e+00> : vector<128x8xf32>
    %105 = tpu.matmul %102, %104, %cst_96 {dimension_numbers = #tpu.dot_dimension_numbers<[1], [0], [0], [1], [0, 0, 1, 1], [], []>} : vector<128x4xbf16>, vector<4x8xbf16>, vector<128x8xf32> -> vector<128x8xf32>
    %c0_97 = arith.constant 0 : index
    %c0_98 = arith.constant 0 : index
    %106 = vector.load %arg6[%c0_97, %c0_98] : memref<128x8xf32, #tpu.memory_space<vmem>>, vector<128x8xf32>
    %107 = arith.addf %106, %105 : vector<128x8xf32>
    %c0_99 = arith.constant 0 : index
    %c0_100 = arith.constant 0 : index
    %108 = vector.load %arg6[%c0_99, %c0_100] : memref<128x8xf32, #tpu.memory_space<vmem>>, vector<128x8xf32>
    tpu.vector_store %arg6[%c0_99, %c0_100], %107 {strides = array<i32>} : memref<128x8xf32, #tpu.memory_space<vmem>>, vector<128x8xf32>,
    %c0_101 = arith.constant 0 : index
    %c0_102 = arith.constant 0 : index
    %109 = vector.load %arg6[%c0_101, %c0_102] : memref<128x8xf32, #tpu.memory_space<vmem>>, vector<128x8xf32>
    %110 = vector.shape_cast %109 : vector<128x8xf32> to vector<8x16x8xf32>
    %111 = vector.extract_strided_slice %110 {offsets = [0, 0, 0], sizes = [8, 8, 8], strides = [1, 1, 1]} : vector<8x16x8xf32> to vector<8x8x8xf32>
    %112 = vector.shape_cast %111 : vector<8x8x8xf32> to vector<64x8xf32>
    %cst_103 = arith.constant dense<0.000000e+00> : vector<8xf32>
    %113 = vector.multi_reduction <add>, %112, %cst_103 [0] : vector<64x8xf32> to vector<8xf32>
    %114 = vector.shape_cast %113 : vector<8xf32> to vector<1x8xf32>
    %c0_104 = arith.constant 0 : index
    %c0_105 = arith.constant 0 : index
    %c0_106 = arith.constant 0 : index
    %115 = vector.load %arg4[%c0_104, %c0_105, %c0_106] : memref<1x2x8xf32, #tpu.memory_space<vmem>>, vector<1x1x8xf32>
    %116 = vector.shape_cast %115 : vector<1x1x8xf32> to vector<1x8xf32>
    %117 = vector.shape_cast %114 : vector<1x8xf32> to vector<1x1x8xf32>
    tpu.vector_store %arg4[%c0_104, %c0_105, %c0_106], %117 {strides = array<i32>} : memref<1x2x8xf32, #tpu.memory_space<vmem>>, vector<1x1x8xf32>,
    %118 = arith.mulf %112, %112 : vector<64x8xf32>
    %cst_107 = arith.constant dense<0.000000e+00> : vector<8xf32>
    %119 = vector.multi_reduction <add>, %118, %cst_107 [0] : vector<64x8xf32> to vector<8xf32>
    %120 = vector.shape_cast %119 : vector<8xf32> to vector<1x8xf32>
    %c0_108 = arith.constant 0 : index
    %c1_109 = arith.constant 1 : index
    %c0_110 = arith.constant 0 : index
    %121 = vector.load %arg4[%c0_108, %c1_109, %c0_110] : memref<1x2x8xf32, #tpu.memory_space<vmem>>, vector<1x1x8xf32>
    %122 = vector.shape_cast %121 : vector<1x1x8xf32> to vector<1x8xf32>
    %123 = vector.shape_cast %120 : vector<1x8xf32> to vector<1x1x8xf32>
    tpu.vector_store %arg4[%c0_108, %c1_109, %c0_110], %123 {strides = array<i32>} : memref<1x2x8xf32, #tpu.memory_space<vmem>>, vector<1x1x8xf32>,
    %124 = arith.truncf %111 : vector<8x8x8xf32> to vector<8x8x8xbf16>
    %c0_111 = arith.constant 0 : index
    %c0_112 = arith.constant 0 : index
    %c0_113 = arith.constant 0 : index
    %c0_114 = arith.constant 0 : index
    %125 = vector.load %arg3[%c0_111, %c0_112, %c0_113, %c0_114] : memref<1x8x8x8xbf16, #tpu.memory_space<vmem>>, vector<1x8x8x8xbf16>
    %126 = vector.shape_cast %125 : vector<1x8x8x8xbf16> to vector<8x8x8xbf16>
    %127 = vector.shape_cast %124 : vector<8x8x8xbf16> to vector<1x8x8x8xbf16>
    tpu.vector_store %arg3[%c0_111, %c0_112, %c0_113, %c0_114], %127 {strides = array<i32>} : memref<1x8x8x8xbf16, #tpu.memory_space<vmem>>, vector<1x8x8x8xbf16>,
    return
  }
  func.func @transform_0(%arg0: i32) -> (i32, i32, i32, i32, i32) {
    %c0_i32 = arith.constant 0 : i32
    %c0_i32_0 = arith.constant 0 : i32
    %c0_i32_1 = arith.constant 0 : i32
    %c0_i32_2 = arith.constant 0 : i32
    %c0_i32_3 = arith.constant 0 : i32
    return %arg0, %c0_i32, %c0_i32_0, %c0_i32_1, %c0_i32_2 : i32, i32, i32, i32, i32
  }
  func.func @transform_1(%arg0: i32) -> (i32, i32, i32) {
    %c0_i32 = arith.constant 0 : i32
    %c0_i32_0 = arith.constant 0 : i32
    %c0_i32_1 = arith.constant 0 : i32
    %c0_i32_2 = arith.constant 0 : i32
    return %c0_i32, %c0_i32_0, %c0_i32_1 : i32, i32, i32
  }
  func.func @transform_2(%arg0: i32) -> (i32, i32, i32, i32) {
    %c0_i32 = arith.constant 0 : i32
    %c0_i32_0 = arith.constant 0 : i32
    %c0_i32_1 = arith.constant 0 : i32
    %c0_i32_2 = arith.constant 0 : i32
    return %arg0, %c0_i32, %c0_i32_0, %c0_i32_1 : i32, i32, i32, i32
  }
  func.func @transform_3(%arg0: i32) -> (i32, i32, i32) {
    %c0_i32 = arith.constant 0 : i32
    %c0_i32_0 = arith.constant 0 : i32
    %c0_i32_1 = arith.constant 0 : i32
    return %arg0, %c0_i32, %c0_i32_0 : i32, i32, i32
  }
}

module attributes {stable_mosaic.version = 11 : i64} {
  func.func @bn2_relu_kernel(%arg0: i32, %arg1: memref<1x8x8x8xbf16, #tpu.memory_space<vmem>>, %arg2: memref<1x8xf32, #tpu.memory_space<vmem>>, %arg3: memref<1x8xf32, #tpu.memory_space<vmem>>, %arg4: memref<1x8x8x8xf32, #tpu.memory_space<vmem>>) attributes {dimension_semantics = [#tpu.dimension_semantics<parallel>], iteration_bounds = array<i64: 2>, scalar_prefetch = 0 : i64, scratch_operands = 0 : i64, tpu.core_type = #tpu.core_type<tc>, window_params = [{transform_indices = @transform_0, window_bounds = array<i64: 1, 8, 8, 8>}, {pipeline_mode = #tpu.pipeline_mode<synchronous>, transform_indices = @transform_1, window_bounds = array<i64: 1, 8>}, {pipeline_mode = #tpu.pipeline_mode<synchronous>, transform_indices = @transform_2, window_bounds = array<i64: 1, 8>}, {transform_indices = @transform_3, window_bounds = array<i64: 1, 8, 8, 8>}]} {
    %c0 = arith.constant 0 : index
    %c0_0 = arith.constant 0 : index
    %c0_1 = arith.constant 0 : index
    %c0_2 = arith.constant 0 : index
    %0 = vector.load %arg1[%c0, %c0_0, %c0_1, %c0_2] : memref<1x8x8x8xbf16, #tpu.memory_space<vmem>>, vector<1x8x8x8xbf16>
    %1 = vector.shape_cast %0 : vector<1x8x8x8xbf16> to vector<8x8x8xbf16>
    %2 = arith.extf %1 : vector<8x8x8xbf16> to vector<8x8x8xf32>
    %c0_3 = arith.constant 0 : index
    %c0_4 = arith.constant 0 : index
    %3 = vector.load %arg2[%c0_3, %c0_4] : memref<1x8xf32, #tpu.memory_space<vmem>>, vector<1x8xf32>
    %4 = vector.shape_cast %3 : vector<1x8xf32> to vector<1x1x8xf32>
    %5 = vector.broadcast %4 : vector<1x1x8xf32> to vector<8x8x8xf32>
    %6 = arith.mulf %2, %5 : vector<8x8x8xf32>
    %c0_5 = arith.constant 0 : index
    %c0_6 = arith.constant 0 : index
    %7 = vector.load %arg3[%c0_5, %c0_6] : memref<1x8xf32, #tpu.memory_space<vmem>>, vector<1x8xf32>
    %8 = vector.shape_cast %7 : vector<1x8xf32> to vector<1x1x8xf32>
    %9 = vector.broadcast %8 : vector<1x1x8xf32> to vector<8x8x8xf32>
    %10 = arith.addf %6, %9 : vector<8x8x8xf32>
    %cst = arith.constant 0.000000e+00 : f32
    %11 = vector.broadcast %cst : f32 to vector<8x8x8xf32>
    %12 = arith.maximumf %10, %11 : vector<8x8x8xf32>
    %c0_7 = arith.constant 0 : index
    %c0_8 = arith.constant 0 : index
    %c0_9 = arith.constant 0 : index
    %c0_10 = arith.constant 0 : index
    %13 = vector.load %arg4[%c0_7, %c0_8, %c0_9, %c0_10] : memref<1x8x8x8xf32, #tpu.memory_space<vmem>>, vector<1x8x8x8xf32>
    %14 = vector.shape_cast %13 : vector<1x8x8x8xf32> to vector<8x8x8xf32>
    %15 = vector.shape_cast %12 : vector<8x8x8xf32> to vector<1x8x8x8xf32>
    tpu.vector_store %arg4[%c0_7, %c0_8, %c0_9, %c0_10], %15 {strides = array<i32>} : memref<1x8x8x8xf32, #tpu.memory_space<vmem>>, vector<1x8x8x8xf32>,
    return
  }
  func.func @transform_0(%arg0: i32) -> (i32, i32, i32, i32) {
    %c0_i32 = arith.constant 0 : i32
    %c0_i32_0 = arith.constant 0 : i32
    %c0_i32_1 = arith.constant 0 : i32
    %c0_i32_2 = arith.constant 0 : i32
    return %arg0, %c0_i32, %c0_i32_0, %c0_i32_1 : i32, i32, i32, i32
  }
  func.func @transform_1(%arg0: i32) -> (i32, i32) {
    %c0_i32 = arith.constant 0 : i32
    %c0_i32_0 = arith.constant 0 : i32
    %c0_i32_1 = arith.constant 0 : i32
    return %c0_i32, %c0_i32_0 : i32, i32
  }
  func.func @transform_2(%arg0: i32) -> (i32, i32) {
    %c0_i32 = arith.constant 0 : i32
    %c0_i32_0 = arith.constant 0 : i32
    %c0_i32_1 = arith.constant 0 : i32
    return %c0_i32, %c0_i32_0 : i32, i32
  }
  func.func @transform_3(%arg0: i32) -> (i32, i32, i32, i32) {
    %c0_i32 = arith.constant 0 : i32
    %c0_i32_0 = arith.constant 0 : i32
    %c0_i32_1 = arith.constant 0 : i32
    %c0_i32_2 = arith.constant 0 : i32
    return %arg0, %c0_i32, %c0_i32_0, %c0_i32_1 : i32, i32, i32, i32
  }
}

module attributes {stable_mosaic.version = 11 : i64} {
  func.func @bn1_relu_conv2_kernel(%arg0: i32, %arg1: memref<1x8x8x8xbf16, #tpu.memory_space<vmem>>, %arg2: memref<1x8xf32, #tpu.memory_space<vmem>>, %arg3: memref<1x8xf32, #tpu.memory_space<vmem>>, %arg4: memref<9x8x8xbf16, #tpu.memory_space<vmem>>, %arg5: memref<1x8x8x8xbf16, #tpu.memory_space<vmem>>, %arg6: memref<1x2x8xf32, #tpu.memory_space<vmem>>, %arg7: memref<168x8xbf16, #tpu.memory_space<vmem>>, %arg8: memref<128x8xf32, #tpu.memory_space<vmem>>) attributes {dimension_semantics = [#tpu.dimension_semantics<parallel>], iteration_bounds = array<i64: 2>, scalar_prefetch = 0 : i64, scratch_operands = 2 : i64, tpu.core_type = #tpu.core_type<tc>, window_params = [{transform_indices = @transform_0, window_bounds = array<i64: 1, 8, 8, 8>}, {pipeline_mode = #tpu.pipeline_mode<synchronous>, transform_indices = @transform_1, window_bounds = array<i64: 1, 8>}, {pipeline_mode = #tpu.pipeline_mode<synchronous>, transform_indices = @transform_2, window_bounds = array<i64: 1, 8>}, {pipeline_mode = #tpu.pipeline_mode<synchronous>, transform_indices = @transform_3, window_bounds = array<i64: 9, 8, 8>}, {transform_indices = @transform_4, window_bounds = array<i64: 1, 8, 8, 8>}, {transform_indices = @transform_5, window_bounds = array<i64: 1, 2, 8>}]} {
    %c0 = arith.constant 0 : index
    %c0_0 = arith.constant 0 : index
    %c0_1 = arith.constant 0 : index
    %c0_2 = arith.constant 0 : index
    %0 = vector.load %arg1[%c0, %c0_0, %c0_1, %c0_2] : memref<1x8x8x8xbf16, #tpu.memory_space<vmem>>, vector<1x8x8x8xbf16>
    %1 = vector.shape_cast %0 : vector<1x8x8x8xbf16> to vector<8x8x8xbf16>
    %2 = arith.extf %1 : vector<8x8x8xbf16> to vector<8x8x8xf32>
    %c0_3 = arith.constant 0 : index
    %c0_4 = arith.constant 0 : index
    %3 = vector.load %arg2[%c0_3, %c0_4] : memref<1x8xf32, #tpu.memory_space<vmem>>, vector<1x8xf32>
    %4 = vector.shape_cast %3 : vector<1x8xf32> to vector<1x1x8xf32>
    %5 = vector.broadcast %4 : vector<1x1x8xf32> to vector<8x8x8xf32>
    %6 = arith.mulf %2, %5 : vector<8x8x8xf32>
    %c0_5 = arith.constant 0 : index
    %c0_6 = arith.constant 0 : index
    %7 = vector.load %arg3[%c0_5, %c0_6] : memref<1x8xf32, #tpu.memory_space<vmem>>, vector<1x8xf32>
    %8 = vector.shape_cast %7 : vector<1x8xf32> to vector<1x1x8xf32>
    %9 = vector.broadcast %8 : vector<1x1x8xf32> to vector<8x8x8xf32>
    %10 = arith.addf %6, %9 : vector<8x8x8xf32>
    %cst = arith.constant 0.000000e+00 : f32
    %11 = vector.broadcast %cst : f32 to vector<8x8x8xf32>
    %12 = arith.maximumf %10, %11 : vector<8x8x8xf32>
    %13 = arith.truncf %12 : vector<8x8x8xf32> to vector<8x8x8xbf16>
    %cst_7 = arith.constant 0.000000e+00 : bf16
    %14 = vector.broadcast %cst_7 : bf16 to vector<17x8xbf16>
    %c0_8 = arith.constant 0 : index
    %c0_9 = arith.constant 0 : index
    %15 = vector.load %arg7[%c0_8, %c0_9] : memref<168x8xbf16, #tpu.memory_space<vmem>>, vector<17x8xbf16>
    tpu.vector_store %arg7[%c0_8, %c0_9], %14 {strides = array<i32>} : memref<168x8xbf16, #tpu.memory_space<vmem>>, vector<17x8xbf16>,
    %cst_10 = arith.constant 0.000000e+00 : bf16
    %16 = vector.broadcast %cst_10 : bf16 to vector<24x8xbf16>
    %c144 = arith.constant 144 : index
    %c0_11 = arith.constant 0 : index
    %17 = vector.load %arg7[%c144, %c0_11] : memref<168x8xbf16, #tpu.memory_space<vmem>>, vector<24x8xbf16>
    tpu.vector_store %arg7[%c144, %c0_11], %16 {strides = array<i32>} : memref<168x8xbf16, #tpu.memory_space<vmem>>, vector<24x8xbf16>,
    %cst_12 = arith.constant 0.000000e+00 : bf16
    %18 = vector.broadcast %cst_12 : bf16 to vector<8x8xbf16>
    %19 = vector.extract_strided_slice %13 {offsets = [0, 0, 0], sizes = [1, 8, 8], strides = [1, 1, 1]} : vector<8x8x8xbf16> to vector<1x8x8xbf16>
    %20 = vector.shape_cast %19 : vector<1x8x8xbf16> to vector<8x8xbf16>
    %c17 = arith.constant 17 : index
    %c0_13 = arith.constant 0 : index
    %21 = vector.load %arg7[%c17, %c0_13] : memref<168x8xbf16, #tpu.memory_space<vmem>>, vector<8x8xbf16>
    tpu.vector_store %arg7[%c17, %c0_13], %20 {strides = array<i32>} : memref<168x8xbf16, #tpu.memory_space<vmem>>, vector<8x8xbf16>,
    %c25 = arith.constant 25 : index
    %c0_14 = arith.constant 0 : index
    %22 = vector.load %arg7[%c25, %c0_14] : memref<168x8xbf16, #tpu.memory_space<vmem>>, vector<8x8xbf16>
    tpu.vector_store %arg7[%c25, %c0_14], %18 {strides = array<i32>} : memref<168x8xbf16, #tpu.memory_space<vmem>>, vector<8x8xbf16>,
    %23 = vector.extract_strided_slice %13 {offsets = [1, 0, 0], sizes = [1, 8, 8], strides = [1, 1, 1]} : vector<8x8x8xbf16> to vector<1x8x8xbf16>
    %24 = vector.shape_cast %23 : vector<1x8x8xbf16> to vector<8x8xbf16>
    %c33 = arith.constant 33 : index
    %c0_15 = arith.constant 0 : index
    %25 = vector.load %arg7[%c33, %c0_15] : memref<168x8xbf16, #tpu.memory_space<vmem>>, vector<8x8xbf16>
    tpu.vector_store %arg7[%c33, %c0_15], %24 {strides = array<i32>} : memref<168x8xbf16, #tpu.memory_space<vmem>>, vector<8x8xbf16>,
    %c41 = arith.constant 41 : index
    %c0_16 = arith.constant 0 : index
    %26 = vector.load %arg7[%c41, %c0_16] : memref<168x8xbf16, #tpu.memory_space<vmem>>, vector<8x8xbf16>
    tpu.vector_store %arg7[%c41, %c0_16], %18 {strides = array<i32>} : memref<168x8xbf16, #tpu.memory_space<vmem>>, vector<8x8xbf16>,
    %27 = vector.extract_strided_slice %13 {offsets = [2, 0, 0], sizes = [1, 8, 8], strides = [1, 1, 1]} : vector<8x8x8xbf16> to vector<1x8x8xbf16>
    %28 = vector.shape_cast %27 : vector<1x8x8xbf16> to vector<8x8xbf16>
    %c49 = arith.constant 49 : index
    %c0_17 = arith.constant 0 : index
    %29 = vector.load %arg7[%c49, %c0_17] : memref<168x8xbf16, #tpu.memory_space<vmem>>, vector<8x8xbf16>
    tpu.vector_store %arg7[%c49, %c0_17], %28 {strides = array<i32>} : memref<168x8xbf16, #tpu.memory_space<vmem>>, vector<8x8xbf16>,
    %c57 = arith.constant 57 : index
    %c0_18 = arith.constant 0 : index
    %30 = vector.load %arg7[%c57, %c0_18] : memref<168x8xbf16, #tpu.memory_space<vmem>>, vector<8x8xbf16>
    tpu.vector_store %arg7[%c57, %c0_18], %18 {strides = array<i32>} : memref<168x8xbf16, #tpu.memory_space<vmem>>, vector<8x8xbf16>,
    %31 = vector.extract_strided_slice %13 {offsets = [3, 0, 0], sizes = [1, 8, 8], strides = [1, 1, 1]} : vector<8x8x8xbf16> to vector<1x8x8xbf16>
    %32 = vector.shape_cast %31 : vector<1x8x8xbf16> to vector<8x8xbf16>
    %c65 = arith.constant 65 : index
    %c0_19 = arith.constant 0 : index
    %33 = vector.load %arg7[%c65, %c0_19] : memref<168x8xbf16, #tpu.memory_space<vmem>>, vector<8x8xbf16>
    tpu.vector_store %arg7[%c65, %c0_19], %32 {strides = array<i32>} : memref<168x8xbf16, #tpu.memory_space<vmem>>, vector<8x8xbf16>,
    %c73 = arith.constant 73 : index
    %c0_20 = arith.constant 0 : index
    %34 = vector.load %arg7[%c73, %c0_20] : memref<168x8xbf16, #tpu.memory_space<vmem>>, vector<8x8xbf16>
    tpu.vector_store %arg7[%c73, %c0_20], %18 {strides = array<i32>} : memref<168x8xbf16, #tpu.memory_space<vmem>>, vector<8x8xbf16>,
    %35 = vector.extract_strided_slice %13 {offsets = [4, 0, 0], sizes = [1, 8, 8], strides = [1, 1, 1]} : vector<8x8x8xbf16> to vector<1x8x8xbf16>
    %36 = vector.shape_cast %35 : vector<1x8x8xbf16> to vector<8x8xbf16>
    %c81 = arith.constant 81 : index
    %c0_21 = arith.constant 0 : index
    %37 = vector.load %arg7[%c81, %c0_21] : memref<168x8xbf16, #tpu.memory_space<vmem>>, vector<8x8xbf16>
    tpu.vector_store %arg7[%c81, %c0_21], %36 {strides = array<i32>} : memref<168x8xbf16, #tpu.memory_space<vmem>>, vector<8x8xbf16>,
    %c89 = arith.constant 89 : index
    %c0_22 = arith.constant 0 : index
    %38 = vector.load %arg7[%c89, %c0_22] : memref<168x8xbf16, #tpu.memory_space<vmem>>, vector<8x8xbf16>
    tpu.vector_store %arg7[%c89, %c0_22], %18 {strides = array<i32>} : memref<168x8xbf16, #tpu.memory_space<vmem>>, vector<8x8xbf16>,
    %39 = vector.extract_strided_slice %13 {offsets = [5, 0, 0], sizes = [1, 8, 8], strides = [1, 1, 1]} : vector<8x8x8xbf16> to vector<1x8x8xbf16>
    %40 = vector.shape_cast %39 : vector<1x8x8xbf16> to vector<8x8xbf16>
    %c97 = arith.constant 97 : index
    %c0_23 = arith.constant 0 : index
    %41 = vector.load %arg7[%c97, %c0_23] : memref<168x8xbf16, #tpu.memory_space<vmem>>, vector<8x8xbf16>
    tpu.vector_store %arg7[%c97, %c0_23], %40 {strides = array<i32>} : memref<168x8xbf16, #tpu.memory_space<vmem>>, vector<8x8xbf16>,
    %c105 = arith.constant 105 : index
    %c0_24 = arith.constant 0 : index
    %42 = vector.load %arg7[%c105, %c0_24] : memref<168x8xbf16, #tpu.memory_space<vmem>>, vector<8x8xbf16>
    tpu.vector_store %arg7[%c105, %c0_24], %18 {strides = array<i32>} : memref<168x8xbf16, #tpu.memory_space<vmem>>, vector<8x8xbf16>,
    %43 = vector.extract_strided_slice %13 {offsets = [6, 0, 0], sizes = [1, 8, 8], strides = [1, 1, 1]} : vector<8x8x8xbf16> to vector<1x8x8xbf16>
    %44 = vector.shape_cast %43 : vector<1x8x8xbf16> to vector<8x8xbf16>
    %c113 = arith.constant 113 : index
    %c0_25 = arith.constant 0 : index
    %45 = vector.load %arg7[%c113, %c0_25] : memref<168x8xbf16, #tpu.memory_space<vmem>>, vector<8x8xbf16>
    tpu.vector_store %arg7[%c113, %c0_25], %44 {strides = array<i32>} : memref<168x8xbf16, #tpu.memory_space<vmem>>, vector<8x8xbf16>,
    %c121 = arith.constant 121 : index
    %c0_26 = arith.constant 0 : index
    %46 = vector.load %arg7[%c121, %c0_26] : memref<168x8xbf16, #tpu.memory_space<vmem>>, vector<8x8xbf16>
    tpu.vector_store %arg7[%c121, %c0_26], %18 {strides = array<i32>} : memref<168x8xbf16, #tpu.memory_space<vmem>>, vector<8x8xbf16>,
    %47 = vector.extract_strided_slice %13 {offsets = [7, 0, 0], sizes = [1, 8, 8], strides = [1, 1, 1]} : vector<8x8x8xbf16> to vector<1x8x8xbf16>
    %48 = vector.shape_cast %47 : vector<1x8x8xbf16> to vector<8x8xbf16>
    %c129 = arith.constant 129 : index
    %c0_27 = arith.constant 0 : index
    %49 = vector.load %arg7[%c129, %c0_27] : memref<168x8xbf16, #tpu.memory_space<vmem>>, vector<8x8xbf16>
    tpu.vector_store %arg7[%c129, %c0_27], %48 {strides = array<i32>} : memref<168x8xbf16, #tpu.memory_space<vmem>>, vector<8x8xbf16>,
    %c137 = arith.constant 137 : index
    %c0_28 = arith.constant 0 : index
    %50 = vector.load %arg7[%c137, %c0_28] : memref<168x8xbf16, #tpu.memory_space<vmem>>, vector<8x8xbf16>
    tpu.vector_store %arg7[%c137, %c0_28], %18 {strides = array<i32>} : memref<168x8xbf16, #tpu.memory_space<vmem>>, vector<8x8xbf16>,
    %c0_29 = arith.constant 0 : index
    %c0_30 = arith.constant 0 : index
    %51 = vector.load %arg7[%c0_29, %c0_30] : memref<168x8xbf16, #tpu.memory_space<vmem>>, vector<128x8xbf16>
    %c0_31 = arith.constant 0 : index
    %c0_32 = arith.constant 0 : index
    %c0_33 = arith.constant 0 : index
    %52 = vector.load %arg4[%c0_31, %c0_32, %c0_33] : memref<9x8x8xbf16, #tpu.memory_space<vmem>>, vector<1x8x8xbf16>
    %53 = vector.shape_cast %52 : vector<1x8x8xbf16> to vector<8x8xbf16>
    %cst_34 = arith.constant dense<0.000000e+00> : vector<128x8xf32>
    %54 = tpu.matmul %51, %53, %cst_34 {dimension_numbers = #tpu.dot_dimension_numbers<[1], [0], [0], [1], [0, 0, 1, 1], [], []>} : vector<128x8xbf16>, vector<8x8xbf16>, vector<128x8xf32> -> vector<128x8xf32>
    %c0_35 = arith.constant 0 : index
    %c0_36 = arith.constant 0 : index
    %55 = vector.load %arg8[%c0_35, %c0_36] : memref<128x8xf32, #tpu.memory_space<vmem>>, vector<128x8xf32>
    tpu.vector_store %arg8[%c0_35, %c0_36], %54 {strides = array<i32>} : memref<128x8xf32, #tpu.memory_space<vmem>>, vector<128x8xf32>,
    %c1 = arith.constant 1 : index
    %c0_37 = arith.constant 0 : index
    %56 = vector.load %arg7[%c1, %c0_37] : memref<168x8xbf16, #tpu.memory_space<vmem>>, vector<128x8xbf16>
    %c1_38 = arith.constant 1 : index
    %c0_39 = arith.constant 0 : index
    %c0_40 = arith.constant 0 : index
    %57 = vector.load %arg4[%c1_38, %c0_39, %c0_40] : memref<9x8x8xbf16, #tpu.memory_space<vmem>>, vector<1x8x8xbf16>
    %58 = vector.shape_cast %57 : vector<1x8x8xbf16> to vector<8x8xbf16>
    %cst_41 = arith.constant dense<0.000000e+00> : vector<128x8xf32>
    %59 = tpu.matmul %56, %58, %cst_41 {dimension_numbers = #tpu.dot_dimension_numbers<[1], [0], [0], [1], [0, 0, 1, 1], [], []>} : vector<128x8xbf16>, vector<8x8xbf16>, vector<128x8xf32> -> vector<128x8xf32>
    %c0_42 = arith.constant 0 : index
    %c0_43 = arith.constant 0 : index
    %60 = vector.load %arg8[%c0_42, %c0_43] : memref<128x8xf32, #tpu.memory_space<vmem>>, vector<128x8xf32>
    %61 = arith.addf %60, %59 : vector<128x8xf32>
    %c0_44 = arith.constant 0 : index
    %c0_45 = arith.constant 0 : index
    %62 = vector.load %arg8[%c0_44, %c0_45] : memref<128x8xf32, #tpu.memory_space<vmem>>, vector<128x8xf32>
    tpu.vector_store %arg8[%c0_44, %c0_45], %61 {strides = array<i32>} : memref<128x8xf32, #tpu.memory_space<vmem>>, vector<128x8xf32>,
    %c2 = arith.constant 2 : index
    %c0_46 = arith.constant 0 : index
    %63 = vector.load %arg7[%c2, %c0_46] : memref<168x8xbf16, #tpu.memory_space<vmem>>, vector<128x8xbf16>
    %c2_47 = arith.constant 2 : index
    %c0_48 = arith.constant 0 : index
    %c0_49 = arith.constant 0 : index
    %64 = vector.load %arg4[%c2_47, %c0_48, %c0_49] : memref<9x8x8xbf16, #tpu.memory_space<vmem>>, vector<1x8x8xbf16>
    %65 = vector.shape_cast %64 : vector<1x8x8xbf16> to vector<8x8xbf16>
    %cst_50 = arith.constant dense<0.000000e+00> : vector<128x8xf32>
    %66 = tpu.matmul %63, %65, %cst_50 {dimension_numbers = #tpu.dot_dimension_numbers<[1], [0], [0], [1], [0, 0, 1, 1], [], []>} : vector<128x8xbf16>, vector<8x8xbf16>, vector<128x8xf32> -> vector<128x8xf32>
    %c0_51 = arith.constant 0 : index
    %c0_52 = arith.constant 0 : index
    %67 = vector.load %arg8[%c0_51, %c0_52] : memref<128x8xf32, #tpu.memory_space<vmem>>, vector<128x8xf32>
    %68 = arith.addf %67, %66 : vector<128x8xf32>
    %c0_53 = arith.constant 0 : index
    %c0_54 = arith.constant 0 : index
    %69 = vector.load %arg8[%c0_53, %c0_54] : memref<128x8xf32, #tpu.memory_space<vmem>>, vector<128x8xf32>
    tpu.vector_store %arg8[%c0_53, %c0_54], %68 {strides = array<i32>} : memref<128x8xf32, #tpu.memory_space<vmem>>, vector<128x8xf32>,
    %c16 = arith.constant 16 : index
    %c0_55 = arith.constant 0 : index
    %70 = vector.load %arg7[%c16, %c0_55] : memref<168x8xbf16, #tpu.memory_space<vmem>>, vector<128x8xbf16>
    %c3 = arith.constant 3 : index
    %c0_56 = arith.constant 0 : index
    %c0_57 = arith.constant 0 : index
    %71 = vector.load %arg4[%c3, %c0_56, %c0_57] : memref<9x8x8xbf16, #tpu.memory_space<vmem>>, vector<1x8x8xbf16>
    %72 = vector.shape_cast %71 : vector<1x8x8xbf16> to vector<8x8xbf16>
    %cst_58 = arith.constant dense<0.000000e+00> : vector<128x8xf32>
    %73 = tpu.matmul %70, %72, %cst_58 {dimension_numbers = #tpu.dot_dimension_numbers<[1], [0], [0], [1], [0, 0, 1, 1], [], []>} : vector<128x8xbf16>, vector<8x8xbf16>, vector<128x8xf32> -> vector<128x8xf32>
    %c0_59 = arith.constant 0 : index
    %c0_60 = arith.constant 0 : index
    %74 = vector.load %arg8[%c0_59, %c0_60] : memref<128x8xf32, #tpu.memory_space<vmem>>, vector<128x8xf32>
    %75 = arith.addf %74, %73 : vector<128x8xf32>
    %c0_61 = arith.constant 0 : index
    %c0_62 = arith.constant 0 : index
    %76 = vector.load %arg8[%c0_61, %c0_62] : memref<128x8xf32, #tpu.memory_space<vmem>>, vector<128x8xf32>
    tpu.vector_store %arg8[%c0_61, %c0_62], %75 {strides = array<i32>} : memref<128x8xf32, #tpu.memory_space<vmem>>, vector<128x8xf32>,
    %c17_63 = arith.constant 17 : index
    %c0_64 = arith.constant 0 : index
    %77 = vector.load %arg7[%c17_63, %c0_64] : memref<168x8xbf16, #tpu.memory_space<vmem>>, vector<128x8xbf16>
    %c4 = arith.constant 4 : index
    %c0_65 = arith.constant 0 : index
    %c0_66 = arith.constant 0 : index
    %78 = vector.load %arg4[%c4, %c0_65, %c0_66] : memref<9x8x8xbf16, #tpu.memory_space<vmem>>, vector<1x8x8xbf16>
    %79 = vector.shape_cast %78 : vector<1x8x8xbf16> to vector<8x8xbf16>
    %cst_67 = arith.constant dense<0.000000e+00> : vector<128x8xf32>
    %80 = tpu.matmul %77, %79, %cst_67 {dimension_numbers = #tpu.dot_dimension_numbers<[1], [0], [0], [1], [0, 0, 1, 1], [], []>} : vector<128x8xbf16>, vector<8x8xbf16>, vector<128x8xf32> -> vector<128x8xf32>
    %c0_68 = arith.constant 0 : index
    %c0_69 = arith.constant 0 : index
    %81 = vector.load %arg8[%c0_68, %c0_69] : memref<128x8xf32, #tpu.memory_space<vmem>>, vector<128x8xf32>
    %82 = arith.addf %81, %80 : vector<128x8xf32>
    %c0_70 = arith.constant 0 : index
    %c0_71 = arith.constant 0 : index
    %83 = vector.load %arg8[%c0_70, %c0_71] : memref<128x8xf32, #tpu.memory_space<vmem>>, vector<128x8xf32>
    tpu.vector_store %arg8[%c0_70, %c0_71], %82 {strides = array<i32>} : memref<128x8xf32, #tpu.memory_space<vmem>>, vector<128x8xf32>,
    %c18 = arith.constant 18 : index
    %c0_72 = arith.constant 0 : index
    %84 = vector.load %arg7[%c18, %c0_72] : memref<168x8xbf16, #tpu.memory_space<vmem>>, vector<128x8xbf16>
    %c5 = arith.constant 5 : index
    %c0_73 = arith.constant 0 : index
    %c0_74 = arith.constant 0 : index
    %85 = vector.load %arg4[%c5, %c0_73, %c0_74] : memref<9x8x8xbf16, #tpu.memory_space<vmem>>, vector<1x8x8xbf16>
    %86 = vector.shape_cast %85 : vector<1x8x8xbf16> to vector<8x8xbf16>
    %cst_75 = arith.constant dense<0.000000e+00> : vector<128x8xf32>
    %87 = tpu.matmul %84, %86, %cst_75 {dimension_numbers = #tpu.dot_dimension_numbers<[1], [0], [0], [1], [0, 0, 1, 1], [], []>} : vector<128x8xbf16>, vector<8x8xbf16>, vector<128x8xf32> -> vector<128x8xf32>
    %c0_76 = arith.constant 0 : index
    %c0_77 = arith.constant 0 : index
    %88 = vector.load %arg8[%c0_76, %c0_77] : memref<128x8xf32, #tpu.memory_space<vmem>>, vector<128x8xf32>
    %89 = arith.addf %88, %87 : vector<128x8xf32>
    %c0_78 = arith.constant 0 : index
    %c0_79 = arith.constant 0 : index
    %90 = vector.load %arg8[%c0_78, %c0_79] : memref<128x8xf32, #tpu.memory_space<vmem>>, vector<128x8xf32>
    tpu.vector_store %arg8[%c0_78, %c0_79], %89 {strides = array<i32>} : memref<128x8xf32, #tpu.memory_space<vmem>>, vector<128x8xf32>,
    %c32 = arith.constant 32 : index
    %c0_80 = arith.constant 0 : index
    %91 = vector.load %arg7[%c32, %c0_80] : memref<168x8xbf16, #tpu.memory_space<vmem>>, vector<128x8xbf16>
    %c6 = arith.constant 6 : index
    %c0_81 = arith.constant 0 : index
    %c0_82 = arith.constant 0 : index
    %92 = vector.load %arg4[%c6, %c0_81, %c0_82] : memref<9x8x8xbf16, #tpu.memory_space<vmem>>, vector<1x8x8xbf16>
    %93 = vector.shape_cast %92 : vector<1x8x8xbf16> to vector<8x8xbf16>
    %cst_83 = arith.constant dense<0.000000e+00> : vector<128x8xf32>
    %94 = tpu.matmul %91, %93, %cst_83 {dimension_numbers = #tpu.dot_dimension_numbers<[1], [0], [0], [1], [0, 0, 1, 1], [], []>} : vector<128x8xbf16>, vector<8x8xbf16>, vector<128x8xf32> -> vector<128x8xf32>
    %c0_84 = arith.constant 0 : index
    %c0_85 = arith.constant 0 : index
    %95 = vector.load %arg8[%c0_84, %c0_85] : memref<128x8xf32, #tpu.memory_space<vmem>>, vector<128x8xf32>
    %96 = arith.addf %95, %94 : vector<128x8xf32>
    %c0_86 = arith.constant 0 : index
    %c0_87 = arith.constant 0 : index
    %97 = vector.load %arg8[%c0_86, %c0_87] : memref<128x8xf32, #tpu.memory_space<vmem>>, vector<128x8xf32>
    tpu.vector_store %arg8[%c0_86, %c0_87], %96 {strides = array<i32>} : memref<128x8xf32, #tpu.memory_space<vmem>>, vector<128x8xf32>,
    %c33_88 = arith.constant 33 : index
    %c0_89 = arith.constant 0 : index
    %98 = vector.load %arg7[%c33_88, %c0_89] : memref<168x8xbf16, #tpu.memory_space<vmem>>, vector<128x8xbf16>
    %c7 = arith.constant 7 : index
    %c0_90 = arith.constant 0 : index
    %c0_91 = arith.constant 0 : index
    %99 = vector.load %arg4[%c7, %c0_90, %c0_91] : memref<9x8x8xbf16, #tpu.memory_space<vmem>>, vector<1x8x8xbf16>
    %100 = vector.shape_cast %99 : vector<1x8x8xbf16> to vector<8x8xbf16>
    %cst_92 = arith.constant dense<0.000000e+00> : vector<128x8xf32>
    %101 = tpu.matmul %98, %100, %cst_92 {dimension_numbers = #tpu.dot_dimension_numbers<[1], [0], [0], [1], [0, 0, 1, 1], [], []>} : vector<128x8xbf16>, vector<8x8xbf16>, vector<128x8xf32> -> vector<128x8xf32>
    %c0_93 = arith.constant 0 : index
    %c0_94 = arith.constant 0 : index
    %102 = vector.load %arg8[%c0_93, %c0_94] : memref<128x8xf32, #tpu.memory_space<vmem>>, vector<128x8xf32>
    %103 = arith.addf %102, %101 : vector<128x8xf32>
    %c0_95 = arith.constant 0 : index
    %c0_96 = arith.constant 0 : index
    %104 = vector.load %arg8[%c0_95, %c0_96] : memref<128x8xf32, #tpu.memory_space<vmem>>, vector<128x8xf32>
    tpu.vector_store %arg8[%c0_95, %c0_96], %103 {strides = array<i32>} : memref<128x8xf32, #tpu.memory_space<vmem>>, vector<128x8xf32>,
    %c34 = arith.constant 34 : index
    %c0_97 = arith.constant 0 : index
    %105 = vector.load %arg7[%c34, %c0_97] : memref<168x8xbf16, #tpu.memory_space<vmem>>, vector<128x8xbf16>
    %c8 = arith.constant 8 : index
    %c0_98 = arith.constant 0 : index
    %c0_99 = arith.constant 0 : index
    %106 = vector.load %arg4[%c8, %c0_98, %c0_99] : memref<9x8x8xbf16, #tpu.memory_space<vmem>>, vector<1x8x8xbf16>
    %107 = vector.shape_cast %106 : vector<1x8x8xbf16> to vector<8x8xbf16>
    %cst_100 = arith.constant dense<0.000000e+00> : vector<128x8xf32>
    %108 = tpu.matmul %105, %107, %cst_100 {dimension_numbers = #tpu.dot_dimension_numbers<[1], [0], [0], [1], [0, 0, 1, 1], [], []>} : vector<128x8xbf16>, vector<8x8xbf16>, vector<128x8xf32> -> vector<128x8xf32>
    %c0_101 = arith.constant 0 : index
    %c0_102 = arith.constant 0 : index
    %109 = vector.load %arg8[%c0_101, %c0_102] : memref<128x8xf32, #tpu.memory_space<vmem>>, vector<128x8xf32>
    %110 = arith.addf %109, %108 : vector<128x8xf32>
    %c0_103 = arith.constant 0 : index
    %c0_104 = arith.constant 0 : index
    %111 = vector.load %arg8[%c0_103, %c0_104] : memref<128x8xf32, #tpu.memory_space<vmem>>, vector<128x8xf32>
    tpu.vector_store %arg8[%c0_103, %c0_104], %110 {strides = array<i32>} : memref<128x8xf32, #tpu.memory_space<vmem>>, vector<128x8xf32>,
    %c0_105 = arith.constant 0 : index
    %c0_106 = arith.constant 0 : index
    %112 = vector.load %arg8[%c0_105, %c0_106] : memref<128x8xf32, #tpu.memory_space<vmem>>, vector<128x8xf32>
    %113 = vector.shape_cast %112 : vector<128x8xf32> to vector<8x16x8xf32>
    %114 = vector.extract_strided_slice %113 {offsets = [0, 0, 0], sizes = [8, 8, 8], strides = [1, 1, 1]} : vector<8x16x8xf32> to vector<8x8x8xf32>
    %115 = vector.shape_cast %114 : vector<8x8x8xf32> to vector<64x8xf32>
    %cst_107 = arith.constant dense<0.000000e+00> : vector<8xf32>
    %116 = vector.multi_reduction <add>, %115, %cst_107 [0] : vector<64x8xf32> to vector<8xf32>
    %117 = vector.shape_cast %116 : vector<8xf32> to vector<1x8xf32>
    %c0_108 = arith.constant 0 : index
    %c0_109 = arith.constant 0 : index
    %c0_110 = arith.constant 0 : index
    %118 = vector.load %arg6[%c0_108, %c0_109, %c0_110] : memref<1x2x8xf32, #tpu.memory_space<vmem>>, vector<1x1x8xf32>
    %119 = vector.shape_cast %118 : vector<1x1x8xf32> to vector<1x8xf32>
    %120 = vector.shape_cast %117 : vector<1x8xf32> to vector<1x1x8xf32>
    tpu.vector_store %arg6[%c0_108, %c0_109, %c0_110], %120 {strides = array<i32>} : memref<1x2x8xf32, #tpu.memory_space<vmem>>, vector<1x1x8xf32>,
    %121 = arith.mulf %115, %115 : vector<64x8xf32>
    %cst_111 = arith.constant dense<0.000000e+00> : vector<8xf32>
    %122 = vector.multi_reduction <add>, %121, %cst_111 [0] : vector<64x8xf32> to vector<8xf32>
    %123 = vector.shape_cast %122 : vector<8xf32> to vector<1x8xf32>
    %c0_112 = arith.constant 0 : index
    %c1_113 = arith.constant 1 : index
    %c0_114 = arith.constant 0 : index
    %124 = vector.load %arg6[%c0_112, %c1_113, %c0_114] : memref<1x2x8xf32, #tpu.memory_space<vmem>>, vector<1x1x8xf32>
    %125 = vector.shape_cast %124 : vector<1x1x8xf32> to vector<1x8xf32>
    %126 = vector.shape_cast %123 : vector<1x8xf32> to vector<1x1x8xf32>
    tpu.vector_store %arg6[%c0_112, %c1_113, %c0_114], %126 {strides = array<i32>} : memref<1x2x8xf32, #tpu.memory_space<vmem>>, vector<1x1x8xf32>,
    %127 = arith.truncf %114 : vector<8x8x8xf32> to vector<8x8x8xbf16>
    %c0_115 = arith.constant 0 : index
    %c0_116 = arith.constant 0 : index
    %c0_117 = arith.constant 0 : index
    %c0_118 = arith.constant 0 : index
    %128 = vector.load %arg5[%c0_115, %c0_116, %c0_117, %c0_118] : memref<1x8x8x8xbf16, #tpu.memory_space<vmem>>, vector<1x8x8x8xbf16>
    %129 = vector.shape_cast %128 : vector<1x8x8x8xbf16> to vector<8x8x8xbf16>
    %130 = vector.shape_cast %127 : vector<8x8x8xbf16> to vector<1x8x8x8xbf16>
    tpu.vector_store %arg5[%c0_115, %c0_116, %c0_117, %c0_118], %130 {strides = array<i32>} : memref<1x8x8x8xbf16, #tpu.memory_space<vmem>>, vector<1x8x8x8xbf16>,
    return
  }
  func.func @transform_0(%arg0: i32) -> (i32, i32, i32, i32) {
    %c0_i32 = arith.constant 0 : i32
    %c0_i32_0 = arith.constant 0 : i32
    %c0_i32_1 = arith.constant 0 : i32
    %c0_i32_2 = arith.constant 0 : i32
    return %arg0, %c0_i32, %c0_i32_0, %c0_i32_1 : i32, i32, i32, i32
  }
  func.func @transform_1(%arg0: i32) -> (i32, i32) {
    %c0_i32 = arith.constant 0 : i32
    %c0_i32_0 = arith.constant 0 : i32
    %c0_i32_1 = arith.constant 0 : i32
    return %c0_i32, %c0_i32_0 : i32, i32
  }
  func.func @transform_2(%arg0: i32) -> (i32, i32) {
    %c0_i32 = arith.constant 0 : i32
    %c0_i32_0 = arith.constant 0 : i32
    %c0_i32_1 = arith.constant 0 : i32
    return %c0_i32, %c0_i32_0 : i32, i32
  }
  func.func @transform_3(%arg0: i32) -> (i32, i32, i32) {
    %c0_i32 = arith.constant 0 : i32
    %c0_i32_0 = arith.constant 0 : i32
    %c0_i32_1 = arith.constant 0 : i32
    %c0_i32_2 = arith.constant 0 : i32
    return %c0_i32, %c0_i32_0, %c0_i32_1 : i32, i32, i32
  }
  func.func @transform_4(%arg0: i32) -> (i32, i32, i32, i32) {
    %c0_i32 = arith.constant 0 : i32
    %c0_i32_0 = arith.constant 0 : i32
    %c0_i32_1 = arith.constant 0 : i32
    %c0_i32_2 = arith.constant 0 : i32
    return %arg0, %c0_i32, %c0_i32_0, %c0_i32_1 : i32, i32, i32, i32
  }
  func.func @transform_5(%arg0: i32) -> (i32, i32, i32) {
    %c0_i32 = arith.constant 0 : i32
    %c0_i32_0 = arith.constant 0 : i32
    %c0_i32_1 = arith.constant 0 : i32
    return %arg0, %c0_i32, %c0_i32_0 : i32, i32, i32
  }
}

</mosaic_0001>

<llo_original>
// kernel: down_forward.5
$region0: #{down_forward.5}
  #allocation0 [shape = 'u32[]', space=smem, size = 0x4, offset = 0x4, fixed_abs, tag = 'smem constant byte address 0x4 - core index']
  #allocation1 [shape = 'u32[144,128]{1,0:T(1,128)}', space=vmem, size = 0x12000, scoped, tag = 'internal scratch']
  %s0 = inlined_call_operand.vmem [shape: bf16[2,8,8,8], index: 0, kind: input, shape index: {}]
  %s1 = inlined_call_operand.vmem [shape: f32[1,8], index: 1, kind: input, shape index: {}]
  %s2 = inlined_call_operand.vmem [shape: f32[1,8], index: 2, kind: input, shape index: {}]
  %s3 = inlined_call_operand.vmem [shape: f32[2,8,8,8], index: 3, kind: output, shape index: {}]
  %s4 = sld [smem:[#allocation0]]
  $region45: #{down_forward.5} parent=0
    _
  %s6 = ssub.s32 1, %s4
  %s7 = scalar_select 0, %s6, %s4
  loop: start=0, step=1, limit=4
  $region2: #{down_forward.5} parent=0 // loop_pre_header
    _
  $region3: #{down_forward.5} parent=0 // loop_header
    %s9 = sphi 0, %s13
    %p10 = scmp.ge.s32.totalorder %s9, 4
    %s19 = sphi 0, %s21
    %s22 = sphi 0, %s19
    %s23 = sphi 0, %s22
    %s39 = sphi 0, %s23
    %s43 = sphi 0, %s43
    %s45 = sphi 0, %s43
    %s46 = sphi 0, %s45
    %s60 = sphi 0, %s46
    %s64 = sphi 0, %s64
    %s66 = sphi 0, %s64
    %s67 = sphi 0, %s66
    %s81 = sphi 0, %s67
    %s87 = sphi 0, %s89
    %s90 = sphi 0, %s87
    %s91 = sphi 0, %s90
    %s107 = sphi 0, %s91
  $region4: #{down_forward.5} parent=0 // loop_header_branch
    %12 = sbr.rel (%p10) target = $region8
  $region5: #{down_forward.5} parent=0 // loop_body
    %s14 = ssub.s32 %s9, 1
    %s15 = ssub.s32 %s9, 2
    %s16 = sadd.s32 %s9, 1
    %s17 = ssub.s32 %s9, %s16
    %p18 = scmp.eq.s32.totalorder %s17, 0
    %s20 = sadd.s32 %s19, 1
    %s21 = scalar_select %p18, %s19, %s20
    %p24 = pneg %p18
    %p25 = scmp.eq.s32.totalorder %s9, 1
    %p26 = por %p24, %p25
    %p27 = scmp.ne.s32.totalorder %s19, %s22
    %p28 = scmp.eq.s32.totalorder %s9, 0
    %p29 = por %p27, %p28
    %p30 = scmp.ne.s32.totalorder %s19, %s22
    %p31 = scmp.eq.s32.totalorder %s14, 1
    %p32 = por %p30, %p31
    %p33 = scmp.ne.s32.totalorder %s22, %s23
    %p34 = scmp.eq.s32.totalorder %s14, 0
    %p35 = por %p33, %p34
    %p36 = scmp.ne.s32.totalorder %s22, %s23
    %p37 = scmp.eq.s32.totalorder %s15, 1
    %p38 = por %p36, %p37
    %p40 = scmp.ne.s32.totalorder %s23, %s39
    %p41 = scmp.eq.s32.totalorder %s15, 0
    %p42 = por %p40, %p41
    %s44 = sadd.s32 %s43, 1
    %p47 = scmp.eq.s32.totalorder %s9, 1
    %p48 = scmp.ne.s32.totalorder %s43, %s45
    %p49 = scmp.eq.s32.totalorder %s9, 0
    %p50 = por %p48, %p49
    %p51 = scmp.ne.s32.totalorder %s43, %s45
    %p52 = scmp.eq.s32.totalorder %s14, 1
    %p53 = por %p51, %p52
    %p54 = scmp.ne.s32.totalorder %s45, %s46
    %p55 = scmp.eq.s32.totalorder %s14, 0
    %p56 = por %p54, %p55
    %p57 = scmp.ne.s32.totalorder %s45, %s46
    %p58 = scmp.eq.s32.totalorder %s15, 1
    %p59 = por %p57, %p58
    %p61 = scmp.ne.s32.totalorder %s46, %s60
    %p62 = scmp.eq.s32.totalorder %s15, 0
    %p63 = por %p61, %p62
    %s65 = sadd.s32 %s64, 1
    %p68 = scmp.eq.s32.totalorder %s9, 1
    %p69 = scmp.ne.s32.totalorder %s64, %s66
    %p70 = scmp.eq.s32.totalorder %s9, 0
    %p71 = por %p69, %p70
    %p72 = scmp.ne.s32.totalorder %s64, %s66
    %p73 = scmp.eq.s32.totalorder %s14, 1
    %p74 = por %p72, %p73
    %p75 = scmp.ne.s32.totalorder %s66, %s67
    %p76 = scmp.eq.s32.totalorder %s14, 0
    %p77 = por %p75, %p76
    %p78 = scmp.ne.s32.totalorder %s66, %s67
    %p79 = scmp.eq.s32.totalorder %s15, 1
    %p80 = por %p78, %p79
    %p82 = scmp.ne.s32.totalorder %s67, %s81
    %p83 = scmp.eq.s32.totalorder %s15, 0
    %p84 = por %p82, %p83
    %s85 = ssub.s32 %s9, %s16
    %p86 = scmp.eq.s32.totalorder %s85, 0
    %s88 = sadd.s32 %s87, 1
    %s89 = scalar_select %p86, %s87, %s88
    %p92 = pneg %p86
    %p93 = scmp.eq.s32.totalorder %s9, 1
    %p94 = por %p92, %p93
    %p95 = scmp.ne.s32.totalorder %s87, %s90
    %p96 = scmp.eq.s32.totalorder %s9, 0
    %p97 = por %p95, %p96
    %p98 = scmp.ne.s32.totalorder %s87, %s90
    %p99 = scmp.eq.s32.totalorder %s14, 1
    %p100 = por %p98, %p99
    %p101 = scmp.ne.s32.totalorder %s90, %s91
    %p102 = scmp.eq.s32.totalorder %s14, 0
    %p103 = por %p101, %p102
    %p104 = scmp.ne.s32.totalorder %s90, %s91
    %p105 = scmp.eq.s32.totalorder %s15, 1
    %p106 = por %p104, %p105
    %p108 = scmp.ne.s32.totalorder %s91, %s107
    %p109 = scmp.eq.s32.totalorder %s15, 0
    %p110 = por %p108, %p109
    %p111 = scmp.le.s32.totalorder 1, %s9
    %p112 = scmp.lt.s32.totalorder %s9, 3
    %p113 = pnand %p111, %p112
    %p114 = pneg %p113
    // Predicated region
    $region9: #{down_forward.5} parent=5 // pred_check
      _
    $region10: #{down_forward.5} parent=5 // pred_check_branch
      %116 = sbr.rel (%p113) target = $region12
    $region11: #{down_forward.5} parent=5 // pred_region
      %s117 = ssub.s32 %s9, 1
      // Predicated region
      $region13: #{down_forward.5} parent=11 // pred_check
        %p118 = pneg %p56
      $region14: #{down_forward.5} parent=11 // pred_check_branch
        %120 = sbr.rel (%p118) target = $region16
      $region15: #{down_forward.5} parent=11 // pred_region
        _
      $region16: #{down_forward.5} parent=11 // pred_fallthru
        _
      // Predicated region
      $region17: #{down_forward.5} parent=11 // pred_check
        %p121 = pneg %p77
      $region18: #{down_forward.5} parent=11 // pred_check_branch
        %123 = sbr.rel (%p121) target = $region20
      $region19: #{down_forward.5} parent=11 // pred_region
        _
      $region20: #{down_forward.5} parent=11 // pred_fallthru
        _
    $region12: #{down_forward.5} parent=5 // pred_fallthru
      _
    %p124 = scmp.lt.s32.totalorder %s9, 2
    // Predicated region
    $region21: #{down_forward.5} parent=5 // pred_check
      %p125 = pneg %p124
    $region22: #{down_forward.5} parent=5 // pred_check_branch
      %127 = sbr.rel (%p125) target = $region24
    $region23: #{down_forward.5} parent=5 // pred_region
      // Predicated region
      $region25: #{down_forward.5} parent=23 // pred_check
        %p128 = pneg %p29
      $region26: #{down_forward.5} parent=23 // pred_check_branch
        %130 = sbr.rel (%p128) target = $region28
      $region27: #{down_forward.5} parent=23 // pred_region
        %p131 = scmp.lt.s32.totalorder %s9, 1
        %s132 = scalar_select %p131, %s9, 1
        %s133 = smul.addr %s132, 8
        %s134 = smul.addr %s133, 4
        %s135 = scalar_lea.vmem %s0, %s134
      $region28: #{down_forward.5} parent=23 // pred_fallthru
        _
    $region24: #{down_forward.5} parent=5 // pred_fallthru
      _
    %p136 = scmp.le.s32.totalorder 1, %s9
    %p137 = scmp.lt.s32.totalorder %s9, 3
    %p138 = pnand %p136, %p137
    %p139 = pneg %p138
    // Predicated region
    $region29: #{down_forward.5} parent=5 // pred_check
      _
    $region30: #{down_forward.5} parent=5 // pred_check_branch
      %141 = sbr.rel (%p138) target = $region32
    $region31: #{down_forward.5} parent=5 // pred_region
      %s142 = ssub.s32 %s9, 1
      %p143 = scmp.lt.s32.totalorder %s14, 1
      %s144 = scalar_select %p143, %s14, 1
      %s145 = smul.addr %s144, 8
      %s146 = smul.addr %s145, 4
      %s147 = scalar_lea.vmem %s0, %s146
      %p148 = pneg %p35
      %p149 = pneg %p32
      %p150 = pneg %p56
      %p151 = pneg %p53
      %p152 = pneg %p77
      %p153 = pneg %p74
      %p154 = pneg %p103
      %p155 = pneg %p100
      %p156 = scmp.lt.s32.totalorder %s14, 1
      %s157 = scalar_select %p156, %s14, 1
      %s158 = smul.addr %s157, 8
      %s159 = smul.addr %s158, 8
      %s160 = scalar_lea.vmem %s3, %s159
      %p161 = scmp.lt.s32.totalorder %s14, 1
      %s162 = scalar_select %p161, %s14, 1
      %s163 = smul.addr %s162, 8
      %s164 = smul.addr %s163, 4
      %s165 = scalar_lea.vmem %s0, %s164
      %p166 = scmp.lt.s32.totalorder %s14, 1
      %s167 = scalar_select %p166, %s14, 1
      %s168 = smul.addr %s167, 8
      %s169 = smul.addr %s168, 8
      %s170 = scalar_lea.vmem %s3, %s169
      %v171 = vld [vmem:[%s165] sm:$0xf]
      %v172 = vld [vmem:[%s165 + $0x4] sm:$0xf]
      %v173 = vld [vmem:[%s165 + $0x8] sm:$0xf]
      %v174 = vld [vmem:[%s165 + $0xc] sm:$0xf]
      %v175 = vld [vmem:[%s165 + $0x10] sm:$0xf]
      %v176 = vld [vmem:[%s165 + $0x14] sm:$0xf]
      %v177 = vld [vmem:[%s165 + $0x18] sm:$0xf]
      %v178 = vld [vmem:[%s165 + $0x1c] sm:$0xf]
      %v179 = vunpack.c.l.bf16 %v171
      %v180 = vunpack.c.l.bf16 %v172
      %v181 = vunpack.c.l.bf16 %v173
      %v182 = vunpack.c.l.bf16 %v174
      %v183 = vunpack.c.l.bf16 %v175
      %v184 = vunpack.c.l.bf16 %v176
      %v185 = vunpack.c.l.bf16 %v177
      %v186 = vunpack.c.l.bf16 %v178
      %v187 = vld [vmem:[%s1] sm:$0x1]
      %v189 = vlaneseq
      %v190 = vshrl.u32 %v189, 7
      %v191 = vsub.s32 0, %v190
      %v192 = vrot.slane %v187, %v191
      %v194 = vmul.f32 %v179, %v192
      %v195 = vmul.f32 %v180, %v192
      %v196 = vmul.f32 %v181, %v192
      %v197 = vmul.f32 %v182, %v192
      %v198 = vmul.f32 %v183, %v192
      %v199 = vmul.f32 %v184, %v192
      %v200 = vmul.f32 %v185, %v192
      %v201 = vmul.f32 %v186, %v192
      %v202 = vld [vmem:[%s2] sm:$0x1]
      %v204 = vlaneseq
      %v205 = vshrl.u32 %v204, 7
      %v206 = vsub.s32 0, %v205
      %v207 = vrot.slane %v202, %v206
      %v209 = vadd.f32 %v194, %v207
      %v210 = vadd.f32 %v195, %v207
      %v211 = vadd.f32 %v196, %v207
      %v212 = vadd.f32 %v197, %v207
      %v213 = vadd.f32 %v198, %v207
      %v214 = vadd.f32 %v199, %v207
      %v215 = vadd.f32 %v200, %v207
      %v216 = vadd.f32 %v201, %v207
      %v217 = vmax.f32 %v209, 0.0
      %v218 = vmax.f32 %v210, 0.0
      %v219 = vmax.f32 %v211, 0.0
      %v220 = vmax.f32 %v212, 0.0
      %v221 = vmax.f32 %v213, 0.0
      %v222 = vmax.f32 %v214, 0.0
      %v223 = vmax.f32 %v215, 0.0
      %v224 = vmax.f32 %v216, 0.0
      %vm225 = vcmask 64512
      %226 = vst.msk [vmem:[%s170] sm:$0xff] %vm225, %v217
      %227 = vst.msk [vmem:[%s170 + $0x8] sm:$0xff] %vm225, %v218
      %228 = vst.msk [vmem:[%s170 + $0x10] sm:$0xff] %vm225, %v219
      %229 = vst.msk [vmem:[%s170 + $0x18] sm:$0xff] %vm225, %v220
      %230 = vst.msk [vmem:[%s170 + $0x20] sm:$0xff] %vm225, %v221
      %231 = vst.msk [vmem:[%s170 + $0x28] sm:$0xff] %vm225, %v222
      %232 = vst.msk [vmem:[%s170 + $0x30] sm:$0xff] %vm225, %v223
      %233 = vst.msk [vmem:[%s170 + $0x38] sm:$0xff] %vm225, %v224
      %p234 = scmp.lt.s32.totalorder %s14, 1
      %s235 = scalar_select %p234, %s14, 1
      %s236 = smul.addr %s235, 8
      %s237 = smul.addr %s236, 8
      %s238 = scalar_lea.vmem %s3, %s237
      // Predicated region
      $region33: #{down_forward.5} parent=31 // pred_check
        %p239 = pneg %p100
      $region34: #{down_forward.5} parent=31 // pred_check_branch
        %241 = sbr.rel (%p239) target = $region36
      $region35: #{down_forward.5} parent=31 // pred_region
        _
      $region36: #{down_forward.5} parent=31 // pred_fallthru
        _
    $region32: #{down_forward.5} parent=5 // pred_fallthru
      _
    %p242 = scmp.le.s32.totalorder 2, %s9
    // Predicated region
    $region37: #{down_forward.5} parent=5 // pred_check
      %p243 = pneg %p242
    $region38: #{down_forward.5} parent=5 // pred_check_branch
      %245 = sbr.rel (%p243) target = $region40
    $region39: #{down_forward.5} parent=5 // pred_region
      %s246 = ssub.s32 %s9, 2
      // Predicated region
      $region41: #{down_forward.5} parent=39 // pred_check
        %p247 = pneg %p106
      $region42: #{down_forward.5} parent=39 // pred_check_branch
        %249 = sbr.rel (%p247) target = $region44
      $region43: #{down_forward.5} parent=39 // pred_region
        %p250 = scmp.lt.s32.totalorder %s15, 1
        %s251 = scalar_select %p250, %s15, 1
        %s252 = smul.addr %s251, 8
        %s253 = smul.addr %s252, 8
        %s254 = scalar_lea.vmem %s3, %s253
      $region44: #{down_forward.5} parent=39 // pred_fallthru
        _
    $region40: #{down_forward.5} parent=5 // pred_fallthru
      _
  $region6: #{down_forward.5} parent=0 // loop_footer
    %s13 = sadd.s32 1, %s9
  $region7: #{down_forward.5} parent=0 // loop_footer_branch
    %8 = sbr.rel target = $region3
  $region8: #{down_forward.5} parent=0 // loop_exit
    _

// kernel: down_forward.3
$region0: #{down_forward.3}
  #allocation0 [shape = 'u32[]', space=smem, size = 0x4, offset = 0x4, fixed_abs, tag = 'smem constant byte address 0x4 - core index']
  #allocation1 [shape = 'u32[144,128]{1,0:T(1,128)}', space=vmem, size = 0x12000, scoped, tag = 'internal scratch']
  #allocation2 [shape = 'bf16[168,4]{1,0:T(8,128)(2,1)}', space=vmem, size = 0xa800, scoped, tag = 'scratch operand']
  #allocation3 [shape = 'f32[128,8]{1,0:T(8,128)}', space=vmem, size = 0x10000, scoped, tag = 'scratch operand']
  %s0 = inlined_call_operand.vmem [shape: f32[2,8,2,8,8], index: 0, kind: input, shape index: {}]
  %s1 = inlined_call_operand.vmem [shape: bf16[9,4,8], index: 1, kind: input, shape index: {}]
  %s2 = inlined_call_operand.vmem [shape: bf16[2,8,8,8], index: 2, kind: output, shape index: {0}]
  %s3 = inlined_call_operand.vmem [shape: f32[2,2,8], index: 3, kind: output, shape index: {1}]
  %4 = xla_tuple %s2, %s3
  %s5 = sld [smem:[#allocation0]]
  $region49: #{down_forward.3} parent=0
    _
  %s7 = ssub.s32 1, %s5
  %s8 = scalar_select 0, %s7, %s5
  loop: start=0, step=1, limit=4
  $region2: #{down_forward.3} parent=0 // loop_pre_header
    _
  $region3: #{down_forward.3} parent=0 // loop_header
    %s10 = sphi 0, %s14
    %p11 = scmp.ge.s32.totalorder %s10, 4
    %s20 = sphi 0, %s22
    %s23 = sphi 0, %s20
    %s24 = sphi 0, %s23
    %s40 = sphi 0, %s24
    %s44 = sphi 0, %s44
    %s46 = sphi 0, %s44
    %s47 = sphi 0, %s46
    %s61 = sphi 0, %s47
    %s67 = sphi 0, %s69
    %s70 = sphi 0, %s67
    %s71 = sphi 0, %s70
    %s87 = sphi 0, %s71
    %s93 = sphi 0, %s95
    %s96 = sphi 0, %s93
    %s97 = sphi 0, %s96
    %s113 = sphi 0, %s97
  $region4: #{down_forward.3} parent=0 // loop_header_branch
    %13 = sbr.rel (%p11) target = $region8
  $region5: #{down_forward.3} parent=0 // loop_body
    %s15 = ssub.s32 %s10, 1
    %s16 = ssub.s32 %s10, 2
    %s17 = sadd.s32 %s10, 1
    %s18 = ssub.s32 %s10, %s17
    %p19 = scmp.eq.s32.totalorder %s18, 0
    %s21 = sadd.s32 %s20, 1
    %s22 = scalar_select %p19, %s20, %s21
    %p25 = pneg %p19
    %p26 = scmp.eq.s32.totalorder %s10, 1
    %p27 = por %p25, %p26
    %p28 = scmp.ne.s32.totalorder %s20, %s23
    %p29 = scmp.eq.s32.totalorder %s10, 0
    %p30 = por %p28, %p29
    %p31 = scmp.ne.s32.totalorder %s20, %s23
    %p32 = scmp.eq.s32.totalorder %s15, 1
    %p33 = por %p31, %p32
    %p34 = scmp.ne.s32.totalorder %s23, %s24
    %p35 = scmp.eq.s32.totalorder %s15, 0
    %p36 = por %p34, %p35
    %p37 = scmp.ne.s32.totalorder %s23, %s24
    %p38 = scmp.eq.s32.totalorder %s16, 1
    %p39 = por %p37, %p38
    %p41 = scmp.ne.s32.totalorder %s24, %s40
    %p42 = scmp.eq.s32.totalorder %s16, 0
    %p43 = por %p41, %p42
    %s45 = sadd.s32 %s44, 1
    %p48 = scmp.eq.s32.totalorder %s10, 1
    %p49 = scmp.ne.s32.totalorder %s44, %s46
    %p50 = scmp.eq.s32.totalorder %s10, 0
    %p51 = por %p49, %p50
    %p52 = scmp.ne.s32.totalorder %s44, %s46
    %p53 = scmp.eq.s32.totalorder %s15, 1
    %p54 = por %p52, %p53
    %p55 = scmp.ne.s32.totalorder %s46, %s47
    %p56 = scmp.eq.s32.totalorder %s15, 0
    %p57 = por %p55, %p56
    %p58 = scmp.ne.s32.totalorder %s46, %s47
    %p59 = scmp.eq.s32.totalorder %s16, 1
    %p60 = por %p58, %p59
    %p62 = scmp.ne.s32.totalorder %s47, %s61
    %p63 = scmp.eq.s32.totalorder %s16, 0
    %p64 = por %p62, %p63
    %s65 = ssub.s32 %s10, %s17
    %p66 = scmp.eq.s32.totalorder %s65, 0
    %s68 = sadd.s32 %s67, 1
    %s69 = scalar_select %p66, %s67, %s68
    %p72 = pneg %p66
    %p73 = scmp.eq.s32.totalorder %s10, 1
    %p74 = por %p72, %p73
    %p75 = scmp.ne.s32.totalorder %s67, %s70
    %p76 = scmp.eq.s32.totalorder %s10, 0
    %p77 = por %p75, %p76
    %p78 = scmp.ne.s32.totalorder %s67, %s70
    %p79 = scmp.eq.s32.totalorder %s15, 1
    %p80 = por %p78, %p79
    %p81 = scmp.ne.s32.totalorder %s70, %s71
    %p82 = scmp.eq.s32.totalorder %s15, 0
    %p83 = por %p81, %p82
    %p84 = scmp.ne.s32.totalorder %s70, %s71
    %p85 = scmp.eq.s32.totalorder %s16, 1
    %p86 = por %p84, %p85
    %p88 = scmp.ne.s32.totalorder %s71, %s87
    %p89 = scmp.eq.s32.totalorder %s16, 0
    %p90 = por %p88, %p89
    %s91 = ssub.s32 %s10, %s17
    %p92 = scmp.eq.s32.totalorder %s91, 0
    %s94 = sadd.s32 %s93, 1
    %s95 = scalar_select %p92, %s93, %s94
    %p98 = pneg %p92
    %p99 = scmp.eq.s32.totalorder %s10, 1
    %p100 = por %p98, %p99
    %p101 = scmp.ne.s32.totalorder %s93, %s96
    %p102 = scmp.eq.s32.totalorder %s10, 0
    %p103 = por %p101, %p102
    %p104 = scmp.ne.s32.totalorder %s93, %s96
    %p105 = scmp.eq.s32.totalorder %s15, 1
    %p106 = por %p104, %p105
    %p107 = scmp.ne.s32.totalorder %s96, %s97
    %p108 = scmp.eq.s32.totalorder %s15, 0
    %p109 = por %p107, %p108
    %p110 = scmp.ne.s32.totalorder %s96, %s97
    %p111 = scmp.eq.s32.totalorder %s16, 1
    %p112 = por %p110, %p111
    %p114 = scmp.ne.s32.totalorder %s97, %s113
    %p115 = scmp.eq.s32.totalorder %s16, 0
    %p116 = por %p114, %p115
    %p117 = scmp.le.s32.totalorder 1, %s10
    %p118 = scmp.lt.s32.totalorder %s10, 3
    %p119 = pnand %p117, %p118
    %p120 = pneg %p119
    // Predicated region
    $region9: #{down_forward.3} parent=5 // pred_check
      _
    $region10: #{down_forward.3} parent=5 // pred_check_branch
      %122 = sbr.rel (%p119) target = $region12
    $region11: #{down_forward.3} parent=5 // pred_region
      %s123 = ssub.s32 %s10, 1
      // Predicated region
      $region13: #{down_forward.3} parent=11 // pred_check
        %p124 = pneg %p57
      $region14: #{down_forward.3} parent=11 // pred_check_branch
        %126 = sbr.rel (%p124) target = $region16
      $region15: #{down_forward.3} parent=11 // pred_region
        _
      $region16: #{down_forward.3} parent=11 // pred_fallthru
        _
    $region12: #{down_forward.3} parent=5 // pred_fallthru
      _
    %p127 = scmp.lt.s32.totalorder %s10, 2
    // Predicated region
    $region17: #{down_forward.3} parent=5 // pred_check
      %p128 = pneg %p127
    $region18: #{down_forward.3} parent=5 // pred_check_branch
      %130 = sbr.rel (%p128) target = $region20
    $region19: #{down_forward.3} parent=5 // pred_region
      // Predicated region
      $region21: #{down_forward.3} parent=19 // pred_check
        %p131 = pneg %p30
      $region22: #{down_forward.3} parent=19 // pred_check_branch
        %133 = sbr.rel (%p131) target = $region24
      $region23: #{down_forward.3} parent=19 // pred_region
        %p134 = scmp.lt.s32.totalorder %s10, 1
        %s135 = scalar_select %p134, %s10, 1
        %s136 = smul.addr %s135, 16
        %s137 = smul.addr %s136, 8
        %s138 = scalar_lea.vmem %s0, %s137
      $region24: #{down_forward.3} parent=19 // pred_fallthru
        _
    $region20: #{down_forward.3} parent=5 // pred_fallthru
      _
    %p139 = scmp.le.s32.totalorder 1, %s10
    %p140 = scmp.lt.s32.totalorder %s10, 3
    %p141 = pnand %p139, %p140
    %p142 = pneg %p141
    // Predicated region
    $region25: #{down_forward.3} parent=5 // pred_check
      _
    $region26: #{down_forward.3} parent=5 // pred_check_branch
      %144 = sbr.rel (%p141) target = $region28
    $region27: #{down_forward.3} parent=5 // pred_region
      %s145 = ssub.s32 %s10, 1
      %p146 = scmp.lt.s32.totalorder %s15, 1
      %s147 = scalar_select %p146, %s15, 1
      %s148 = smul.addr %s147, 16
      %s149 = smul.addr %s148, 8
      %s150 = scalar_lea.vmem %s0, %s149
      %p151 = pneg %p36
      %p152 = pneg %p33
      %p153 = pneg %p57
      %p154 = pneg %p54
      %p155 = pneg %p83
      %p156 = pneg %p80
      %p157 = scmp.lt.s32.totalorder %s15, 1
      %s158 = scalar_select %p157, %s15, 1
      %s159 = smul.addr %s158, 8
      %s160 = smul.addr %s159, 4
      %s161 = scalar_lea.vmem %s2, %s160
      %p162 = pneg %p109
      %p163 = pneg %p106
      %p164 = scmp.lt.s32.totalorder %s15, 1
      %s165 = scalar_select %p164, %s15, 1
      %s166 = smul.addr %s165, 2
      %s167 = scalar_lea.vmem %s3, %s166
      %p168 = scmp.lt.s32.totalorder %s15, 1
      %s169 = scalar_select %p168, %s15, 1
      %s170 = smul.addr %s169, 16
      %s171 = smul.addr %s170, 8
      %s172 = scalar_lea.vmem %s0, %s171
      %p173 = scmp.lt.s32.totalorder %s15, 1
      %s174 = scalar_select %p173, %s15, 1
      %s175 = smul.addr %s174, 8
      %s176 = smul.addr %s175, 4
      %s177 = scalar_lea.vmem %s2, %s176
      %p178 = scmp.lt.s32.totalorder %s15, 1
      %s179 = scalar_select %p178, %s15, 1
      %s180 = smul.addr %s179, 2
      %s181 = scalar_lea.vmem %s3, %s180
      %v183 = vld [vmem:[%s172] sm:$0xff]
      %v184 = vld [vmem:[%s172 + $0x8] sm:$0xff]
      %v185 = vld [vmem:[%s172 + $0x10] sm:$0xff]
      %v186 = vld [vmem:[%s172 + $0x18] sm:$0xff]
      %v187 = vld [vmem:[%s172 + $0x20] sm:$0xff]
      %v188 = vld [vmem:[%s172 + $0x28] sm:$0xff]
      %v189 = vld [vmem:[%s172 + $0x30] sm:$0xff]
      %v190 = vld [vmem:[%s172 + $0x38] sm:$0xff]
      %v191 = vld [vmem:[%s172 + $0x40] sm:$0xff]
      %v192 = vld [vmem:[%s172 + $0x48] sm:$0xff]
      %v193 = vld [vmem:[%s172 + $0x50] sm:$0xff]
      %v194 = vld [vmem:[%s172 + $0x58] sm:$0xff]
      %v195 = vld [vmem:[%s172 + $0x60] sm:$0xff]
      %v196 = vld [vmem:[%s172 + $0x68] sm:$0xff]
      %v197 = vld [vmem:[%s172 + $0x70] sm:$0xff]
      %v198 = vld [vmem:[%s172 + $0x78] sm:$0xff]
      %v199 = vmax.f32 %v183, %v184
      %v200 = vmax.f32 %v185, %v186
      %v201 = vmax.f32 %v187, %v188
      %v202 = vmax.f32 %v189, %v190
      %v203 = vmax.f32 %v191, %v192
      %v204 = vmax.f32 %v193, %v194
      %v205 = vmax.f32 %v195, %v196
      %v206 = vmax.f32 %v197, %v198
      %215 = vrot.lane.b32.xlu0 %v199, 124
      %v216 = vpop.permute.xlu0 %215
      %217 = vrot.lane.b32.xlu0 %v200, 124
      %v218 = vpop.permute.xlu0 %217
      %219 = vrot.lane.b32.xlu0 %v201, 124
      %v220 = vpop.permute.xlu0 %219
      %221 = vrot.lane.b32.xlu0 %v202, 124
      %v222 = vpop.permute.xlu0 %221
      %223 = vrot.lane.b32.xlu0 %v203, 124
      %v224 = vpop.permute.xlu0 %223
      %225 = vrot.lane.b32.xlu0 %v204, 124
      %v226 = vpop.permute.xlu0 %225
      %227 = vrot.lane.b32.xlu0 %v205, 124
      %v228 = vpop.permute.xlu0 %227
      %229 = vrot.lane.b32.xlu0 %v206, 124
      %v230 = vpop.permute.xlu0 %229
      %v239 = vmax.f32 %v199, %v216
      %v240 = vmax.f32 %v200, %v218
      %v241 = vmax.f32 %v201, %v220
      %v242 = vmax.f32 %v202, %v222
      %v243 = vmax.f32 %v203, %v224
      %v244 = vmax.f32 %v204, %v226
      %v245 = vmax.f32 %v205, %v228
      %v246 = vmax.f32 %v206, %v230
      %v247 = vpack.c.bf16 %v239, %v239
      %v248 = vpack.c.bf16 %v240, %v240
      %v249 = vpack.c.bf16 %v241, %v241
      %v250 = vpack.c.bf16 %v242, %v242
      %v251 = vpack.c.bf16 %v243, %v243
      %v252 = vpack.c.bf16 %v244, %v244
      %v253 = vpack.c.bf16 %v245, %v245
      %v254 = vpack.c.bf16 %v246, %v246
      %vm255 = vcmask 27648
      %256 = vst.msk [vmem:[#allocation2] sm:$0xf] %vm255, 0
      %257 = vst.msk [vmem:[#allocation2 + $0x4] sm:$0xf] %vm255, 0
      %vm258 = vcmask 24576
      %vm259 = vsmask.f32 256
      %vm260 = vmand %vm258, %vm259
      %v261 = vld [vmem:[#allocation2 + $0x8] sm:$0x1]
      %v262 = vsel %vm260, 0, %v261
      %263 = vst [vmem:[#allocation2 + $0x8] sm:$0x1] %v262
      %264 = vst.msk [vmem:[#allocation2 + $0x48] sm:$0xf] %vm255, 0
      %265 = vst.msk [vmem:[#allocation2 + $0x4c] sm:$0xf] %vm255, 0
      %266 = vst.msk [vmem:[#allocation2 + $0x50] sm:$0xf] %vm255, 0
      %v268 = vunpack.c.l.b16 %v247
      %v269 = vpack.c.b16 %v268, %v268
      %v271 = vshrl.u32 %v269, 16
      %v273 = vrot.slane %v271, 7
      %v274 = vshll.u32 %v269, 16
      %v276 = vor.u32 %v273, %v274
      %v277 = vrot.slane %v273, 4
      %vm280 = vcmask 27648
      %vm281 = vsmask.f32 7938
      %vm282 = vmand %vm280, %vm281
      %v283 = vld [vmem:[#allocation2 + $0x8] sm:$0xf]
      %v284 = vsel %vm282, %v276, %v283
      %285 = vst [vmem:[#allocation2 + $0x8] sm:$0xf] %v284
      %v286 = vld [vmem:[#allocation2 + $0xc] sm:$0x1]
      %v287 = vsel %vm260, %v277, %v286
      %288 = vst [vmem:[#allocation2 + $0xc] sm:$0x1] %v287
      %v289 = vld [vmem:[#allocation2 + $0xc] sm:$0xf]
      %v290 = vsel %vm282, 0, %v289
      %291 = vst [vmem:[#allocation2 + $0xc] sm:$0xf] %v290
      %v292 = vld [vmem:[#allocation2 + $0x10] sm:$0x1]
      %v293 = vsel %vm260, 0, %v292
      %294 = vst [vmem:[#allocation2 + $0x10] sm:$0x1] %v293
      %v296 = vunpack.c.l.b16 %v248
      %v297 = vpack.c.b16 %v296, %v296
      %v299 = vshrl.u32 %v297, 16
      %v301 = vrot.slane %v299, 7
      %v302 = vshll.u32 %v297, 16
      %v304 = vor.u32 %v301, %v302
      %v305 = vrot.slane %v301, 4
      %v308 = vld [vmem:[#allocation2 + $0x10] sm:$0xf]
      %v309 = vsel %vm282, %v304, %v308
      %310 = vst [vmem:[#allocation2 + $0x10] sm:$0xf] %v309
      %v311 = vld [vmem:[#allocation2 + $0x14] sm:$0x1]
      %v312 = vsel %vm260, %v305, %v311
      %313 = vst [vmem:[#allocation2 + $0x14] sm:$0x1] %v312
      %v314 = vld [vmem:[#allocation2 + $0x14] sm:$0xf]
      %v315 = vsel %vm282, 0, %v314
      %316 = vst [vmem:[#allocation2 + $0x14] sm:$0xf] %v315
      %v317 = vld [vmem:[#allocation2 + $0x18] sm:$0x1]
      %v318 = vsel %vm260, 0, %v317
      %319 = vst [vmem:[#allocation2 + $0x18] sm:$0x1] %v318
      %v321 = vunpack.c.l.b16 %v249
      %v322 = vpack.c.b16 %v321, %v321
      %v324 = vshrl.u32 %v322, 16
      %v326 = vrot.slane %v324, 7
      %v327 = vshll.u32 %v322, 16
      %v329 = vor.u32 %v326, %v327
      %v330 = vrot.slane %v326, 4
      %v333 = vld [vmem:[#allocation2 + $0x18] sm:$0xf]
      %v334 = vsel %vm282, %v329, %v333
      %335 = vst [vmem:[#allocation2 + $0x18] sm:$0xf] %v334
      %v336 = vld [vmem:[#allocation2 + $0x1c] sm:$0x1]
      %v337 = vsel %vm260, %v330, %v336
      %338 = vst [vmem:[#allocation2 + $0x1c] sm:$0x1] %v337
      %v339 = vld [vmem:[#allocation2 + $0x1c] sm:$0xf]
      %v340 = vsel %vm282, 0, %v339
      %341 = vst [vmem:[#allocation2 + $0x1c] sm:$0xf] %v340
      %v342 = vld [vmem:[#allocation2 + $0x20] sm:$0x1]
      %v343 = vsel %vm260, 0, %v342
      %344 = vst [vmem:[#allocation2 + $0x20] sm:$0x1] %v343
      %v346 = vunpack.c.l.b16 %v250
      %v347 = vpack.c.b16 %v346, %v346
      %v349 = vshrl.u32 %v347, 16
      %v351 = vrot.slane %v349, 7
      %v352 = vshll.u32 %v347, 16
      %v354 = vor.u32 %v351, %v352
      %v355 = vrot.slane %v351, 4
      %v358 = vld [vmem:[#allocation2 + $0x20] sm:$0xf]
      %v359 = vsel %vm282, %v354, %v358
      %360 = vst [vmem:[#allocation2 + $0x20] sm:$0xf] %v359
      %v361 = vld [vmem:[#allocation2 + $0x24] sm:$0x1]
      %v362 = vsel %vm260, %v355, %v361
      %363 = vst [vmem:[#allocation2 + $0x24] sm:$0x1] %v362
      %v364 = vld [vmem:[#allocation2 + $0x24] sm:$0xf]
      %v365 = vsel %vm282, 0, %v364
      %366 = vst [vmem:[#allocation2 + $0x24] sm:$0xf] %v365
      %v367 = vld [vmem:[#allocation2 + $0x28] sm:$0x1]
      %v368 = vsel %vm260, 0, %v367
      %369 = vst [vmem:[#allocation2 + $0x28] sm:$0x1] %v368
      %v371 = vunpack.c.l.b16 %v251
      %v372 = vpack.c.b16 %v371, %v371
      %v374 = vshrl.u32 %v372, 16
      %v376 = vrot.slane %v374, 7
      %v377 = vshll.u32 %v372, 16
      %v379 = vor.u32 %v376, %v377
      %v380 = vrot.slane %v376, 4
      %v383 = vld [vmem:[#allocation2 + $0x28] sm:$0xf]
      %v384 = vsel %vm282, %v379, %v383
      %385 = vst [vmem:[#allocation2 + $0x28] sm:$0xf] %v384
      %v386 = vld [vmem:[#allocation2 + $0x2c] sm:$0x1]
      %v387 = vsel %vm260, %v380, %v386
      %388 = vst [vmem:[#allocation2 + $0x2c] sm:$0x1] %v387
      %v389 = vld [vmem:[#allocation2 + $0x2c] sm:$0xf]
      %v390 = vsel %vm282, 0, %v389
      %391 = vst [vmem:[#allocation2 + $0x2c] sm:$0xf] %v390
      %v392 = vld [vmem:[#allocation2 + $0x30] sm:$0x1]
      %v393 = vsel %vm260, 0, %v392
      %394 = vst [vmem:[#allocation2 + $0x30] sm:$0x1] %v393
      %v396 = vunpack.c.l.b16 %v252
      %v397 = vpack.c.b16 %v396, %v396
      %v399 = vshrl.u32 %v397, 16
      %v401 = vrot.slane %v399, 7
      %v402 = vshll.u32 %v397, 16
      %v404 = vor.u32 %v401, %v402
      %v405 = vrot.slane %v401, 4
      %v408 = vld [vmem:[#allocation2 + $0x30] sm:$0xf]
      %v409 = vsel %vm282, %v404, %v408
      %410 = vst [vmem:[#allocation2 + $0x30] sm:$0xf] %v409
      %v411 = vld [vmem:[#allocation2 + $0x34] sm:$0x1]
      %v412 = vsel %vm260, %v405, %v411
      %413 = vst [vmem:[#allocation2 + $0x34] sm:$0x1] %v412
      %v414 = vld [vmem:[#allocation2 + $0x34] sm:$0xf]
      %v415 = vsel %vm282, 0, %v414
      %416 = vst [vmem:[#allocation2 + $0x34] sm:$0xf] %v415
      %v417 = vld [vmem:[#allocation2 + $0x38] sm:$0x1]
      %v418 = vsel %vm260, 0, %v417
      %419 = vst [vmem:[#allocation2 + $0x38] sm:$0x1] %v418
      %v421 = vunpack.c.l.b16 %v253
      %v422 = vpack.c.b16 %v421, %v421
      %v424 = vshrl.u32 %v422, 16
      %v426 = vrot.slane %v424, 7
      %v427 = vshll.u32 %v422, 16
      %v429 = vor.u32 %v426, %v427
      %v430 = vrot.slane %v426, 4
      %v433 = vld [vmem:[#allocation2 + $0x38] sm:$0xf]
      %v434 = vsel %vm282, %v429, %v433
      %435 = vst [vmem:[#allocation2 + $0x38] sm:$0xf] %v434
      %v436 = vld [vmem:[#allocation2 + $0x3c] sm:$0x1]
      %v437 = vsel %vm260, %v430, %v436
      %438 = vst [vmem:[#allocation2 + $0x3c] sm:$0x1] %v437
      %v439 = vld [vmem:[#allocation2 + $0x3c] sm:$0xf]
      %v440 = vsel %vm282, 0, %v439
      %441 = vst [vmem:[#allocation2 + $0x3c] sm:$0xf] %v440
      %v442 = vld [vmem:[#allocation2 + $0x40] sm:$0x1]
      %v443 = vsel %vm260, 0, %v442
      %444 = vst [vmem:[#allocation2 + $0x40] sm:$0x1] %v443
      %v446 = vunpack.c.l.b16 %v254
      %v447 = vpack.c.b16 %v446, %v446
      %v449 = vshrl.u32 %v447, 16
      %v451 = vrot.slane %v449, 7
      %v452 = vshll.u32 %v447, 16
      %v454 = vor.u32 %v451, %v452
      %v455 = vrot.slane %v451, 4
      %v458 = vld [vmem:[#allocation2 + $0x40] sm:$0xf]
      %v459 = vsel %vm282, %v454, %v458
      %460 = vst [vmem:[#allocation2 + $0x40] sm:$0xf] %v459
      %v461 = vld [vmem:[#allocation2 + $0x44] sm:$0x1]
      %v462 = vsel %vm260, %v455, %v461
      %463 = vst [vmem:[#allocation2 + $0x44] sm:$0x1] %v462
      %v464 = vld [vmem:[#allocation2 + $0x44] sm:$0xf]
      %v465 = vsel %vm282, 0, %v464
      %466 = vst [vmem:[#allocation2 + $0x44] sm:$0xf] %v465
      %v467 = vld [vmem:[#allocation2 + $0x48] sm:$0x1]
      %v468 = vsel %vm260, 0, %v467
      %469 = vst [vmem:[#allocation2 + $0x48] sm:$0x1] %v468
      %v470 = vld [vmem:[#allocation2] sm:$0xf]
      %v471 = vld [vmem:[#allocation2 + $0x4] sm:$0xf]
      %v472 = vld [vmem:[#allocation2 + $0x8] sm:$0xf]
      %v473 = vld [vmem:[#allocation2 + $0xc] sm:$0xf]
      %v474 = vld [vmem:[#allocation2 + $0x10] sm:$0xf]
      %v475 = vld [vmem:[#allocation2 + $0x14] sm:$0xf]
      %v476 = vld [vmem:[#allocation2 + $0x18] sm:$0xf]
      %v477 = vld [vmem:[#allocation2 + $0x1c] sm:$0xf]
      %v478 = vld [vmem:[#allocation2 + $0x20] sm:$0xf]
      %v479 = vld [vmem:[#allocation2 + $0x24] sm:$0xf]
      %v480 = vld [vmem:[#allocation2 + $0x28] sm:$0xf]
      %v481 = vld [vmem:[#allocation2 + $0x2c] sm:$0xf]
      %v482 = vld [vmem:[#allocation2 + $0x30] sm:$0xf]
      %v483 = vld [vmem:[#allocation2 + $0x34] sm:$0xf]
      %v484 = vld [vmem:[#allocation2 + $0x38] sm:$0xf]
      %v485 = vld [vmem:[#allocation2 + $0x3c] sm:$0xf]
      %v486 = vld [vmem:[%s1] sm:$0x3]
      %v503 = vunpack.c.l.b16 %v470
      %v504 = vunpack.c.l.b16 %v471
      %v505 = vunpack.c.l.b16 %v472
      %v506 = vunpack.c.l.b16 %v473
      %v507 = vunpack.c.l.b16 %v474
      %v508 = vunpack.c.l.b16 %v475
      %v509 = vunpack.c.l.b16 %v476
      %v510 = vunpack.c.l.b16 %v477
      %v511 = vunpack.c.l.b16 %v478
      %v512 = vunpack.c.l.b16 %v479
      %v513 = vunpack.c.l.b16 %v480
      %v514 = vunpack.c.l.b16 %v481
      %v515 = vunpack.c.l.b16 %v482
      %v516 = vunpack.c.l.b16 %v483
      %v517 = vunpack.c.l.b16 %v484
      %v518 = vunpack.c.l.b16 %v485
      %v519 = vpack.c.b16 %v504, %v503
      %v520 = vpack.c.b16 %v506, %v505
      %v521 = vpack.c.b16 %v508, %v507
      %v522 = vpack.c.b16 %v510, %v509
      %v523 = vpack.c.b16 %v512, %v511
      %v524 = vpack.c.b16 %v514, %v513
      %v525 = vpack.c.b16 %v516, %v515
      %v526 = vpack.c.b16 %v518, %v517
      %vm527 = vcmask 31744
      %v529 = vsel %vm527, %v519, 0
      %v532 = vsel %vm527, %v520, 0
      %v535 = vsel %vm527, %v521, 0
      %v538 = vsel %vm527, %v522, 0
      %v541 = vsel %vm527, %v523, 0
      %v544 = vsel %vm527, %v524, 0
      %v547 = vsel %vm527, %v525, 0
      %v550 = vsel %vm527, %v526, 0
      %vm552 = vcmask 1041408
      %v554 = vsel %vm552, %v486, 0
      %556 = vmatprep.subr.bf16.mxu0 0
      %557 = vmatpush1.bf16.msra.mxu0 %v554
      %558 = vmatprep.subr.bf16.mxu0 0
      %559 = vmatpush1.bf16.msra.mxu0 0
      %560 = vmatprep.subr.bf16.mxu0 0
      %561 = vmatpush1.bf16.msra.mxu0 0
      %562 = vmatprep.subr.bf16.mxu0 0
      %563 = vmatpush1.bf16.msra.mxu0 0
      %564 = vmatprep.subr.bf16.mxu0 0
      %565 = vmatpush1.bf16.msra.mxu0 0
      %566 = vmatprep.subr.bf16.mxu0 0
      %567 = vmatpush1.bf16.msra.mxu0 0
      %568 = vmatprep.subr.bf16.mxu0 0
      %569 = vmatpush1.bf16.msra.mxu0 0
      %570 = vmatprep.subr.bf16.mxu0 0
      %571 = vmatpush1.bf16.msra.mxu0 0
      %572 = vmatprep.subr.bf16.mxu0 0
      %573 = vmatpush1.bf16.msra.mxu0 0
      %574 = vmatprep.subr.bf16.mxu0 0
      %575 = vmatpush1.bf16.msra.mxu0 0
      %576 = vmatprep.subr.bf16.mxu0 0
      %577 = vmatpush1.bf16.msra.mxu0 0
      %578 = vmatprep.subr.bf16.mxu0 0
      %579 = vmatpush1.bf16.msra.mxu0 0
      %580 = vmatprep.subr.bf16.mxu0 0
      %581 = vmatpush1.bf16.msra.mxu0 0
      %582 = vmatprep.subr.bf16.mxu0 0
      %583 = vmatpush1.bf16.msra.mxu0 0
      %584 = vmatprep.subr.bf16.mxu0 0
      %585 = vmatpush1.bf16.msra.mxu0 0
      %586 = vmatprep.subr.bf16.mxu0 0
      %587 = vmatpush1.bf16.msra.mxu0 0
      %588 = vmatprep.mubr.bf16.mxu0 0
      %589 = vmatmul.mubr.bf16.gmra.mrb[0].mxu0 %v529
      %v590 = vpop.f32.mrb[0].mxu0
      %v591 = vadd.f32 0.0, %v590
      %v592 = vpop.f32.mrb[0].mxu0
      %v593 = vpop.f32.mrb[0].mxu0
      %v594 = vadd.f32 0.0, %v593
      %v595 = vpop.f32.mrb[0].mxu0
      %596 = vmatprep.mubr.bf16.mxu0 0
      %597 = vmatmul.mubr.bf16.gmra.mrb[0].mxu0 %v532
      %v598 = vpop.f32.mrb[0].mxu0
      %v599 = vadd.f32 0.0, %v598
      %v600 = vpop.f32.mrb[0].mxu0
      %v601 = vpop.f32.mrb[0].mxu0
      %v602 = vadd.f32 0.0, %v601
      %v603 = vpop.f32.mrb[0].mxu0
      %604 = vmatprep.mubr.bf16.mxu0 0
      %605 = vmatmul.mubr.bf16.gmra.mrb[0].mxu0 %v535
      %v606 = vpop.f32.mrb[0].mxu0
      %v607 = vadd.f32 0.0, %v606
      %v608 = vpop.f32.mrb[0].mxu0
      %v609 = vpop.f32.mrb[0].mxu0
      %v610 = vadd.f32 0.0, %v609
      %v611 = vpop.f32.mrb[0].mxu0
      %612 = vmatprep.mubr.bf16.mxu0 0
      %613 = vmatmul.mubr.bf16.gmra.mrb[0].mxu0 %v538
      %v614 = vpop.f32.mrb[0].mxu0
      %v615 = vadd.f32 0.0, %v614
      %v616 = vpop.f32.mrb[0].mxu0
      %v617 = vpop.f32.mrb[0].mxu0
      %v618 = vadd.f32 0.0, %v617
      %v619 = vpop.f32.mrb[0].mxu0
      %620 = vmatprep.mubr.bf16.mxu0 0
      %621 = vmatmul.mubr.bf16.gmra.mrb[0].mxu0 %v541
      %v622 = vpop.f32.mrb[0].mxu0
      %v623 = vadd.f32 0.0, %v622
      %v624 = vpop.f32.mrb[0].mxu0
      %v625 = vpop.f32.mrb[0].mxu0
      %v626 = vadd.f32 0.0, %v625
      %v627 = vpop.f32.mrb[0].mxu0
      %628 = vmatprep.mubr.bf16.mxu0 0
      %629 = vmatmul.mubr.bf16.gmra.mrb[0].mxu0 %v544
      %v630 = vpop.f32.mrb[0].mxu0
      %v631 = vadd.f32 0.0, %v630
      %v632 = vpop.f32.mrb[0].mxu0
      %v633 = vpop.f32.mrb[0].mxu0
      %v634 = vadd.f32 0.0, %v633
      %v635 = vpop.f32.mrb[0].mxu0
      %636 = vmatprep.mubr.bf16.mxu0 0
      %637 = vmatmul.mubr.bf16.gmra.mrb[0].mxu0 %v547
      %v638 = vpop.f32.mrb[0].mxu0
      %v639 = vadd.f32 0.0, %v638
      %v640 = vpop.f32.mrb[0].mxu0
      %v641 = vpop.f32.mrb[0].mxu0
      %v642 = vadd.f32 0.0, %v641
      %v643 = vpop.f32.mrb[0].mxu0
      %644 = vmatprep.mubr.bf16.mxu0 0
      %645 = vmatmul.mubr.bf16.gmra.mrb[0].mxu0 %v550
      %v646 = vpop.f32.mrb[0].mxu0
      %v647 = vadd.f32 0.0, %v646
      %v648 = vpop.f32.mrb[0].mxu0
      %v649 = vpop.f32.mrb[0].mxu0
      %v650 = vadd.f32 0.0, %v649
      %v651 = vpop.f32.mrb[0].mxu0
      %652 = vdwg.mxu0
      %vm653 = vcmask 64512
      %654 = vst.msk [vmem:[#allocation3] sm:$0xff] %vm653, %v591
      %655 = vst.msk [vmem:[#allocation3 + $0x8] sm:$0xff] %vm653, %v594
      %656 = vst.msk [vmem:[#allocation3 + $0x10] sm:$0xff] %vm653, %v599
      %657 = vst.msk [vmem:[#allocation3 + $0x18] sm:$0xff] %vm653, %v602
      %658 = vst.msk [vmem:[#allocation3 + $0x20] sm:$0xff] %vm653, %v607
      %659 = vst.msk [vmem:[#allocation3 + $0x28] sm:$0xff] %vm653, %v610
      %660 = vst.msk [vmem:[#allocation3 + $0x30] sm:$0xff] %vm653, %v615
      %661 = vst.msk [vmem:[#allocation3 + $0x38] sm:$0xff] %vm653, %v618
      %662 = vst.msk [vmem:[#allocation3 + $0x40] sm:$0xff] %vm653, %v623
      %663 = vst.msk [vmem:[#allocation3 + $0x48] sm:$0xff] %vm653, %v626
      %664 = vst.msk [vmem:[#allocation3 + $0x50] sm:$0xff] %vm653, %v631
      %665 = vst.msk [vmem:[#allocation3 + $0x58] sm:$0xff] %vm653, %v634
      %666 = vst.msk [vmem:[#allocation3 + $0x60] sm:$0xff] %vm653, %v639
      %667 = vst.msk [vmem:[#allocation3 + $0x68] sm:$0xff] %vm653, %v642
      %668 = vst.msk [vmem:[#allocation3 + $0x70] sm:$0xff] %vm653, %v647
      %669 = vst.msk [vmem:[#allocation3 + $0x78] sm:$0xff] %vm653, %v650
      %v670 = vld [vmem:[#allocation2] sm:$0xf]
      %v671 = vld [vmem:[#allocation2 + $0x4] sm:$0xf]
      %v672 = vld [vmem:[#allocation2 + $0x8] sm:$0xf]
      %v673 = vld [vmem:[#allocation2 + $0xc] sm:$0xf]
      %v674 = vld [vmem:[#allocation2 + $0x10] sm:$0xf]
      %v675 = vld [vmem:[#allocation2 + $0x14] sm:$0xf]
      %v676 = vld [vmem:[#allocation2 + $0x18] sm:$0xf]
      %v677 = vld [vmem:[#allocation2 + $0x1c] sm:$0xf]
      %v678 = vld [vmem:[#allocation2 + $0x20] sm:$0xf]
      %v679 = vld [vmem:[#allocation2 + $0x24] sm:$0xf]
      %v680 = vld [vmem:[#allocation2 + $0x28] sm:$0xf]
      %v681 = vld [vmem:[#allocation2 + $0x2c] sm:$0xf]
      %v682 = vld [vmem:[#allocation2 + $0x30] sm:$0xf]
      %v683 = vld [vmem:[#allocation2 + $0x34] sm:$0xf]
      %v684 = vld [vmem:[#allocation2 + $0x38] sm:$0xf]
      %v685 = vld [vmem:[#allocation2 + $0x3c] sm:$0xf]
      %v686 = vld [vmem:[#allocation2 + $0x40] sm:$0x1]
      %s687 = scalar_lea.vmem %s1, 2
      %v688 = vld [vmem:[%s687] sm:$0x3]
      %v706 = vunpack.c.l.b16 %v670
      %v707 = vunpack.c.l.b16 %v671
      %v708 = vunpack.c.l.b16 %v672
      %v709 = vunpack.c.l.b16 %v673
      %v710 = vunpack.c.l.b16 %v674
      %v711 = vunpack.c.l.b16 %v675
      %v712 = vunpack.c.l.b16 %v676
      %v713 = vunpack.c.l.b16 %v677
      %v714 = vunpack.c.l.b16 %v678
      %v715 = vunpack.c.l.b16 %v679
      %v716 = vunpack.c.l.b16 %v680
      %v717 = vunpack.c.l.b16 %v681
      %v718 = vunpack.c.l.b16 %v682
      %v719 = vunpack.c.l.b16 %v683
      %v720 = vunpack.c.l.b16 %v684
      %v721 = vunpack.c.l.b16 %v685
      %v722 = vunpack.c.l.b16 %v686
      %v723 = vpack.c.b16 %v707, %v706
      %v724 = vpack.c.b16 %v709, %v708
      %v725 = vpack.c.b16 %v711, %v710
      %v726 = vpack.c.b16 %v713, %v712
      %v727 = vpack.c.b16 %v715, %v714
      %v728 = vpack.c.b16 %v717, %v716
      %v729 = vpack.c.b16 %v719, %v718
      %v730 = vpack.c.b16 %v721, %v720
      %v731 = vpack.c.b16 %v722, %v722
      %vm732 = vsmask.f32 7424
      %v734 = vshrl.u32 %v723, 16
      %v736 = vshll.u32 %v723, 16
      %v738 = vrot.slane %v736, 1
      %v739 = vor.u32 %v734, %v738
      %v741 = vshll.u32 %v724, 16
      %v743 = vrot.slane %v741, 1
      %v744 = vsel %vm732, %v739, %v743
      %v745 = vshrl.u32 %v724, 16
      %v747 = vor.u32 %v745, %v743
      %v749 = vshll.u32 %v725, 16
      %v751 = vrot.slane %v749, 1
      %v752 = vsel %vm732, %v747, %v751
      %v753 = vshrl.u32 %v725, 16
      %v755 = vor.u32 %v753, %v751
      %v757 = vshll.u32 %v726, 16
      %v759 = vrot.slane %v757, 1
      %v760 = vsel %vm732, %v755, %v759
      %v761 = vshrl.u32 %v726, 16
      %v763 = vor.u32 %v761, %v759
      %v765 = vshll.u32 %v727, 16
      %v767 = vrot.slane %v765, 1
      %v768 = vsel %vm732, %v763, %v767
      %v769 = vshrl.u32 %v727, 16
      %v771 = vor.u32 %v769, %v767
      %v773 = vshll.u32 %v728, 16
      %v775 = vrot.slane %v773, 1
      %v776 = vsel %vm732, %v771, %v775
      %v777 = vshrl.u32 %v728, 16
      %v779 = vor.u32 %v777, %v775
      %v781 = vshll.u32 %v729, 16
      %v783 = vrot.slane %v781, 1
      %v784 = vsel %vm732, %v779, %v783
      %v785 = vshrl.u32 %v729, 16
      %v787 = vor.u32 %v785, %v783
      %v789 = vshll.u32 %v730, 16
      %v791 = vrot.slane %v789, 1
      %v792 = vsel %vm732, %v787, %v791
      %v793 = vshrl.u32 %v730, 16
      %v795 = vor.u32 %v793, %v791
      %v797 = vshll.u32 %v731, 16
      %v799 = vrot.slane %v797, 1
      %v800 = vsel %vm732, %v795, %v799
      %v802 = vsel %vm527, %v744, 0
      %v805 = vsel %vm527, %v752, 0
      %v808 = vsel %vm527, %v760, 0
      %v811 = vsel %vm527, %v768, 0
      %v814 = vsel %vm527, %v776, 0
      %v817 = vsel %vm527, %v784, 0
      %v820 = vsel %vm527, %v792, 0
      %v823 = vsel %vm527, %v800, 0
      %v826 = vsel %vm552, %v688, 0
      %828 = vmatprep.subr.bf16.mxu0 0
      %829 = vmatpush1.bf16.msra.mxu0 %v826
      %830 = vmatprep.subr.bf16.mxu0 0
      %831 = vmatpush1.bf16.msra.mxu0 0
      %832 = vmatprep.subr.bf16.mxu0 0
      %833 = vmatpush1.bf16.msra.mxu0 0
      %834 = vmatprep.subr.bf16.mxu0 0
      %835 = vmatpush1.bf16.msra.mxu0 0
      %836 = vmatprep.subr.bf16.mxu0 0
      %837 = vmatpush1.bf16.msra.mxu0 0
      %838 = vmatprep.subr.bf16.mxu0 0
      %839 = vmatpush1.bf16.msra.mxu0 0
      %840 = vmatprep.subr.bf16.mxu0 0
      %841 = vmatpush1.bf16.msra.mxu0 0
      %842 = vmatprep.subr.bf16.mxu0 0
      %843 = vmatpush1.bf16.msra.mxu0 0
      %844 = vmatprep.subr.bf16.mxu0 0
      %845 = vmatpush1.bf16.msra.mxu0 0
      %846 = vmatprep.subr.bf16.mxu0 0
      %847 = vmatpush1.bf16.msra.mxu0 0
      %848 = vmatprep.subr.bf16.mxu0 0
      %849 = vmatpush1.bf16.msra.mxu0 0
      %850 = vmatprep.subr.bf16.mxu0 0
      %851 = vmatpush1.bf16.msra.mxu0 0
      %852 = vmatprep.subr.bf16.mxu0 0
      %853 = vmatpush1.bf16.msra.mxu0 0
      %854 = vmatprep.subr.bf16.mxu0 0
      %855 = vmatpush1.bf16.msra.mxu0 0
      %856 = vmatprep.subr.bf16.mxu0 0
      %857 = vmatpush1.bf16.msra.mxu0 0
      %858 = vmatprep.subr.bf16.mxu0 0
      %859 = vmatpush1.bf16.msra.mxu0 0
      %860 = vmatprep.mubr.bf16.mxu0 0
      %861 = vmatmul.mubr.bf16.gmra.mrb[0].mxu0 %v802
      %v862 = vpop.f32.mrb[0].mxu0
      %v863 = vadd.f32 0.0, %v862
      %v864 = vpop.f32.mrb[0].mxu0
      %v865 = vpop.f32.mrb[0].mxu0
      %v866 = vadd.f32 0.0, %v865
      %v867 = vpop.f32.mrb[0].mxu0
      %868 = vmatprep.mubr.bf16.mxu0 0
      %869 = vmatmul.mubr.bf16.gmra.mrb[0].mxu0 %v805
      %v870 = vpop.f32.mrb[0].mxu0
      %v871 = vadd.f32 0.0, %v870
      %v872 = vpop.f32.mrb[0].mxu0
      %v873 = vpop.f32.mrb[0].mxu0
      %v874 = vadd.f32 0.0, %v873
      %v875 = vpop.f32.mrb[0].mxu0
      %876 = vmatprep.mubr.bf16.mxu0 0
      %877 = vmatmul.mubr.bf16.gmra.mrb[0].mxu0 %v808
      %v878 = vpop.f32.mrb[0].mxu0
      %v879 = vadd.f32 0.0, %v878
      %v880 = vpop.f32.mrb[0].mxu0
      %v881 = vpop.f32.mrb[0].mxu0
      %v882 = vadd.f32 0.0, %v881
      %v883 = vpop.f32.mrb[0].mxu0
      %884 = vmatprep.mubr.bf16.mxu0 0
      %885 = vmatmul.mubr.bf16.gmra.mrb[0].mxu0 %v811
      %v886 = vpop.f32.mrb[0].mxu0
      %v887 = vadd.f32 0.0, %v886
      %v888 = vpop.f32.mrb[0].mxu0
      %v889 = vpop.f32.mrb[0].mxu0
      %v890 = vadd.f32 0.0, %v889
      %v891 = vpop.f32.mrb[0].mxu0
      %892 = vmatprep.mubr.bf16.mxu0 0
      %893 = vmatmul.mubr.bf16.gmra.mrb[0].mxu0 %v814
      %v894 = vpop.f32.mrb[0].mxu0
      %v895 = vadd.f32 0.0, %v894
      %v896 = vpop.f32.mrb[0].mxu0
      %v897 = vpop.f32.mrb[0].mxu0
      %v898 = vadd.f32 0.0, %v897
      %v899 = vpop.f32.mrb[0].mxu0
      %900 = vmatprep.mubr.bf16.mxu0 0
      %901 = vmatmul.mubr.bf16.gmra.mrb[0].mxu0 %v817
      %v902 = vpop.f32.mrb[0].mxu0
      %v903 = vadd.f32 0.0, %v902
      %v904 = vpop.f32.mrb[0].mxu0
      %v905 = vpop.f32.mrb[0].mxu0
      %v906 = vadd.f32 0.0, %v905
      %v907 = vpop.f32.mrb[0].mxu0
      %908 = vmatprep.mubr.bf16.mxu0 0
      %909 = vmatmul.mubr.bf16.gmra.mrb[0].mxu0 %v820
      %v910 = vpop.f32.mrb[0].mxu0
      %v911 = vadd.f32 0.0, %v910
      %v912 = vpop.f32.mrb[0].mxu0
      %v913 = vpop.f32.mrb[0].mxu0
      %v914 = vadd.f32 0.0, %v913
      %v915 = vpop.f32.mrb[0].mxu0
      %916 = vmatprep.mubr.bf16.mxu0 0
      %917 = vmatmul.mubr.bf16.gmra.mrb[0].mxu0 %v823
      %v918 = vpop.f32.mrb[0].mxu0
      %v919 = vadd.f32 0.0, %v918
      %v920 = vpop.f32.mrb[0].mxu0
      %v921 = vpop.f32.mrb[0].mxu0
      %v922 = vadd.f32 0.0, %v921
      %v923 = vpop.f32.mrb[0].mxu0
      %924 = vdwg.mxu0
      %v925 = vld [vmem:[#allocation3] sm:$0xff]
      %v926 = vld [vmem:[#allocation3 + $0x8] sm:$0xff]
      %v927 = vld [vmem:[#allocation3 + $0x10] sm:$0xff]
      %v928 = vld [vmem:[#allocation3 + $0x18] sm:$0xff]
      %v929 = vld [vmem:[#allocation3 + $0x20] sm:$0xff]
      %v930 = vld [vmem:[#allocation3 + $0x28] sm:$0xff]
      %v931 = vld [vmem:[#allocation3 + $0x30] sm:$0xff]
      %v932 = vld [vmem:[#allocation3 + $0x38] sm:$0xff]
      %v933 = vld [vmem:[#allocation3 + $0x40] sm:$0xff]
      %v934 = vld [vmem:[#allocation3 + $0x48] sm:$0xff]
      %v935 = vld [vmem:[#allocation3 + $0x50] sm:$0xff]
      %v936 = vld [vmem:[#allocation3 + $0x58] sm:$0xff]
      %v937 = vld [vmem:[#allocation3 + $0x60] sm:$0xff]
      %v938 = vld [vmem:[#allocation3 + $0x68] sm:$0xff]
      %v939 = vld [vmem:[#allocation3 + $0x70] sm:$0xff]
      %v940 = vld [vmem:[#allocation3 + $0x78] sm:$0xff]
      %v941 = vadd.f32 %v925, %v863
      %v942 = vadd.f32 %v926, %v866
      %v943 = vadd.f32 %v927, %v871
      %v944 = vadd.f32 %v928, %v874
      %v945 = vadd.f32 %v929, %v879
      %v946 = vadd.f32 %v930, %v882
      %v947 = vadd.f32 %v931, %v887
      %v948 = vadd.f32 %v932, %v890
      %v949 = vadd.f32 %v933, %v895
      %v950 = vadd.f32 %v934, %v898
      %v951 = vadd.f32 %v935, %v903
      %v952 = vadd.f32 %v936, %v906
      %v953 = vadd.f32 %v937, %v911
      %v954 = vadd.f32 %v938, %v914
      %v955 = vadd.f32 %v939, %v919
      %v956 = vadd.f32 %v940, %v922
      %957 = vst.msk [vmem:[#allocation3] sm:$0xff] %vm653, %v941
      %958 = vst.msk [vmem:[#allocation3 + $0x8] sm:$0xff] %vm653, %v942
      %959 = vst.msk [vmem:[#allocation3 + $0x10] sm:$0xff] %vm653, %v943
      %960 = vst.msk [vmem:[#allocation3 + $0x18] sm:$0xff] %vm653, %v944
      %961 = vst.msk [vmem:[#allocation3 + $0x20] sm:$0xff] %vm653, %v945
      %962 = vst.msk [vmem:[#allocation3 + $0x28] sm:$0xff] %vm653, %v946
      %963 = vst.msk [vmem:[#allocation3 + $0x30] sm:$0xff] %vm653, %v947
      %964 = vst.msk [vmem:[#allocation3 + $0x38] sm:$0xff] %vm653, %v948
      %965 = vst.msk [vmem:[#allocation3 + $0x40] sm:$0xff] %vm653, %v949
      %966 = vst.msk [vmem:[#allocation3 + $0x48] sm:$0xff] %vm653, %v950
      %967 = vst.msk [vmem:[#allocation3 + $0x50] sm:$0xff] %vm653, %v951
      %968 = vst.msk [vmem:[#allocation3 + $0x58] sm:$0xff] %vm653, %v952
      %969 = vst.msk [vmem:[#allocation3 + $0x60] sm:$0xff] %vm653, %v953
      %970 = vst.msk [vmem:[#allocation3 + $0x68] sm:$0xff] %vm653, %v954
      %971 = vst.msk [vmem:[#allocation3 + $0x70] sm:$0xff] %vm653, %v955
      %972 = vst.msk [vmem:[#allocation3 + $0x78] sm:$0xff] %vm653, %v956
      %v973 = vld [vmem:[#allocation2] sm:$0xe]
      %v974 = vld [vmem:[#allocation2 + $0x4] sm:$0xf]
      %v975 = vld [vmem:[#allocation2 + $0x8] sm:$0xf]
      %v976 = vld [vmem:[#allocation2 + $0xc] sm:$0xf]
      %v977 = vld [vmem:[#allocation2 + $0x10] sm:$0xf]
      %v978 = vld [vmem:[#allocation2 + $0x14] sm:$0xf]
      %v979 = vld [vmem:[#allocation2 + $0x18] sm:$0xf]
      %v980 = vld [vmem:[#allocation2 + $0x1c] sm:$0xf]
      %v981 = vld [vmem:[#allocation2 + $0x20] sm:$0xf]
      %v982 = vld [vmem:[#allocation2 + $0x24] sm:$0xf]
      %v983 = vld [vmem:[#allocation2 + $0x28] sm:$0xf]
      %v984 = vld [vmem:[#allocation2 + $0x2c] sm:$0xf]
      %v985 = vld [vmem:[#allocation2 + $0x30] sm:$0xf]
      %v986 = vld [vmem:[#allocation2 + $0x34] sm:$0xf]
      %v987 = vld [vmem:[#allocation2 + $0x38] sm:$0xf]
      %v988 = vld [vmem:[#allocation2 + $0x3c] sm:$0xf]
      %v989 = vld [vmem:[#allocation2 + $0x40] sm:$0x1]
      %s990 = scalar_lea.vmem %s1, 4
      %v991 = vld [vmem:[%s990] sm:$0x3]
      %v1009 = vunpack.c.l.b16 %v973
      %v1010 = vunpack.c.l.b16 %v974
      %v1011 = vunpack.c.l.b16 %v975
      %v1012 = vunpack.c.l.b16 %v976
      %v1013 = vunpack.c.l.b16 %v977
      %v1014 = vunpack.c.l.b16 %v978
      %v1015 = vunpack.c.l.b16 %v979
      %v1016 = vunpack.c.l.b16 %v980
      %v1017 = vunpack.c.l.b16 %v981
      %v1018 = vunpack.c.l.b16 %v982
      %v1019 = vunpack.c.l.b16 %v983
      %v1020 = vunpack.c.l.b16 %v984
      %v1021 = vunpack.c.l.b16 %v985
      %v1022 = vunpack.c.l.b16 %v986
      %v1023 = vunpack.c.l.b16 %v987
      %v1024 = vunpack.c.l.b16 %v988
      %v1025 = vunpack.c.l.b16 %v989
      %v1026 = vpack.c.b16 %v1010, %v1009
      %v1027 = vpack.c.b16 %v1012, %v1011
      %v1028 = vpack.c.b16 %v1014, %v1013
      %v1029 = vpack.c.b16 %v1016, %v1015
      %v1030 = vpack.c.b16 %v1018, %v1017
      %v1031 = vpack.c.b16 %v1020, %v1019
      %v1032 = vpack.c.b16 %v1022, %v1021
      %v1033 = vpack.c.b16 %v1024, %v1023
      %v1034 = vpack.c.b16 %v1025, %v1025
      %vm1035 = vcmask 1046528
      %v1036 = vrot.slane %v1026, 1
      %v1037 = vrot.slane %v1027, 1
      %v1038 = vsel %vm1035, %v1036, %v1037
      %v1039 = vrot.slane %v1028, 1
      %v1040 = vsel %vm1035, %v1037, %v1039
      %v1041 = vrot.slane %v1029, 1
      %v1042 = vsel %vm1035, %v1039, %v1041
      %v1043 = vrot.slane %v1030, 1
      %v1044 = vsel %vm1035, %v1041, %v1043
      %v1045 = vrot.slane %v1031, 1
      %v1046 = vsel %vm1035, %v1043, %v1045
      %v1047 = vrot.slane %v1032, 1
      %v1048 = vsel %vm1035, %v1045, %v1047
      %v1049 = vrot.slane %v1033, 1
      %v1050 = vsel %vm1035, %v1047, %v1049
      %v1051 = vrot.slane %v1034, 1
      %v1052 = vsel %vm1035, %v1049, %v1051
      %v1054 = vsel %vm527, %v1038, 0
      %v1057 = vsel %vm527, %v1040, 0
      %v1060 = vsel %vm527, %v1042, 0
      %v1063 = vsel %vm527, %v1044, 0
      %v1066 = vsel %vm527, %v1046, 0
      %v1069 = vsel %vm527, %v1048, 0
      %v1072 = vsel %vm527, %v1050, 0
      %v1075 = vsel %vm527, %v1052, 0
      %v1078 = vsel %vm552, %v991, 0
      %1080 = vmatprep.subr.bf16.mxu0 0
      %1081 = vmatpush1.bf16.msra.mxu0 %v1078
      %1082 = vmatprep.subr.bf16.mxu0 0
      %1083 = vmatpush1.bf16.msra.mxu0 0
      %1084 = vmatprep.subr.bf16.mxu0 0
      %1085 = vmatpush1.bf16.msra.mxu0 0
      %1086 = vmatprep.subr.bf16.mxu0 0
      %1087 = vmatpush1.bf16.msra.mxu0 0
      %1088 = vmatprep.subr.bf16.mxu0 0
      %1089 = vmatpush1.bf16.msra.mxu0 0
      %1090 = vmatprep.subr.bf16.mxu0 0
      %1091 = vmatpush1.bf16.msra.mxu0 0
      %1092 = vmatprep.subr.bf16.mxu0 0
      %1093 = vmatpush1.bf16.msra.mxu0 0
      %1094 = vmatprep.subr.bf16.mxu0 0
      %1095 = vmatpush1.bf16.msra.mxu0 0
      %1096 = vmatprep.subr.bf16.mxu0 0
      %1097 = vmatpush1.bf16.msra.mxu0 0
      %1098 = vmatprep.subr.bf16.mxu0 0
      %1099 = vmatpush1.bf16.msra.mxu0 0
      %1100 = vmatprep.subr.bf16.mxu0 0
      %1101 = vmatpush1.bf16.msra.mxu0 0
      %1102 = vmatprep.subr.bf16.mxu0 0
      %1103 = vmatpush1.bf16.msra.mxu0 0
      %1104 = vmatprep.subr.bf16.mxu0 0
      %1105 = vmatpush1.bf16.msra.mxu0 0
      %1106 = vmatprep.subr.bf16.mxu0 0
      %1107 = vmatpush1.bf16.msra.mxu0 0
      %1108 = vmatprep.subr.bf16.mxu0 0
      %1109 = vmatpush1.bf16.msra.mxu0 0
      %1110 = vmatprep.subr.bf16.mxu0 0
      %1111 = vmatpush1.bf16.msra.mxu0 0
      %1112 = vmatprep.mubr.bf16.mxu0 0
      %1113 = vmatmul.mubr.bf16.gmra.mrb[0].mxu0 %v1054
      %v1114 = vpop.f32.mrb[0].mxu0
      %v1115 = vadd.f32 0.0, %v1114
      %v1116 = vpop.f32.mrb[0].mxu0
      %v1117 = vpop.f32.mrb[0].mxu0
      %v1118 = vadd.f32 0.0, %v1117
      %v1119 = vpop.f32.mrb[0].mxu0
      %1120 = vmatprep.mubr.bf16.mxu0 0
      %1121 = vmatmul.mubr.bf16.gmra.mrb[0].mxu0 %v1057
      %v1122 = vpop.f32.mrb[0].mxu0
      %v1123 = vadd.f32 0.0, %v1122
      %v1124 = vpop.f32.mrb[0].mxu0
      %v1125 = vpop.f32.mrb[0].mxu0
      %v1126 = vadd.f32 0.0, %v1125
      %v1127 = vpop.f32.mrb[0].mxu0
      %1128 = vmatprep.mubr.bf16.mxu0 0
      %1129 = vmatmul.mubr.bf16.gmra.mrb[0].mxu0 %v1060
      %v1130 = vpop.f32.mrb[0].mxu0
      %v1131 = vadd.f32 0.0, %v1130
      %v1132 = vpop.f32.mrb[0].mxu0
      %v1133 = vpop.f32.mrb[0].mxu0
      %v1134 = vadd.f32 0.0, %v1133
      %v1135 = vpop.f32.mrb[0].mxu0
      %1136 = vmatprep.mubr.bf16.mxu0 0
      %1137 = vmatmul.mubr.bf16.gmra.mrb[0].mxu0 %v1063
      %v1138 = vpop.f32.mrb[0].mxu0
      %v1139 = vadd.f32 0.0, %v1138
      %v1140 = vpop.f32.mrb[0].mxu0
      %v1141 = vpop.f32.mrb[0].mxu0
      %v1142 = vadd.f32 0.0, %v1141
      %v1143 = vpop.f32.mrb[0].mxu0
      %1144 = vmatprep.mubr.bf16.mxu0 0
      %1145 = vmatmul.mubr.bf16.gmra.mrb[0].mxu0 %v1066
      %v1146 = vpop.f32.mrb[0].mxu0
      %v1147 = vadd.f32 0.0, %v1146
      %v1148 = vpop.f32.mrb[0].mxu0
      %v1149 = vpop.f32.mrb[0].mxu0
      %v1150 = vadd.f32 0.0, %v1149
      %v1151 = vpop.f32.mrb[0].mxu0
      %1152 = vmatprep.mubr.bf16.mxu0 0
      %1153 = vmatmul.mubr.bf16.gmra.mrb[0].mxu0 %v1069
      %v1154 = vpop.f32.mrb[0].mxu0
      %v1155 = vadd.f32 0.0, %v1154
      %v1156 = vpop.f32.mrb[0].mxu0
      %v1157 = vpop.f32.mrb[0].mxu0
      %v1158 = vadd.f32 0.0, %v1157
      %v1159 = vpop.f32.mrb[0].mxu0
      %1160 = vmatprep.mubr.bf16.mxu0 0
      %1161 = vmatmul.mubr.bf16.gmra.mrb[0].mxu0 %v1072
      %v1162 = vpop.f32.mrb[0].mxu0
      %v1163 = vadd.f32 0.0, %v1162
      %v1164 = vpop.f32.mrb[0].mxu0
      %v1165 = vpop.f32.mrb[0].mxu0
      %v1166 = vadd.f32 0.0, %v1165
      %v1167 = vpop.f32.mrb[0].mxu0
      %1168 = vmatprep.mubr.bf16.mxu0 0
      %1169 = vmatmul.mubr.bf16.gmra.mrb[0].mxu0 %v1075
      %v1170 = vpop.f32.mrb[0].mxu0
      %v1171 = vadd.f32 0.0, %v1170
      %v1172 = vpop.f32.mrb[0].mxu0
      %v1173 = vpop.f32.mrb[0].mxu0
      %v1174 = vadd.f32 0.0, %v1173
      %v1175 = vpop.f32.mrb[0].mxu0
      %1176 = vdwg.mxu0
      %v1177 = vld [vmem:[#allocation3] sm:$0xff]
      %v1178 = vld [vmem:[#allocation3 + $0x8] sm:$0xff]
      %v1179 = vld [vmem:[#allocation3 + $0x10] sm:$0xff]
      %v1180 = vld [vmem:[#allocation3 + $0x18] sm:$0xff]
      %v1181 = vld [vmem:[#allocation3 + $0x20] sm:$0xff]
      %v1182 = vld [vmem:[#allocation3 + $0x28] sm:$0xff]
      %v1183 = vld [vmem:[#allocation3 + $0x30] sm:$0xff]
      %v1184 = vld [vmem:[#allocation3 + $0x38] sm:$0xff]
      %v1185 = vld [vmem:[#allocation3 + $0x40] sm:$0xff]
      %v1186 = vld [vmem:[#allocation3 + $0x48] sm:$0xff]
      %v1187 = vld [vmem:[#allocation3 + $0x50] sm:$0xff]
      %v1188 = vld [vmem:[#allocation3 + $0x58] sm:$0xff]
      %v1189 = vld [vmem:[#allocation3 + $0x60] sm:$0xff]
      %v1190 = vld [vmem:[#allocation3 + $0x68] sm:$0xff]
      %v1191 = vld [vmem:[#allocation3 + $0x70] sm:$0xff]
      %v1192 = vld [vmem:[#allocation3 + $0x78] sm:$0xff]
      %v1193 = vadd.f32 %v1177, %v1115
      %v1194 = vadd.f32 %v1178, %v1118
      %v1195 = vadd.f32 %v1179, %v1123
      %v1196 = vadd.f32 %v1180, %v1126
      %v1197 = vadd.f32 %v1181, %v1131
      %v1198 = vadd.f32 %v1182, %v1134
      %v1199 = vadd.f32 %v1183, %v1139
      %v1200 = vadd.f32 %v1184, %v1142
      %v1201 = vadd.f32 %v1185, %v1147
      %v1202 = vadd.f32 %v1186, %v1150
      %v1203 = vadd.f32 %v1187, %v1155
      %v1204 = vadd.f32 %v1188, %v1158
      %v1205 = vadd.f32 %v1189, %v1163
      %v1206 = vadd.f32 %v1190, %v1166
      %v1207 = vadd.f32 %v1191, %v1171
      %v1208 = vadd.f32 %v1192, %v1174
      %1209 = vst.msk [vmem:[#allocation3] sm:$0xff] %vm653, %v1193
      %1210 = vst.msk [vmem:[#allocation3 + $0x8] sm:$0xff] %vm653, %v1194
      %1211 = vst.msk [vmem:[#allocation3 + $0x10] sm:$0xff] %vm653, %v1195
      %1212 = vst.msk [vmem:[#allocation3 + $0x18] sm:$0xff] %vm653, %v1196
      %1213 = vst.msk [vmem:[#allocation3 + $0x20] sm:$0xff] %vm653, %v1197
      %1214 = vst.msk [vmem:[#allocation3 + $0x28] sm:$0xff] %vm653, %v1198
      %1215 = vst.msk [vmem:[#allocation3 + $0x30] sm:$0xff] %vm653, %v1199
      %1216 = vst.msk [vmem:[#allocation3 + $0x38] sm:$0xff] %vm653, %v1200
      %1217 = vst.msk [vmem:[#allocation3 + $0x40] sm:$0xff] %vm653, %v1201
      %1218 = vst.msk [vmem:[#allocation3 + $0x48] sm:$0xff] %vm653, %v1202
      %1219 = vst.msk [vmem:[#allocation3 + $0x50] sm:$0xff] %vm653, %v1203
      %1220 = vst.msk [vmem:[#allocation3 + $0x58] sm:$0xff] %vm653, %v1204
      %1221 = vst.msk [vmem:[#allocation3 + $0x60] sm:$0xff] %vm653, %v1205
      %1222 = vst.msk [vmem:[#allocation3 + $0x68] sm:$0xff] %vm653, %v1206
      %1223 = vst.msk [vmem:[#allocation3 + $0x70] sm:$0xff] %vm653, %v1207
      %1224 = vst.msk [vmem:[#allocation3 + $0x78] sm:$0xff] %vm653, %v1208
      %v1225 = vld [vmem:[#allocation2 + $0x8] sm:$0xf]
      %v1226 = vld [vmem:[#allocation2 + $0xc] sm:$0xf]
      %v1227 = vld [vmem:[#allocation2 + $0x10] sm:$0xf]
      %v1228 = vld [vmem:[#allocation2 + $0x14] sm:$0xf]
      %v1229 = vld [vmem:[#allocation2 + $0x18] sm:$0xf]
      %v1230 = vld [vmem:[#allocation2 + $0x1c] sm:$0xf]
      %v1231 = vld [vmem:[#allocation2 + $0x20] sm:$0xf]
      %v1232 = vld [vmem:[#allocation2 + $0x24] sm:$0xf]
      %v1233 = vld [vmem:[#allocation2 + $0x28] sm:$0xf]
      %v1234 = vld [vmem:[#allocation2 + $0x2c] sm:$0xf]
      %v1235 = vld [vmem:[#allocation2 + $0x30] sm:$0xf]
      %v1236 = vld [vmem:[#allocation2 + $0x34] sm:$0xf]
      %v1237 = vld [vmem:[#allocation2 + $0x38] sm:$0xf]
      %v1238 = vld [vmem:[#allocation2 + $0x3c] sm:$0xf]
      %v1239 = vld [vmem:[#allocation2 + $0x40] sm:$0xf]
      %v1240 = vld [vmem:[#allocation2 + $0x44] sm:$0xf]
      %s1241 = scalar_lea.vmem %s1, 6
      %v1242 = vld [vmem:[%s1241] sm:$0x3]
      %v1259 = vunpack.c.l.b16 %v1225
      %v1260 = vunpack.c.l.b16 %v1226
      %v1261 = vunpack.c.l.b16 %v1227
      %v1262 = vunpack.c.l.b16 %v1228
      %v1263 = vunpack.c.l.b16 %v1229
      %v1264 = vunpack.c.l.b16 %v1230
      %v1265 = vunpack.c.l.b16 %v1231
      %v1266 = vunpack.c.l.b16 %v1232
      %v1267 = vunpack.c.l.b16 %v1233
      %v1268 = vunpack.c.l.b16 %v1234
      %v1269 = vunpack.c.l.b16 %v1235
      %v1270 = vunpack.c.l.b16 %v1236
      %v1271 = vunpack.c.l.b16 %v1237
      %v1272 = vunpack.c.l.b16 %v1238
      %v1273 = vunpack.c.l.b16 %v1239
      %v1274 = vunpack.c.l.b16 %v1240
      %v1275 = vpack.c.b16 %v1260, %v1259
      %v1276 = vpack.c.b16 %v1262, %v1261
      %v1277 = vpack.c.b16 %v1264, %v1263
      %v1278 = vpack.c.b16 %v1266, %v1265
      %v1279 = vpack.c.b16 %v1268, %v1267
      %v1280 = vpack.c.b16 %v1270, %v1269
      %v1281 = vpack.c.b16 %v1272, %v1271
      %v1282 = vpack.c.b16 %v1274, %v1273
      %v1284 = vsel %vm527, %v1275, 0
      %v1287 = vsel %vm527, %v1276, 0
      %v1290 = vsel %vm527, %v1277, 0
      %v1293 = vsel %vm527, %v1278, 0
      %v1296 = vsel %vm527, %v1279, 0
      %v1299 = vsel %vm527, %v1280, 0
      %v1302 = vsel %vm527, %v1281, 0
      %v1305 = vsel %vm527, %v1282, 0
      %v1308 = vsel %vm552, %v1242, 0
      %1310 = vmatprep.subr.bf16.mxu0 0
      %1311 = vmatpush1.bf16.msra.mxu0 %v1308
      %1312 = vmatprep.subr.bf16.mxu0 0
      %1313 = vmatpush1.bf16.msra.mxu0 0
      %1314 = vmatprep.subr.bf16.mxu0 0
      %1315 = vmatpush1.bf16.msra.mxu0 0
      %1316 = vmatprep.subr.bf16.mxu0 0
      %1317 = vmatpush1.bf16.msra.mxu0 0
      %1318 = vmatprep.subr.bf16.mxu0 0
      %1319 = vmatpush1.bf16.msra.mxu0 0
      %1320 = vmatprep.subr.bf16.mxu0 0
      %1321 = vmatpush1.bf16.msra.mxu0 0
      %1322 = vmatprep.subr.bf16.mxu0 0
      %1323 = vmatpush1.bf16.msra.mxu0 0
      %1324 = vmatprep.subr.bf16.mxu0 0
      %1325 = vmatpush1.bf16.msra.mxu0 0
      %1326 = vmatprep.subr.bf16.mxu0 0
      %1327 = vmatpush1.bf16.msra.mxu0 0
      %1328 = vmatprep.subr.bf16.mxu0 0
      %1329 = vmatpush1.bf16.msra.mxu0 0
      %1330 = vmatprep.subr.bf16.mxu0 0
      %1331 = vmatpush1.bf16.msra.mxu0 0
      %1332 = vmatprep.subr.bf16.mxu0 0
      %1333 = vmatpush1.bf16.msra.mxu0 0
      %1334 = vmatprep.subr.bf16.mxu0 0
      %1335 = vmatpush1.bf16.msra.mxu0 0
      %1336 = vmatprep.subr.bf16.mxu0 0
      %1337 = vmatpush1.bf16.msra.mxu0 0
      %1338 = vmatprep.subr.bf16.mxu0 0
      %1339 = vmatpush1.bf16.msra.mxu0 0
      %1340 = vmatprep.subr.bf16.mxu0 0
      %1341 = vmatpush1.bf16.msra.mxu0 0
      %1342 = vmatprep.mubr.bf16.mxu0 0
      %1343 = vmatmul.mubr.bf16.gmra.mrb[0].mxu0 %v1284
      %v1344 = vpop.f32.mrb[0].mxu0
      %v1345 = vadd.f32 0.0, %v1344
      %v1346 = vpop.f32.mrb[0].mxu0
      %v1347 = vpop.f32.mrb[0].mxu0
      %v1348 = vadd.f32 0.0, %v1347
      %v1349 = vpop.f32.mrb[0].mxu0
      %1350 = vmatprep.mubr.bf16.mxu0 0
      %1351 = vmatmul.mubr.bf16.gmra.mrb[0].mxu0 %v1287
      %v1352 = vpop.f32.mrb[0].mxu0
      %v1353 = vadd.f32 0.0, %v1352
      %v1354 = vpop.f32.mrb[0].mxu0
      %v1355 = vpop.f32.mrb[0].mxu0
      %v1356 = vadd.f32 0.0, %v1355
      %v1357 = vpop.f32.mrb[0].mxu0
      %1358 = vmatprep.mubr.bf16.mxu0 0
      %1359 = vmatmul.mubr.bf16.gmra.mrb[0].mxu0 %v1290
      %v1360 = vpop.f32.mrb[0].mxu0
      %v1361 = vadd.f32 0.0, %v1360
      %v1362 = vpop.f32.mrb[0].mxu0
      %v1363 = vpop.f32.mrb[0].mxu0
      %v1364 = vadd.f32 0.0, %v1363
      %v1365 = vpop.f32.mrb[0].mxu0
      %1366 = vmatprep.mubr.bf16.mxu0 0
      %1367 = vmatmul.mubr.bf16.gmra.mrb[0].mxu0 %v1293
      %v1368 = vpop.f32.mrb[0].mxu0
      %v1369 = vadd.f32 0.0, %v1368
      %v1370 = vpop.f32.mrb[0].mxu0
      %v1371 = vpop.f32.mrb[0].mxu0
      %v1372 = vadd.f32 0.0, %v1371
      %v1373 = vpop.f32.mrb[0].mxu0
      %1374 = vmatprep.mubr.bf16.mxu0 0
      %1375 = vmatmul.mubr.bf16.gmra.mrb[0].mxu0 %v1296
      %v1376 = vpop.f32.mrb[0].mxu0
      %v1377 = vadd.f32 0.0, %v1376
      %v1378 = vpop.f32.mrb[0].mxu0
      %v1379 = vpop.f32.mrb[0].mxu0
      %v1380 = vadd.f32 0.0, %v1379
      %v1381 = vpop.f32.mrb[0].mxu0
      %1382 = vmatprep.mubr.bf16.mxu0 0
      %1383 = vmatmul.mubr.bf16.gmra.mrb[0].mxu0 %v1299
      %v1384 = vpop.f32.mrb[0].mxu0
      %v1385 = vadd.f32 0.0, %v1384
      %v1386 = vpop.f32.mrb[0].mxu0
      %v1387 = vpop.f32.mrb[0].mxu0
      %v1388 = vadd.f32 0.0, %v1387
      %v1389 = vpop.f32.mrb[0].mxu0
      %1390 = vmatprep.mubr.bf16.mxu0 0
      %1391 = vmatmul.mubr.bf16.gmra.mrb[0].mxu0 %v1302
      %v1392 = vpop.f32.mrb[0].mxu0
      %v1393 = vadd.f32 0.0, %v1392
      %v1394 = vpop.f32.mrb[0].mxu0
      %v1395 = vpop.f32.mrb[0].mxu0
      %v1396 = vadd.f32 0.0, %v1395
      %v1397 = vpop.f32.mrb[0].mxu0
      %1398 = vmatprep.mubr.bf16.mxu0 0
      %1399 = vmatmul.mubr.bf16.gmra.mrb[0].mxu0 %v1305
      %v1400 = vpop.f32.mrb[0].mxu0
      %v1401 = vadd.f32 0.0, %v1400
      %v1402 = vpop.f32.mrb[0].mxu0
      %v1403 = vpop.f32.mrb[0].mxu0
      %v1404 = vadd.f32 0.0, %v1403
      %v1405 = vpop.f32.mrb[0].mxu0
      %1406 = vdwg.mxu0
      %v1407 = vld [vmem:[#allocation3] sm:$0xff]
      %v1408 = vld [vmem:[#allocation3 + $0x8] sm:$0xff]
      %v1409 = vld [vmem:[#allocation3 + $0x10] sm:$0xff]
      %v1410 = vld [vmem:[#allocation3 + $0x18] sm:$0xff]
      %v1411 = vld [vmem:[#allocation3 + $0x20] sm:$0xff]
      %v1412 = vld [vmem:[#allocation3 + $0x28] sm:$0xff]
      %v1413 = vld [vmem:[#allocation3 + $0x30] sm:$0xff]
      %v1414 = vld [vmem:[#allocation3 + $0x38] sm:$0xff]
      %v1415 = vld [vmem:[#allocation3 + $0x40] sm:$0xff]
      %v1416 = vld [vmem:[#allocation3 + $0x48] sm:$0xff]
      %v1417 = vld [vmem:[#allocation3 + $0x50] sm:$0xff]
      %v1418 = vld [vmem:[#allocation3 + $0x58] sm:$0xff]
      %v1419 = vld [vmem:[#allocation3 + $0x60] sm:$0xff]
      %v1420 = vld [vmem:[#allocation3 + $0x68] sm:$0xff]
      %v1421 = vld [vmem:[#allocation3 + $0x70] sm:$0xff]
      %v1422 = vld [vmem:[#allocation3 + $0x78] sm:$0xff]
      %v1423 = vadd.f32 %v1407, %v1345
      %v1424 = vadd.f32 %v1408, %v1348
      %v1425 = vadd.f32 %v1409, %v1353
      %v1426 = vadd.f32 %v1410, %v1356
      %v1427 = vadd.f32 %v1411, %v1361
      %v1428 = vadd.f32 %v1412, %v1364
      %v1429 = vadd.f32 %v1413, %v1369
      %v1430 = vadd.f32 %v1414, %v1372
      %v1431 = vadd.f32 %v1415, %v1377
      %v1432 = vadd.f32 %v1416, %v1380
      %v1433 = vadd.f32 %v1417, %v1385
      %v1434 = vadd.f32 %v1418, %v1388
      %v1435 = vadd.f32 %v1419, %v1393
      %v1436 = vadd.f32 %v1420, %v1396
      %v1437 = vadd.f32 %v1421, %v1401
      %v1438 = vadd.f32 %v1422, %v1404
      %1439 = vst.msk [vmem:[#allocation3] sm:$0xff] %vm653, %v1423
      %1440 = vst.msk [vmem:[#allocation3 + $0x8] sm:$0xff] %vm653, %v1424
      %1441 = vst.msk [vmem:[#allocation3 + $0x10] sm:$0xff] %vm653, %v1425
      %1442 = vst.msk [vmem:[#allocation3 + $0x18] sm:$0xff] %vm653, %v1426
      %1443 = vst.msk [vmem:[#allocation3 + $0x20] sm:$0xff] %vm653, %v1427
      %1444 = vst.msk [vmem:[#allocation3 + $0x28] sm:$0xff] %vm653, %v1428
      %1445 = vst.msk [vmem:[#allocation3 + $0x30] sm:$0xff] %vm653, %v1429
      %1446 = vst.msk [vmem:[#allocation3 + $0x38] sm:$0xff] %vm653, %v1430
      %1447 = vst.msk [vmem:[#allocation3 + $0x40] sm:$0xff] %vm653, %v1431
      %1448 = vst.msk [vmem:[#allocation3 + $0x48] sm:$0xff] %vm653, %v1432
      %1449 = vst.msk [vmem:[#allocation3 + $0x50] sm:$0xff] %vm653, %v1433
      %1450 = vst.msk [vmem:[#allocation3 + $0x58] sm:$0xff] %vm653, %v1434
      %1451 = vst.msk [vmem:[#allocation3 + $0x60] sm:$0xff] %vm653, %v1435
      %1452 = vst.msk [vmem:[#allocation3 + $0x68] sm:$0xff] %vm653, %v1436
      %1453 = vst.msk [vmem:[#allocation3 + $0x70] sm:$0xff] %vm653, %v1437
      %1454 = vst.msk [vmem:[#allocation3 + $0x78] sm:$0xff] %vm653, %v1438
      %v1455 = vld [vmem:[#allocation2 + $0x8] sm:$0xf]
      %v1456 = vld [vmem:[#allocation2 + $0xc] sm:$0xf]
      %v1457 = vld [vmem:[#allocation2 + $0x10] sm:$0xf]
      %v1458 = vld [vmem:[#allocation2 + $0x14] sm:$0xf]
      %v1459 = vld [vmem:[#allocation2 + $0x18] sm:$0xf]
      %v1460 = vld [vmem:[#allocation2 + $0x1c] sm:$0xf]
      %v1461 = vld [vmem:[#allocation2 + $0x20] sm:$0xf]
      %v1462 = vld [vmem:[#allocation2 + $0x24] sm:$0xf]
      %v1463 = vld [vmem:[#allocation2 + $0x28] sm:$0xf]
      %v1464 = vld [vmem:[#allocation2 + $0x2c] sm:$0xf]
      %v1465 = vld [vmem:[#allocation2 + $0x30] sm:$0xf]
      %v1466 = vld [vmem:[#allocation2 + $0x34] sm:$0xf]
      %v1467 = vld [vmem:[#allocation2 + $0x38] sm:$0xf]
      %v1468 = vld [vmem:[#allocation2 + $0x3c] sm:$0xf]
      %v1469 = vld [vmem:[#allocation2 + $0x40] sm:$0xf]
      %v1470 = vld [vmem:[#allocation2 + $0x44] sm:$0xf]
      %v1471 = vld [vmem:[#allocation2 + $0x48] sm:$0x1]
      %s1472 = scalar_lea.vmem %s1, 8
      %v1473 = vld [vmem:[%s1472] sm:$0x3]
      %v1491 = vunpack.c.l.b16 %v1455
      %v1492 = vunpack.c.l.b16 %v1456
      %v1493 = vunpack.c.l.b16 %v1457
      %v1494 = vunpack.c.l.b16 %v1458
      %v1495 = vunpack.c.l.b16 %v1459
      %v1496 = vunpack.c.l.b16 %v1460
      %v1497 = vunpack.c.l.b16 %v1461
      %v1498 = vunpack.c.l.b16 %v1462
      %v1499 = vunpack.c.l.b16 %v1463
      %v1500 = vunpack.c.l.b16 %v1464
      %v1501 = vunpack.c.l.b16 %v1465
      %v1502 = vunpack.c.l.b16 %v1466
      %v1503 = vunpack.c.l.b16 %v1467
      %v1504 = vunpack.c.l.b16 %v1468
      %v1505 = vunpack.c.l.b16 %v1469
      %v1506 = vunpack.c.l.b16 %v1470
      %v1507 = vunpack.c.l.b16 %v1471
      %v1508 = vpack.c.b16 %v1492, %v1491
      %v1509 = vpack.c.b16 %v1494, %v1493
      %v1510 = vpack.c.b16 %v1496, %v1495
      %v1511 = vpack.c.b16 %v1498, %v1497
      %v1512 = vpack.c.b16 %v1500, %v1499
      %v1513 = vpack.c.b16 %v1502, %v1501
      %v1514 = vpack.c.b16 %v1504, %v1503
      %v1515 = vpack.c.b16 %v1506, %v1505
      %v1516 = vpack.c.b16 %v1507, %v1507
      %v1518 = vshrl.u32 %v1508, 16
      %v1520 = vshll.u32 %v1508, 16
      %v1522 = vrot.slane %v1520, 1
      %v1523 = vor.u32 %v1518, %v1522
      %v1525 = vshll.u32 %v1509, 16
      %v1527 = vrot.slane %v1525, 1
      %v1528 = vsel %vm732, %v1523, %v1527
      %v1529 = vshrl.u32 %v1509, 16
      %v1531 = vor.u32 %v1529, %v1527
      %v1533 = vshll.u32 %v1510, 16
      %v1535 = vrot.slane %v1533, 1
      %v1536 = vsel %vm732, %v1531, %v1535
      %v1537 = vshrl.u32 %v1510, 16
      %v1539 = vor.u32 %v1537, %v1535
      %v1541 = vshll.u32 %v1511, 16
      %v1543 = vrot.slane %v1541, 1
      %v1544 = vsel %vm732, %v1539, %v1543
      %v1545 = vshrl.u32 %v1511, 16
      %v1547 = vor.u32 %v1545, %v1543
      %v1549 = vshll.u32 %v1512, 16
      %v1551 = vrot.slane %v1549, 1
      %v1552 = vsel %vm732, %v1547, %v1551
      %v1553 = vshrl.u32 %v1512, 16
      %v1555 = vor.u32 %v1553, %v1551
      %v1557 = vshll.u32 %v1513, 16
      %v1559 = vrot.slane %v1557, 1
      %v1560 = vsel %vm732, %v1555, %v1559
      %v1561 = vshrl.u32 %v1513, 16
      %v1563 = vor.u32 %v1561, %v1559
      %v1565 = vshll.u32 %v1514, 16
      %v1567 = vrot.slane %v1565, 1
      %v1568 = vsel %vm732, %v1563, %v1567
      %v1569 = vshrl.u32 %v1514, 16
      %v1571 = vor.u32 %v1569, %v1567
      %v1573 = vshll.u32 %v1515, 16
      %v1575 = vrot.slane %v1573, 1
      %v1576 = vsel %vm732, %v1571, %v1575
      %v1577 = vshrl.u32 %v1515, 16
      %v1579 = vor.u32 %v1577, %v1575
      %v1581 = vshll.u32 %v1516, 16
      %v1583 = vrot.slane %v1581, 1
      %v1584 = vsel %vm732, %v1579, %v1583
      %v1586 = vsel %vm527, %v1528, 0
      %v1589 = vsel %vm527, %v1536, 0
      %v1592 = vsel %vm527, %v1544, 0
      %v1595 = vsel %vm527, %v1552, 0
      %v1598 = vsel %vm527, %v1560, 0
      %v1601 = vsel %vm527, %v1568, 0
      %v1604 = vsel %vm527, %v1576, 0
      %v1607 = vsel %vm527, %v1584, 0
      %v1610 = vsel %vm552, %v1473, 0
      %1612 = vmatprep.subr.bf16.mxu0 0
      %1613 = vmatpush1.bf16.msra.mxu0 %v1610
      %1614 = vmatprep.subr.bf16.mxu0 0
      %1615 = vmatpush1.bf16.msra.mxu0 0
      %1616 = vmatprep.subr.bf16.mxu0 0
      %1617 = vmatpush1.bf16.msra.mxu0 0
      %1618 = vmatprep.subr.bf16.mxu0 0
      %1619 = vmatpush1.bf16.msra.mxu0 0
      %1620 = vmatprep.subr.bf16.mxu0 0
      %1621 = vmatpush1.bf16.msra.mxu0 0
      %1622 = vmatprep.subr.bf16.mxu0 0
      %1623 = vmatpush1.bf16.msra.mxu0 0
      %1624 = vmatprep.subr.bf16.mxu0 0
      %1625 = vmatpush1.bf16.msra.mxu0 0
      %1626 = vmatprep.subr.bf16.mxu0 0
      %1627 = vmatpush1.bf16.msra.mxu0 0
      %1628 = vmatprep.subr.bf16.mxu0 0
      %1629 = vmatpush1.bf16.msra.mxu0 0
      %1630 = vmatprep.subr.bf16.mxu0 0
      %1631 = vmatpush1.bf16.msra.mxu0 0
      %1632 = vmatprep.subr.bf16.mxu0 0
      %1633 = vmatpush1.bf16.msra.mxu0 0
      %1634 = vmatprep.subr.bf16.mxu0 0
      %1635 = vmatpush1.bf16.msra.mxu0 0
      %1636 = vmatprep.subr.bf16.mxu0 0
      %1637 = vmatpush1.bf16.msra.mxu0 0
      %1638 = vmatprep.subr.bf16.mxu0 0
      %1639 = vmatpush1.bf16.msra.mxu0 0
      %1640 = vmatprep.subr.bf16.mxu0 0
      %1641 = vmatpush1.bf16.msra.mxu0 0
      %1642 = vmatprep.subr.bf16.mxu0 0
      %1643 = vmatpush1.bf16.msra.mxu0 0
      %1644 = vmatprep.mubr.bf16.mxu0 0
      %1645 = vmatmul.mubr.bf16.gmra.mrb[0].mxu0 %v1586
      %v1646 = vpop.f32.mrb[0].mxu0
      %v1647 = vadd.f32 0.0, %v1646
      %v1648 = vpop.f32.mrb[0].mxu0
      %v1649 = vpop.f32.mrb[0].mxu0
      %v1650 = vadd.f32 0.0, %v1649
      %v1651 = vpop.f32.mrb[0].mxu0
      %1652 = vmatprep.mubr.bf16.mxu0 0
      %1653 = vmatmul.mubr.bf16.gmra.mrb[0].mxu0 %v1589
      %v1654 = vpop.f32.mrb[0].mxu0
      %v1655 = vadd.f32 0.0, %v1654
      %v1656 = vpop.f32.mrb[0].mxu0
      %v1657 = vpop.f32.mrb[0].mxu0
      %v1658 = vadd.f32 0.0, %v1657
      %v1659 = vpop.f32.mrb[0].mxu0
      %1660 = vmatprep.mubr.bf16.mxu0 0
      %1661 = vmatmul.mubr.bf16.gmra.mrb[0].mxu0 %v1592
      %v1662 = vpop.f32.mrb[0].mxu0
      %v1663 = vadd.f32 0.0, %v1662
      %v1664 = vpop.f32.mrb[0].mxu0
      %v1665 = vpop.f32.mrb[0].mxu0
      %v1666 = vadd.f32 0.0, %v1665
      %v1667 = vpop.f32.mrb[0].mxu0
      %1668 = vmatprep.mubr.bf16.mxu0 0
      %1669 = vmatmul.mubr.bf16.gmra.mrb[0].mxu0 %v1595
      %v1670 = vpop.f32.mrb[0].mxu0
      %v1671 = vadd.f32 0.0, %v1670
      %v1672 = vpop.f32.mrb[0].mxu0
      %v1673 = vpop.f32.mrb[0].mxu0
      %v1674 = vadd.f32 0.0, %v1673
      %v1675 = vpop.f32.mrb[0].mxu0
      %1676 = vmatprep.mubr.bf16.mxu0 0
      %1677 = vmatmul.mubr.bf16.gmra.mrb[0].mxu0 %v1598
      %v1678 = vpop.f32.mrb[0].mxu0
      %v1679 = vadd.f32 0.0, %v1678
      %v1680 = vpop.f32.mrb[0].mxu0
      %v1681 = vpop.f32.mrb[0].mxu0
      %v1682 = vadd.f32 0.0, %v1681
      %v1683 = vpop.f32.mrb[0].mxu0
      %1684 = vmatprep.mubr.bf16.mxu0 0
      %1685 = vmatmul.mubr.bf16.gmra.mrb[0].mxu0 %v1601
      %v1686 = vpop.f32.mrb[0].mxu0
      %v1687 = vadd.f32 0.0, %v1686
      %v1688 = vpop.f32.mrb[0].mxu0
      %v1689 = vpop.f32.mrb[0].mxu0
      %v1690 = vadd.f32 0.0, %v1689
      %v1691 = vpop.f32.mrb[0].mxu0
      %1692 = vmatprep.mubr.bf16.mxu0 0
      %1693 = vmatmul.mubr.bf16.gmra.mrb[0].mxu0 %v1604
      %v1694 = vpop.f32.mrb[0].mxu0
      %v1695 = vadd.f32 0.0, %v1694
      %v1696 = vpop.f32.mrb[0].mxu0
      %v1697 = vpop.f32.mrb[0].mxu0
      %v1698 = vadd.f32 0.0, %v1697
      %v1699 = vpop.f32.mrb[0].mxu0
      %1700 = vmatprep.mubr.bf16.mxu0 0
      %1701 = vmatmul.mubr.bf16.gmra.mrb[0].mxu0 %v1607
      %v1702 = vpop.f32.mrb[0].mxu0
      %v1703 = vadd.f32 0.0, %v1702
      %v1704 = vpop.f32.mrb[0].mxu0
      %v1705 = vpop.f32.mrb[0].mxu0
      %v1706 = vadd.f32 0.0, %v1705
      %v1707 = vpop.f32.mrb[0].mxu0
      %1708 = vdwg.mxu0
      %v1709 = vld [vmem:[#allocation3] sm:$0xff]
      %v1710 = vld [vmem:[#allocation3 + $0x8] sm:$0xff]
      %v1711 = vld [vmem:[#allocation3 + $0x10] sm:$0xff]
      %v1712 = vld [vmem:[#allocation3 + $0x18] sm:$0xff]
      %v1713 = vld [vmem:[#allocation3 + $0x20] sm:$0xff]
      %v1714 = vld [vmem:[#allocation3 + $0x28] sm:$0xff]
      %v1715 = vld [vmem:[#allocation3 + $0x30] sm:$0xff]
      %v1716 = vld [vmem:[#allocation3 + $0x38] sm:$0xff]
      %v1717 = vld [vmem:[#allocation3 + $0x40] sm:$0xff]
      %v1718 = vld [vmem:[#allocation3 + $0x48] sm:$0xff]
      %v1719 = vld [vmem:[#allocation3 + $0x50] sm:$0xff]
      %v1720 = vld [vmem:[#allocation3 + $0x58] sm:$0xff]
      %v1721 = vld [vmem:[#allocation3 + $0x60] sm:$0xff]
      %v1722 = vld [vmem:[#allocation3 + $0x68] sm:$0xff]
      %v1723 = vld [vmem:[#allocation3 + $0x70] sm:$0xff]
      %v1724 = vld [vmem:[#allocation3 + $0x78] sm:$0xff]
      %v1725 = vadd.f32 %v1709, %v1647
      %v1726 = vadd.f32 %v1710, %v1650
      %v1727 = vadd.f32 %v1711, %v1655
      %v1728 = vadd.f32 %v1712, %v1658
      %v1729 = vadd.f32 %v1713, %v1663
      %v1730 = vadd.f32 %v1714, %v1666
      %v1731 = vadd.f32 %v1715, %v1671
      %v1732 = vadd.f32 %v1716, %v1674
      %v1733 = vadd.f32 %v1717, %v1679
      %v1734 = vadd.f32 %v1718, %v1682
      %v1735 = vadd.f32 %v1719, %v1687
      %v1736 = vadd.f32 %v1720, %v1690
      %v1737 = vadd.f32 %v1721, %v1695
      %v1738 = vadd.f32 %v1722, %v1698
      %v1739 = vadd.f32 %v1723, %v1703
      %v1740 = vadd.f32 %v1724, %v1706
      %1741 = vst.msk [vmem:[#allocation3] sm:$0xff] %vm653, %v1725
      %1742 = vst.msk [vmem:[#allocation3 + $0x8] sm:$0xff] %vm653, %v1726
      %1743 = vst.msk [vmem:[#allocation3 + $0x10] sm:$0xff] %vm653, %v1727
      %1744 = vst.msk [vmem:[#allocation3 + $0x18] sm:$0xff] %vm653, %v1728
      %1745 = vst.msk [vmem:[#allocation3 + $0x20] sm:$0xff] %vm653, %v1729
      %1746 = vst.msk [vmem:[#allocation3 + $0x28] sm:$0xff] %vm653, %v1730
      %1747 = vst.msk [vmem:[#allocation3 + $0x30] sm:$0xff] %vm653, %v1731
      %1748 = vst.msk [vmem:[#allocation3 + $0x38] sm:$0xff] %vm653, %v1732
      %1749 = vst.msk [vmem:[#allocation3 + $0x40] sm:$0xff] %vm653, %v1733
      %1750 = vst.msk [vmem:[#allocation3 + $0x48] sm:$0xff] %vm653, %v1734
      %1751 = vst.msk [vmem:[#allocation3 + $0x50] sm:$0xff] %vm653, %v1735
      %1752 = vst.msk [vmem:[#allocation3 + $0x58] sm:$0xff] %vm653, %v1736
      %1753 = vst.msk [vmem:[#allocation3 + $0x60] sm:$0xff] %vm653, %v1737
      %1754 = vst.msk [vmem:[#allocation3 + $0x68] sm:$0xff] %vm653, %v1738
      %1755 = vst.msk [vmem:[#allocation3 + $0x70] sm:$0xff] %vm653, %v1739
      %1756 = vst.msk [vmem:[#allocation3 + $0x78] sm:$0xff] %vm653, %v1740
      %v1757 = vld [vmem:[#allocation2 + $0x8] sm:$0xe]
      %v1758 = vld [vmem:[#allocation2 + $0xc] sm:$0xf]
      %v1759 = vld [vmem:[#allocation2 + $0x10] sm:$0xf]
      %v1760 = vld [vmem:[#allocation2 + $0x14] sm:$0xf]
      %v1761 = vld [vmem:[#allocation2 + $0x18] sm:$0xf]
      %v1762 = vld [vmem:[#allocation2 + $0x1c] sm:$0xf]
      %v1763 = vld [vmem:[#allocation2 + $0x20] sm:$0xf]
      %v1764 = vld [vmem:[#allocation2 + $0x24] sm:$0xf]
      %v1765 = vld [vmem:[#allocation2 + $0x28] sm:$0xf]
      %v1766 = vld [vmem:[#allocation2 + $0x2c] sm:$0xf]
      %v1767 = vld [vmem:[#allocation2 + $0x30] sm:$0xf]
      %v1768 = vld [vmem:[#allocation2 + $0x34] sm:$0xf]
      %v1769 = vld [vmem:[#allocation2 + $0x38] sm:$0xf]
      %v1770 = vld [vmem:[#allocation2 + $0x3c] sm:$0xf]
      %v1771 = vld [vmem:[#allocation2 + $0x40] sm:$0xf]
      %v1772 = vld [vmem:[#allocation2 + $0x44] sm:$0xf]
      %v1773 = vld [vmem:[#allocation2 + $0x48] sm:$0x1]
      %s1774 = scalar_lea.vmem %s1, 10
      %v1775 = vld [vmem:[%s1774] sm:$0x3]
      %v1793 = vunpack.c.l.b16 %v1757
      %v1794 = vunpack.c.l.b16 %v1758
      %v1795 = vunpack.c.l.b16 %v1759
      %v1796 = vunpack.c.l.b16 %v1760
      %v1797 = vunpack.c.l.b16 %v1761
      %v1798 = vunpack.c.l.b16 %v1762
      %v1799 = vunpack.c.l.b16 %v1763
      %v1800 = vunpack.c.l.b16 %v1764
      %v1801 = vunpack.c.l.b16 %v1765
      %v1802 = vunpack.c.l.b16 %v1766
      %v1803 = vunpack.c.l.b16 %v1767
      %v1804 = vunpack.c.l.b16 %v1768
      %v1805 = vunpack.c.l.b16 %v1769
      %v1806 = vunpack.c.l.b16 %v1770
      %v1807 = vunpack.c.l.b16 %v1771
      %v1808 = vunpack.c.l.b16 %v1772
      %v1809 = vunpack.c.l.b16 %v1773
      %v1810 = vpack.c.b16 %v1794, %v1793
      %v1811 = vpack.c.b16 %v1796, %v1795
      %v1812 = vpack.c.b16 %v1798, %v1797
      %v1813 = vpack.c.b16 %v1800, %v1799
      %v1814 = vpack.c.b16 %v1802, %v1801
      %v1815 = vpack.c.b16 %v1804, %v1803
      %v1816 = vpack.c.b16 %v1806, %v1805
      %v1817 = vpack.c.b16 %v1808, %v1807
      %v1818 = vpack.c.b16 %v1809, %v1809
      %v1819 = vrot.slane %v1810, 1
      %v1820 = vrot.slane %v1811, 1
      %v1821 = vsel %vm1035, %v1819, %v1820
      %v1822 = vrot.slane %v1812, 1
      %v1823 = vsel %vm1035, %v1820, %v1822
      %v1824 = vrot.slane %v1813, 1
      %v1825 = vsel %vm1035, %v1822, %v1824
      %v1826 = vrot.slane %v1814, 1
      %v1827 = vsel %vm1035, %v1824, %v1826
      %v1828 = vrot.slane %v1815, 1
      %v1829 = vsel %vm1035, %v1826, %v1828
      %v1830 = vrot.slane %v1816, 1
      %v1831 = vsel %vm1035, %v1828, %v1830
      %v1832 = vrot.slane %v1817, 1
      %v1833 = vsel %vm1035, %v1830, %v1832
      %v1834 = vrot.slane %v1818, 1
      %v1835 = vsel %vm1035, %v1832, %v1834
      %v1837 = vsel %vm527, %v1821, 0
      %v1840 = vsel %vm527, %v1823, 0
      %v1843 = vsel %vm527, %v1825, 0
      %v1846 = vsel %vm527, %v1827, 0
      %v1849 = vsel %vm527, %v1829, 0
      %v1852 = vsel %vm527, %v1831, 0
      %v1855 = vsel %vm527, %v1833, 0
      %v1858 = vsel %vm527, %v1835, 0
      %v1861 = vsel %vm552, %v1775, 0
      %1863 = vmatprep.subr.bf16.mxu0 0
      %1864 = vmatpush1.bf16.msra.mxu0 %v1861
      %1865 = vmatprep.subr.bf16.mxu0 0
      %1866 = vmatpush1.bf16.msra.mxu0 0
      %1867 = vmatprep.subr.bf16.mxu0 0
      %1868 = vmatpush1.bf16.msra.mxu0 0
      %1869 = vmatprep.subr.bf16.mxu0 0
      %1870 = vmatpush1.bf16.msra.mxu0 0
      %1871 = vmatprep.subr.bf16.mxu0 0
      %1872 = vmatpush1.bf16.msra.mxu0 0
      %1873 = vmatprep.subr.bf16.mxu0 0
      %1874 = vmatpush1.bf16.msra.mxu0 0
      %1875 = vmatprep.subr.bf16.mxu0 0
      %1876 = vmatpush1.bf16.msra.mxu0 0
      %1877 = vmatprep.subr.bf16.mxu0 0
      %1878 = vmatpush1.bf16.msra.mxu0 0
      %1879 = vmatprep.subr.bf16.mxu0 0
      %1880 = vmatpush1.bf16.msra.mxu0 0
      %1881 = vmatprep.subr.bf16.mxu0 0
      %1882 = vmatpush1.bf16.msra.mxu0 0
      %1883 = vmatprep.subr.bf16.mxu0 0
      %1884 = vmatpush1.bf16.msra.mxu0 0
      %1885 = vmatprep.subr.bf16.mxu0 0
      %1886 = vmatpush1.bf16.msra.mxu0 0
      %1887 = vmatprep.subr.bf16.mxu0 0
      %1888 = vmatpush1.bf16.msra.mxu0 0
      %1889 = vmatprep.subr.bf16.mxu0 0
      %1890 = vmatpush1.bf16.msra.mxu0 0
      %1891 = vmatprep.subr.bf16.mxu0 0
      %1892 = vmatpush1.bf16.msra.mxu0 0
      %1893 = vmatprep.subr.bf16.mxu0 0
      %1894 = vmatpush1.bf16.msra.mxu0 0
      %1895 = vmatprep.mubr.bf16.mxu0 0
      %1896 = vmatmul.mubr.bf16.gmra.mrb[0].mxu0 %v1837
      %v1897 = vpop.f32.mrb[0].mxu0
      %v1898 = vadd.f32 0.0, %v1897
      %v1899 = vpop.f32.mrb[0].mxu0
      %v1900 = vpop.f32.mrb[0].mxu0
      %v1901 = vadd.f32 0.0, %v1900
      %v1902 = vpop.f32.mrb[0].mxu0
      %1903 = vmatprep.mubr.bf16.mxu0 0
      %1904 = vmatmul.mubr.bf16.gmra.mrb[0].mxu0 %v1840
      %v1905 = vpop.f32.mrb[0].mxu0
      %v1906 = vadd.f32 0.0, %v1905
      %v1907 = vpop.f32.mrb[0].mxu0
      %v1908 = vpop.f32.mrb[0].mxu0
      %v1909 = vadd.f32 0.0, %v1908
      %v1910 = vpop.f32.mrb[0].mxu0
      %1911 = vmatprep.mubr.bf16.mxu0 0
      %1912 = vmatmul.mubr.bf16.gmra.mrb[0].mxu0 %v1843
      %v1913 = vpop.f32.mrb[0].mxu0
      %v1914 = vadd.f32 0.0, %v1913
      %v1915 = vpop.f32.mrb[0].mxu0
      %v1916 = vpop.f32.mrb[0].mxu0
      %v1917 = vadd.f32 0.0, %v1916
      %v1918 = vpop.f32.mrb[0].mxu0
      %1919 = vmatprep.mubr.bf16.mxu0 0
      %1920 = vmatmul.mubr.bf16.gmra.mrb[0].mxu0 %v1846
      %v1921 = vpop.f32.mrb[0].mxu0
      %v1922 = vadd.f32 0.0, %v1921
      %v1923 = vpop.f32.mrb[0].mxu0
      %v1924 = vpop.f32.mrb[0].mxu0
      %v1925 = vadd.f32 0.0, %v1924
      %v1926 = vpop.f32.mrb[0].mxu0
      %1927 = vmatprep.mubr.bf16.mxu0 0
      %1928 = vmatmul.mubr.bf16.gmra.mrb[0].mxu0 %v1849
      %v1929 = vpop.f32.mrb[0].mxu0
      %v1930 = vadd.f32 0.0, %v1929
      %v1931 = vpop.f32.mrb[0].mxu0
      %v1932 = vpop.f32.mrb[0].mxu0
      %v1933 = vadd.f32 0.0, %v1932
      %v1934 = vpop.f32.mrb[0].mxu0
      %1935 = vmatprep.mubr.bf16.mxu0 0
      %1936 = vmatmul.mubr.bf16.gmra.mrb[0].mxu0 %v1852
      %v1937 = vpop.f32.mrb[0].mxu0
      %v1938 = vadd.f32 0.0, %v1937
      %v1939 = vpop.f32.mrb[0].mxu0
      %v1940 = vpop.f32.mrb[0].mxu0
      %v1941 = vadd.f32 0.0, %v1940
      %v1942 = vpop.f32.mrb[0].mxu0
      %1943 = vmatprep.mubr.bf16.mxu0 0
      %1944 = vmatmul.mubr.bf16.gmra.mrb[0].mxu0 %v1855
      %v1945 = vpop.f32.mrb[0].mxu0
      %v1946 = vadd.f32 0.0, %v1945
      %v1947 = vpop.f32.mrb[0].mxu0
      %v1948 = vpop.f32.mrb[0].mxu0
      %v1949 = vadd.f32 0.0, %v1948
      %v1950 = vpop.f32.mrb[0].mxu0
      %1951 = vmatprep.mubr.bf16.mxu0 0
      %1952 = vmatmul.mubr.bf16.gmra.mrb[0].mxu0 %v1858
      %v1953 = vpop.f32.mrb[0].mxu0
      %v1954 = vadd.f32 0.0, %v1953
      %v1955 = vpop.f32.mrb[0].mxu0
      %v1956 = vpop.f32.mrb[0].mxu0
      %v1957 = vadd.f32 0.0, %v1956
      %v1958 = vpop.f32.mrb[0].mxu0
      %1959 = vdwg.mxu0
      %v1960 = vld [vmem:[#allocation3] sm:$0xff]
      %v1961 = vld [vmem:[#allocation3 + $0x8] sm:$0xff]
      %v1962 = vld [vmem:[#allocation3 + $0x10] sm:$0xff]
      %v1963 = vld [vmem:[#allocation3 + $0x18] sm:$0xff]
      %v1964 = vld [vmem:[#allocation3 + $0x20] sm:$0xff]
      %v1965 = vld [vmem:[#allocation3 + $0x28] sm:$0xff]
      %v1966 = vld [vmem:[#allocation3 + $0x30] sm:$0xff]
      %v1967 = vld [vmem:[#allocation3 + $0x38] sm:$0xff]
      %v1968 = vld [vmem:[#allocation3 + $0x40] sm:$0xff]
      %v1969 = vld [vmem:[#allocation3 + $0x48] sm:$0xff]
      %v1970 = vld [vmem:[#allocation3 + $0x50] sm:$0xff]
      %v1971 = vld [vmem:[#allocation3 + $0x58] sm:$0xff]
      %v1972 = vld [vmem:[#allocation3 + $0x60] sm:$0xff]
      %v1973 = vld [vmem:[#allocation3 + $0x68] sm:$0xff]
      %v1974 = vld [vmem:[#allocation3 + $0x70] sm:$0xff]
      %v1975 = vld [vmem:[#allocation3 + $0x78] sm:$0xff]
      %v1976 = vadd.f32 %v1960, %v1898
      %v1977 = vadd.f32 %v1961, %v1901
      %v1978 = vadd.f32 %v1962, %v1906
      %v1979 = vadd.f32 %v1963, %v1909
      %v1980 = vadd.f32 %v1964, %v1914
      %v1981 = vadd.f32 %v1965, %v1917
      %v1982 = vadd.f32 %v1966, %v1922
      %v1983 = vadd.f32 %v1967, %v1925
      %v1984 = vadd.f32 %v1968, %v1930
      %v1985 = vadd.f32 %v1969, %v1933
      %v1986 = vadd.f32 %v1970, %v1938
      %v1987 = vadd.f32 %v1971, %v1941
      %v1988 = vadd.f32 %v1972, %v1946
      %v1989 = vadd.f32 %v1973, %v1949
      %v1990 = vadd.f32 %v1974, %v1954
      %v1991 = vadd.f32 %v1975, %v1957
      %1992 = vst.msk [vmem:[#allocation3] sm:$0xff] %vm653, %v1976
      %1993 = vst.msk [vmem:[#allocation3 + $0x8] sm:$0xff] %vm653, %v1977
      %1994 = vst.msk [vmem:[#allocation3 + $0x10] sm:$0xff] %vm653, %v1978
      %1995 = vst.msk [vmem:[#allocation3 + $0x18] sm:$0xff] %vm653, %v1979
      %1996 = vst.msk [vmem:[#allocation3 + $0x20] sm:$0xff] %vm653, %v1980
      %1997 = vst.msk [vmem:[#allocation3 + $0x28] sm:$0xff] %vm653, %v1981
      %1998 = vst.msk [vmem:[#allocation3 + $0x30] sm:$0xff] %vm653, %v1982
      %1999 = vst.msk [vmem:[#allocation3 + $0x38] sm:$0xff] %vm653, %v1983
      %2000 = vst.msk [vmem:[#allocation3 + $0x40] sm:$0xff] %vm653, %v1984
      %2001 = vst.msk [vmem:[#allocation3 + $0x48] sm:$0xff] %vm653, %v1985
      %2002 = vst.msk [vmem:[#allocation3 + $0x50] sm:$0xff] %vm653, %v1986
      %2003 = vst.msk [vmem:[#allocation3 + $0x58] sm:$0xff] %vm653, %v1987
      %2004 = vst.msk [vmem:[#allocation3 + $0x60] sm:$0xff] %vm653, %v1988
      %2005 = vst.msk [vmem:[#allocation3 + $0x68] sm:$0xff] %vm653, %v1989
      %2006 = vst.msk [vmem:[#allocation3 + $0x70] sm:$0xff] %vm653, %v1990
      %2007 = vst.msk [vmem:[#allocation3 + $0x78] sm:$0xff] %vm653, %v1991
      %v2008 = vld [vmem:[#allocation2 + $0x10] sm:$0xf]
      %v2009 = vld [vmem:[#allocation2 + $0x14] sm:$0xf]
      %v2010 = vld [vmem:[#allocation2 + $0x18] sm:$0xf]
      %v2011 = vld [vmem:[#allocation2 + $0x1c] sm:$0xf]
      %v2012 = vld [vmem:[#allocation2 + $0x20] sm:$0xf]
      %v2013 = vld [vmem:[#allocation2 + $0x24] sm:$0xf]
      %v2014 = vld [vmem:[#allocation2 + $0x28] sm:$0xf]
      %v2015 = vld [vmem:[#allocation2 + $0x2c] sm:$0xf]
      %v2016 = vld [vmem:[#allocation2 + $0x30] sm:$0xf]
      %v2017 = vld [vmem:[#allocation2 + $0x34] sm:$0xf]
      %v2018 = vld [vmem:[#allocation2 + $0x38] sm:$0xf]
      %v2019 = vld [vmem:[#allocation2 + $0x3c] sm:$0xf]
      %v2020 = vld [vmem:[#allocation2 + $0x40] sm:$0xf]
      %v2021 = vld [vmem:[#allocation2 + $0x44] sm:$0xf]
      %v2022 = vld [vmem:[#allocation2 + $0x48] sm:$0xf]
      %v2023 = vld [vmem:[#allocation2 + $0x4c] sm:$0xf]
      %s2024 = scalar_lea.vmem %s1, 12
      %v2025 = vld [vmem:[%s2024] sm:$0x3]
      %v2042 = vunpack.c.l.b16 %v2008
      %v2043 = vunpack.c.l.b16 %v2009
      %v2044 = vunpack.c.l.b16 %v2010
      %v2045 = vunpack.c.l.b16 %v2011
      %v2046 = vunpack.c.l.b16 %v2012
      %v2047 = vunpack.c.l.b16 %v2013
      %v2048 = vunpack.c.l.b16 %v2014
      %v2049 = vunpack.c.l.b16 %v2015
      %v2050 = vunpack.c.l.b16 %v2016
      %v2051 = vunpack.c.l.b16 %v2017
      %v2052 = vunpack.c.l.b16 %v2018
      %v2053 = vunpack.c.l.b16 %v2019
      %v2054 = vunpack.c.l.b16 %v2020
      %v2055 = vunpack.c.l.b16 %v2021
      %v2056 = vunpack.c.l.b16 %v2022
      %v2057 = vunpack.c.l.b16 %v2023
      %v2058 = vpack.c.b16 %v2043, %v2042
      %v2059 = vpack.c.b16 %v2045, %v2044
      %v2060 = vpack.c.b16 %v2047, %v2046
      %v2061 = vpack.c.b16 %v2049, %v2048
      %v2062 = vpack.c.b16 %v2051, %v2050
      %v2063 = vpack.c.b16 %v2053, %v2052
      %v2064 = vpack.c.b16 %v2055, %v2054
      %v2065 = vpack.c.b16 %v2057, %v2056
      %v2067 = vsel %vm527, %v2058, 0
      %v2070 = vsel %vm527, %v2059, 0
      %v2073 = vsel %vm527, %v2060, 0
      %v2076 = vsel %vm527, %v2061, 0
      %v2079 = vsel %vm527, %v2062, 0
      %v2082 = vsel %vm527, %v2063, 0
      %v2085 = vsel %vm527, %v2064, 0
      %v2088 = vsel %vm527, %v2065, 0
      %v2091 = vsel %vm552, %v2025, 0
      %2093 = vmatprep.subr.bf16.mxu0 0
      %2094 = vmatpush1.bf16.msra.mxu0 %v2091
      %2095 = vmatprep.subr.bf16.mxu0 0
      %2096 = vmatpush1.bf16.msra.mxu0 0
      %2097 = vmatprep.subr.bf16.mxu0 0
      %2098 = vmatpush1.bf16.msra.mxu0 0
      %2099 = vmatprep.subr.bf16.mxu0 0
      %2100 = vmatpush1.bf16.msra.mxu0 0
      %2101 = vmatprep.subr.bf16.mxu0 0
      %2102 = vmatpush1.bf16.msra.mxu0 0
      %2103 = vmatprep.subr.bf16.mxu0 0
      %2104 = vmatpush1.bf16.msra.mxu0 0
      %2105 = vmatprep.subr.bf16.mxu0 0
      %2106 = vmatpush1.bf16.msra.mxu0 0
      %2107 = vmatprep.subr.bf16.mxu0 0
      %2108 = vmatpush1.bf16.msra.mxu0 0
      %2109 = vmatprep.subr.bf16.mxu0 0
      %2110 = vmatpush1.bf16.msra.mxu0 0
      %2111 = vmatprep.subr.bf16.mxu0 0
      %2112 = vmatpush1.bf16.msra.mxu0 0
      %2113 = vmatprep.subr.bf16.mxu0 0
      %2114 = vmatpush1.bf16.msra.mxu0 0
      %2115 = vmatprep.subr.bf16.mxu0 0
      %2116 = vmatpush1.bf16.msra.mxu0 0
      %2117 = vmatprep.subr.bf16.mxu0 0
      %2118 = vmatpush1.bf16.msra.mxu0 0
      %2119 = vmatprep.subr.bf16.mxu0 0
      %2120 = vmatpush1.bf16.msra.mxu0 0
      %2121 = vmatprep.subr.bf16.mxu0 0
      %2122 = vmatpush1.bf16.msra.mxu0 0
      %2123 = vmatprep.subr.bf16.mxu0 0
      %2124 = vmatpush1.bf16.msra.mxu0 0
      %2125 = vmatprep.mubr.bf16.mxu0 0
      %2126 = vmatmul.mubr.bf16.gmra.mrb[0].mxu0 %v2067
      %v2127 = vpop.f32.mrb[0].mxu0
      %v2128 = vadd.f32 0.0, %v2127
      %v2129 = vpop.f32.mrb[0].mxu0
      %v2130 = vpop.f32.mrb[0].mxu0
      %v2131 = vadd.f32 0.0, %v2130
      %v2132 = vpop.f32.mrb[0].mxu0
      %2133 = vmatprep.mubr.bf16.mxu0 0
      %2134 = vmatmul.mubr.bf16.gmra.mrb[0].mxu0 %v2070
      %v2135 = vpop.f32.mrb[0].mxu0
      %v2136 = vadd.f32 0.0, %v2135
      %v2137 = vpop.f32.mrb[0].mxu0
      %v2138 = vpop.f32.mrb[0].mxu0
      %v2139 = vadd.f32 0.0, %v2138
      %v2140 = vpop.f32.mrb[0].mxu0
      %2141 = vmatprep.mubr.bf16.mxu0 0
      %2142 = vmatmul.mubr.bf16.gmra.mrb[0].mxu0 %v2073
      %v2143 = vpop.f32.mrb[0].mxu0
      %v2144 = vadd.f32 0.0, %v2143
      %v2145 = vpop.f32.mrb[0].mxu0
      %v2146 = vpop.f32.mrb[0].mxu0
      %v2147 = vadd.f32 0.0, %v2146
      %v2148 = vpop.f32.mrb[0].mxu0
      %2149 = vmatprep.mubr.bf16.mxu0 0
      %2150 = vmatmul.mubr.bf16.gmra.mrb[0].mxu0 %v2076
      %v2151 = vpop.f32.mrb[0].mxu0
      %v2152 = vadd.f32 0.0, %v2151
      %v2153 = vpop.f32.mrb[0].mxu0
      %v2154 = vpop.f32.mrb[0].mxu0
      %v2155 = vadd.f32 0.0, %v2154
      %v2156 = vpop.f32.mrb[0].mxu0
      %2157 = vmatprep.mubr.bf16.mxu0 0
      %2158 = vmatmul.mubr.bf16.gmra.mrb[0].mxu0 %v2079
      %v2159 = vpop.f32.mrb[0].mxu0
      %v2160 = vadd.f32 0.0, %v2159
      %v2161 = vpop.f32.mrb[0].mxu0
      %v2162 = vpop.f32.mrb[0].mxu0
      %v2163 = vadd.f32 0.0, %v2162
      %v2164 = vpop.f32.mrb[0].mxu0
      %2165 = vmatprep.mubr.bf16.mxu0 0
      %2166 = vmatmul.mubr.bf16.gmra.mrb[0].mxu0 %v2082
      %v2167 = vpop.f32.mrb[0].mxu0
      %v2168 = vadd.f32 0.0, %v2167
      %v2169 = vpop.f32.mrb[0].mxu0
      %v2170 = vpop.f32.mrb[0].mxu0
      %v2171 = vadd.f32 0.0, %v2170
      %v2172 = vpop.f32.mrb[0].mxu0
      %2173 = vmatprep.mubr.bf16.mxu0 0
      %2174 = vmatmul.mubr.bf16.gmra.mrb[0].mxu0 %v2085
      %v2175 = vpop.f32.mrb[0].mxu0
      %v2176 = vadd.f32 0.0, %v2175
      %v2177 = vpop.f32.mrb[0].mxu0
      %v2178 = vpop.f32.mrb[0].mxu0
      %v2179 = vadd.f32 0.0, %v2178
      %v2180 = vpop.f32.mrb[0].mxu0
      %2181 = vmatprep.mubr.bf16.mxu0 0
      %2182 = vmatmul.mubr.bf16.gmra.mrb[0].mxu0 %v2088
      %v2183 = vpop.f32.mrb[0].mxu0
      %v2184 = vadd.f32 0.0, %v2183
      %v2185 = vpop.f32.mrb[0].mxu0
      %v2186 = vpop.f32.mrb[0].mxu0
      %v2187 = vadd.f32 0.0, %v2186
      %v2188 = vpop.f32.mrb[0].mxu0
      %2189 = vdwg.mxu0
      %v2190 = vld [vmem:[#allocation3] sm:$0xff]
      %v2191 = vld [vmem:[#allocation3 + $0x8] sm:$0xff]
      %v2192 = vld [vmem:[#allocation3 + $0x10] sm:$0xff]
      %v2193 = vld [vmem:[#allocation3 + $0x18] sm:$0xff]
      %v2194 = vld [vmem:[#allocation3 + $0x20] sm:$0xff]
      %v2195 = vld [vmem:[#allocation3 + $0x28] sm:$0xff]
      %v2196 = vld [vmem:[#allocation3 + $0x30] sm:$0xff]
      %v2197 = vld [vmem:[#allocation3 + $0x38] sm:$0xff]
      %v2198 = vld [vmem:[#allocation3 + $0x40] sm:$0xff]
      %v2199 = vld [vmem:[#allocation3 + $0x48] sm:$0xff]
      %v2200 = vld [vmem:[#allocation3 + $0x50] sm:$0xff]
      %v2201 = vld [vmem:[#allocation3 + $0x58] sm:$0xff]
      %v2202 = vld [vmem:[#allocation3 + $0x60] sm:$0xff]
      %v2203 = vld [vmem:[#allocation3 + $0x68] sm:$0xff]
      %v2204 = vld [vmem:[#allocation3 + $0x70] sm:$0xff]
      %v2205 = vld [vmem:[#allocation3 + $0x78] sm:$0xff]
      %v2206 = vadd.f32 %v2190, %v2128
      %v2207 = vadd.f32 %v2191, %v2131
      %v2208 = vadd.f32 %v2192, %v2136
      %v2209 = vadd.f32 %v2193, %v2139
      %v2210 = vadd.f32 %v2194, %v2144
      %v2211 = vadd.f32 %v2195, %v2147
      %v2212 = vadd.f32 %v2196, %v2152
      %v2213 = vadd.f32 %v2197, %v2155
      %v2214 = vadd.f32 %v2198, %v2160
      %v2215 = vadd.f32 %v2199, %v2163
      %v2216 = vadd.f32 %v2200, %v2168
      %v2217 = vadd.f32 %v2201, %v2171
      %v2218 = vadd.f32 %v2202, %v2176
      %v2219 = vadd.f32 %v2203, %v2179
      %v2220 = vadd.f32 %v2204, %v2184
      %v2221 = vadd.f32 %v2205, %v2187
      %2222 = vst.msk [vmem:[#allocation3] sm:$0xff] %vm653, %v2206
      %2223 = vst.msk [vmem:[#allocation3 + $0x8] sm:$0xff] %vm653, %v2207
      %2224 = vst.msk [vmem:[#allocation3 + $0x10] sm:$0xff] %vm653, %v2208
      %2225 = vst.msk [vmem:[#allocation3 + $0x18] sm:$0xff] %vm653, %v2209
      %2226 = vst.msk [vmem:[#allocation3 + $0x20] sm:$0xff] %vm653, %v2210
      %2227 = vst.msk [vmem:[#allocation3 + $0x28] sm:$0xff] %vm653, %v2211
      %2228 = vst.msk [vmem:[#allocation3 + $0x30] sm:$0xff] %vm653, %v2212
      %2229 = vst.msk [vmem:[#allocation3 + $0x38] sm:$0xff] %vm653, %v2213
      %2230 = vst.msk [vmem:[#allocation3 + $0x40] sm:$0xff] %vm653, %v2214
      %2231 = vst.msk [vmem:[#allocation3 + $0x48] sm:$0xff] %vm653, %v2215
      %2232 = vst.msk [vmem:[#allocation3 + $0x50] sm:$0xff] %vm653, %v2216
      %2233 = vst.msk [vmem:[#allocation3 + $0x58] sm:$0xff] %vm653, %v2217
      %2234 = vst.msk [vmem:[#allocation3 + $0x60] sm:$0xff] %vm653, %v2218
      %2235 = vst.msk [vmem:[#allocation3 + $0x68] sm:$0xff] %vm653, %v2219
      %2236 = vst.msk [vmem:[#allocation3 + $0x70] sm:$0xff] %vm653, %v2220
      %2237 = vst.msk [vmem:[#allocation3 + $0x78] sm:$0xff] %vm653, %v2221
      %v2238 = vld [vmem:[#allocation2 + $0x10] sm:$0xf]
      %v2239 = vld [vmem:[#allocation2 + $0x14] sm:$0xf]
      %v2240 = vld [vmem:[#allocation2 + $0x18] sm:$0xf]
      %v2241 = vld [vmem:[#allocation2 + $0x1c] sm:$0xf]
      %v2242 = vld [vmem:[#allocation2 + $0x20] sm:$0xf]
      %v2243 = vld [vmem:[#allocation2 + $0x24] sm:$0xf]
      %v2244 = vld [vmem:[#allocation2 + $0x28] sm:$0xf]
      %v2245 = vld [vmem:[#allocation2 + $0x2c] sm:$0xf]
      %v2246 = vld [vmem:[#allocation2 + $0x30] sm:$0xf]
      %v2247 = vld [vmem:[#allocation2 + $0x34] sm:$0xf]
      %v2248 = vld [vmem:[#allocation2 + $0x38] sm:$0xf]
      %v2249 = vld [vmem:[#allocation2 + $0x3c] sm:$0xf]
      %v2250 = vld [vmem:[#allocation2 + $0x40] sm:$0xf]
      %v2251 = vld [vmem:[#allocation2 + $0x44] sm:$0xf]
      %v2252 = vld [vmem:[#allocation2 + $0x48] sm:$0xf]
      %v2253 = vld [vmem:[#allocation2 + $0x4c] sm:$0xf]
      %v2254 = vld [vmem:[#allocation2 + $0x50] sm:$0x1]
      %s2255 = scalar_lea.vmem %s1, 14
      %v2256 = vld [vmem:[%s2255] sm:$0x3]
      %v2274 = vunpack.c.l.b16 %v2238
      %v2275 = vunpack.c.l.b16 %v2239
      %v2276 = vunpack.c.l.b16 %v2240
      %v2277 = vunpack.c.l.b16 %v2241
      %v2278 = vunpack.c.l.b16 %v2242
      %v2279 = vunpack.c.l.b16 %v2243
      %v2280 = vunpack.c.l.b16 %v2244
      %v2281 = vunpack.c.l.b16 %v2245
      %v2282 = vunpack.c.l.b16 %v2246
      %v2283 = vunpack.c.l.b16 %v2247
      %v2284 = vunpack.c.l.b16 %v2248
      %v2285 = vunpack.c.l.b16 %v2249
      %v2286 = vunpack.c.l.b16 %v2250
      %v2287 = vunpack.c.l.b16 %v2251
      %v2288 = vunpack.c.l.b16 %v2252
      %v2289 = vunpack.c.l.b16 %v2253
      %v2290 = vunpack.c.l.b16 %v2254
      %v2291 = vpack.c.b16 %v2275, %v2274
      %v2292 = vpack.c.b16 %v2277, %v2276
      %v2293 = vpack.c.b16 %v2279, %v2278
      %v2294 = vpack.c.b16 %v2281, %v2280
      %v2295 = vpack.c.b16 %v2283, %v2282
      %v2296 = vpack.c.b16 %v2285, %v2284
      %v2297 = vpack.c.b16 %v2287, %v2286
      %v2298 = vpack.c.b16 %v2289, %v2288
      %v2299 = vpack.c.b16 %v2290, %v2290
      %v2301 = vshrl.u32 %v2291, 16
      %v2303 = vshll.u32 %v2291, 16
      %v2305 = vrot.slane %v2303, 1
      %v2306 = vor.u32 %v2301, %v2305
      %v2308 = vshll.u32 %v2292, 16
      %v2310 = vrot.slane %v2308, 1
      %v2311 = vsel %vm732, %v2306, %v2310
      %v2312 = vshrl.u32 %v2292, 16
      %v2314 = vor.u32 %v2312, %v2310
      %v2316 = vshll.u32 %v2293, 16
      %v2318 = vrot.slane %v2316, 1
      %v2319 = vsel %vm732, %v2314, %v2318
      %v2320 = vshrl.u32 %v2293, 16
      %v2322 = vor.u32 %v2320, %v2318
      %v2324 = vshll.u32 %v2294, 16
      %v2326 = vrot.slane %v2324, 1
      %v2327 = vsel %vm732, %v2322, %v2326
      %v2328 = vshrl.u32 %v2294, 16
      %v2330 = vor.u32 %v2328, %v2326
      %v2332 = vshll.u32 %v2295, 16
      %v2334 = vrot.slane %v2332, 1
      %v2335 = vsel %vm732, %v2330, %v2334
      %v2336 = vshrl.u32 %v2295, 16
      %v2338 = vor.u32 %v2336, %v2334
      %v2340 = vshll.u32 %v2296, 16
      %v2342 = vrot.slane %v2340, 1
      %v2343 = vsel %vm732, %v2338, %v2342
      %v2344 = vshrl.u32 %v2296, 16
      %v2346 = vor.u32 %v2344, %v2342
      %v2348 = vshll.u32 %v2297, 16
      %v2350 = vrot.slane %v2348, 1
      %v2351 = vsel %vm732, %v2346, %v2350
      %v2352 = vshrl.u32 %v2297, 16
      %v2354 = vor.u32 %v2352, %v2350
      %v2356 = vshll.u32 %v2298, 16
      %v2358 = vrot.slane %v2356, 1
      %v2359 = vsel %vm732, %v2354, %v2358
      %v2360 = vshrl.u32 %v2298, 16
      %v2362 = vor.u32 %v2360, %v2358
      %v2364 = vshll.u32 %v2299, 16
      %v2366 = vrot.slane %v2364, 1
      %v2367 = vsel %vm732, %v2362, %v2366
      %v2369 = vsel %vm527, %v2311, 0
      %v2372 = vsel %vm527, %v2319, 0
      %v2375 = vsel %vm527, %v2327, 0
      %v2378 = vsel %vm527, %v2335, 0
      %v2381 = vsel %vm527, %v2343, 0
      %v2384 = vsel %vm527, %v2351, 0
      %v2387 = vsel %vm527, %v2359, 0
      %v2390 = vsel %vm527, %v2367, 0
      %v2393 = vsel %vm552, %v2256, 0
      %2395 = vmatprep.subr.bf16.mxu0 0
      %2396 = vmatpush1.bf16.msra.mxu0 %v2393
      %2397 = vmatprep.subr.bf16.mxu0 0
      %2398 = vmatpush1.bf16.msra.mxu0 0
      %2399 = vmatprep.subr.bf16.mxu0 0
      %2400 = vmatpush1.bf16.msra.mxu0 0
      %2401 = vmatprep.subr.bf16.mxu0 0
      %2402 = vmatpush1.bf16.msra.mxu0 0
      %2403 = vmatprep.subr.bf16.mxu0 0
      %2404 = vmatpush1.bf16.msra.mxu0 0
      %2405 = vmatprep.subr.bf16.mxu0 0
      %2406 = vmatpush1.bf16.msra.mxu0 0
      %2407 = vmatprep.subr.bf16.mxu0 0
      %2408 = vmatpush1.bf16.msra.mxu0 0
      %2409 = vmatprep.subr.bf16.mxu0 0
      %2410 = vmatpush1.bf16.msra.mxu0 0
      %2411 = vmatprep.subr.bf16.mxu0 0
      %2412 = vmatpush1.bf16.msra.mxu0 0
      %2413 = vmatprep.subr.bf16.mxu0 0
      %2414 = vmatpush1.bf16.msra.mxu0 0
      %2415 = vmatprep.subr.bf16.mxu0 0
      %2416 = vmatpush1.bf16.msra.mxu0 0
      %2417 = vmatprep.subr.bf16.mxu0 0
      %2418 = vmatpush1.bf16.msra.mxu0 0
      %2419 = vmatprep.subr.bf16.mxu0 0
      %2420 = vmatpush1.bf16.msra.mxu0 0
      %2421 = vmatprep.subr.bf16.mxu0 0
      %2422 = vmatpush1.bf16.msra.mxu0 0
      %2423 = vmatprep.subr.bf16.mxu0 0
      %2424 = vmatpush1.bf16.msra.mxu0 0
      %2425 = vmatprep.subr.bf16.mxu0 0
      %2426 = vmatpush1.bf16.msra.mxu0 0
      %2427 = vmatprep.mubr.bf16.mxu0 0
      %2428 = vmatmul.mubr.bf16.gmra.mrb[0].mxu0 %v2369
      %v2429 = vpop.f32.mrb[0].mxu0
      %v2430 = vadd.f32 0.0, %v2429
      %v2431 = vpop.f32.mrb[0].mxu0
      %v2432 = vpop.f32.mrb[0].mxu0
      %v2433 = vadd.f32 0.0, %v2432
      %v2434 = vpop.f32.mrb[0].mxu0
      %2435 = vmatprep.mubr.bf16.mxu0 0
      %2436 = vmatmul.mubr.bf16.gmra.mrb[0].mxu0 %v2372
      %v2437 = vpop.f32.mrb[0].mxu0
      %v2438 = vadd.f32 0.0, %v2437
      %v2439 = vpop.f32.mrb[0].mxu0
      %v2440 = vpop.f32.mrb[0].mxu0
      %v2441 = vadd.f32 0.0, %v2440
      %v2442 = vpop.f32.mrb[0].mxu0
      %2443 = vmatprep.mubr.bf16.mxu0 0
      %2444 = vmatmul.mubr.bf16.gmra.mrb[0].mxu0 %v2375
      %v2445 = vpop.f32.mrb[0].mxu0
      %v2446 = vadd.f32 0.0, %v2445
      %v2447 = vpop.f32.mrb[0].mxu0
      %v2448 = vpop.f32.mrb[0].mxu0
      %v2449 = vadd.f32 0.0, %v2448
      %v2450 = vpop.f32.mrb[0].mxu0
      %2451 = vmatprep.mubr.bf16.mxu0 0
      %2452 = vmatmul.mubr.bf16.gmra.mrb[0].mxu0 %v2378
      %v2453 = vpop.f32.mrb[0].mxu0
      %v2454 = vadd.f32 0.0, %v2453
      %v2455 = vpop.f32.mrb[0].mxu0
      %v2456 = vpop.f32.mrb[0].mxu0
      %v2457 = vadd.f32 0.0, %v2456
      %v2458 = vpop.f32.mrb[0].mxu0
      %2459 = vmatprep.mubr.bf16.mxu0 0
      %2460 = vmatmul.mubr.bf16.gmra.mrb[0].mxu0 %v2381
      %v2461 = vpop.f32.mrb[0].mxu0
      %v2462 = vadd.f32 0.0, %v2461
      %v2463 = vpop.f32.mrb[0].mxu0
      %v2464 = vpop.f32.mrb[0].mxu0
      %v2465 = vadd.f32 0.0, %v2464
      %v2466 = vpop.f32.mrb[0].mxu0
      %2467 = vmatprep.mubr.bf16.mxu0 0
      %2468 = vmatmul.mubr.bf16.gmra.mrb[0].mxu0 %v2384
      %v2469 = vpop.f32.mrb[0].mxu0
      %v2470 = vadd.f32 0.0, %v2469
      %v2471 = vpop.f32.mrb[0].mxu0
      %v2472 = vpop.f32.mrb[0].mxu0
      %v2473 = vadd.f32 0.0, %v2472
      %v2474 = vpop.f32.mrb[0].mxu0
      %2475 = vmatprep.mubr.bf16.mxu0 0
      %2476 = vmatmul.mubr.bf16.gmra.mrb[0].mxu0 %v2387
      %v2477 = vpop.f32.mrb[0].mxu0
      %v2478 = vadd.f32 0.0, %v2477
      %v2479 = vpop.f32.mrb[0].mxu0
      %v2480 = vpop.f32.mrb[0].mxu0
      %v2481 = vadd.f32 0.0, %v2480
      %v2482 = vpop.f32.mrb[0].mxu0
      %2483 = vmatprep.mubr.bf16.mxu0 0
      %2484 = vmatmul.mubr.bf16.gmra.mrb[0].mxu0 %v2390
      %v2485 = vpop.f32.mrb[0].mxu0
      %v2486 = vadd.f32 0.0, %v2485
      %v2487 = vpop.f32.mrb[0].mxu0
      %v2488 = vpop.f32.mrb[0].mxu0
      %v2489 = vadd.f32 0.0, %v2488
      %v2490 = vpop.f32.mrb[0].mxu0
      %2491 = vdwg.mxu0
      %v2492 = vld [vmem:[#allocation3] sm:$0xff]
      %v2493 = vld [vmem:[#allocation3 + $0x8] sm:$0xff]
      %v2494 = vld [vmem:[#allocation3 + $0x10] sm:$0xff]
      %v2495 = vld [vmem:[#allocation3 + $0x18] sm:$0xff]
      %v2496 = vld [vmem:[#allocation3 + $0x20] sm:$0xff]
      %v2497 = vld [vmem:[#allocation3 + $0x28] sm:$0xff]
      %v2498 = vld [vmem:[#allocation3 + $0x30] sm:$0xff]
      %v2499 = vld [vmem:[#allocation3 + $0x38] sm:$0xff]
      %v2500 = vld [vmem:[#allocation3 + $0x40] sm:$0xff]
      %v2501 = vld [vmem:[#allocation3 + $0x48] sm:$0xff]
      %v2502 = vld [vmem:[#allocation3 + $0x50] sm:$0xff]
      %v2503 = vld [vmem:[#allocation3 + $0x58] sm:$0xff]
      %v2504 = vld [vmem:[#allocation3 + $0x60] sm:$0xff]
      %v2505 = vld [vmem:[#allocation3 + $0x68] sm:$0xff]
      %v2506 = vld [vmem:[#allocation3 + $0x70] sm:$0xff]
      %v2507 = vld [vmem:[#allocation3 + $0x78] sm:$0xff]
      %v2508 = vadd.f32 %v2492, %v2430
      %v2509 = vadd.f32 %v2493, %v2433
      %v2510 = vadd.f32 %v2494, %v2438
      %v2511 = vadd.f32 %v2495, %v2441
      %v2512 = vadd.f32 %v2496, %v2446
      %v2513 = vadd.f32 %v2497, %v2449
      %v2514 = vadd.f32 %v2498, %v2454
      %v2515 = vadd.f32 %v2499, %v2457
      %v2516 = vadd.f32 %v2500, %v2462
      %v2517 = vadd.f32 %v2501, %v2465
      %v2518 = vadd.f32 %v2502, %v2470
      %v2519 = vadd.f32 %v2503, %v2473
      %v2520 = vadd.f32 %v2504, %v2478
      %v2521 = vadd.f32 %v2505, %v2481
      %v2522 = vadd.f32 %v2506, %v2486
      %v2523 = vadd.f32 %v2507, %v2489
      %2524 = vst.msk [vmem:[#allocation3] sm:$0xff] %vm653, %v2508
      %2525 = vst.msk [vmem:[#allocation3 + $0x8] sm:$0xff] %vm653, %v2509
      %2526 = vst.msk [vmem:[#allocation3 + $0x10] sm:$0xff] %vm653, %v2510
      %2527 = vst.msk [vmem:[#allocation3 + $0x18] sm:$0xff] %vm653, %v2511
      %2528 = vst.msk [vmem:[#allocation3 + $0x20] sm:$0xff] %vm653, %v2512
      %2529 = vst.msk [vmem:[#allocation3 + $0x28] sm:$0xff] %vm653, %v2513
      %2530 = vst.msk [vmem:[#allocation3 + $0x30] sm:$0xff] %vm653, %v2514
      %2531 = vst.msk [vmem:[#allocation3 + $0x38] sm:$0xff] %vm653, %v2515
      %2532 = vst.msk [vmem:[#allocation3 + $0x40] sm:$0xff] %vm653, %v2516
      %2533 = vst.msk [vmem:[#allocation3 + $0x48] sm:$0xff] %vm653, %v2517
      %2534 = vst.msk [vmem:[#allocation3 + $0x50] sm:$0xff] %vm653, %v2518
      %2535 = vst.msk [vmem:[#allocation3 + $0x58] sm:$0xff] %vm653, %v2519
      %2536 = vst.msk [vmem:[#allocation3 + $0x60] sm:$0xff] %vm653, %v2520
      %2537 = vst.msk [vmem:[#allocation3 + $0x68] sm:$0xff] %vm653, %v2521
      %2538 = vst.msk [vmem:[#allocation3 + $0x70] sm:$0xff] %vm653, %v2522
      %2539 = vst.msk [vmem:[#allocation3 + $0x78] sm:$0xff] %vm653, %v2523
      %v2540 = vld [vmem:[#allocation2 + $0x10] sm:$0xe]
      %v2541 = vld [vmem:[#allocation2 + $0x14] sm:$0xf]
      %v2542 = vld [vmem:[#allocation2 + $0x18] sm:$0xf]
      %v2543 = vld [vmem:[#allocation2 + $0x1c] sm:$0xf]
      %v2544 = vld [vmem:[#allocation2 + $0x20] sm:$0xf]
      %v2545 = vld [vmem:[#allocation2 + $0x24] sm:$0xf]
      %v2546 = vld [vmem:[#allocation2 + $0x28] sm:$0xf]
      %v2547 = vld [vmem:[#allocation2 + $0x2c] sm:$0xf]
      %v2548 = vld [vmem:[#allocation2 + $0x30] sm:$0xf]
      %v2549 = vld [vmem:[#allocation2 + $0x34] sm:$0xf]
      %v2550 = vld [vmem:[#allocation2 + $0x38] sm:$0xf]
      %v2551 = vld [vmem:[#allocation2 + $0x3c] sm:$0xf]
      %v2552 = vld [vmem:[#allocation2 + $0x40] sm:$0xf]
      %v2553 = vld [vmem:[#allocation2 + $0x44] sm:$0xf]
      %v2554 = vld [vmem:[#allocation2 + $0x48] sm:$0xf]
      %v2555 = vld [vmem:[#allocation2 + $0x4c] sm:$0xf]
      %v2556 = vld [vmem:[#allocation2 + $0x50] sm:$0x1]
      %s2557 = scalar_lea.vmem %s1, 16
      %v2558 = vld [vmem:[%s2557] sm:$0x3]
      %v2576 = vunpack.c.l.b16 %v2540
      %v2577 = vunpack.c.l.b16 %v2541
      %v2578 = vunpack.c.l.b16 %v2542
      %v2579 = vunpack.c.l.b16 %v2543
      %v2580 = vunpack.c.l.b16 %v2544
      %v2581 = vunpack.c.l.b16 %v2545
      %v2582 = vunpack.c.l.b16 %v2546
      %v2583 = vunpack.c.l.b16 %v2547
      %v2584 = vunpack.c.l.b16 %v2548
      %v2585 = vunpack.c.l.b16 %v2549
      %v2586 = vunpack.c.l.b16 %v2550
      %v2587 = vunpack.c.l.b16 %v2551
      %v2588 = vunpack.c.l.b16 %v2552
      %v2589 = vunpack.c.l.b16 %v2553
      %v2590 = vunpack.c.l.b16 %v2554
      %v2591 = vunpack.c.l.b16 %v2555
      %v2592 = vunpack.c.l.b16 %v2556
      %v2593 = vpack.c.b16 %v2577, %v2576
      %v2594 = vpack.c.b16 %v2579, %v2578
      %v2595 = vpack.c.b16 %v2581, %v2580
      %v2596 = vpack.c.b16 %v2583, %v2582
      %v2597 = vpack.c.b16 %v2585, %v2584
      %v2598 = vpack.c.b16 %v2587, %v2586
      %v2599 = vpack.c.b16 %v2589, %v2588
      %v2600 = vpack.c.b16 %v2591, %v2590
      %v2601 = vpack.c.b16 %v2592, %v2592
      %v2602 = vrot.slane %v2593, 1
      %v2603 = vrot.slane %v2594, 1
      %v2604 = vsel %vm1035, %v2602, %v2603
      %v2605 = vrot.slane %v2595, 1
      %v2606 = vsel %vm1035, %v2603, %v2605
      %v2607 = vrot.slane %v2596, 1
      %v2608 = vsel %vm1035, %v2605, %v2607
      %v2609 = vrot.slane %v2597, 1
      %v2610 = vsel %vm1035, %v2607, %v2609
      %v2611 = vrot.slane %v2598, 1
      %v2612 = vsel %vm1035, %v2609, %v2611
      %v2613 = vrot.slane %v2599, 1
      %v2614 = vsel %vm1035, %v2611, %v2613
      %v2615 = vrot.slane %v2600, 1
      %v2616 = vsel %vm1035, %v2613, %v2615
      %v2617 = vrot.slane %v2601, 1
      %v2618 = vsel %vm1035, %v2615, %v2617
      %v2620 = vsel %vm527, %v2604, 0
      %v2623 = vsel %vm527, %v2606, 0
      %v2626 = vsel %vm527, %v2608, 0
      %v2629 = vsel %vm527, %v2610, 0
      %v2632 = vsel %vm527, %v2612, 0
      %v2635 = vsel %vm527, %v2614, 0
      %v2638 = vsel %vm527, %v2616, 0
      %v2641 = vsel %vm527, %v2618, 0
      %v2644 = vsel %vm552, %v2558, 0
      %2646 = vmatprep.subr.bf16.mxu0 0
      %2647 = vmatpush1.bf16.msra.mxu0 %v2644
      %2648 = vmatprep.subr.bf16.mxu0 0
      %2649 = vmatpush1.bf16.msra.mxu0 0
      %2650 = vmatprep.subr.bf16.mxu0 0
      %2651 = vmatpush1.bf16.msra.mxu0 0
      %2652 = vmatprep.subr.bf16.mxu0 0
      %2653 = vmatpush1.bf16.msra.mxu0 0
      %2654 = vmatprep.subr.bf16.mxu0 0
      %2655 = vmatpush1.bf16.msra.mxu0 0
      %2656 = vmatprep.subr.bf16.mxu0 0
      %2657 = vmatpush1.bf16.msra.mxu0 0
      %2658 = vmatprep.subr.bf16.mxu0 0
      %2659 = vmatpush1.bf16.msra.mxu0 0
      %2660 = vmatprep.subr.bf16.mxu0 0
      %2661 = vmatpush1.bf16.msra.mxu0 0
      %2662 = vmatprep.subr.bf16.mxu0 0
      %2663 = vmatpush1.bf16.msra.mxu0 0
      %2664 = vmatprep.subr.bf16.mxu0 0
      %2665 = vmatpush1.bf16.msra.mxu0 0
      %2666 = vmatprep.subr.bf16.mxu0 0
      %2667 = vmatpush1.bf16.msra.mxu0 0
      %2668 = vmatprep.subr.bf16.mxu0 0
      %2669 = vmatpush1.bf16.msra.mxu0 0
      %2670 = vmatprep.subr.bf16.mxu0 0
      %2671 = vmatpush1.bf16.msra.mxu0 0
      %2672 = vmatprep.subr.bf16.mxu0 0
      %2673 = vmatpush1.bf16.msra.mxu0 0
      %2674 = vmatprep.subr.bf16.mxu0 0
      %2675 = vmatpush1.bf16.msra.mxu0 0
      %2676 = vmatprep.subr.bf16.mxu0 0
      %2677 = vmatpush1.bf16.msra.mxu0 0
      %2678 = vmatprep.mubr.bf16.mxu0 0
      %2679 = vmatmul.mubr.bf16.gmra.mrb[0].mxu0 %v2620
      %v2680 = vpop.f32.mrb[0].mxu0
      %v2681 = vadd.f32 0.0, %v2680
      %v2682 = vpop.f32.mrb[0].mxu0
      %v2683 = vpop.f32.mrb[0].mxu0
      %v2684 = vadd.f32 0.0, %v2683
      %v2685 = vpop.f32.mrb[0].mxu0
      %2686 = vmatprep.mubr.bf16.mxu0 0
      %2687 = vmatmul.mubr.bf16.gmra.mrb[0].mxu0 %v2623
      %v2688 = vpop.f32.mrb[0].mxu0
      %v2689 = vadd.f32 0.0, %v2688
      %v2690 = vpop.f32.mrb[0].mxu0
      %v2691 = vpop.f32.mrb[0].mxu0
      %v2692 = vadd.f32 0.0, %v2691
      %v2693 = vpop.f32.mrb[0].mxu0
      %2694 = vmatprep.mubr.bf16.mxu0 0
      %2695 = vmatmul.mubr.bf16.gmra.mrb[0].mxu0 %v2626
      %v2696 = vpop.f32.mrb[0].mxu0
      %v2697 = vadd.f32 0.0, %v2696
      %v2698 = vpop.f32.mrb[0].mxu0
      %v2699 = vpop.f32.mrb[0].mxu0
      %v2700 = vadd.f32 0.0, %v2699
      %v2701 = vpop.f32.mrb[0].mxu0
      %2702 = vmatprep.mubr.bf16.mxu0 0
      %2703 = vmatmul.mubr.bf16.gmra.mrb[0].mxu0 %v2629
      %v2704 = vpop.f32.mrb[0].mxu0
      %v2705 = vadd.f32 0.0, %v2704
      %v2706 = vpop.f32.mrb[0].mxu0
      %v2707 = vpop.f32.mrb[0].mxu0
      %v2708 = vadd.f32 0.0, %v2707
      %v2709 = vpop.f32.mrb[0].mxu0
      %2710 = vmatprep.mubr.bf16.mxu0 0
      %2711 = vmatmul.mubr.bf16.gmra.mrb[0].mxu0 %v2632
      %v2712 = vpop.f32.mrb[0].mxu0
      %v2713 = vadd.f32 0.0, %v2712
      %v2714 = vpop.f32.mrb[0].mxu0
      %v2715 = vpop.f32.mrb[0].mxu0
      %v2716 = vadd.f32 0.0, %v2715
      %v2717 = vpop.f32.mrb[0].mxu0
      %2718 = vmatprep.mubr.bf16.mxu0 0
      %2719 = vmatmul.mubr.bf16.gmra.mrb[0].mxu0 %v2635
      %v2720 = vpop.f32.mrb[0].mxu0
      %v2721 = vadd.f32 0.0, %v2720
      %v2722 = vpop.f32.mrb[0].mxu0
      %v2723 = vpop.f32.mrb[0].mxu0
      %v2724 = vadd.f32 0.0, %v2723
      %v2725 = vpop.f32.mrb[0].mxu0
      %2726 = vmatprep.mubr.bf16.mxu0 0
      %2727 = vmatmul.mubr.bf16.gmra.mrb[0].mxu0 %v2638
      %v2728 = vpop.f32.mrb[0].mxu0
      %v2729 = vadd.f32 0.0, %v2728
      %v2730 = vpop.f32.mrb[0].mxu0
      %v2731 = vpop.f32.mrb[0].mxu0
      %v2732 = vadd.f32 0.0, %v2731
      %v2733 = vpop.f32.mrb[0].mxu0
      %2734 = vmatprep.mubr.bf16.mxu0 0
      %2735 = vmatmul.mubr.bf16.gmra.mrb[0].mxu0 %v2641
      %v2736 = vpop.f32.mrb[0].mxu0
      %v2737 = vadd.f32 0.0, %v2736
      %v2738 = vpop.f32.mrb[0].mxu0
      %v2739 = vpop.f32.mrb[0].mxu0
      %v2740 = vadd.f32 0.0, %v2739
      %v2741 = vpop.f32.mrb[0].mxu0
      %2742 = vdwg.mxu0
      %v2743 = vld [vmem:[#allocation3] sm:$0xff]
      %v2744 = vld [vmem:[#allocation3 + $0x8] sm:$0xff]
      %v2745 = vld [vmem:[#allocation3 + $0x10] sm:$0xff]
      %v2746 = vld [vmem:[#allocation3 + $0x18] sm:$0xff]
      %v2747 = vld [vmem:[#allocation3 + $0x20] sm:$0xff]
      %v2748 = vld [vmem:[#allocation3 + $0x28] sm:$0xff]
      %v2749 = vld [vmem:[#allocation3 + $0x30] sm:$0xff]
      %v2750 = vld [vmem:[#allocation3 + $0x38] sm:$0xff]
      %v2751 = vld [vmem:[#allocation3 + $0x40] sm:$0xff]
      %v2752 = vld [vmem:[#allocation3 + $0x48] sm:$0xff]
      %v2753 = vld [vmem:[#allocation3 + $0x50] sm:$0xff]
      %v2754 = vld [vmem:[#allocation3 + $0x58] sm:$0xff]
      %v2755 = vld [vmem:[#allocation3 + $0x60] sm:$0xff]
      %v2756 = vld [vmem:[#allocation3 + $0x68] sm:$0xff]
      %v2757 = vld [vmem:[#allocation3 + $0x70] sm:$0xff]
      %v2758 = vld [vmem:[#allocation3 + $0x78] sm:$0xff]
      %v2759 = vadd.f32 %v2743, %v2681
      %v2760 = vadd.f32 %v2744, %v2684
      %v2761 = vadd.f32 %v2745, %v2689
      %v2762 = vadd.f32 %v2746, %v2692
      %v2763 = vadd.f32 %v2747, %v2697
      %v2764 = vadd.f32 %v2748, %v2700
      %v2765 = vadd.f32 %v2749, %v2705
      %v2766 = vadd.f32 %v2750, %v2708
      %v2767 = vadd.f32 %v2751, %v2713
      %v2768 = vadd.f32 %v2752, %v2716
      %v2769 = vadd.f32 %v2753, %v2721
      %v2770 = vadd.f32 %v2754, %v2724
      %v2771 = vadd.f32 %v2755, %v2729
      %v2772 = vadd.f32 %v2756, %v2732
      %v2773 = vadd.f32 %v2757, %v2737
      %v2774 = vadd.f32 %v2758, %v2740
      %2775 = vst.msk [vmem:[#allocation3] sm:$0xff] %vm653, %v2759
      %2776 = vst.msk [vmem:[#allocation3 + $0x8] sm:$0xff] %vm653, %v2760
      %2777 = vst.msk [vmem:[#allocation3 + $0x10] sm:$0xff] %vm653, %v2761
      %2778 = vst.msk [vmem:[#allocation3 + $0x18] sm:$0xff] %vm653, %v2762
      %2779 = vst.msk [vmem:[#allocation3 + $0x20] sm:$0xff] %vm653, %v2763
      %2780 = vst.msk [vmem:[#allocation3 + $0x28] sm:$0xff] %vm653, %v2764
      %2781 = vst.msk [vmem:[#allocation3 + $0x30] sm:$0xff] %vm653, %v2765
      %2782 = vst.msk [vmem:[#allocation3 + $0x38] sm:$0xff] %vm653, %v2766
      %2783 = vst.msk [vmem:[#allocation3 + $0x40] sm:$0xff] %vm653, %v2767
      %2784 = vst.msk [vmem:[#allocation3 + $0x48] sm:$0xff] %vm653, %v2768
      %2785 = vst.msk [vmem:[#allocation3 + $0x50] sm:$0xff] %vm653, %v2769
      %2786 = vst.msk [vmem:[#allocation3 + $0x58] sm:$0xff] %vm653, %v2770
      %2787 = vst.msk [vmem:[#allocation3 + $0x60] sm:$0xff] %vm653, %v2771
      %2788 = vst.msk [vmem:[#allocation3 + $0x68] sm:$0xff] %vm653, %v2772
      %2789 = vst.msk [vmem:[#allocation3 + $0x70] sm:$0xff] %vm653, %v2773
      %2790 = vst.msk [vmem:[#allocation3 + $0x78] sm:$0xff] %vm653, %v2774
      %v2791 = vld [vmem:[#allocation3] sm:$0xff]
      %v2792 = vld [vmem:[#allocation3 + $0x10] sm:$0xff]
      %v2793 = vld [vmem:[#allocation3 + $0x20] sm:$0xff]
      %v2794 = vld [vmem:[#allocation3 + $0x30] sm:$0xff]
      %v2795 = vld [vmem:[#allocation3 + $0x40] sm:$0xff]
      %v2796 = vld [vmem:[#allocation3 + $0x50] sm:$0xff]
      %v2797 = vld [vmem:[#allocation3 + $0x60] sm:$0xff]
      %v2798 = vld [vmem:[#allocation3 + $0x70] sm:$0xff]
      %v2799 = vsel %vm653, %v2791, 0.0
      %v2800 = vsel %vm653, %v2792, 0.0
      %v2801 = vadd.f32 %v2799, %v2800
      %v2802 = vsel %vm653, %v2793, 0.0
      %v2803 = vadd.f32 %v2801, %v2802
      %v2804 = vsel %vm653, %v2794, 0.0
      %v2805 = vadd.f32 %v2803, %v2804
      %v2806 = vsel %vm653, %v2795, 0.0
      %v2807 = vadd.f32 %v2805, %v2806
      %v2808 = vsel %vm653, %v2796, 0.0
      %v2809 = vadd.f32 %v2807, %v2808
      %v2810 = vsel %vm653, %v2797, 0.0
      %v2811 = vadd.f32 %v2809, %v2810
      %v2812 = vsel %vm653, %v2798, 0.0
      %v2813 = vadd.f32 %v2811, %v2812
      %v2814 = vrot.slane %v2813, 4
      %v2815 = vadd.f32 %v2813, %v2814
      %v2816 = vrot.slane %v2815, 2
      %v2817 = vadd.f32 %v2815, %v2816
      %v2818 = vrot.slane %v2817, 1
      %v2819 = vadd.f32 %v2817, %v2818
      %vm2820 = vcmask 57344
      %2821 = vst.msk [vmem:[%s181] sm:$0x1] %vm2820, %v2819
      %v2822 = vmul.f32 %v2791, %v2791
      %v2823 = vmul.f32 %v2792, %v2792
      %v2824 = vmul.f32 %v2793, %v2793
      %v2825 = vmul.f32 %v2794, %v2794
      %v2826 = vmul.f32 %v2795, %v2795
      %v2827 = vmul.f32 %v2796, %v2796
      %v2828 = vmul.f32 %v2797, %v2797
      %v2829 = vmul.f32 %v2798, %v2798
      %v2830 = vsel %vm653, %v2822, 0.0
      %v2831 = vsel %vm653, %v2823, 0.0
      %v2832 = vadd.f32 %v2830, %v2831
      %v2833 = vsel %vm653, %v2824, 0.0
      %v2834 = vadd.f32 %v2832, %v2833
      %v2835 = vsel %vm653, %v2825, 0.0
      %v2836 = vadd.f32 %v2834, %v2835
      %v2837 = vsel %vm653, %v2826, 0.0
      %v2838 = vadd.f32 %v2836, %v2837
      %v2839 = vsel %vm653, %v2827, 0.0
      %v2840 = vadd.f32 %v2838, %v2839
      %v2841 = vsel %vm653, %v2828, 0.0
      %v2842 = vadd.f32 %v2840, %v2841
      %v2843 = vsel %vm653, %v2829, 0.0
      %v2844 = vadd.f32 %v2842, %v2843
      %v2845 = vrot.slane %v2844, 4
      %v2846 = vadd.f32 %v2844, %v2845
      %v2847 = vrot.slane %v2846, 2
      %v2848 = vadd.f32 %v2846, %v2847
      %v2849 = vrot.slane %v2848, 1
      %v2850 = vadd.f32 %v2848, %v2849
      %2851 = vst.msk [vmem:[%s181 + $0x1] sm:$0x1] %vm2820, %v2850
      %v2852 = vpack.c.bf16 %v2791, %v2791
      %v2853 = vpack.c.bf16 %v2792, %v2792
      %v2854 = vpack.c.bf16 %v2793, %v2793
      %v2855 = vpack.c.bf16 %v2794, %v2794
      %v2856 = vpack.c.bf16 %v2795, %v2795
      %v2857 = vpack.c.bf16 %v2796, %v2796
      %v2858 = vpack.c.bf16 %v2797, %v2797
      %v2859 = vpack.c.bf16 %v2798, %v2798
      %vm2860 = vcmask 60416
      %2861 = vst.msk [vmem:[%s177] sm:$0xf] %vm2860, %v2852
      %2862 = vst.msk [vmem:[%s177 + $0x4] sm:$0xf] %vm2860, %v2853
      %2863 = vst.msk [vmem:[%s177 + $0x8] sm:$0xf] %vm2860, %v2854
      %2864 = vst.msk [vmem:[%s177 + $0xc] sm:$0xf] %vm2860, %v2855
      %2865 = vst.msk [vmem:[%s177 + $0x10] sm:$0xf] %vm2860, %v2856
      %2866 = vst.msk [vmem:[%s177 + $0x14] sm:$0xf] %vm2860, %v2857
      %2867 = vst.msk [vmem:[%s177 + $0x18] sm:$0xf] %vm2860, %v2858
      %2868 = vst.msk [vmem:[%s177 + $0x1c] sm:$0xf] %vm2860, %v2859
      %p2869 = scmp.lt.s32.totalorder %s15, 1
      %s2870 = scalar_select %p2869, %s15, 1
      %s2871 = smul.addr %s2870, 8
      %s2872 = smul.addr %s2871, 4
      %s2873 = scalar_lea.vmem %s2, %s2872
      %p2874 = scmp.lt.s32.totalorder %s15, 1
      %s2875 = scalar_select %p2874, %s15, 1
      %s2876 = smul.addr %s2875, 2
      %s2877 = scalar_lea.vmem %s3, %s2876
      // Predicated region
      $region29: #{down_forward.3} parent=27 // pred_check
        %p2878 = pneg %p80
      $region30: #{down_forward.3} parent=27 // pred_check_branch
        %2880 = sbr.rel (%p2878) target = $region32
      $region31: #{down_forward.3} parent=27 // pred_region
        _
      $region32: #{down_forward.3} parent=27 // pred_fallthru
        _
      // Predicated region
      $region33: #{down_forward.3} parent=27 // pred_check
        %p2881 = pneg %p106
      $region34: #{down_forward.3} parent=27 // pred_check_branch
        %2883 = sbr.rel (%p2881) target = $region36
      $region35: #{down_forward.3} parent=27 // pred_region
        _
      $region36: #{down_forward.3} parent=27 // pred_fallthru
        _
    $region28: #{down_forward.3} parent=5 // pred_fallthru
      _
    %p2884 = scmp.le.s32.totalorder 2, %s10
    // Predicated region
    $region37: #{down_forward.3} parent=5 // pred_check
      %p2885 = pneg %p2884
    $region38: #{down_forward.3} parent=5 // pred_check_branch
      %2887 = sbr.rel (%p2885) target = $region40
    $region39: #{down_forward.3} parent=5 // pred_region
      %s2888 = ssub.s32 %s10, 2
      // Predicated region
      $region41: #{down_forward.3} parent=39 // pred_check
        %p2889 = pneg %p86
      $region42: #{down_forward.3} parent=39 // pred_check_branch
        %2891 = sbr.rel (%p2889) target = $region44
      $region43: #{down_forward.3} parent=39 // pred_region
        %p2892 = scmp.lt.s32.totalorder %s16, 1
        %s2893 = scalar_select %p2892, %s16, 1
        %s2894 = smul.addr %s2893, 8
        %s2895 = smul.addr %s2894, 4
        %s2896 = scalar_lea.vmem %s2, %s2895
      $region44: #{down_forward.3} parent=39 // pred_fallthru
        _
      // Predicated region
      $region45: #{down_forward.3} parent=39 // pred_check
        %p2897 = pneg %p112
      $region46: #{down_forward.3} parent=39 // pred_check_branch
        %2899 = sbr.rel (%p2897) target = $region48
      $region47: #{down_forward.3} parent=39 // pred_region
        %p2900 = scmp.lt.s32.totalorder %s16, 1
        %s2901 = scalar_select %p2900, %s16, 1
        %s2902 = smul.addr %s2901, 2
        %s2903 = scalar_lea.vmem %s3, %s2902
      $region48: #{down_forward.3} parent=39 // pred_fallthru
        _
    $region40: #{down_forward.3} parent=5 // pred_fallthru
      _
  $region6: #{down_forward.3} parent=0 // loop_footer
    %s14 = sadd.s32 1, %s10
  $region7: #{down_forward.3} parent=0 // loop_footer_branch
    %9 = sbr.rel target = $region3
  $region8: #{down_forward.3} parent=0 // loop_exit
    _

// kernel: down_forward.4
$region0: #{down_forward.4}
  #allocation0 [shape = 'u32[]', space=smem, size = 0x4, offset = 0x4, fixed_abs, tag = 'smem constant byte address 0x4 - core index']
  #allocation1 [shape = 'u32[144,128]{1,0:T(1,128)}', space=vmem, size = 0x12000, scoped, tag = 'internal scratch']
  #allocation2 [shape = 'bf16[168,8]{1,0:T(8,128)(2,1)}', space=vmem, size = 0xa800, scoped, tag = 'scratch operand']
  #allocation3 [shape = 'f32[128,8]{1,0:T(8,128)}', space=vmem, size = 0x10000, scoped, tag = 'scratch operand']
  %s0 = inlined_call_operand.vmem [shape: bf16[2,8,8,8], index: 0, kind: input, shape index: {}]
  %s1 = inlined_call_operand.vmem [shape: f32[1,8], index: 1, kind: input, shape index: {}]
  %s2 = inlined_call_operand.vmem [shape: f32[1,8], index: 2, kind: input, shape index: {}]
  %s3 = inlined_call_operand.vmem [shape: bf16[9,8,8], index: 3, kind: input, shape index: {}]
  %s4 = inlined_call_operand.vmem [shape: bf16[2,8,8,8], index: 4, kind: output, shape index: {0}]
  %s5 = inlined_call_operand.vmem [shape: f32[2,2,8], index: 5, kind: output, shape index: {1}]
  %6 = xla_tuple %s4, %s5
  %s7 = sld [smem:[#allocation0]]
  $region57: #{down_forward.4} parent=0
    _
  %s9 = ssub.s32 1, %s7
  %s10 = scalar_select 0, %s9, %s7
  loop: start=0, step=1, limit=4
  $region2: #{down_forward.4} parent=0 // loop_pre_header
    _
  $region3: #{down_forward.4} parent=0 // loop_header
    %s12 = sphi 0, %s16
    %p13 = scmp.ge.s32.totalorder %s12, 4
    %s22 = sphi 0, %s24
    %s25 = sphi 0, %s22
    %s26 = sphi 0, %s25
    %s42 = sphi 0, %s26
    %s46 = sphi 0, %s46
    %s48 = sphi 0, %s46
    %s49 = sphi 0, %s48
    %s63 = sphi 0, %s49
    %s67 = sphi 0, %s67
    %s69 = sphi 0, %s67
    %s70 = sphi 0, %s69
    %s84 = sphi 0, %s70
    %s88 = sphi 0, %s88
    %s90 = sphi 0, %s88
    %s91 = sphi 0, %s90
    %s105 = sphi 0, %s91
    %s111 = sphi 0, %s113
    %s114 = sphi 0, %s111
    %s115 = sphi 0, %s114
    %s131 = sphi 0, %s115
    %s137 = sphi 0, %s139
    %s140 = sphi 0, %s137
    %s141 = sphi 0, %s140
    %s157 = sphi 0, %s141
  $region4: #{down_forward.4} parent=0 // loop_header_branch
    %15 = sbr.rel (%p13) target = $region8
  $region5: #{down_forward.4} parent=0 // loop_body
    %s17 = ssub.s32 %s12, 1
    %s18 = ssub.s32 %s12, 2
    %s19 = sadd.s32 %s12, 1
    %s20 = ssub.s32 %s12, %s19
    %p21 = scmp.eq.s32.totalorder %s20, 0
    %s23 = sadd.s32 %s22, 1
    %s24 = scalar_select %p21, %s22, %s23
    %p27 = pneg %p21
    %p28 = scmp.eq.s32.totalorder %s12, 1
    %p29 = por %p27, %p28
    %p30 = scmp.ne.s32.totalorder %s22, %s25
    %p31 = scmp.eq.s32.totalorder %s12, 0
    %p32 = por %p30, %p31
    %p33 = scmp.ne.s32.totalorder %s22, %s25
    %p34 = scmp.eq.s32.totalorder %s17, 1
    %p35 = por %p33, %p34
    %p36 = scmp.ne.s32.totalorder %s25, %s26
    %p37 = scmp.eq.s32.totalorder %s17, 0
    %p38 = por %p36, %p37
    %p39 = scmp.ne.s32.totalorder %s25, %s26
    %p40 = scmp.eq.s32.totalorder %s18, 1
    %p41 = por %p39, %p40
    %p43 = scmp.ne.s32.totalorder %s26, %s42
    %p44 = scmp.eq.s32.totalorder %s18, 0
    %p45 = por %p43, %p44
    %s47 = sadd.s32 %s46, 1
    %p50 = scmp.eq.s32.totalorder %s12, 1
    %p51 = scmp.ne.s32.totalorder %s46, %s48
    %p52 = scmp.eq.s32.totalorder %s12, 0
    %p53 = por %p51, %p52
    %p54 = scmp.ne.s32.totalorder %s46, %s48
    %p55 = scmp.eq.s32.totalorder %s17, 1
    %p56 = por %p54, %p55
    %p57 = scmp.ne.s32.totalorder %s48, %s49
    %p58 = scmp.eq.s32.totalorder %s17, 0
    %p59 = por %p57, %p58
    %p60 = scmp.ne.s32.totalorder %s48, %s49
    %p61 = scmp.eq.s32.totalorder %s18, 1
    %p62 = por %p60, %p61
    %p64 = scmp.ne.s32.totalorder %s49, %s63
    %p65 = scmp.eq.s32.totalorder %s18, 0
    %p66 = por %p64, %p65
    %s68 = sadd.s32 %s67, 1
    %p71 = scmp.eq.s32.totalorder %s12, 1
    %p72 = scmp.ne.s32.totalorder %s67, %s69
    %p73 = scmp.eq.s32.totalorder %s12, 0
    %p74 = por %p72, %p73
    %p75 = scmp.ne.s32.totalorder %s67, %s69
    %p76 = scmp.eq.s32.totalorder %s17, 1
    %p77 = por %p75, %p76
    %p78 = scmp.ne.s32.totalorder %s69, %s70
    %p79 = scmp.eq.s32.totalorder %s17, 0
    %p80 = por %p78, %p79
    %p81 = scmp.ne.s32.totalorder %s69, %s70
    %p82 = scmp.eq.s32.totalorder %s18, 1
    %p83 = por %p81, %p82
    %p85 = scmp.ne.s32.totalorder %s70, %s84
    %p86 = scmp.eq.s32.totalorder %s18, 0
    %p87 = por %p85, %p86
    %s89 = sadd.s32 %s88, 1
    %p92 = scmp.eq.s32.totalorder %s12, 1
    %p93 = scmp.ne.s32.totalorder %s88, %s90
    %p94 = scmp.eq.s32.totalorder %s12, 0
    %p95 = por %p93, %p94
    %p96 = scmp.ne.s32.totalorder %s88, %s90
    %p97 = scmp.eq.s32.totalorder %s17, 1
    %p98 = por %p96, %p97
    %p99 = scmp.ne.s32.totalorder %s90, %s91
    %p100 = scmp.eq.s32.totalorder %s17, 0
    %p101 = por %p99, %p100
    %p102 = scmp.ne.s32.totalorder %s90, %s91
    %p103 = scmp.eq.s32.totalorder %s18, 1
    %p104 = por %p102, %p103
    %p106 = scmp.ne.s32.totalorder %s91, %s105
    %p107 = scmp.eq.s32.totalorder %s18, 0
    %p108 = por %p106, %p107
    %s109 = ssub.s32 %s12, %s19
    %p110 = scmp.eq.s32.totalorder %s109, 0
    %s112 = sadd.s32 %s111, 1
    %s113 = scalar_select %p110, %s111, %s112
    %p116 = pneg %p110
    %p117 = scmp.eq.s32.totalorder %s12, 1
    %p118 = por %p116, %p117
    %p119 = scmp.ne.s32.totalorder %s111, %s114
    %p120 = scmp.eq.s32.totalorder %s12, 0
    %p121 = por %p119, %p120
    %p122 = scmp.ne.s32.totalorder %s111, %s114
    %p123 = scmp.eq.s32.totalorder %s17, 1
    %p124 = por %p122, %p123
    %p125 = scmp.ne.s32.totalorder %s114, %s115
    %p126 = scmp.eq.s32.totalorder %s17, 0
    %p127 = por %p125, %p126
    %p128 = scmp.ne.s32.totalorder %s114, %s115
    %p129 = scmp.eq.s32.totalorder %s18, 1
    %p130 = por %p128, %p129
    %p132 = scmp.ne.s32.totalorder %s115, %s131
    %p133 = scmp.eq.s32.totalorder %s18, 0
    %p134 = por %p132, %p133
    %s135 = ssub.s32 %s12, %s19
    %p136 = scmp.eq.s32.totalorder %s135, 0
    %s138 = sadd.s32 %s137, 1
    %s139 = scalar_select %p136, %s137, %s138
    %p142 = pneg %p136
    %p143 = scmp.eq.s32.totalorder %s12, 1
    %p144 = por %p142, %p143
    %p145 = scmp.ne.s32.totalorder %s137, %s140
    %p146 = scmp.eq.s32.totalorder %s12, 0
    %p147 = por %p145, %p146
    %p148 = scmp.ne.s32.totalorder %s137, %s140
    %p149 = scmp.eq.s32.totalorder %s17, 1
    %p150 = por %p148, %p149
    %p151 = scmp.ne.s32.totalorder %s140, %s141
    %p152 = scmp.eq.s32.totalorder %s17, 0
    %p153 = por %p151, %p152
    %p154 = scmp.ne.s32.totalorder %s140, %s141
    %p155 = scmp.eq.s32.totalorder %s18, 1
    %p156 = por %p154, %p155
    %p158 = scmp.ne.s32.totalorder %s141, %s157
    %p159 = scmp.eq.s32.totalorder %s18, 0
    %p160 = por %p158, %p159
    %p161 = scmp.le.s32.totalorder 1, %s12
    %p162 = scmp.lt.s32.totalorder %s12, 3
    %p163 = pnand %p161, %p162
    %p164 = pneg %p163
    // Predicated region
    $region9: #{down_forward.4} parent=5 // pred_check
      _
    $region10: #{down_forward.4} parent=5 // pred_check_branch
      %166 = sbr.rel (%p163) target = $region12
    $region11: #{down_forward.4} parent=5 // pred_region
      %s167 = ssub.s32 %s12, 1
      // Predicated region
      $region13: #{down_forward.4} parent=11 // pred_check
        %p168 = pneg %p59
      $region14: #{down_forward.4} parent=11 // pred_check_branch
        %170 = sbr.rel (%p168) target = $region16
      $region15: #{down_forward.4} parent=11 // pred_region
        _
      $region16: #{down_forward.4} parent=11 // pred_fallthru
        _
      // Predicated region
      $region17: #{down_forward.4} parent=11 // pred_check
        %p171 = pneg %p80
      $region18: #{down_forward.4} parent=11 // pred_check_branch
        %173 = sbr.rel (%p171) target = $region20
      $region19: #{down_forward.4} parent=11 // pred_region
        _
      $region20: #{down_forward.4} parent=11 // pred_fallthru
        _
      // Predicated region
      $region21: #{down_forward.4} parent=11 // pred_check
        %p174 = pneg %p101
      $region22: #{down_forward.4} parent=11 // pred_check_branch
        %176 = sbr.rel (%p174) target = $region24
      $region23: #{down_forward.4} parent=11 // pred_region
        _
      $region24: #{down_forward.4} parent=11 // pred_fallthru
        _
    $region12: #{down_forward.4} parent=5 // pred_fallthru
      _
    %p177 = scmp.lt.s32.totalorder %s12, 2
    // Predicated region
    $region25: #{down_forward.4} parent=5 // pred_check
      %p178 = pneg %p177
    $region26: #{down_forward.4} parent=5 // pred_check_branch
      %180 = sbr.rel (%p178) target = $region28
    $region27: #{down_forward.4} parent=5 // pred_region
      // Predicated region
      $region29: #{down_forward.4} parent=27 // pred_check
        %p181 = pneg %p32
      $region30: #{down_forward.4} parent=27 // pred_check_branch
        %183 = sbr.rel (%p181) target = $region32
      $region31: #{down_forward.4} parent=27 // pred_region
        %p184 = scmp.lt.s32.totalorder %s12, 1
        %s185 = scalar_select %p184, %s12, 1
        %s186 = smul.addr %s185, 8
        %s187 = smul.addr %s186, 4
        %s188 = scalar_lea.vmem %s0, %s187
      $region32: #{down_forward.4} parent=27 // pred_fallthru
        _
    $region28: #{down_forward.4} parent=5 // pred_fallthru
      _
    %p189 = scmp.le.s32.totalorder 1, %s12
    %p190 = scmp.lt.s32.totalorder %s12, 3
    %p191 = pnand %p189, %p190
    %p192 = pneg %p191
    // Predicated region
    $region33: #{down_forward.4} parent=5 // pred_check
      _
    $region34: #{down_forward.4} parent=5 // pred_check_branch
      %194 = sbr.rel (%p191) target = $region36
    $region35: #{down_forward.4} parent=5 // pred_region
      %s195 = ssub.s32 %s12, 1
      %p196 = scmp.lt.s32.totalorder %s17, 1
      %s197 = scalar_select %p196, %s17, 1
      %s198 = smul.addr %s197, 8
      %s199 = smul.addr %s198, 4
      %s200 = scalar_lea.vmem %s0, %s199
      %p201 = pneg %p38
      %p202 = pneg %p35
      %p203 = pneg %p59
      %p204 = pneg %p56
      %p205 = pneg %p80
      %p206 = pneg %p77
      %p207 = pneg %p101
      %p208 = pneg %p98
      %p209 = pneg %p127
      %p210 = pneg %p124
      %p211 = scmp.lt.s32.totalorder %s17, 1
      %s212 = scalar_select %p211, %s17, 1
      %s213 = smul.addr %s212, 8
      %s214 = smul.addr %s213, 4
      %s215 = scalar_lea.vmem %s4, %s214
      %p216 = pneg %p153
      %p217 = pneg %p150
      %p218 = scmp.lt.s32.totalorder %s17, 1
      %s219 = scalar_select %p218, %s17, 1
      %s220 = smul.addr %s219, 2
      %s221 = scalar_lea.vmem %s5, %s220
      %p222 = scmp.lt.s32.totalorder %s17, 1
      %s223 = scalar_select %p222, %s17, 1
      %s224 = smul.addr %s223, 8
      %s225 = smul.addr %s224, 4
      %s226 = scalar_lea.vmem %s0, %s225
      %p227 = scmp.lt.s32.totalorder %s17, 1
      %s228 = scalar_select %p227, %s17, 1
      %s229 = smul.addr %s228, 8
      %s230 = smul.addr %s229, 4
      %s231 = scalar_lea.vmem %s4, %s230
      %p232 = scmp.lt.s32.totalorder %s17, 1
      %s233 = scalar_select %p232, %s17, 1
      %s234 = smul.addr %s233, 2
      %s235 = scalar_lea.vmem %s5, %s234
      %v237 = vld [vmem:[%s226] sm:$0xf]
      %v238 = vld [vmem:[%s226 + $0x4] sm:$0xf]
      %v239 = vld [vmem:[%s226 + $0x8] sm:$0xf]
      %v240 = vld [vmem:[%s226 + $0xc] sm:$0xf]
      %v241 = vld [vmem:[%s226 + $0x10] sm:$0xf]
      %v242 = vld [vmem:[%s226 + $0x14] sm:$0xf]
      %v243 = vld [vmem:[%s226 + $0x18] sm:$0xf]
      %v244 = vld [vmem:[%s226 + $0x1c] sm:$0xf]
      %v245 = vunpack.c.l.bf16 %v237
      %v246 = vunpack.c.l.bf16 %v238
      %v247 = vunpack.c.l.bf16 %v239
      %v248 = vunpack.c.l.bf16 %v240
      %v249 = vunpack.c.l.bf16 %v241
      %v250 = vunpack.c.l.bf16 %v242
      %v251 = vunpack.c.l.bf16 %v243
      %v252 = vunpack.c.l.bf16 %v244
      %v253 = vld [vmem:[%s1] sm:$0x1]
      %v255 = vlaneseq
      %v256 = vshrl.u32 %v255, 7
      %v257 = vsub.s32 0, %v256
      %v258 = vrot.slane %v253, %v257
      %v260 = vmul.f32 %v245, %v258
      %v261 = vmul.f32 %v246, %v258
      %v262 = vmul.f32 %v247, %v258
      %v263 = vmul.f32 %v248, %v258
      %v264 = vmul.f32 %v249, %v258
      %v265 = vmul.f32 %v250, %v258
      %v266 = vmul.f32 %v251, %v258
      %v267 = vmul.f32 %v252, %v258
      %v268 = vld [vmem:[%s2] sm:$0x1]
      %v270 = vlaneseq
      %v271 = vshrl.u32 %v270, 7
      %v272 = vsub.s32 0, %v271
      %v273 = vrot.slane %v268, %v272
      %v275 = vadd.f32 %v260, %v273
      %v276 = vadd.f32 %v261, %v273
      %v277 = vadd.f32 %v262, %v273
      %v278 = vadd.f32 %v263, %v273
      %v279 = vadd.f32 %v264, %v273
      %v280 = vadd.f32 %v265, %v273
      %v281 = vadd.f32 %v266, %v273
      %v282 = vadd.f32 %v267, %v273
      %v283 = vmax.f32 %v275, 0.0
      %v284 = vmax.f32 %v276, 0.0
      %v285 = vmax.f32 %v277, 0.0
      %v286 = vmax.f32 %v278, 0.0
      %v287 = vmax.f32 %v279, 0.0
      %v288 = vmax.f32 %v280, 0.0
      %v289 = vmax.f32 %v281, 0.0
      %v290 = vmax.f32 %v282, 0.0
      %v291 = vpack.c.bf16 %v283, %v283
      %v292 = vpack.c.bf16 %v284, %v284
      %v293 = vpack.c.bf16 %v285, %v285
      %v294 = vpack.c.bf16 %v286, %v286
      %v295 = vpack.c.bf16 %v287, %v287
      %v296 = vpack.c.bf16 %v288, %v288
      %v297 = vpack.c.bf16 %v289, %v289
      %v298 = vpack.c.bf16 %v290, %v290
      %vm299 = vcmask 60416
      %300 = vst.msk [vmem:[#allocation2] sm:$0xf] %vm299, 0
      %301 = vst.msk [vmem:[#allocation2 + $0x4] sm:$0xf] %vm299, 0
      %vm302 = vcmask 57344
      %vm303 = vsmask.f32 256
      %vm304 = vmand %vm302, %vm303
      %v305 = vld [vmem:[#allocation2 + $0x8] sm:$0x1]
      %v306 = vsel %vm304, 0, %v305
      %307 = vst [vmem:[#allocation2 + $0x8] sm:$0x1] %v306
      %308 = vst.msk [vmem:[#allocation2 + $0x48] sm:$0xf] %vm299, 0
      %309 = vst.msk [vmem:[#allocation2 + $0x4c] sm:$0xf] %vm299, 0
      %310 = vst.msk [vmem:[#allocation2 + $0x50] sm:$0xf] %vm299, 0
      %v312 = vunpack.c.l.b16 %v291
      %v313 = vpack.c.b16 %v312, %v312
      %v315 = vshrl.u32 %v313, 16
      %v317 = vrot.slane %v315, 7
      %v318 = vshll.u32 %v313, 16
      %v320 = vor.u32 %v317, %v318
      %v321 = vrot.slane %v317, 4
      %vm324 = vcmask 60416
      %vm325 = vsmask.f32 7938
      %vm326 = vmand %vm324, %vm325
      %v327 = vld [vmem:[#allocation2 + $0x8] sm:$0xf]
      %v328 = vsel %vm326, %v320, %v327
      %329 = vst [vmem:[#allocation2 + $0x8] sm:$0xf] %v328
      %v330 = vld [vmem:[#allocation2 + $0xc] sm:$0x1]
      %v331 = vsel %vm304, %v321, %v330
      %332 = vst [vmem:[#allocation2 + $0xc] sm:$0x1] %v331
      %v333 = vld [vmem:[#allocation2 + $0xc] sm:$0xf]
      %v334 = vsel %vm326, 0, %v333
      %335 = vst [vmem:[#allocation2 + $0xc] sm:$0xf] %v334
      %v336 = vld [vmem:[#allocation2 + $0x10] sm:$0x1]
      %v337 = vsel %vm304, 0, %v336
      %338 = vst [vmem:[#allocation2 + $0x10] sm:$0x1] %v337
      %v340 = vunpack.c.l.b16 %v292
      %v341 = vpack.c.b16 %v340, %v340
      %v343 = vshrl.u32 %v341, 16
      %v345 = vrot.slane %v343, 7
      %v346 = vshll.u32 %v341, 16
      %v348 = vor.u32 %v345, %v346
      %v349 = vrot.slane %v345, 4
      %v352 = vld [vmem:[#allocation2 + $0x10] sm:$0xf]
      %v353 = vsel %vm326, %v348, %v352
      %354 = vst [vmem:[#allocation2 + $0x10] sm:$0xf] %v353
      %v355 = vld [vmem:[#allocation2 + $0x14] sm:$0x1]
      %v356 = vsel %vm304, %v349, %v355
      %357 = vst [vmem:[#allocation2 + $0x14] sm:$0x1] %v356
      %v358 = vld [vmem:[#allocation2 + $0x14] sm:$0xf]
      %v359 = vsel %vm326, 0, %v358
      %360 = vst [vmem:[#allocation2 + $0x14] sm:$0xf] %v359
      %v361 = vld [vmem:[#allocation2 + $0x18] sm:$0x1]
      %v362 = vsel %vm304, 0, %v361
      %363 = vst [vmem:[#allocation2 + $0x18] sm:$0x1] %v362
      %v365 = vunpack.c.l.b16 %v293
      %v366 = vpack.c.b16 %v365, %v365
      %v368 = vshrl.u32 %v366, 16
      %v370 = vrot.slane %v368, 7
      %v371 = vshll.u32 %v366, 16
      %v373 = vor.u32 %v370, %v371
      %v374 = vrot.slane %v370, 4
      %v377 = vld [vmem:[#allocation2 + $0x18] sm:$0xf]
      %v378 = vsel %vm326, %v373, %v377
      %379 = vst [vmem:[#allocation2 + $0x18] sm:$0xf] %v378
      %v380 = vld [vmem:[#allocation2 + $0x1c] sm:$0x1]
      %v381 = vsel %vm304, %v374, %v380
      %382 = vst [vmem:[#allocation2 + $0x1c] sm:$0x1] %v381
      %v383 = vld [vmem:[#allocation2 + $0x1c] sm:$0xf]
      %v384 = vsel %vm326, 0, %v383
      %385 = vst [vmem:[#allocation2 + $0x1c] sm:$0xf] %v384
      %v386 = vld [vmem:[#allocation2 + $0x20] sm:$0x1]
      %v387 = vsel %vm304, 0, %v386
      %388 = vst [vmem:[#allocation2 + $0x20] sm:$0x1] %v387
      %v390 = vunpack.c.l.b16 %v294
      %v391 = vpack.c.b16 %v390, %v390
      %v393 = vshrl.u32 %v391, 16
      %v395 = vrot.slane %v393, 7
      %v396 = vshll.u32 %v391, 16
      %v398 = vor.u32 %v395, %v396
      %v399 = vrot.slane %v395, 4
      %v402 = vld [vmem:[#allocation2 + $0x20] sm:$0xf]
      %v403 = vsel %vm326, %v398, %v402
      %404 = vst [vmem:[#allocation2 + $0x20] sm:$0xf] %v403
      %v405 = vld [vmem:[#allocation2 + $0x24] sm:$0x1]
      %v406 = vsel %vm304, %v399, %v405
      %407 = vst [vmem:[#allocation2 + $0x24] sm:$0x1] %v406
      %v408 = vld [vmem:[#allocation2 + $0x24] sm:$0xf]
      %v409 = vsel %vm326, 0, %v408
      %410 = vst [vmem:[#allocation2 + $0x24] sm:$0xf] %v409
      %v411 = vld [vmem:[#allocation2 + $0x28] sm:$0x1]
      %v412 = vsel %vm304, 0, %v411
      %413 = vst [vmem:[#allocation2 + $0x28] sm:$0x1] %v412
      %v415 = vunpack.c.l.b16 %v295
      %v416 = vpack.c.b16 %v415, %v415
      %v418 = vshrl.u32 %v416, 16
      %v420 = vrot.slane %v418, 7
      %v421 = vshll.u32 %v416, 16
      %v423 = vor.u32 %v420, %v421
      %v424 = vrot.slane %v420, 4
      %v427 = vld [vmem:[#allocation2 + $0x28] sm:$0xf]
      %v428 = vsel %vm326, %v423, %v427
      %429 = vst [vmem:[#allocation2 + $0x28] sm:$0xf] %v428
      %v430 = vld [vmem:[#allocation2 + $0x2c] sm:$0x1]
      %v431 = vsel %vm304, %v424, %v430
      %432 = vst [vmem:[#allocation2 + $0x2c] sm:$0x1] %v431
      %v433 = vld [vmem:[#allocation2 + $0x2c] sm:$0xf]
      %v434 = vsel %vm326, 0, %v433
      %435 = vst [vmem:[#allocation2 + $0x2c] sm:$0xf] %v434
      %v436 = vld [vmem:[#allocation2 + $0x30] sm:$0x1]
      %v437 = vsel %vm304, 0, %v436
      %438 = vst [vmem:[#allocation2 + $0x30] sm:$0x1] %v437
      %v440 = vunpack.c.l.b16 %v296
      %v441 = vpack.c.b16 %v440, %v440
      %v443 = vshrl.u32 %v441, 16
      %v445 = vrot.slane %v443, 7
      %v446 = vshll.u32 %v441, 16
      %v448 = vor.u32 %v445, %v446
      %v449 = vrot.slane %v445, 4
      %v452 = vld [vmem:[#allocation2 + $0x30] sm:$0xf]
      %v453 = vsel %vm326, %v448, %v452
      %454 = vst [vmem:[#allocation2 + $0x30] sm:$0xf] %v453
      %v455 = vld [vmem:[#allocation2 + $0x34] sm:$0x1]
      %v456 = vsel %vm304, %v449, %v455
      %457 = vst [vmem:[#allocation2 + $0x34] sm:$0x1] %v456
      %v458 = vld [vmem:[#allocation2 + $0x34] sm:$0xf]
      %v459 = vsel %vm326, 0, %v458
      %460 = vst [vmem:[#allocation2 + $0x34] sm:$0xf] %v459
      %v461 = vld [vmem:[#allocation2 + $0x38] sm:$0x1]
      %v462 = vsel %vm304, 0, %v461
      %463 = vst [vmem:[#allocation2 + $0x38] sm:$0x1] %v462
      %v465 = vunpack.c.l.b16 %v297
      %v466 = vpack.c.b16 %v465, %v465
      %v468 = vshrl.u32 %v466, 16
      %v470 = vrot.slane %v468, 7
      %v471 = vshll.u32 %v466, 16
      %v473 = vor.u32 %v470, %v471
      %v474 = vrot.slane %v470, 4
      %v477 = vld [vmem:[#allocation2 + $0x38] sm:$0xf]
      %v478 = vsel %vm326, %v473, %v477
      %479 = vst [vmem:[#allocation2 + $0x38] sm:$0xf] %v478
      %v480 = vld [vmem:[#allocation2 + $0x3c] sm:$0x1]
      %v481 = vsel %vm304, %v474, %v480
      %482 = vst [vmem:[#allocation2 + $0x3c] sm:$0x1] %v481
      %v483 = vld [vmem:[#allocation2 + $0x3c] sm:$0xf]
      %v484 = vsel %vm326, 0, %v483
      %485 = vst [vmem:[#allocation2 + $0x3c] sm:$0xf] %v484
      %v486 = vld [vmem:[#allocation2 + $0x40] sm:$0x1]
      %v487 = vsel %vm304, 0, %v486
      %488 = vst [vmem:[#allocation2 + $0x40] sm:$0x1] %v487
      %v490 = vunpack.c.l.b16 %v298
      %v491 = vpack.c.b16 %v490, %v490
      %v493 = vshrl.u32 %v491, 16
      %v495 = vrot.slane %v493, 7
      %v496 = vshll.u32 %v491, 16
      %v498 = vor.u32 %v495, %v496
      %v499 = vrot.slane %v495, 4
      %v502 = vld [vmem:[#allocation2 + $0x40] sm:$0xf]
      %v503 = vsel %vm326, %v498, %v502
      %504 = vst [vmem:[#allocation2 + $0x40] sm:$0xf] %v503
      %v505 = vld [vmem:[#allocation2 + $0x44] sm:$0x1]
      %v506 = vsel %vm304, %v499, %v505
      %507 = vst [vmem:[#allocation2 + $0x44] sm:$0x1] %v506
      %v508 = vld [vmem:[#allocation2 + $0x44] sm:$0xf]
      %v509 = vsel %vm326, 0, %v508
      %510 = vst [vmem:[#allocation2 + $0x44] sm:$0xf] %v509
      %v511 = vld [vmem:[#allocation2 + $0x48] sm:$0x1]
      %v512 = vsel %vm304, 0, %v511
      %513 = vst [vmem:[#allocation2 + $0x48] sm:$0x1] %v512
      %v514 = vld [vmem:[#allocation2] sm:$0xf]
      %v515 = vld [vmem:[#allocation2 + $0x4] sm:$0xf]
      %v516 = vld [vmem:[#allocation2 + $0x8] sm:$0xf]
      %v517 = vld [vmem:[#allocation2 + $0xc] sm:$0xf]
      %v518 = vld [vmem:[#allocation2 + $0x10] sm:$0xf]
      %v519 = vld [vmem:[#allocation2 + $0x14] sm:$0xf]
      %v520 = vld [vmem:[#allocation2 + $0x18] sm:$0xf]
      %v521 = vld [vmem:[#allocation2 + $0x1c] sm:$0xf]
      %v522 = vld [vmem:[#allocation2 + $0x20] sm:$0xf]
      %v523 = vld [vmem:[#allocation2 + $0x24] sm:$0xf]
      %v524 = vld [vmem:[#allocation2 + $0x28] sm:$0xf]
      %v525 = vld [vmem:[#allocation2 + $0x2c] sm:$0xf]
      %v526 = vld [vmem:[#allocation2 + $0x30] sm:$0xf]
      %v527 = vld [vmem:[#allocation2 + $0x34] sm:$0xf]
      %v528 = vld [vmem:[#allocation2 + $0x38] sm:$0xf]
      %v529 = vld [vmem:[#allocation2 + $0x3c] sm:$0xf]
      %v530 = vld [vmem:[%s3] sm:$0xf]
      %v547 = vunpack.c.l.b16 %v514
      %v548 = vunpack.c.l.b16 %v515
      %v549 = vunpack.c.l.b16 %v516
      %v550 = vunpack.c.l.b16 %v517
      %v551 = vunpack.c.l.b16 %v518
      %v552 = vunpack.c.l.b16 %v519
      %v553 = vunpack.c.l.b16 %v520
      %v554 = vunpack.c.l.b16 %v521
      %v555 = vunpack.c.l.b16 %v522
      %v556 = vunpack.c.l.b16 %v523
      %v557 = vunpack.c.l.b16 %v524
      %v558 = vunpack.c.l.b16 %v525
      %v559 = vunpack.c.l.b16 %v526
      %v560 = vunpack.c.l.b16 %v527
      %v561 = vunpack.c.l.b16 %v528
      %v562 = vunpack.c.l.b16 %v529
      %v563 = vpack.c.b16 %v548, %v547
      %v564 = vpack.c.b16 %v550, %v549
      %v565 = vpack.c.b16 %v552, %v551
      %v566 = vpack.c.b16 %v554, %v553
      %v567 = vpack.c.b16 %v556, %v555
      %v568 = vpack.c.b16 %v558, %v557
      %v569 = vpack.c.b16 %v560, %v559
      %v570 = vpack.c.b16 %v562, %v561
      %vm571 = vcmask 64512
      %v573 = vsel %vm571, %v563, 0
      %v576 = vsel %vm571, %v564, 0
      %v579 = vsel %vm571, %v565, 0
      %v582 = vsel %vm571, %v566, 0
      %v585 = vsel %vm571, %v567, 0
      %v588 = vsel %vm571, %v568, 0
      %v591 = vsel %vm571, %v569, 0
      %v594 = vsel %vm571, %v570, 0
      %vm596 = vcmask 1043456
      %v598 = vsel %vm596, %v530, 0
      %600 = vmatprep.subr.bf16.mxu0 0
      %601 = vmatpush1.bf16.msra.mxu0 %v598
      %602 = vmatprep.subr.bf16.mxu0 0
      %603 = vmatpush1.bf16.msra.mxu0 0
      %604 = vmatprep.subr.bf16.mxu0 0
      %605 = vmatpush1.bf16.msra.mxu0 0
      %606 = vmatprep.subr.bf16.mxu0 0
      %607 = vmatpush1.bf16.msra.mxu0 0
      %608 = vmatprep.subr.bf16.mxu0 0
      %609 = vmatpush1.bf16.msra.mxu0 0
      %610 = vmatprep.subr.bf16.mxu0 0
      %611 = vmatpush1.bf16.msra.mxu0 0
      %612 = vmatprep.subr.bf16.mxu0 0
      %613 = vmatpush1.bf16.msra.mxu0 0
      %614 = vmatprep.subr.bf16.mxu0 0
      %615 = vmatpush1.bf16.msra.mxu0 0
      %616 = vmatprep.subr.bf16.mxu0 0
      %617 = vmatpush1.bf16.msra.mxu0 0
      %618 = vmatprep.subr.bf16.mxu0 0
      %619 = vmatpush1.bf16.msra.mxu0 0
      %620 = vmatprep.subr.bf16.mxu0 0
      %621 = vmatpush1.bf16.msra.mxu0 0
      %622 = vmatprep.subr.bf16.mxu0 0
      %623 = vmatpush1.bf16.msra.mxu0 0
      %624 = vmatprep.subr.bf16.mxu0 0
      %625 = vmatpush1.bf16.msra.mxu0 0
      %626 = vmatprep.subr.bf16.mxu0 0
      %627 = vmatpush1.bf16.msra.mxu0 0
      %628 = vmatprep.subr.bf16.mxu0 0
      %629 = vmatpush1.bf16.msra.mxu0 0
      %630 = vmatprep.subr.bf16.mxu0 0
      %631 = vmatpush1.bf16.msra.mxu0 0
      %632 = vmatprep.mubr.bf16.mxu0 0
      %633 = vmatmul.mubr.bf16.gmra.mrb[0].mxu0 %v573
      %v634 = vpop.f32.mrb[0].mxu0
      %v635 = vadd.f32 0.0, %v634
      %v636 = vpop.f32.mrb[0].mxu0
      %v637 = vpop.f32.mrb[0].mxu0
      %v638 = vadd.f32 0.0, %v637
      %v639 = vpop.f32.mrb[0].mxu0
      %640 = vmatprep.mubr.bf16.mxu0 0
      %641 = vmatmul.mubr.bf16.gmra.mrb[0].mxu0 %v576
      %v642 = vpop.f32.mrb[0].mxu0
      %v643 = vadd.f32 0.0, %v642
      %v644 = vpop.f32.mrb[0].mxu0
      %v645 = vpop.f32.mrb[0].mxu0
      %v646 = vadd.f32 0.0, %v645
      %v647 = vpop.f32.mrb[0].mxu0
      %648 = vmatprep.mubr.bf16.mxu0 0
      %649 = vmatmul.mubr.bf16.gmra.mrb[0].mxu0 %v579
      %v650 = vpop.f32.mrb[0].mxu0
      %v651 = vadd.f32 0.0, %v650
      %v652 = vpop.f32.mrb[0].mxu0
      %v653 = vpop.f32.mrb[0].mxu0
      %v654 = vadd.f32 0.0, %v653
      %v655 = vpop.f32.mrb[0].mxu0
      %656 = vmatprep.mubr.bf16.mxu0 0
      %657 = vmatmul.mubr.bf16.gmra.mrb[0].mxu0 %v582
      %v658 = vpop.f32.mrb[0].mxu0
      %v659 = vadd.f32 0.0, %v658
      %v660 = vpop.f32.mrb[0].mxu0
      %v661 = vpop.f32.mrb[0].mxu0
      %v662 = vadd.f32 0.0, %v661
      %v663 = vpop.f32.mrb[0].mxu0
      %664 = vmatprep.mubr.bf16.mxu0 0
      %665 = vmatmul.mubr.bf16.gmra.mrb[0].mxu0 %v585
      %v666 = vpop.f32.mrb[0].mxu0
      %v667 = vadd.f32 0.0, %v666
      %v668 = vpop.f32.mrb[0].mxu0
      %v669 = vpop.f32.mrb[0].mxu0
      %v670 = vadd.f32 0.0, %v669
      %v671 = vpop.f32.mrb[0].mxu0
      %672 = vmatprep.mubr.bf16.mxu0 0
      %673 = vmatmul.mubr.bf16.gmra.mrb[0].mxu0 %v588
      %v674 = vpop.f32.mrb[0].mxu0
      %v675 = vadd.f32 0.0, %v674
      %v676 = vpop.f32.mrb[0].mxu0
      %v677 = vpop.f32.mrb[0].mxu0
      %v678 = vadd.f32 0.0, %v677
      %v679 = vpop.f32.mrb[0].mxu0
      %680 = vmatprep.mubr.bf16.mxu0 0
      %681 = vmatmul.mubr.bf16.gmra.mrb[0].mxu0 %v591
      %v682 = vpop.f32.mrb[0].mxu0
      %v683 = vadd.f32 0.0, %v682
      %v684 = vpop.f32.mrb[0].mxu0
      %v685 = vpop.f32.mrb[0].mxu0
      %v686 = vadd.f32 0.0, %v685
      %v687 = vpop.f32.mrb[0].mxu0
      %688 = vmatprep.mubr.bf16.mxu0 0
      %689 = vmatmul.mubr.bf16.gmra.mrb[0].mxu0 %v594
      %v690 = vpop.f32.mrb[0].mxu0
      %v691 = vadd.f32 0.0, %v690
      %v692 = vpop.f32.mrb[0].mxu0
      %v693 = vpop.f32.mrb[0].mxu0
      %v694 = vadd.f32 0.0, %v693
      %v695 = vpop.f32.mrb[0].mxu0
      %696 = vdwg.mxu0
      %697 = vst.msk [vmem:[#allocation3] sm:$0xff] %vm571, %v635
      %698 = vst.msk [vmem:[#allocation3 + $0x8] sm:$0xff] %vm571, %v638
      %699 = vst.msk [vmem:[#allocation3 + $0x10] sm:$0xff] %vm571, %v643
      %700 = vst.msk [vmem:[#allocation3 + $0x18] sm:$0xff] %vm571, %v646
      %701 = vst.msk [vmem:[#allocation3 + $0x20] sm:$0xff] %vm571, %v651
      %702 = vst.msk [vmem:[#allocation3 + $0x28] sm:$0xff] %vm571, %v654
      %703 = vst.msk [vmem:[#allocation3 + $0x30] sm:$0xff] %vm571, %v659
      %704 = vst.msk [vmem:[#allocation3 + $0x38] sm:$0xff] %vm571, %v662
      %705 = vst.msk [vmem:[#allocation3 + $0x40] sm:$0xff] %vm571, %v667
      %706 = vst.msk [vmem:[#allocation3 + $0x48] sm:$0xff] %vm571, %v670
      %707 = vst.msk [vmem:[#allocation3 + $0x50] sm:$0xff] %vm571, %v675
      %708 = vst.msk [vmem:[#allocation3 + $0x58] sm:$0xff] %vm571, %v678
      %709 = vst.msk [vmem:[#allocation3 + $0x60] sm:$0xff] %vm571, %v683
      %710 = vst.msk [vmem:[#allocation3 + $0x68] sm:$0xff] %vm571, %v686
      %711 = vst.msk [vmem:[#allocation3 + $0x70] sm:$0xff] %vm571, %v691
      %712 = vst.msk [vmem:[#allocation3 + $0x78] sm:$0xff] %vm571, %v694
      %v713 = vld [vmem:[#allocation2] sm:$0xf]
      %v714 = vld [vmem:[#allocation2 + $0x4] sm:$0xf]
      %v715 = vld [vmem:[#allocation2 + $0x8] sm:$0xf]
      %v716 = vld [vmem:[#allocation2 + $0xc] sm:$0xf]
      %v717 = vld [vmem:[#allocation2 + $0x10] sm:$0xf]
      %v718 = vld [vmem:[#allocation2 + $0x14] sm:$0xf]
      %v719 = vld [vmem:[#allocation2 + $0x18] sm:$0xf]
      %v720 = vld [vmem:[#allocation2 + $0x1c] sm:$0xf]
      %v721 = vld [vmem:[#allocation2 + $0x20] sm:$0xf]
      %v722 = vld [vmem:[#allocation2 + $0x24] sm:$0xf]
      %v723 = vld [vmem:[#allocation2 + $0x28] sm:$0xf]
      %v724 = vld [vmem:[#allocation2 + $0x2c] sm:$0xf]
      %v725 = vld [vmem:[#allocation2 + $0x30] sm:$0xf]
      %v726 = vld [vmem:[#allocation2 + $0x34] sm:$0xf]
      %v727 = vld [vmem:[#allocation2 + $0x38] sm:$0xf]
      %v728 = vld [vmem:[#allocation2 + $0x3c] sm:$0xf]
      %v729 = vld [vmem:[#allocation2 + $0x40] sm:$0x1]
      %s730 = scalar_lea.vmem %s3, 4
      %v731 = vld [vmem:[%s730] sm:$0xf]
      %v749 = vunpack.c.l.b16 %v713
      %v750 = vunpack.c.l.b16 %v714
      %v751 = vunpack.c.l.b16 %v715
      %v752 = vunpack.c.l.b16 %v716
      %v753 = vunpack.c.l.b16 %v717
      %v754 = vunpack.c.l.b16 %v718
      %v755 = vunpack.c.l.b16 %v719
      %v756 = vunpack.c.l.b16 %v720
      %v757 = vunpack.c.l.b16 %v721
      %v758 = vunpack.c.l.b16 %v722
      %v759 = vunpack.c.l.b16 %v723
      %v760 = vunpack.c.l.b16 %v724
      %v761 = vunpack.c.l.b16 %v725
      %v762 = vunpack.c.l.b16 %v726
      %v763 = vunpack.c.l.b16 %v727
      %v764 = vunpack.c.l.b16 %v728
      %v765 = vunpack.c.l.b16 %v729
      %v766 = vpack.c.b16 %v750, %v749
      %v767 = vpack.c.b16 %v752, %v751
      %v768 = vpack.c.b16 %v754, %v753
      %v769 = vpack.c.b16 %v756, %v755
      %v770 = vpack.c.b16 %v758, %v757
      %v771 = vpack.c.b16 %v760, %v759
      %v772 = vpack.c.b16 %v762, %v761
      %v773 = vpack.c.b16 %v764, %v763
      %v774 = vpack.c.b16 %v765, %v765
      %vm775 = vsmask.f32 7424
      %v777 = vshrl.u32 %v766, 16
      %v779 = vshll.u32 %v766, 16
      %v781 = vrot.slane %v779, 1
      %v782 = vor.u32 %v777, %v781
      %v784 = vshll.u32 %v767, 16
      %v786 = vrot.slane %v784, 1
      %v787 = vsel %vm775, %v782, %v786
      %v788 = vshrl.u32 %v767, 16
      %v790 = vor.u32 %v788, %v786
      %v792 = vshll.u32 %v768, 16
      %v794 = vrot.slane %v792, 1
      %v795 = vsel %vm775, %v790, %v794
      %v796 = vshrl.u32 %v768, 16
      %v798 = vor.u32 %v796, %v794
      %v800 = vshll.u32 %v769, 16
      %v802 = vrot.slane %v800, 1
      %v803 = vsel %vm775, %v798, %v802
      %v804 = vshrl.u32 %v769, 16
      %v806 = vor.u32 %v804, %v802
      %v808 = vshll.u32 %v770, 16
      %v810 = vrot.slane %v808, 1
      %v811 = vsel %vm775, %v806, %v810
      %v812 = vshrl.u32 %v770, 16
      %v814 = vor.u32 %v812, %v810
      %v816 = vshll.u32 %v771, 16
      %v818 = vrot.slane %v816, 1
      %v819 = vsel %vm775, %v814, %v818
      %v820 = vshrl.u32 %v771, 16
      %v822 = vor.u32 %v820, %v818
      %v824 = vshll.u32 %v772, 16
      %v826 = vrot.slane %v824, 1
      %v827 = vsel %vm775, %v822, %v826
      %v828 = vshrl.u32 %v772, 16
      %v830 = vor.u32 %v828, %v826
      %v832 = vshll.u32 %v773, 16
      %v834 = vrot.slane %v832, 1
      %v835 = vsel %vm775, %v830, %v834
      %v836 = vshrl.u32 %v773, 16
      %v838 = vor.u32 %v836, %v834
      %v840 = vshll.u32 %v774, 16
      %v842 = vrot.slane %v840, 1
      %v843 = vsel %vm775, %v838, %v842
      %v845 = vsel %vm571, %v787, 0
      %v848 = vsel %vm571, %v795, 0
      %v851 = vsel %vm571, %v803, 0
      %v854 = vsel %vm571, %v811, 0
      %v857 = vsel %vm571, %v819, 0
      %v860 = vsel %vm571, %v827, 0
      %v863 = vsel %vm571, %v835, 0
      %v866 = vsel %vm571, %v843, 0
      %v869 = vsel %vm596, %v731, 0
      %871 = vmatprep.subr.bf16.mxu0 0
      %872 = vmatpush1.bf16.msra.mxu0 %v869
      %873 = vmatprep.subr.bf16.mxu0 0
      %874 = vmatpush1.bf16.msra.mxu0 0
      %875 = vmatprep.subr.bf16.mxu0 0
      %876 = vmatpush1.bf16.msra.mxu0 0
      %877 = vmatprep.subr.bf16.mxu0 0
      %878 = vmatpush1.bf16.msra.mxu0 0
      %879 = vmatprep.subr.bf16.mxu0 0
      %880 = vmatpush1.bf16.msra.mxu0 0
      %881 = vmatprep.subr.bf16.mxu0 0
      %882 = vmatpush1.bf16.msra.mxu0 0
      %883 = vmatprep.subr.bf16.mxu0 0
      %884 = vmatpush1.bf16.msra.mxu0 0
      %885 = vmatprep.subr.bf16.mxu0 0
      %886 = vmatpush1.bf16.msra.mxu0 0
      %887 = vmatprep.subr.bf16.mxu0 0
      %888 = vmatpush1.bf16.msra.mxu0 0
      %889 = vmatprep.subr.bf16.mxu0 0
      %890 = vmatpush1.bf16.msra.mxu0 0
      %891 = vmatprep.subr.bf16.mxu0 0
      %892 = vmatpush1.bf16.msra.mxu0 0
      %893 = vmatprep.subr.bf16.mxu0 0
      %894 = vmatpush1.bf16.msra.mxu0 0
      %895 = vmatprep.subr.bf16.mxu0 0
      %896 = vmatpush1.bf16.msra.mxu0 0
      %897 = vmatprep.subr.bf16.mxu0 0
      %898 = vmatpush1.bf16.msra.mxu0 0
      %899 = vmatprep.subr.bf16.mxu0 0
      %900 = vmatpush1.bf16.msra.mxu0 0
      %901 = vmatprep.subr.bf16.mxu0 0
      %902 = vmatpush1.bf16.msra.mxu0 0
      %903 = vmatprep.mubr.bf16.mxu0 0
      %904 = vmatmul.mubr.bf16.gmra.mrb[0].mxu0 %v845
      %v905 = vpop.f32.mrb[0].mxu0
      %v906 = vadd.f32 0.0, %v905
      %v907 = vpop.f32.mrb[0].mxu0
      %v908 = vpop.f32.mrb[0].mxu0
      %v909 = vadd.f32 0.0, %v908
      %v910 = vpop.f32.mrb[0].mxu0
      %911 = vmatprep.mubr.bf16.mxu0 0
      %912 = vmatmul.mubr.bf16.gmra.mrb[0].mxu0 %v848
      %v913 = vpop.f32.mrb[0].mxu0
      %v914 = vadd.f32 0.0, %v913
      %v915 = vpop.f32.mrb[0].mxu0
      %v916 = vpop.f32.mrb[0].mxu0
      %v917 = vadd.f32 0.0, %v916
      %v918 = vpop.f32.mrb[0].mxu0
      %919 = vmatprep.mubr.bf16.mxu0 0
      %920 = vmatmul.mubr.bf16.gmra.mrb[0].mxu0 %v851
      %v921 = vpop.f32.mrb[0].mxu0
      %v922 = vadd.f32 0.0, %v921
      %v923 = vpop.f32.mrb[0].mxu0
      %v924 = vpop.f32.mrb[0].mxu0
      %v925 = vadd.f32 0.0, %v924
      %v926 = vpop.f32.mrb[0].mxu0
      %927 = vmatprep.mubr.bf16.mxu0 0
      %928 = vmatmul.mubr.bf16.gmra.mrb[0].mxu0 %v854
      %v929 = vpop.f32.mrb[0].mxu0
      %v930 = vadd.f32 0.0, %v929
      %v931 = vpop.f32.mrb[0].mxu0
      %v932 = vpop.f32.mrb[0].mxu0
      %v933 = vadd.f32 0.0, %v932
      %v934 = vpop.f32.mrb[0].mxu0
      %935 = vmatprep.mubr.bf16.mxu0 0
      %936 = vmatmul.mubr.bf16.gmra.mrb[0].mxu0 %v857
      %v937 = vpop.f32.mrb[0].mxu0
      %v938 = vadd.f32 0.0, %v937
      %v939 = vpop.f32.mrb[0].mxu0
      %v940 = vpop.f32.mrb[0].mxu0
      %v941 = vadd.f32 0.0, %v940
      %v942 = vpop.f32.mrb[0].mxu0
      %943 = vmatprep.mubr.bf16.mxu0 0
      %944 = vmatmul.mubr.bf16.gmra.mrb[0].mxu0 %v860
      %v945 = vpop.f32.mrb[0].mxu0
      %v946 = vadd.f32 0.0, %v945
      %v947 = vpop.f32.mrb[0].mxu0
      %v948 = vpop.f32.mrb[0].mxu0
      %v949 = vadd.f32 0.0, %v948
      %v950 = vpop.f32.mrb[0].mxu0
      %951 = vmatprep.mubr.bf16.mxu0 0
      %952 = vmatmul.mubr.bf16.gmra.mrb[0].mxu0 %v863
      %v953 = vpop.f32.mrb[0].mxu0
      %v954 = vadd.f32 0.0, %v953
      %v955 = vpop.f32.mrb[0].mxu0
      %v956 = vpop.f32.mrb[0].mxu0
      %v957 = vadd.f32 0.0, %v956
      %v958 = vpop.f32.mrb[0].mxu0
      %959 = vmatprep.mubr.bf16.mxu0 0
      %960 = vmatmul.mubr.bf16.gmra.mrb[0].mxu0 %v866
      %v961 = vpop.f32.mrb[0].mxu0
      %v962 = vadd.f32 0.0, %v961
      %v963 = vpop.f32.mrb[0].mxu0
      %v964 = vpop.f32.mrb[0].mxu0
      %v965 = vadd.f32 0.0, %v964
      %v966 = vpop.f32.mrb[0].mxu0
      %967 = vdwg.mxu0
      %v968 = vld [vmem:[#allocation3] sm:$0xff]
      %v969 = vld [vmem:[#allocation3 + $0x8] sm:$0xff]
      %v970 = vld [vmem:[#allocation3 + $0x10] sm:$0xff]
      %v971 = vld [vmem:[#allocation3 + $0x18] sm:$0xff]
      %v972 = vld [vmem:[#allocation3 + $0x20] sm:$0xff]
      %v973 = vld [vmem:[#allocation3 + $0x28] sm:$0xff]
      %v974 = vld [vmem:[#allocation3 + $0x30] sm:$0xff]
      %v975 = vld [vmem:[#allocation3 + $0x38] sm:$0xff]
      %v976 = vld [vmem:[#allocation3 + $0x40] sm:$0xff]
      %v977 = vld [vmem:[#allocation3 + $0x48] sm:$0xff]
      %v978 = vld [vmem:[#allocation3 + $0x50] sm:$0xff]
      %v979 = vld [vmem:[#allocation3 + $0x58] sm:$0xff]
      %v980 = vld [vmem:[#allocation3 + $0x60] sm:$0xff]
      %v981 = vld [vmem:[#allocation3 + $0x68] sm:$0xff]
      %v982 = vld [vmem:[#allocation3 + $0x70] sm:$0xff]
      %v983 = vld [vmem:[#allocation3 + $0x78] sm:$0xff]
      %v984 = vadd.f32 %v968, %v906
      %v985 = vadd.f32 %v969, %v909
      %v986 = vadd.f32 %v970, %v914
      %v987 = vadd.f32 %v971, %v917
      %v988 = vadd.f32 %v972, %v922
      %v989 = vadd.f32 %v973, %v925
      %v990 = vadd.f32 %v974, %v930
      %v991 = vadd.f32 %v975, %v933
      %v992 = vadd.f32 %v976, %v938
      %v993 = vadd.f32 %v977, %v941
      %v994 = vadd.f32 %v978, %v946
      %v995 = vadd.f32 %v979, %v949
      %v996 = vadd.f32 %v980, %v954
      %v997 = vadd.f32 %v981, %v957
      %v998 = vadd.f32 %v982, %v962
      %v999 = vadd.f32 %v983, %v965
      %1000 = vst.msk [vmem:[#allocation3] sm:$0xff] %vm571, %v984
      %1001 = vst.msk [vmem:[#allocation3 + $0x8] sm:$0xff] %vm571, %v985
      %1002 = vst.msk [vmem:[#allocation3 + $0x10] sm:$0xff] %vm571, %v986
      %1003 = vst.msk [vmem:[#allocation3 + $0x18] sm:$0xff] %vm571, %v987
      %1004 = vst.msk [vmem:[#allocation3 + $0x20] sm:$0xff] %vm571, %v988
      %1005 = vst.msk [vmem:[#allocation3 + $0x28] sm:$0xff] %vm571, %v989
      %1006 = vst.msk [vmem:[#allocation3 + $0x30] sm:$0xff] %vm571, %v990
      %1007 = vst.msk [vmem:[#allocation3 + $0x38] sm:$0xff] %vm571, %v991
      %1008 = vst.msk [vmem:[#allocation3 + $0x40] sm:$0xff] %vm571, %v992
      %1009 = vst.msk [vmem:[#allocation3 + $0x48] sm:$0xff] %vm571, %v993
      %1010 = vst.msk [vmem:[#allocation3 + $0x50] sm:$0xff] %vm571, %v994
      %1011 = vst.msk [vmem:[#allocation3 + $0x58] sm:$0xff] %vm571, %v995
      %1012 = vst.msk [vmem:[#allocation3 + $0x60] sm:$0xff] %vm571, %v996
      %1013 = vst.msk [vmem:[#allocation3 + $0x68] sm:$0xff] %vm571, %v997
      %1014 = vst.msk [vmem:[#allocation3 + $0x70] sm:$0xff] %vm571, %v998
      %1015 = vst.msk [vmem:[#allocation3 + $0x78] sm:$0xff] %vm571, %v999
      %v1016 = vld [vmem:[#allocation2] sm:$0xe]
      %v1017 = vld [vmem:[#allocation2 + $0x4] sm:$0xf]
      %v1018 = vld [vmem:[#allocation2 + $0x8] sm:$0xf]
      %v1019 = vld [vmem:[#allocation2 + $0xc] sm:$0xf]
      %v1020 = vld [vmem:[#allocation2 + $0x10] sm:$0xf]
      %v1021 = vld [vmem:[#allocation2 + $0x14] sm:$0xf]
      %v1022 = vld [vmem:[#allocation2 + $0x18] sm:$0xf]
      %v1023 = vld [vmem:[#allocation2 + $0x1c] sm:$0xf]
      %v1024 = vld [vmem:[#allocation2 + $0x20] sm:$0xf]
      %v1025 = vld [vmem:[#allocation2 + $0x24] sm:$0xf]
      %v1026 = vld [vmem:[#allocation2 + $0x28] sm:$0xf]
      %v1027 = vld [vmem:[#allocation2 + $0x2c] sm:$0xf]
      %v1028 = vld [vmem:[#allocation2 + $0x30] sm:$0xf]
      %v1029 = vld [vmem:[#allocation2 + $0x34] sm:$0xf]
      %v1030 = vld [vmem:[#allocation2 + $0x38] sm:$0xf]
      %v1031 = vld [vmem:[#allocation2 + $0x3c] sm:$0xf]
      %v1032 = vld [vmem:[#allocation2 + $0x40] sm:$0x1]
      %s1033 = scalar_lea.vmem %s3, 8
      %v1034 = vld [vmem:[%s1033] sm:$0xf]
      %v1052 = vunpack.c.l.b16 %v1016
      %v1053 = vunpack.c.l.b16 %v1017
      %v1054 = vunpack.c.l.b16 %v1018
      %v1055 = vunpack.c.l.b16 %v1019
      %v1056 = vunpack.c.l.b16 %v1020
      %v1057 = vunpack.c.l.b16 %v1021
      %v1058 = vunpack.c.l.b16 %v1022
      %v1059 = vunpack.c.l.b16 %v1023
      %v1060 = vunpack.c.l.b16 %v1024
      %v1061 = vunpack.c.l.b16 %v1025
      %v1062 = vunpack.c.l.b16 %v1026
      %v1063 = vunpack.c.l.b16 %v1027
      %v1064 = vunpack.c.l.b16 %v1028
      %v1065 = vunpack.c.l.b16 %v1029
      %v1066 = vunpack.c.l.b16 %v1030
      %v1067 = vunpack.c.l.b16 %v1031
      %v1068 = vunpack.c.l.b16 %v1032
      %v1069 = vpack.c.b16 %v1053, %v1052
      %v1070 = vpack.c.b16 %v1055, %v1054
      %v1071 = vpack.c.b16 %v1057, %v1056
      %v1072 = vpack.c.b16 %v1059, %v1058
      %v1073 = vpack.c.b16 %v1061, %v1060
      %v1074 = vpack.c.b16 %v1063, %v1062
      %v1075 = vpack.c.b16 %v1065, %v1064
      %v1076 = vpack.c.b16 %v1067, %v1066
      %v1077 = vpack.c.b16 %v1068, %v1068
      %vm1078 = vcmask 1046528
      %v1079 = vrot.slane %v1069, 1
      %v1080 = vrot.slane %v1070, 1
      %v1081 = vsel %vm1078, %v1079, %v1080
      %v1082 = vrot.slane %v1071, 1
      %v1083 = vsel %vm1078, %v1080, %v1082
      %v1084 = vrot.slane %v1072, 1
      %v1085 = vsel %vm1078, %v1082, %v1084
      %v1086 = vrot.slane %v1073, 1
      %v1087 = vsel %vm1078, %v1084, %v1086
      %v1088 = vrot.slane %v1074, 1
      %v1089 = vsel %vm1078, %v1086, %v1088
      %v1090 = vrot.slane %v1075, 1
      %v1091 = vsel %vm1078, %v1088, %v1090
      %v1092 = vrot.slane %v1076, 1
      %v1093 = vsel %vm1078, %v1090, %v1092
      %v1094 = vrot.slane %v1077, 1
      %v1095 = vsel %vm1078, %v1092, %v1094
      %v1097 = vsel %vm571, %v1081, 0
      %v1100 = vsel %vm571, %v1083, 0
      %v1103 = vsel %vm571, %v1085, 0
      %v1106 = vsel %vm571, %v1087, 0
      %v1109 = vsel %vm571, %v1089, 0
      %v1112 = vsel %vm571, %v1091, 0
      %v1115 = vsel %vm571, %v1093, 0
      %v1118 = vsel %vm571, %v1095, 0
      %v1121 = vsel %vm596, %v1034, 0
      %1123 = vmatprep.subr.bf16.mxu0 0
      %1124 = vmatpush1.bf16.msra.mxu0 %v1121
      %1125 = vmatprep.subr.bf16.mxu0 0
      %1126 = vmatpush1.bf16.msra.mxu0 0
      %1127 = vmatprep.subr.bf16.mxu0 0
      %1128 = vmatpush1.bf16.msra.mxu0 0
      %1129 = vmatprep.subr.bf16.mxu0 0
      %1130 = vmatpush1.bf16.msra.mxu0 0
      %1131 = vmatprep.subr.bf16.mxu0 0
      %1132 = vmatpush1.bf16.msra.mxu0 0
      %1133 = vmatprep.subr.bf16.mxu0 0
      %1134 = vmatpush1.bf16.msra.mxu0 0
      %1135 = vmatprep.subr.bf16.mxu0 0
      %1136 = vmatpush1.bf16.msra.mxu0 0
      %1137 = vmatprep.subr.bf16.mxu0 0
      %1138 = vmatpush1.bf16.msra.mxu0 0
      %1139 = vmatprep.subr.bf16.mxu0 0
      %1140 = vmatpush1.bf16.msra.mxu0 0
      %1141 = vmatprep.subr.bf16.mxu0 0
      %1142 = vmatpush1.bf16.msra.mxu0 0
      %1143 = vmatprep.subr.bf16.mxu0 0
      %1144 = vmatpush1.bf16.msra.mxu0 0
      %1145 = vmatprep.subr.bf16.mxu0 0
      %1146 = vmatpush1.bf16.msra.mxu0 0
      %1147 = vmatprep.subr.bf16.mxu0 0
      %1148 = vmatpush1.bf16.msra.mxu0 0
      %1149 = vmatprep.subr.bf16.mxu0 0
      %1150 = vmatpush1.bf16.msra.mxu0 0
      %1151 = vmatprep.subr.bf16.mxu0 0
      %1152 = vmatpush1.bf16.msra.mxu0 0
      %1153 = vmatprep.subr.bf16.mxu0 0
      %1154 = vmatpush1.bf16.msra.mxu0 0
      %1155 = vmatprep.mubr.bf16.mxu0 0
      %1156 = vmatmul.mubr.bf16.gmra.mrb[0].mxu0 %v1097
      %v1157 = vpop.f32.mrb[0].mxu0
      %v1158 = vadd.f32 0.0, %v1157
      %v1159 = vpop.f32.mrb[0].mxu0
      %v1160 = vpop.f32.mrb[0].mxu0
      %v1161 = vadd.f32 0.0, %v1160
      %v1162 = vpop.f32.mrb[0].mxu0
      %1163 = vmatprep.mubr.bf16.mxu0 0
      %1164 = vmatmul.mubr.bf16.gmra.mrb[0].mxu0 %v1100
      %v1165 = vpop.f32.mrb[0].mxu0
      %v1166 = vadd.f32 0.0, %v1165
      %v1167 = vpop.f32.mrb[0].mxu0
      %v1168 = vpop.f32.mrb[0].mxu0
      %v1169 = vadd.f32 0.0, %v1168
      %v1170 = vpop.f32.mrb[0].mxu0
      %1171 = vmatprep.mubr.bf16.mxu0 0
      %1172 = vmatmul.mubr.bf16.gmra.mrb[0].mxu0 %v1103
      %v1173 = vpop.f32.mrb[0].mxu0
      %v1174 = vadd.f32 0.0, %v1173
      %v1175 = vpop.f32.mrb[0].mxu0
      %v1176 = vpop.f32.mrb[0].mxu0
      %v1177 = vadd.f32 0.0, %v1176
      %v1178 = vpop.f32.mrb[0].mxu0
      %1179 = vmatprep.mubr.bf16.mxu0 0
      %1180 = vmatmul.mubr.bf16.gmra.mrb[0].mxu0 %v1106
      %v1181 = vpop.f32.mrb[0].mxu0
      %v1182 = vadd.f32 0.0, %v1181
      %v1183 = vpop.f32.mrb[0].mxu0
      %v1184 = vpop.f32.mrb[0].mxu0
      %v1185 = vadd.f32 0.0, %v1184
      %v1186 = vpop.f32.mrb[0].mxu0
      %1187 = vmatprep.mubr.bf16.mxu0 0
      %1188 = vmatmul.mubr.bf16.gmra.mrb[0].mxu0 %v1109
      %v1189 = vpop.f32.mrb[0].mxu0
      %v1190 = vadd.f32 0.0, %v1189
      %v1191 = vpop.f32.mrb[0].mxu0
      %v1192 = vpop.f32.mrb[0].mxu0
      %v1193 = vadd.f32 0.0, %v1192
      %v1194 = vpop.f32.mrb[0].mxu0
      %1195 = vmatprep.mubr.bf16.mxu0 0
      %1196 = vmatmul.mubr.bf16.gmra.mrb[0].mxu0 %v1112
      %v1197 = vpop.f32.mrb[0].mxu0
      %v1198 = vadd.f32 0.0, %v1197
      %v1199 = vpop.f32.mrb[0].mxu0
      %v1200 = vpop.f32.mrb[0].mxu0
      %v1201 = vadd.f32 0.0, %v1200
      %v1202 = vpop.f32.mrb[0].mxu0
      %1203 = vmatprep.mubr.bf16.mxu0 0
      %1204 = vmatmul.mubr.bf16.gmra.mrb[0].mxu0 %v1115
      %v1205 = vpop.f32.mrb[0].mxu0
      %v1206 = vadd.f32 0.0, %v1205
      %v1207 = vpop.f32.mrb[0].mxu0
      %v1208 = vpop.f32.mrb[0].mxu0
      %v1209 = vadd.f32 0.0, %v1208
      %v1210 = vpop.f32.mrb[0].mxu0
      %1211 = vmatprep.mubr.bf16.mxu0 0
      %1212 = vmatmul.mubr.bf16.gmra.mrb[0].mxu0 %v1118
      %v1213 = vpop.f32.mrb[0].mxu0
      %v1214 = vadd.f32 0.0, %v1213
      %v1215 = vpop.f32.mrb[0].mxu0
      %v1216 = vpop.f32.mrb[0].mxu0
      %v1217 = vadd.f32 0.0, %v1216
      %v1218 = vpop.f32.mrb[0].mxu0
      %1219 = vdwg.mxu0
      %v1220 = vld [vmem:[#allocation3] sm:$0xff]
      %v1221 = vld [vmem:[#allocation3 + $0x8] sm:$0xff]
      %v1222 = vld [vmem:[#allocation3 + $0x10] sm:$0xff]
      %v1223 = vld [vmem:[#allocation3 + $0x18] sm:$0xff]
      %v1224 = vld [vmem:[#allocation3 + $0x20] sm:$0xff]
      %v1225 = vld [vmem:[#allocation3 + $0x28] sm:$0xff]
      %v1226 = vld [vmem:[#allocation3 + $0x30] sm:$0xff]
      %v1227 = vld [vmem:[#allocation3 + $0x38] sm:$0xff]
      %v1228 = vld [vmem:[#allocation3 + $0x40] sm:$0xff]
      %v1229 = vld [vmem:[#allocation3 + $0x48] sm:$0xff]
      %v1230 = vld [vmem:[#allocation3 + $0x50] sm:$0xff]
      %v1231 = vld [vmem:[#allocation3 + $0x58] sm:$0xff]
      %v1232 = vld [vmem:[#allocation3 + $0x60] sm:$0xff]
      %v1233 = vld [vmem:[#allocation3 + $0x68] sm:$0xff]
      %v1234 = vld [vmem:[#allocation3 + $0x70] sm:$0xff]
      %v1235 = vld [vmem:[#allocation3 + $0x78] sm:$0xff]
      %v1236 = vadd.f32 %v1220, %v1158
      %v1237 = vadd.f32 %v1221, %v1161
      %v1238 = vadd.f32 %v1222, %v1166
      %v1239 = vadd.f32 %v1223, %v1169
      %v1240 = vadd.f32 %v1224, %v1174
      %v1241 = vadd.f32 %v1225, %v1177
      %v1242 = vadd.f32 %v1226, %v1182
      %v1243 = vadd.f32 %v1227, %v1185
      %v1244 = vadd.f32 %v1228, %v1190
      %v1245 = vadd.f32 %v1229, %v1193
      %v1246 = vadd.f32 %v1230, %v1198
      %v1247 = vadd.f32 %v1231, %v1201
      %v1248 = vadd.f32 %v1232, %v1206
      %v1249 = vadd.f32 %v1233, %v1209
      %v1250 = vadd.f32 %v1234, %v1214
      %v1251 = vadd.f32 %v1235, %v1217
      %1252 = vst.msk [vmem:[#allocation3] sm:$0xff] %vm571, %v1236
      %1253 = vst.msk [vmem:[#allocation3 + $0x8] sm:$0xff] %vm571, %v1237
      %1254 = vst.msk [vmem:[#allocation3 + $0x10] sm:$0xff] %vm571, %v1238
      %1255 = vst.msk [vmem:[#allocation3 + $0x18] sm:$0xff] %vm571, %v1239
      %1256 = vst.msk [vmem:[#allocation3 + $0x20] sm:$0xff] %vm571, %v1240
      %1257 = vst.msk [vmem:[#allocation3 + $0x28] sm:$0xff] %vm571, %v1241
      %1258 = vst.msk [vmem:[#allocation3 + $0x30] sm:$0xff] %vm571, %v1242
      %1259 = vst.msk [vmem:[#allocation3 + $0x38] sm:$0xff] %vm571, %v1243
      %1260 = vst.msk [vmem:[#allocation3 + $0x40] sm:$0xff] %vm571, %v1244
      %1261 = vst.msk [vmem:[#allocation3 + $0x48] sm:$0xff] %vm571, %v1245
      %1262 = vst.msk [vmem:[#allocation3 + $0x50] sm:$0xff] %vm571, %v1246
      %1263 = vst.msk [vmem:[#allocation3 + $0x58] sm:$0xff] %vm571, %v1247
      %1264 = vst.msk [vmem:[#allocation3 + $0x60] sm:$0xff] %vm571, %v1248
      %1265 = vst.msk [vmem:[#allocation3 + $0x68] sm:$0xff] %vm571, %v1249
      %1266 = vst.msk [vmem:[#allocation3 + $0x70] sm:$0xff] %vm571, %v1250
      %1267 = vst.msk [vmem:[#allocation3 + $0x78] sm:$0xff] %vm571, %v1251
      %v1268 = vld [vmem:[#allocation2 + $0x8] sm:$0xf]
      %v1269 = vld [vmem:[#allocation2 + $0xc] sm:$0xf]
      %v1270 = vld [vmem:[#allocation2 + $0x10] sm:$0xf]
      %v1271 = vld [vmem:[#allocation2 + $0x14] sm:$0xf]
      %v1272 = vld [vmem:[#allocation2 + $0x18] sm:$0xf]
      %v1273 = vld [vmem:[#allocation2 + $0x1c] sm:$0xf]
      %v1274 = vld [vmem:[#allocation2 + $0x20] sm:$0xf]
      %v1275 = vld [vmem:[#allocation2 + $0x24] sm:$0xf]
      %v1276 = vld [vmem:[#allocation2 + $0x28] sm:$0xf]
      %v1277 = vld [vmem:[#allocation2 + $0x2c] sm:$0xf]
      %v1278 = vld [vmem:[#allocation2 + $0x30] sm:$0xf]
      %v1279 = vld [vmem:[#allocation2 + $0x34] sm:$0xf]
      %v1280 = vld [vmem:[#allocation2 + $0x38] sm:$0xf]
      %v1281 = vld [vmem:[#allocation2 + $0x3c] sm:$0xf]
      %v1282 = vld [vmem:[#allocation2 + $0x40] sm:$0xf]
      %v1283 = vld [vmem:[#allocation2 + $0x44] sm:$0xf]
      %s1284 = scalar_lea.vmem %s3, 12
      %v1285 = vld [vmem:[%s1284] sm:$0xf]
      %v1302 = vunpack.c.l.b16 %v1268
      %v1303 = vunpack.c.l.b16 %v1269
      %v1304 = vunpack.c.l.b16 %v1270
      %v1305 = vunpack.c.l.b16 %v1271
      %v1306 = vunpack.c.l.b16 %v1272
      %v1307 = vunpack.c.l.b16 %v1273
      %v1308 = vunpack.c.l.b16 %v1274
      %v1309 = vunpack.c.l.b16 %v1275
      %v1310 = vunpack.c.l.b16 %v1276
      %v1311 = vunpack.c.l.b16 %v1277
      %v1312 = vunpack.c.l.b16 %v1278
      %v1313 = vunpack.c.l.b16 %v1279
      %v1314 = vunpack.c.l.b16 %v1280
      %v1315 = vunpack.c.l.b16 %v1281
      %v1316 = vunpack.c.l.b16 %v1282
      %v1317 = vunpack.c.l.b16 %v1283
      %v1318 = vpack.c.b16 %v1303, %v1302
      %v1319 = vpack.c.b16 %v1305, %v1304
      %v1320 = vpack.c.b16 %v1307, %v1306
      %v1321 = vpack.c.b16 %v1309, %v1308
      %v1322 = vpack.c.b16 %v1311, %v1310
      %v1323 = vpack.c.b16 %v1313, %v1312
      %v1324 = vpack.c.b16 %v1315, %v1314
      %v1325 = vpack.c.b16 %v1317, %v1316
      %v1327 = vsel %vm571, %v1318, 0
      %v1330 = vsel %vm571, %v1319, 0
      %v1333 = vsel %vm571, %v1320, 0
      %v1336 = vsel %vm571, %v1321, 0
      %v1339 = vsel %vm571, %v1322, 0
      %v1342 = vsel %vm571, %v1323, 0
      %v1345 = vsel %vm571, %v1324, 0
      %v1348 = vsel %vm571, %v1325, 0
      %v1351 = vsel %vm596, %v1285, 0
      %1353 = vmatprep.subr.bf16.mxu0 0
      %1354 = vmatpush1.bf16.msra.mxu0 %v1351
      %1355 = vmatprep.subr.bf16.mxu0 0
      %1356 = vmatpush1.bf16.msra.mxu0 0
      %1357 = vmatprep.subr.bf16.mxu0 0
      %1358 = vmatpush1.bf16.msra.mxu0 0
      %1359 = vmatprep.subr.bf16.mxu0 0
      %1360 = vmatpush1.bf16.msra.mxu0 0
      %1361 = vmatprep.subr.bf16.mxu0 0
      %1362 = vmatpush1.bf16.msra.mxu0 0
      %1363 = vmatprep.subr.bf16.mxu0 0
      %1364 = vmatpush1.bf16.msra.mxu0 0
      %1365 = vmatprep.subr.bf16.mxu0 0
      %1366 = vmatpush1.bf16.msra.mxu0 0
      %1367 = vmatprep.subr.bf16.mxu0 0
      %1368 = vmatpush1.bf16.msra.mxu0 0
      %1369 = vmatprep.subr.bf16.mxu0 0
      %1370 = vmatpush1.bf16.msra.mxu0 0
      %1371 = vmatprep.subr.bf16.mxu0 0
      %1372 = vmatpush1.bf16.msra.mxu0 0
      %1373 = vmatprep.subr.bf16.mxu0 0
      %1374 = vmatpush1.bf16.msra.mxu0 0
      %1375 = vmatprep.subr.bf16.mxu0 0
      %1376 = vmatpush1.bf16.msra.mxu0 0
      %1377 = vmatprep.subr.bf16.mxu0 0
      %1378 = vmatpush1.bf16.msra.mxu0 0
      %1379 = vmatprep.subr.bf16.mxu0 0
      %1380 = vmatpush1.bf16.msra.mxu0 0
      %1381 = vmatprep.subr.bf16.mxu0 0
      %1382 = vmatpush1.bf16.msra.mxu0 0
      %1383 = vmatprep.subr.bf16.mxu0 0
      %1384 = vmatpush1.bf16.msra.mxu0 0
      %1385 = vmatprep.mubr.bf16.mxu0 0
      %1386 = vmatmul.mubr.bf16.gmra.mrb[0].mxu0 %v1327
      %v1387 = vpop.f32.mrb[0].mxu0
      %v1388 = vadd.f32 0.0, %v1387
      %v1389 = vpop.f32.mrb[0].mxu0
      %v1390 = vpop.f32.mrb[0].mxu0
      %v1391 = vadd.f32 0.0, %v1390
      %v1392 = vpop.f32.mrb[0].mxu0
      %1393 = vmatprep.mubr.bf16.mxu0 0
      %1394 = vmatmul.mubr.bf16.gmra.mrb[0].mxu0 %v1330
      %v1395 = vpop.f32.mrb[0].mxu0
      %v1396 = vadd.f32 0.0, %v1395
      %v1397 = vpop.f32.mrb[0].mxu0
      %v1398 = vpop.f32.mrb[0].mxu0
      %v1399 = vadd.f32 0.0, %v1398
      %v1400 = vpop.f32.mrb[0].mxu0
      %1401 = vmatprep.mubr.bf16.mxu0 0
      %1402 = vmatmul.mubr.bf16.gmra.mrb[0].mxu0 %v1333
      %v1403 = vpop.f32.mrb[0].mxu0
      %v1404 = vadd.f32 0.0, %v1403
      %v1405 = vpop.f32.mrb[0].mxu0
      %v1406 = vpop.f32.mrb[0].mxu0
      %v1407 = vadd.f32 0.0, %v1406
      %v1408 = vpop.f32.mrb[0].mxu0
      %1409 = vmatprep.mubr.bf16.mxu0 0
      %1410 = vmatmul.mubr.bf16.gmra.mrb[0].mxu0 %v1336
      %v1411 = vpop.f32.mrb[0].mxu0
      %v1412 = vadd.f32 0.0, %v1411
      %v1413 = vpop.f32.mrb[0].mxu0
      %v1414 = vpop.f32.mrb[0].mxu0
      %v1415 = vadd.f32 0.0, %v1414
      %v1416 = vpop.f32.mrb[0].mxu0
      %1417 = vmatprep.mubr.bf16.mxu0 0
      %1418 = vmatmul.mubr.bf16.gmra.mrb[0].mxu0 %v1339
      %v1419 = vpop.f32.mrb[0].mxu0
      %v1420 = vadd.f32 0.0, %v1419
      %v1421 = vpop.f32.mrb[0].mxu0
      %v1422 = vpop.f32.mrb[0].mxu0
      %v1423 = vadd.f32 0.0, %v1422
      %v1424 = vpop.f32.mrb[0].mxu0
      %1425 = vmatprep.mubr.bf16.mxu0 0
      %1426 = vmatmul.mubr.bf16.gmra.mrb[0].mxu0 %v1342
      %v1427 = vpop.f32.mrb[0].mxu0
      %v1428 = vadd.f32 0.0, %v1427
      %v1429 = vpop.f32.mrb[0].mxu0
      %v1430 = vpop.f32.mrb[0].mxu0
      %v1431 = vadd.f32 0.0, %v1430
      %v1432 = vpop.f32.mrb[0].mxu0
      %1433 = vmatprep.mubr.bf16.mxu0 0
      %1434 = vmatmul.mubr.bf16.gmra.mrb[0].mxu0 %v1345
      %v1435 = vpop.f32.mrb[0].mxu0
      %v1436 = vadd.f32 0.0, %v1435
      %v1437 = vpop.f32.mrb[0].mxu0
      %v1438 = vpop.f32.mrb[0].mxu0
      %v1439 = vadd.f32 0.0, %v1438
      %v1440 = vpop.f32.mrb[0].mxu0
      %1441 = vmatprep.mubr.bf16.mxu0 0
      %1442 = vmatmul.mubr.bf16.gmra.mrb[0].mxu0 %v1348
      %v1443 = vpop.f32.mrb[0].mxu0
      %v1444 = vadd.f32 0.0, %v1443
      %v1445 = vpop.f32.mrb[0].mxu0
      %v1446 = vpop.f32.mrb[0].mxu0
      %v1447 = vadd.f32 0.0, %v1446
      %v1448 = vpop.f32.mrb[0].mxu0
      %1449 = vdwg.mxu0
      %v1450 = vld [vmem:[#allocation3] sm:$0xff]
      %v1451 = vld [vmem:[#allocation3 + $0x8] sm:$0xff]
      %v1452 = vld [vmem:[#allocation3 + $0x10] sm:$0xff]
      %v1453 = vld [vmem:[#allocation3 + $0x18] sm:$0xff]
      %v1454 = vld [vmem:[#allocation3 + $0x20] sm:$0xff]
      %v1455 = vld [vmem:[#allocation3 + $0x28] sm:$0xff]
      %v1456 = vld [vmem:[#allocation3 + $0x30] sm:$0xff]
      %v1457 = vld [vmem:[#allocation3 + $0x38] sm:$0xff]
      %v1458 = vld [vmem:[#allocation3 + $0x40] sm:$0xff]
      %v1459 = vld [vmem:[#allocation3 + $0x48] sm:$0xff]
      %v1460 = vld [vmem:[#allocation3 + $0x50] sm:$0xff]
      %v1461 = vld [vmem:[#allocation3 + $0x58] sm:$0xff]
      %v1462 = vld [vmem:[#allocation3 + $0x60] sm:$0xff]
      %v1463 = vld [vmem:[#allocation3 + $0x68] sm:$0xff]
      %v1464 = vld [vmem:[#allocation3 + $0x70] sm:$0xff]
      %v1465 = vld [vmem:[#allocation3 + $0x78] sm:$0xff]
      %v1466 = vadd.f32 %v1450, %v1388
      %v1467 = vadd.f32 %v1451, %v1391
      %v1468 = vadd.f32 %v1452, %v1396
      %v1469 = vadd.f32 %v1453, %v1399
      %v1470 = vadd.f32 %v1454, %v1404
      %v1471 = vadd.f32 %v1455, %v1407
      %v1472 = vadd.f32 %v1456, %v1412
      %v1473 = vadd.f32 %v1457, %v1415
      %v1474 = vadd.f32 %v1458, %v1420
      %v1475 = vadd.f32 %v1459, %v1423
      %v1476 = vadd.f32 %v1460, %v1428
      %v1477 = vadd.f32 %v1461, %v1431
      %v1478 = vadd.f32 %v1462, %v1436
      %v1479 = vadd.f32 %v1463, %v1439
      %v1480 = vadd.f32 %v1464, %v1444
      %v1481 = vadd.f32 %v1465, %v1447
      %1482 = vst.msk [vmem:[#allocation3] sm:$0xff] %vm571, %v1466
      %1483 = vst.msk [vmem:[#allocation3 + $0x8] sm:$0xff] %vm571, %v1467
      %1484 = vst.msk [vmem:[#allocation3 + $0x10] sm:$0xff] %vm571, %v1468
      %1485 = vst.msk [vmem:[#allocation3 + $0x18] sm:$0xff] %vm571, %v1469
      %1486 = vst.msk [vmem:[#allocation3 + $0x20] sm:$0xff] %vm571, %v1470
      %1487 = vst.msk [vmem:[#allocation3 + $0x28] sm:$0xff] %vm571, %v1471
      %1488 = vst.msk [vmem:[#allocation3 + $0x30] sm:$0xff] %vm571, %v1472
      %1489 = vst.msk [vmem:[#allocation3 + $0x38] sm:$0xff] %vm571, %v1473
      %1490 = vst.msk [vmem:[#allocation3 + $0x40] sm:$0xff] %vm571, %v1474
      %1491 = vst.msk [vmem:[#allocation3 + $0x48] sm:$0xff] %vm571, %v1475
      %1492 = vst.msk [vmem:[#allocation3 + $0x50] sm:$0xff] %vm571, %v1476
      %1493 = vst.msk [vmem:[#allocation3 + $0x58] sm:$0xff] %vm571, %v1477
      %1494 = vst.msk [vmem:[#allocation3 + $0x60] sm:$0xff] %vm571, %v1478
      %1495 = vst.msk [vmem:[#allocation3 + $0x68] sm:$0xff] %vm571, %v1479
      %1496 = vst.msk [vmem:[#allocation3 + $0x70] sm:$0xff] %vm571, %v1480
      %1497 = vst.msk [vmem:[#allocation3 + $0x78] sm:$0xff] %vm571, %v1481
      %v1498 = vld [vmem:[#allocation2 + $0x8] sm:$0xf]
      %v1499 = vld [vmem:[#allocation2 + $0xc] sm:$0xf]
      %v1500 = vld [vmem:[#allocation2 + $0x10] sm:$0xf]
      %v1501 = vld [vmem:[#allocation2 + $0x14] sm:$0xf]
      %v1502 = vld [vmem:[#allocation2 + $0x18] sm:$0xf]
      %v1503 = vld [vmem:[#allocation2 + $0x1c] sm:$0xf]
      %v1504 = vld [vmem:[#allocation2 + $0x20] sm:$0xf]
      %v1505 = vld [vmem:[#allocation2 + $0x24] sm:$0xf]
      %v1506 = vld [vmem:[#allocation2 + $0x28] sm:$0xf]
      %v1507 = vld [vmem:[#allocation2 + $0x2c] sm:$0xf]
      %v1508 = vld [vmem:[#allocation2 + $0x30] sm:$0xf]
      %v1509 = vld [vmem:[#allocation2 + $0x34] sm:$0xf]
      %v1510 = vld [vmem:[#allocation2 + $0x38] sm:$0xf]
      %v1511 = vld [vmem:[#allocation2 + $0x3c] sm:$0xf]
      %v1512 = vld [vmem:[#allocation2 + $0x40] sm:$0xf]
      %v1513 = vld [vmem:[#allocation2 + $0x44] sm:$0xf]
      %v1514 = vld [vmem:[#allocation2 + $0x48] sm:$0x1]
      %s1515 = scalar_lea.vmem %s3, 16
      %v1516 = vld [vmem:[%s1515] sm:$0xf]
      %v1534 = vunpack.c.l.b16 %v1498
      %v1535 = vunpack.c.l.b16 %v1499
      %v1536 = vunpack.c.l.b16 %v1500
      %v1537 = vunpack.c.l.b16 %v1501
      %v1538 = vunpack.c.l.b16 %v1502
      %v1539 = vunpack.c.l.b16 %v1503
      %v1540 = vunpack.c.l.b16 %v1504
      %v1541 = vunpack.c.l.b16 %v1505
      %v1542 = vunpack.c.l.b16 %v1506
      %v1543 = vunpack.c.l.b16 %v1507
      %v1544 = vunpack.c.l.b16 %v1508
      %v1545 = vunpack.c.l.b16 %v1509
      %v1546 = vunpack.c.l.b16 %v1510
      %v1547 = vunpack.c.l.b16 %v1511
      %v1548 = vunpack.c.l.b16 %v1512
      %v1549 = vunpack.c.l.b16 %v1513
      %v1550 = vunpack.c.l.b16 %v1514
      %v1551 = vpack.c.b16 %v1535, %v1534
      %v1552 = vpack.c.b16 %v1537, %v1536
      %v1553 = vpack.c.b16 %v1539, %v1538
      %v1554 = vpack.c.b16 %v1541, %v1540
      %v1555 = vpack.c.b16 %v1543, %v1542
      %v1556 = vpack.c.b16 %v1545, %v1544
      %v1557 = vpack.c.b16 %v1547, %v1546
      %v1558 = vpack.c.b16 %v1549, %v1548
      %v1559 = vpack.c.b16 %v1550, %v1550
      %v1561 = vshrl.u32 %v1551, 16
      %v1563 = vshll.u32 %v1551, 16
      %v1565 = vrot.slane %v1563, 1
      %v1566 = vor.u32 %v1561, %v1565
      %v1568 = vshll.u32 %v1552, 16
      %v1570 = vrot.slane %v1568, 1
      %v1571 = vsel %vm775, %v1566, %v1570
      %v1572 = vshrl.u32 %v1552, 16
      %v1574 = vor.u32 %v1572, %v1570
      %v1576 = vshll.u32 %v1553, 16
      %v1578 = vrot.slane %v1576, 1
      %v1579 = vsel %vm775, %v1574, %v1578
      %v1580 = vshrl.u32 %v1553, 16
      %v1582 = vor.u32 %v1580, %v1578
      %v1584 = vshll.u32 %v1554, 16
      %v1586 = vrot.slane %v1584, 1
      %v1587 = vsel %vm775, %v1582, %v1586
      %v1588 = vshrl.u32 %v1554, 16
      %v1590 = vor.u32 %v1588, %v1586
      %v1592 = vshll.u32 %v1555, 16
      %v1594 = vrot.slane %v1592, 1
      %v1595 = vsel %vm775, %v1590, %v1594
      %v1596 = vshrl.u32 %v1555, 16
      %v1598 = vor.u32 %v1596, %v1594
      %v1600 = vshll.u32 %v1556, 16
      %v1602 = vrot.slane %v1600, 1
      %v1603 = vsel %vm775, %v1598, %v1602
      %v1604 = vshrl.u32 %v1556, 16
      %v1606 = vor.u32 %v1604, %v1602
      %v1608 = vshll.u32 %v1557, 16
      %v1610 = vrot.slane %v1608, 1
      %v1611 = vsel %vm775, %v1606, %v1610
      %v1612 = vshrl.u32 %v1557, 16
      %v1614 = vor.u32 %v1612, %v1610
      %v1616 = vshll.u32 %v1558, 16
      %v1618 = vrot.slane %v1616, 1
      %v1619 = vsel %vm775, %v1614, %v1618
      %v1620 = vshrl.u32 %v1558, 16
      %v1622 = vor.u32 %v1620, %v1618
      %v1624 = vshll.u32 %v1559, 16
      %v1626 = vrot.slane %v1624, 1
      %v1627 = vsel %vm775, %v1622, %v1626
      %v1629 = vsel %vm571, %v1571, 0
      %v1632 = vsel %vm571, %v1579, 0
      %v1635 = vsel %vm571, %v1587, 0
      %v1638 = vsel %vm571, %v1595, 0
      %v1641 = vsel %vm571, %v1603, 0
      %v1644 = vsel %vm571, %v1611, 0
      %v1647 = vsel %vm571, %v1619, 0
      %v1650 = vsel %vm571, %v1627, 0
      %v1653 = vsel %vm596, %v1516, 0
      %1655 = vmatprep.subr.bf16.mxu0 0
      %1656 = vmatpush1.bf16.msra.mxu0 %v1653
      %1657 = vmatprep.subr.bf16.mxu0 0
      %1658 = vmatpush1.bf16.msra.mxu0 0
      %1659 = vmatprep.subr.bf16.mxu0 0
      %1660 = vmatpush1.bf16.msra.mxu0 0
      %1661 = vmatprep.subr.bf16.mxu0 0
      %1662 = vmatpush1.bf16.msra.mxu0 0
      %1663 = vmatprep.subr.bf16.mxu0 0
      %1664 = vmatpush1.bf16.msra.mxu0 0
      %1665 = vmatprep.subr.bf16.mxu0 0
      %1666 = vmatpush1.bf16.msra.mxu0 0
      %1667 = vmatprep.subr.bf16.mxu0 0
      %1668 = vmatpush1.bf16.msra.mxu0 0
      %1669 = vmatprep.subr.bf16.mxu0 0
      %1670 = vmatpush1.bf16.msra.mxu0 0
      %1671 = vmatprep.subr.bf16.mxu0 0
      %1672 = vmatpush1.bf16.msra.mxu0 0
      %1673 = vmatprep.subr.bf16.mxu0 0
      %1674 = vmatpush1.bf16.msra.mxu0 0
      %1675 = vmatprep.subr.bf16.mxu0 0
      %1676 = vmatpush1.bf16.msra.mxu0 0
      %1677 = vmatprep.subr.bf16.mxu0 0
      %1678 = vmatpush1.bf16.msra.mxu0 0
      %1679 = vmatprep.subr.bf16.mxu0 0
      %1680 = vmatpush1.bf16.msra.mxu0 0
      %1681 = vmatprep.subr.bf16.mxu0 0
      %1682 = vmatpush1.bf16.msra.mxu0 0
      %1683 = vmatprep.subr.bf16.mxu0 0
      %1684 = vmatpush1.bf16.msra.mxu0 0
      %1685 = vmatprep.subr.bf16.mxu0 0
      %1686 = vmatpush1.bf16.msra.mxu0 0
      %1687 = vmatprep.mubr.bf16.mxu0 0
      %1688 = vmatmul.mubr.bf16.gmra.mrb[0].mxu0 %v1629
      %v1689 = vpop.f32.mrb[0].mxu0
      %v1690 = vadd.f32 0.0, %v1689
      %v1691 = vpop.f32.mrb[0].mxu0
      %v1692 = vpop.f32.mrb[0].mxu0
      %v1693 = vadd.f32 0.0, %v1692
      %v1694 = vpop.f32.mrb[0].mxu0
      %1695 = vmatprep.mubr.bf16.mxu0 0
      %1696 = vmatmul.mubr.bf16.gmra.mrb[0].mxu0 %v1632
      %v1697 = vpop.f32.mrb[0].mxu0
      %v1698 = vadd.f32 0.0, %v1697
      %v1699 = vpop.f32.mrb[0].mxu0
      %v1700 = vpop.f32.mrb[0].mxu0
      %v1701 = vadd.f32 0.0, %v1700
      %v1702 = vpop.f32.mrb[0].mxu0
      %1703 = vmatprep.mubr.bf16.mxu0 0
      %1704 = vmatmul.mubr.bf16.gmra.mrb[0].mxu0 %v1635
      %v1705 = vpop.f32.mrb[0].mxu0
      %v1706 = vadd.f32 0.0, %v1705
      %v1707 = vpop.f32.mrb[0].mxu0
      %v1708 = vpop.f32.mrb[0].mxu0
      %v1709 = vadd.f32 0.0, %v1708
      %v1710 = vpop.f32.mrb[0].mxu0
      %1711 = vmatprep.mubr.bf16.mxu0 0
      %1712 = vmatmul.mubr.bf16.gmra.mrb[0].mxu0 %v1638
      %v1713 = vpop.f32.mrb[0].mxu0
      %v1714 = vadd.f32 0.0, %v1713
      %v1715 = vpop.f32.mrb[0].mxu0
      %v1716 = vpop.f32.mrb[0].mxu0
      %v1717 = vadd.f32 0.0, %v1716
      %v1718 = vpop.f32.mrb[0].mxu0
      %1719 = vmatprep.mubr.bf16.mxu0 0
      %1720 = vmatmul.mubr.bf16.gmra.mrb[0].mxu0 %v1641
      %v1721 = vpop.f32.mrb[0].mxu0
      %v1722 = vadd.f32 0.0, %v1721
      %v1723 = vpop.f32.mrb[0].mxu0
      %v1724 = vpop.f32.mrb[0].mxu0
      %v1725 = vadd.f32 0.0, %v1724
      %v1726 = vpop.f32.mrb[0].mxu0
      %1727 = vmatprep.mubr.bf16.mxu0 0
      %1728 = vmatmul.mubr.bf16.gmra.mrb[0].mxu0 %v1644
      %v1729 = vpop.f32.mrb[0].mxu0
      %v1730 = vadd.f32 0.0, %v1729
      %v1731 = vpop.f32.mrb[0].mxu0
      %v1732 = vpop.f32.mrb[0].mxu0
      %v1733 = vadd.f32 0.0, %v1732
      %v1734 = vpop.f32.mrb[0].mxu0
      %1735 = vmatprep.mubr.bf16.mxu0 0
      %1736 = vmatmul.mubr.bf16.gmra.mrb[0].mxu0 %v1647
      %v1737 = vpop.f32.mrb[0].mxu0
      %v1738 = vadd.f32 0.0, %v1737
      %v1739 = vpop.f32.mrb[0].mxu0
      %v1740 = vpop.f32.mrb[0].mxu0
      %v1741 = vadd.f32 0.0, %v1740
      %v1742 = vpop.f32.mrb[0].mxu0
      %1743 = vmatprep.mubr.bf16.mxu0 0
      %1744 = vmatmul.mubr.bf16.gmra.mrb[0].mxu0 %v1650
      %v1745 = vpop.f32.mrb[0].mxu0
      %v1746 = vadd.f32 0.0, %v1745
      %v1747 = vpop.f32.mrb[0].mxu0
      %v1748 = vpop.f32.mrb[0].mxu0
      %v1749 = vadd.f32 0.0, %v1748
      %v1750 = vpop.f32.mrb[0].mxu0
      %1751 = vdwg.mxu0
      %v1752 = vld [vmem:[#allocation3] sm:$0xff]
      %v1753 = vld [vmem:[#allocation3 + $0x8] sm:$0xff]
      %v1754 = vld [vmem:[#allocation3 + $0x10] sm:$0xff]
      %v1755 = vld [vmem:[#allocation3 + $0x18] sm:$0xff]
      %v1756 = vld [vmem:[#allocation3 + $0x20] sm:$0xff]
      %v1757 = vld [vmem:[#allocation3 + $0x28] sm:$0xff]
      %v1758 = vld [vmem:[#allocation3 + $0x30] sm:$0xff]
      %v1759 = vld [vmem:[#allocation3 + $0x38] sm:$0xff]
      %v1760 = vld [vmem:[#allocation3 + $0x40] sm:$0xff]
      %v1761 = vld [vmem:[#allocation3 + $0x48] sm:$0xff]
      %v1762 = vld [vmem:[#allocation3 + $0x50] sm:$0xff]
      %v1763 = vld [vmem:[#allocation3 + $0x58] sm:$0xff]
      %v1764 = vld [vmem:[#allocation3 + $0x60] sm:$0xff]
      %v1765 = vld [vmem:[#allocation3 + $0x68] sm:$0xff]
      %v1766 = vld [vmem:[#allocation3 + $0x70] sm:$0xff]
      %v1767 = vld [vmem:[#allocation3 + $0x78] sm:$0xff]
      %v1768 = vadd.f32 %v1752, %v1690
      %v1769 = vadd.f32 %v1753, %v1693
      %v1770 = vadd.f32 %v1754, %v1698
      %v1771 = vadd.f32 %v1755, %v1701
      %v1772 = vadd.f32 %v1756, %v1706
      %v1773 = vadd.f32 %v1757, %v1709
      %v1774 = vadd.f32 %v1758, %v1714
      %v1775 = vadd.f32 %v1759, %v1717
      %v1776 = vadd.f32 %v1760, %v1722
      %v1777 = vadd.f32 %v1761, %v1725
      %v1778 = vadd.f32 %v1762, %v1730
      %v1779 = vadd.f32 %v1763, %v1733
      %v1780 = vadd.f32 %v1764, %v1738
      %v1781 = vadd.f32 %v1765, %v1741
      %v1782 = vadd.f32 %v1766, %v1746
      %v1783 = vadd.f32 %v1767, %v1749
      %1784 = vst.msk [vmem:[#allocation3] sm:$0xff] %vm571, %v1768
      %1785 = vst.msk [vmem:[#allocation3 + $0x8] sm:$0xff] %vm571, %v1769
      %1786 = vst.msk [vmem:[#allocation3 + $0x10] sm:$0xff] %vm571, %v1770
      %1787 = vst.msk [vmem:[#allocation3 + $0x18] sm:$0xff] %vm571, %v1771
      %1788 = vst.msk [vmem:[#allocation3 + $0x20] sm:$0xff] %vm571, %v1772
      %1789 = vst.msk [vmem:[#allocation3 + $0x28] sm:$0xff] %vm571, %v1773
      %1790 = vst.msk [vmem:[#allocation3 + $0x30] sm:$0xff] %vm571, %v1774
      %1791 = vst.msk [vmem:[#allocation3 + $0x38] sm:$0xff] %vm571, %v1775
      %1792 = vst.msk [vmem:[#allocation3 + $0x40] sm:$0xff] %vm571, %v1776
      %1793 = vst.msk [vmem:[#allocation3 + $0x48] sm:$0xff] %vm571, %v1777
      %1794 = vst.msk [vmem:[#allocation3 + $0x50] sm:$0xff] %vm571, %v1778
      %1795 = vst.msk [vmem:[#allocation3 + $0x58] sm:$0xff] %vm571, %v1779
      %1796 = vst.msk [vmem:[#allocation3 + $0x60] sm:$0xff] %vm571, %v1780
      %1797 = vst.msk [vmem:[#allocation3 + $0x68] sm:$0xff] %vm571, %v1781
      %1798 = vst.msk [vmem:[#allocation3 + $0x70] sm:$0xff] %vm571, %v1782
      %1799 = vst.msk [vmem:[#allocation3 + $0x78] sm:$0xff] %vm571, %v1783
      %v1800 = vld [vmem:[#allocation2 + $0x8] sm:$0xe]
      %v1801 = vld [vmem:[#allocation2 + $0xc] sm:$0xf]
      %v1802 = vld [vmem:[#allocation2 + $0x10] sm:$0xf]
      %v1803 = vld [vmem:[#allocation2 + $0x14] sm:$0xf]
      %v1804 = vld [vmem:[#allocation2 + $0x18] sm:$0xf]
      %v1805 = vld [vmem:[#allocation2 + $0x1c] sm:$0xf]
      %v1806 = vld [vmem:[#allocation2 + $0x20] sm:$0xf]
      %v1807 = vld [vmem:[#allocation2 + $0x24] sm:$0xf]
      %v1808 = vld [vmem:[#allocation2 + $0x28] sm:$0xf]
      %v1809 = vld [vmem:[#allocation2 + $0x2c] sm:$0xf]
      %v1810 = vld [vmem:[#allocation2 + $0x30] sm:$0xf]
      %v1811 = vld [vmem:[#allocation2 + $0x34] sm:$0xf]
      %v1812 = vld [vmem:[#allocation2 + $0x38] sm:$0xf]
      %v1813 = vld [vmem:[#allocation2 + $0x3c] sm:$0xf]
      %v1814 = vld [vmem:[#allocation2 + $0x40] sm:$0xf]
      %v1815 = vld [vmem:[#allocation2 + $0x44] sm:$0xf]
      %v1816 = vld [vmem:[#allocation2 + $0x48] sm:$0x1]
      %s1817 = scalar_lea.vmem %s3, 20
      %v1818 = vld [vmem:[%s1817] sm:$0xf]
      %v1836 = vunpack.c.l.b16 %v1800
      %v1837 = vunpack.c.l.b16 %v1801
      %v1838 = vunpack.c.l.b16 %v1802
      %v1839 = vunpack.c.l.b16 %v1803
      %v1840 = vunpack.c.l.b16 %v1804
      %v1841 = vunpack.c.l.b16 %v1805
      %v1842 = vunpack.c.l.b16 %v1806
      %v1843 = vunpack.c.l.b16 %v1807
      %v1844 = vunpack.c.l.b16 %v1808
      %v1845 = vunpack.c.l.b16 %v1809
      %v1846 = vunpack.c.l.b16 %v1810
      %v1847 = vunpack.c.l.b16 %v1811
      %v1848 = vunpack.c.l.b16 %v1812
      %v1849 = vunpack.c.l.b16 %v1813
      %v1850 = vunpack.c.l.b16 %v1814
      %v1851 = vunpack.c.l.b16 %v1815
      %v1852 = vunpack.c.l.b16 %v1816
      %v1853 = vpack.c.b16 %v1837, %v1836
      %v1854 = vpack.c.b16 %v1839, %v1838
      %v1855 = vpack.c.b16 %v1841, %v1840
      %v1856 = vpack.c.b16 %v1843, %v1842
      %v1857 = vpack.c.b16 %v1845, %v1844
      %v1858 = vpack.c.b16 %v1847, %v1846
      %v1859 = vpack.c.b16 %v1849, %v1848
      %v1860 = vpack.c.b16 %v1851, %v1850
      %v1861 = vpack.c.b16 %v1852, %v1852
      %v1862 = vrot.slane %v1853, 1
      %v1863 = vrot.slane %v1854, 1
      %v1864 = vsel %vm1078, %v1862, %v1863
      %v1865 = vrot.slane %v1855, 1
      %v1866 = vsel %vm1078, %v1863, %v1865
      %v1867 = vrot.slane %v1856, 1
      %v1868 = vsel %vm1078, %v1865, %v1867
      %v1869 = vrot.slane %v1857, 1
      %v1870 = vsel %vm1078, %v1867, %v1869
      %v1871 = vrot.slane %v1858, 1
      %v1872 = vsel %vm1078, %v1869, %v1871
      %v1873 = vrot.slane %v1859, 1
      %v1874 = vsel %vm1078, %v1871, %v1873
      %v1875 = vrot.slane %v1860, 1
      %v1876 = vsel %vm1078, %v1873, %v1875
      %v1877 = vrot.slane %v1861, 1
      %v1878 = vsel %vm1078, %v1875, %v1877
      %v1880 = vsel %vm571, %v1864, 0
      %v1883 = vsel %vm571, %v1866, 0
      %v1886 = vsel %vm571, %v1868, 0
      %v1889 = vsel %vm571, %v1870, 0
      %v1892 = vsel %vm571, %v1872, 0
      %v1895 = vsel %vm571, %v1874, 0
      %v1898 = vsel %vm571, %v1876, 0
      %v1901 = vsel %vm571, %v1878, 0
      %v1904 = vsel %vm596, %v1818, 0
      %1906 = vmatprep.subr.bf16.mxu0 0
      %1907 = vmatpush1.bf16.msra.mxu0 %v1904
      %1908 = vmatprep.subr.bf16.mxu0 0
      %1909 = vmatpush1.bf16.msra.mxu0 0
      %1910 = vmatprep.subr.bf16.mxu0 0
      %1911 = vmatpush1.bf16.msra.mxu0 0
      %1912 = vmatprep.subr.bf16.mxu0 0
      %1913 = vmatpush1.bf16.msra.mxu0 0
      %1914 = vmatprep.subr.bf16.mxu0 0
      %1915 = vmatpush1.bf16.msra.mxu0 0
      %1916 = vmatprep.subr.bf16.mxu0 0
      %1917 = vmatpush1.bf16.msra.mxu0 0
      %1918 = vmatprep.subr.bf16.mxu0 0
      %1919 = vmatpush1.bf16.msra.mxu0 0
      %1920 = vmatprep.subr.bf16.mxu0 0
      %1921 = vmatpush1.bf16.msra.mxu0 0
      %1922 = vmatprep.subr.bf16.mxu0 0
      %1923 = vmatpush1.bf16.msra.mxu0 0
      %1924 = vmatprep.subr.bf16.mxu0 0
      %1925 = vmatpush1.bf16.msra.mxu0 0
      %1926 = vmatprep.subr.bf16.mxu0 0
      %1927 = vmatpush1.bf16.msra.mxu0 0
      %1928 = vmatprep.subr.bf16.mxu0 0
      %1929 = vmatpush1.bf16.msra.mxu0 0
      %1930 = vmatprep.subr.bf16.mxu0 0
      %1931 = vmatpush1.bf16.msra.mxu0 0
      %1932 = vmatprep.subr.bf16.mxu0 0
      %1933 = vmatpush1.bf16.msra.mxu0 0
      %1934 = vmatprep.subr.bf16.mxu0 0
      %1935 = vmatpush1.bf16.msra.mxu0 0
      %1936 = vmatprep.subr.bf16.mxu0 0
      %1937 = vmatpush1.bf16.msra.mxu0 0
      %1938 = vmatprep.mubr.bf16.mxu0 0
      %1939 = vmatmul.mubr.bf16.gmra.mrb[0].mxu0 %v1880
      %v1940 = vpop.f32.mrb[0].mxu0
      %v1941 = vadd.f32 0.0, %v1940
      %v1942 = vpop.f32.mrb[0].mxu0
      %v1943 = vpop.f32.mrb[0].mxu0
      %v1944 = vadd.f32 0.0, %v1943
      %v1945 = vpop.f32.mrb[0].mxu0
      %1946 = vmatprep.mubr.bf16.mxu0 0
      %1947 = vmatmul.mubr.bf16.gmra.mrb[0].mxu0 %v1883
      %v1948 = vpop.f32.mrb[0].mxu0
      %v1949 = vadd.f32 0.0, %v1948
      %v1950 = vpop.f32.mrb[0].mxu0
      %v1951 = vpop.f32.mrb[0].mxu0
      %v1952 = vadd.f32 0.0, %v1951
      %v1953 = vpop.f32.mrb[0].mxu0
      %1954 = vmatprep.mubr.bf16.mxu0 0
      %1955 = vmatmul.mubr.bf16.gmra.mrb[0].mxu0 %v1886
      %v1956 = vpop.f32.mrb[0].mxu0
      %v1957 = vadd.f32 0.0, %v1956
      %v1958 = vpop.f32.mrb[0].mxu0
      %v1959 = vpop.f32.mrb[0].mxu0
      %v1960 = vadd.f32 0.0, %v1959
      %v1961 = vpop.f32.mrb[0].mxu0
      %1962 = vmatprep.mubr.bf16.mxu0 0
      %1963 = vmatmul.mubr.bf16.gmra.mrb[0].mxu0 %v1889
      %v1964 = vpop.f32.mrb[0].mxu0
      %v1965 = vadd.f32 0.0, %v1964
      %v1966 = vpop.f32.mrb[0].mxu0
      %v1967 = vpop.f32.mrb[0].mxu0
      %v1968 = vadd.f32 0.0, %v1967
      %v1969 = vpop.f32.mrb[0].mxu0
      %1970 = vmatprep.mubr.bf16.mxu0 0
      %1971 = vmatmul.mubr.bf16.gmra.mrb[0].mxu0 %v1892
      %v1972 = vpop.f32.mrb[0].mxu0
      %v1973 = vadd.f32 0.0, %v1972
      %v1974 = vpop.f32.mrb[0].mxu0
      %v1975 = vpop.f32.mrb[0].mxu0
      %v1976 = vadd.f32 0.0, %v1975
      %v1977 = vpop.f32.mrb[0].mxu0
      %1978 = vmatprep.mubr.bf16.mxu0 0
      %1979 = vmatmul.mubr.bf16.gmra.mrb[0].mxu0 %v1895
      %v1980 = vpop.f32.mrb[0].mxu0
      %v1981 = vadd.f32 0.0, %v1980
      %v1982 = vpop.f32.mrb[0].mxu0
      %v1983 = vpop.f32.mrb[0].mxu0
      %v1984 = vadd.f32 0.0, %v1983
      %v1985 = vpop.f32.mrb[0].mxu0
      %1986 = vmatprep.mubr.bf16.mxu0 0
      %1987 = vmatmul.mubr.bf16.gmra.mrb[0].mxu0 %v1898
      %v1988 = vpop.f32.mrb[0].mxu0
      %v1989 = vadd.f32 0.0, %v1988
      %v1990 = vpop.f32.mrb[0].mxu0
      %v1991 = vpop.f32.mrb[0].mxu0
      %v1992 = vadd.f32 0.0, %v1991
      %v1993 = vpop.f32.mrb[0].mxu0
      %1994 = vmatprep.mubr.bf16.mxu0 0
      %1995 = vmatmul.mubr.bf16.gmra.mrb[0].mxu0 %v1901
      %v1996 = vpop.f32.mrb[0].mxu0
      %v1997 = vadd.f32 0.0, %v1996
      %v1998 = vpop.f32.mrb[0].mxu0
      %v1999 = vpop.f32.mrb[0].mxu0
      %v2000 = vadd.f32 0.0, %v1999
      %v2001 = vpop.f32.mrb[0].mxu0
      %2002 = vdwg.mxu0
      %v2003 = vld [vmem:[#allocation3] sm:$0xff]
      %v2004 = vld [vmem:[#allocation3 + $0x8] sm:$0xff]
      %v2005 = vld [vmem:[#allocation3 + $0x10] sm:$0xff]
      %v2006 = vld [vmem:[#allocation3 + $0x18] sm:$0xff]
      %v2007 = vld [vmem:[#allocation3 + $0x20] sm:$0xff]
      %v2008 = vld [vmem:[#allocation3 + $0x28] sm:$0xff]
      %v2009 = vld [vmem:[#allocation3 + $0x30] sm:$0xff]
      %v2010 = vld [vmem:[#allocation3 + $0x38] sm:$0xff]
      %v2011 = vld [vmem:[#allocation3 + $0x40] sm:$0xff]
      %v2012 = vld [vmem:[#allocation3 + $0x48] sm:$0xff]
      %v2013 = vld [vmem:[#allocation3 + $0x50] sm:$0xff]
      %v2014 = vld [vmem:[#allocation3 + $0x58] sm:$0xff]
      %v2015 = vld [vmem:[#allocation3 + $0x60] sm:$0xff]
      %v2016 = vld [vmem:[#allocation3 + $0x68] sm:$0xff]
      %v2017 = vld [vmem:[#allocation3 + $0x70] sm:$0xff]
      %v2018 = vld [vmem:[#allocation3 + $0x78] sm:$0xff]
      %v2019 = vadd.f32 %v2003, %v1941
      %v2020 = vadd.f32 %v2004, %v1944
      %v2021 = vadd.f32 %v2005, %v1949
      %v2022 = vadd.f32 %v2006, %v1952
      %v2023 = vadd.f32 %v2007, %v1957
      %v2024 = vadd.f32 %v2008, %v1960
      %v2025 = vadd.f32 %v2009, %v1965
      %v2026 = vadd.f32 %v2010, %v1968
      %v2027 = vadd.f32 %v2011, %v1973
      %v2028 = vadd.f32 %v2012, %v1976
      %v2029 = vadd.f32 %v2013, %v1981
      %v2030 = vadd.f32 %v2014, %v1984
      %v2031 = vadd.f32 %v2015, %v1989
      %v2032 = vadd.f32 %v2016, %v1992
      %v2033 = vadd.f32 %v2017, %v1997
      %v2034 = vadd.f32 %v2018, %v2000
      %2035 = vst.msk [vmem:[#allocation3] sm:$0xff] %vm571, %v2019
      %2036 = vst.msk [vmem:[#allocation3 + $0x8] sm:$0xff] %vm571, %v2020
      %2037 = vst.msk [vmem:[#allocation3 + $0x10] sm:$0xff] %vm571, %v2021
      %2038 = vst.msk [vmem:[#allocation3 + $0x18] sm:$0xff] %vm571, %v2022
      %2039 = vst.msk [vmem:[#allocation3 + $0x20] sm:$0xff] %vm571, %v2023
      %2040 = vst.msk [vmem:[#allocation3 + $0x28] sm:$0xff] %vm571, %v2024
      %2041 = vst.msk [vmem:[#allocation3 + $0x30] sm:$0xff] %vm571, %v2025
      %2042 = vst.msk [vmem:[#allocation3 + $0x38] sm:$0xff] %vm571, %v2026
      %2043 = vst.msk [vmem:[#allocation3 + $0x40] sm:$0xff] %vm571, %v2027
      %2044 = vst.msk [vmem:[#allocation3 + $0x48] sm:$0xff] %vm571, %v2028
      %2045 = vst.msk [vmem:[#allocation3 + $0x50] sm:$0xff] %vm571, %v2029
      %2046 = vst.msk [vmem:[#allocation3 + $0x58] sm:$0xff] %vm571, %v2030
      %2047 = vst.msk [vmem:[#allocation3 + $0x60] sm:$0xff] %vm571, %v2031
      %2048 = vst.msk [vmem:[#allocation3 + $0x68] sm:$0xff] %vm571, %v2032
      %2049 = vst.msk [vmem:[#allocation3 + $0x70] sm:$0xff] %vm571, %v2033
      %2050 = vst.msk [vmem:[#allocation3 + $0x78] sm:$0xff] %vm571, %v2034
      %v2051 = vld [vmem:[#allocation2 + $0x10] sm:$0xf]
      %v2052 = vld [vmem:[#allocation2 + $0x14] sm:$0xf]
      %v2053 = vld [vmem:[#allocation2 + $0x18] sm:$0xf]
      %v2054 = vld [vmem:[#allocation2 + $0x1c] sm:$0xf]
      %v2055 = vld [vmem:[#allocation2 + $0x20] sm:$0xf]
      %v2056 = vld [vmem:[#allocation2 + $0x24] sm:$0xf]
      %v2057 = vld [vmem:[#allocation2 + $0x28] sm:$0xf]
      %v2058 = vld [vmem:[#allocation2 + $0x2c] sm:$0xf]
      %v2059 = vld [vmem:[#allocation2 + $0x30] sm:$0xf]
      %v2060 = vld [vmem:[#allocation2 + $0x34] sm:$0xf]
      %v2061 = vld [vmem:[#allocation2 + $0x38] sm:$0xf]
      %v2062 = vld [vmem:[#allocation2 + $0x3c] sm:$0xf]
      %v2063 = vld [vmem:[#allocation2 + $0x40] sm:$0xf]
      %v2064 = vld [vmem:[#allocation2 + $0x44] sm:$0xf]
      %v2065 = vld [vmem:[#allocation2 + $0x48] sm:$0xf]
      %v2066 = vld [vmem:[#allocation2 + $0x4c] sm:$0xf]
      %s2067 = scalar_lea.vmem %s3, 24
      %v2068 = vld [vmem:[%s2067] sm:$0xf]
      %v2085 = vunpack.c.l.b16 %v2051
      %v2086 = vunpack.c.l.b16 %v2052
      %v2087 = vunpack.c.l.b16 %v2053
      %v2088 = vunpack.c.l.b16 %v2054
      %v2089 = vunpack.c.l.b16 %v2055
      %v2090 = vunpack.c.l.b16 %v2056
      %v2091 = vunpack.c.l.b16 %v2057
      %v2092 = vunpack.c.l.b16 %v2058
      %v2093 = vunpack.c.l.b16 %v2059
      %v2094 = vunpack.c.l.b16 %v2060
      %v2095 = vunpack.c.l.b16 %v2061
      %v2096 = vunpack.c.l.b16 %v2062
      %v2097 = vunpack.c.l.b16 %v2063
      %v2098 = vunpack.c.l.b16 %v2064
      %v2099 = vunpack.c.l.b16 %v2065
      %v2100 = vunpack.c.l.b16 %v2066
      %v2101 = vpack.c.b16 %v2086, %v2085
      %v2102 = vpack.c.b16 %v2088, %v2087
      %v2103 = vpack.c.b16 %v2090, %v2089
      %v2104 = vpack.c.b16 %v2092, %v2091
      %v2105 = vpack.c.b16 %v2094, %v2093
      %v2106 = vpack.c.b16 %v2096, %v2095
      %v2107 = vpack.c.b16 %v2098, %v2097
      %v2108 = vpack.c.b16 %v2100, %v2099
      %v2110 = vsel %vm571, %v2101, 0
      %v2113 = vsel %vm571, %v2102, 0
      %v2116 = vsel %vm571, %v2103, 0
      %v2119 = vsel %vm571, %v2104, 0
      %v2122 = vsel %vm571, %v2105, 0
      %v2125 = vsel %vm571, %v2106, 0
      %v2128 = vsel %vm571, %v2107, 0
      %v2131 = vsel %vm571, %v2108, 0
      %v2134 = vsel %vm596, %v2068, 0
      %2136 = vmatprep.subr.bf16.mxu0 0
      %2137 = vmatpush1.bf16.msra.mxu0 %v2134
      %2138 = vmatprep.subr.bf16.mxu0 0
      %2139 = vmatpush1.bf16.msra.mxu0 0
      %2140 = vmatprep.subr.bf16.mxu0 0
      %2141 = vmatpush1.bf16.msra.mxu0 0
      %2142 = vmatprep.subr.bf16.mxu0 0
      %2143 = vmatpush1.bf16.msra.mxu0 0
      %2144 = vmatprep.subr.bf16.mxu0 0
      %2145 = vmatpush1.bf16.msra.mxu0 0
      %2146 = vmatprep.subr.bf16.mxu0 0
      %2147 = vmatpush1.bf16.msra.mxu0 0
      %2148 = vmatprep.subr.bf16.mxu0 0
      %2149 = vmatpush1.bf16.msra.mxu0 0
      %2150 = vmatprep.subr.bf16.mxu0 0
      %2151 = vmatpush1.bf16.msra.mxu0 0
      %2152 = vmatprep.subr.bf16.mxu0 0
      %2153 = vmatpush1.bf16.msra.mxu0 0
      %2154 = vmatprep.subr.bf16.mxu0 0
      %2155 = vmatpush1.bf16.msra.mxu0 0
      %2156 = vmatprep.subr.bf16.mxu0 0
      %2157 = vmatpush1.bf16.msra.mxu0 0
      %2158 = vmatprep.subr.bf16.mxu0 0
      %2159 = vmatpush1.bf16.msra.mxu0 0
      %2160 = vmatprep.subr.bf16.mxu0 0
      %2161 = vmatpush1.bf16.msra.mxu0 0
      %2162 = vmatprep.subr.bf16.mxu0 0
      %2163 = vmatpush1.bf16.msra.mxu0 0
      %2164 = vmatprep.subr.bf16.mxu0 0
      %2165 = vmatpush1.bf16.msra.mxu0 0
      %2166 = vmatprep.subr.bf16.mxu0 0
      %2167 = vmatpush1.bf16.msra.mxu0 0
      %2168 = vmatprep.mubr.bf16.mxu0 0
      %2169 = vmatmul.mubr.bf16.gmra.mrb[0].mxu0 %v2110
      %v2170 = vpop.f32.mrb[0].mxu0
      %v2171 = vadd.f32 0.0, %v2170
      %v2172 = vpop.f32.mrb[0].mxu0
      %v2173 = vpop.f32.mrb[0].mxu0
      %v2174 = vadd.f32 0.0, %v2173
      %v2175 = vpop.f32.mrb[0].mxu0
      %2176 = vmatprep.mubr.bf16.mxu0 0
      %2177 = vmatmul.mubr.bf16.gmra.mrb[0].mxu0 %v2113
      %v2178 = vpop.f32.mrb[0].mxu0
      %v2179 = vadd.f32 0.0, %v2178
      %v2180 = vpop.f32.mrb[0].mxu0
      %v2181 = vpop.f32.mrb[0].mxu0
      %v2182 = vadd.f32 0.0, %v2181
      %v2183 = vpop.f32.mrb[0].mxu0
      %2184 = vmatprep.mubr.bf16.mxu0 0
      %2185 = vmatmul.mubr.bf16.gmra.mrb[0].mxu0 %v2116
      %v2186 = vpop.f32.mrb[0].mxu0
      %v2187 = vadd.f32 0.0, %v2186
      %v2188 = vpop.f32.mrb[0].mxu0
      %v2189 = vpop.f32.mrb[0].mxu0
      %v2190 = vadd.f32 0.0, %v2189
      %v2191 = vpop.f32.mrb[0].mxu0
      %2192 = vmatprep.mubr.bf16.mxu0 0
      %2193 = vmatmul.mubr.bf16.gmra.mrb[0].mxu0 %v2119
      %v2194 = vpop.f32.mrb[0].mxu0
      %v2195 = vadd.f32 0.0, %v2194
      %v2196 = vpop.f32.mrb[0].mxu0
      %v2197 = vpop.f32.mrb[0].mxu0
      %v2198 = vadd.f32 0.0, %v2197
      %v2199 = vpop.f32.mrb[0].mxu0
      %2200 = vmatprep.mubr.bf16.mxu0 0
      %2201 = vmatmul.mubr.bf16.gmra.mrb[0].mxu0 %v2122
      %v2202 = vpop.f32.mrb[0].mxu0
      %v2203 = vadd.f32 0.0, %v2202
      %v2204 = vpop.f32.mrb[0].mxu0
      %v2205 = vpop.f32.mrb[0].mxu0
      %v2206 = vadd.f32 0.0, %v2205
      %v2207 = vpop.f32.mrb[0].mxu0
      %2208 = vmatprep.mubr.bf16.mxu0 0
      %2209 = vmatmul.mubr.bf16.gmra.mrb[0].mxu0 %v2125
      %v2210 = vpop.f32.mrb[0].mxu0
      %v2211 = vadd.f32 0.0, %v2210
      %v2212 = vpop.f32.mrb[0].mxu0
      %v2213 = vpop.f32.mrb[0].mxu0
      %v2214 = vadd.f32 0.0, %v2213
      %v2215 = vpop.f32.mrb[0].mxu0
      %2216 = vmatprep.mubr.bf16.mxu0 0
      %2217 = vmatmul.mubr.bf16.gmra.mrb[0].mxu0 %v2128
      %v2218 = vpop.f32.mrb[0].mxu0
      %v2219 = vadd.f32 0.0, %v2218
      %v2220 = vpop.f32.mrb[0].mxu0
      %v2221 = vpop.f32.mrb[0].mxu0
      %v2222 = vadd.f32 0.0, %v2221
      %v2223 = vpop.f32.mrb[0].mxu0
      %2224 = vmatprep.mubr.bf16.mxu0 0
      %2225 = vmatmul.mubr.bf16.gmra.mrb[0].mxu0 %v2131
      %v2226 = vpop.f32.mrb[0].mxu0
      %v2227 = vadd.f32 0.0, %v2226
      %v2228 = vpop.f32.mrb[0].mxu0
      %v2229 = vpop.f32.mrb[0].mxu0
      %v2230 = vadd.f32 0.0, %v2229
      %v2231 = vpop.f32.mrb[0].mxu0
      %2232 = vdwg.mxu0
      %v2233 = vld [vmem:[#allocation3] sm:$0xff]
      %v2234 = vld [vmem:[#allocation3 + $0x8] sm:$0xff]
      %v2235 = vld [vmem:[#allocation3 + $0x10] sm:$0xff]
      %v2236 = vld [vmem:[#allocation3 + $0x18] sm:$0xff]
      %v2237 = vld [vmem:[#allocation3 + $0x20] sm:$0xff]
      %v2238 = vld [vmem:[#allocation3 + $0x28] sm:$0xff]
      %v2239 = vld [vmem:[#allocation3 + $0x30] sm:$0xff]
      %v2240 = vld [vmem:[#allocation3 + $0x38] sm:$0xff]
      %v2241 = vld [vmem:[#allocation3 + $0x40] sm:$0xff]
      %v2242 = vld [vmem:[#allocation3 + $0x48] sm:$0xff]
      %v2243 = vld [vmem:[#allocation3 + $0x50] sm:$0xff]
      %v2244 = vld [vmem:[#allocation3 + $0x58] sm:$0xff]
      %v2245 = vld [vmem:[#allocation3 + $0x60] sm:$0xff]
      %v2246 = vld [vmem:[#allocation3 + $0x68] sm:$0xff]
      %v2247 = vld [vmem:[#allocation3 + $0x70] sm:$0xff]
      %v2248 = vld [vmem:[#allocation3 + $0x78] sm:$0xff]
      %v2249 = vadd.f32 %v2233, %v2171
      %v2250 = vadd.f32 %v2234, %v2174
      %v2251 = vadd.f32 %v2235, %v2179
      %v2252 = vadd.f32 %v2236, %v2182
      %v2253 = vadd.f32 %v2237, %v2187
      %v2254 = vadd.f32 %v2238, %v2190
      %v2255 = vadd.f32 %v2239, %v2195
      %v2256 = vadd.f32 %v2240, %v2198
      %v2257 = vadd.f32 %v2241, %v2203
      %v2258 = vadd.f32 %v2242, %v2206
      %v2259 = vadd.f32 %v2243, %v2211
      %v2260 = vadd.f32 %v2244, %v2214
      %v2261 = vadd.f32 %v2245, %v2219
      %v2262 = vadd.f32 %v2246, %v2222
      %v2263 = vadd.f32 %v2247, %v2227
      %v2264 = vadd.f32 %v2248, %v2230
      %2265 = vst.msk [vmem:[#allocation3] sm:$0xff] %vm571, %v2249
      %2266 = vst.msk [vmem:[#allocation3 + $0x8] sm:$0xff] %vm571, %v2250
      %2267 = vst.msk [vmem:[#allocation3 + $0x10] sm:$0xff] %vm571, %v2251
      %2268 = vst.msk [vmem:[#allocation3 + $0x18] sm:$0xff] %vm571, %v2252
      %2269 = vst.msk [vmem:[#allocation3 + $0x20] sm:$0xff] %vm571, %v2253
      %2270 = vst.msk [vmem:[#allocation3 + $0x28] sm:$0xff] %vm571, %v2254
      %2271 = vst.msk [vmem:[#allocation3 + $0x30] sm:$0xff] %vm571, %v2255
      %2272 = vst.msk [vmem:[#allocation3 + $0x38] sm:$0xff] %vm571, %v2256
      %2273 = vst.msk [vmem:[#allocation3 + $0x40] sm:$0xff] %vm571, %v2257
      %2274 = vst.msk [vmem:[#allocation3 + $0x48] sm:$0xff] %vm571, %v2258
      %2275 = vst.msk [vmem:[#allocation3 + $0x50] sm:$0xff] %vm571, %v2259
      %2276 = vst.msk [vmem:[#allocation3 + $0x58] sm:$0xff] %vm571, %v2260
      %2277 = vst.msk [vmem:[#allocation3 + $0x60] sm:$0xff] %vm571, %v2261
      %2278 = vst.msk [vmem:[#allocation3 + $0x68] sm:$0xff] %vm571, %v2262
      %2279 = vst.msk [vmem:[#allocation3 + $0x70] sm:$0xff] %vm571, %v2263
      %2280 = vst.msk [vmem:[#allocation3 + $0x78] sm:$0xff] %vm571, %v2264
      %v2281 = vld [vmem:[#allocation2 + $0x10] sm:$0xf]
      %v2282 = vld [vmem:[#allocation2 + $0x14] sm:$0xf]
      %v2283 = vld [vmem:[#allocation2 + $0x18] sm:$0xf]
      %v2284 = vld [vmem:[#allocation2 + $0x1c] sm:$0xf]
      %v2285 = vld [vmem:[#allocation2 + $0x20] sm:$0xf]
      %v2286 = vld [vmem:[#allocation2 + $0x24] sm:$0xf]
      %v2287 = vld [vmem:[#allocation2 + $0x28] sm:$0xf]
      %v2288 = vld [vmem:[#allocation2 + $0x2c] sm:$0xf]
      %v2289 = vld [vmem:[#allocation2 + $0x30] sm:$0xf]
      %v2290 = vld [vmem:[#allocation2 + $0x34] sm:$0xf]
      %v2291 = vld [vmem:[#allocation2 + $0x38] sm:$0xf]
      %v2292 = vld [vmem:[#allocation2 + $0x3c] sm:$0xf]
      %v2293 = vld [vmem:[#allocation2 + $0x40] sm:$0xf]
      %v2294 = vld [vmem:[#allocation2 + $0x44] sm:$0xf]
      %v2295 = vld [vmem:[#allocation2 + $0x48] sm:$0xf]
      %v2296 = vld [vmem:[#allocation2 + $0x4c] sm:$0xf]
      %v2297 = vld [vmem:[#allocation2 + $0x50] sm:$0x1]
      %s2298 = scalar_lea.vmem %s3, 28
      %v2299 = vld [vmem:[%s2298] sm:$0xf]
      %v2317 = vunpack.c.l.b16 %v2281
      %v2318 = vunpack.c.l.b16 %v2282
      %v2319 = vunpack.c.l.b16 %v2283
      %v2320 = vunpack.c.l.b16 %v2284
      %v2321 = vunpack.c.l.b16 %v2285
      %v2322 = vunpack.c.l.b16 %v2286
      %v2323 = vunpack.c.l.b16 %v2287
      %v2324 = vunpack.c.l.b16 %v2288
      %v2325 = vunpack.c.l.b16 %v2289
      %v2326 = vunpack.c.l.b16 %v2290
      %v2327 = vunpack.c.l.b16 %v2291
      %v2328 = vunpack.c.l.b16 %v2292
      %v2329 = vunpack.c.l.b16 %v2293
      %v2330 = vunpack.c.l.b16 %v2294
      %v2331 = vunpack.c.l.b16 %v2295
      %v2332 = vunpack.c.l.b16 %v2296
      %v2333 = vunpack.c.l.b16 %v2297
      %v2334 = vpack.c.b16 %v2318, %v2317
      %v2335 = vpack.c.b16 %v2320, %v2319
      %v2336 = vpack.c.b16 %v2322, %v2321
      %v2337 = vpack.c.b16 %v2324, %v2323
      %v2338 = vpack.c.b16 %v2326, %v2325
      %v2339 = vpack.c.b16 %v2328, %v2327
      %v2340 = vpack.c.b16 %v2330, %v2329
      %v2341 = vpack.c.b16 %v2332, %v2331
      %v2342 = vpack.c.b16 %v2333, %v2333
      %v2344 = vshrl.u32 %v2334, 16
      %v2346 = vshll.u32 %v2334, 16
      %v2348 = vrot.slane %v2346, 1
      %v2349 = vor.u32 %v2344, %v2348
      %v2351 = vshll.u32 %v2335, 16
      %v2353 = vrot.slane %v2351, 1
      %v2354 = vsel %vm775, %v2349, %v2353
      %v2355 = vshrl.u32 %v2335, 16
      %v2357 = vor.u32 %v2355, %v2353
      %v2359 = vshll.u32 %v2336, 16
      %v2361 = vrot.slane %v2359, 1
      %v2362 = vsel %vm775, %v2357, %v2361
      %v2363 = vshrl.u32 %v2336, 16
      %v2365 = vor.u32 %v2363, %v2361
      %v2367 = vshll.u32 %v2337, 16
      %v2369 = vrot.slane %v2367, 1
      %v2370 = vsel %vm775, %v2365, %v2369
      %v2371 = vshrl.u32 %v2337, 16
      %v2373 = vor.u32 %v2371, %v2369
      %v2375 = vshll.u32 %v2338, 16
      %v2377 = vrot.slane %v2375, 1
      %v2378 = vsel %vm775, %v2373, %v2377
      %v2379 = vshrl.u32 %v2338, 16
      %v2381 = vor.u32 %v2379, %v2377
      %v2383 = vshll.u32 %v2339, 16
      %v2385 = vrot.slane %v2383, 1
      %v2386 = vsel %vm775, %v2381, %v2385
      %v2387 = vshrl.u32 %v2339, 16
      %v2389 = vor.u32 %v2387, %v2385
      %v2391 = vshll.u32 %v2340, 16
      %v2393 = vrot.slane %v2391, 1
      %v2394 = vsel %vm775, %v2389, %v2393
      %v2395 = vshrl.u32 %v2340, 16
      %v2397 = vor.u32 %v2395, %v2393
      %v2399 = vshll.u32 %v2341, 16
      %v2401 = vrot.slane %v2399, 1
      %v2402 = vsel %vm775, %v2397, %v2401
      %v2403 = vshrl.u32 %v2341, 16
      %v2405 = vor.u32 %v2403, %v2401
      %v2407 = vshll.u32 %v2342, 16
      %v2409 = vrot.slane %v2407, 1
      %v2410 = vsel %vm775, %v2405, %v2409
      %v2412 = vsel %vm571, %v2354, 0
      %v2415 = vsel %vm571, %v2362, 0
      %v2418 = vsel %vm571, %v2370, 0
      %v2421 = vsel %vm571, %v2378, 0
      %v2424 = vsel %vm571, %v2386, 0
      %v2427 = vsel %vm571, %v2394, 0
      %v2430 = vsel %vm571, %v2402, 0
      %v2433 = vsel %vm571, %v2410, 0
      %v2436 = vsel %vm596, %v2299, 0
      %2438 = vmatprep.subr.bf16.mxu0 0
      %2439 = vmatpush1.bf16.msra.mxu0 %v2436
      %2440 = vmatprep.subr.bf16.mxu0 0
      %2441 = vmatpush1.bf16.msra.mxu0 0
      %2442 = vmatprep.subr.bf16.mxu0 0
      %2443 = vmatpush1.bf16.msra.mxu0 0
      %2444 = vmatprep.subr.bf16.mxu0 0
      %2445 = vmatpush1.bf16.msra.mxu0 0
      %2446 = vmatprep.subr.bf16.mxu0 0
      %2447 = vmatpush1.bf16.msra.mxu0 0
      %2448 = vmatprep.subr.bf16.mxu0 0
      %2449 = vmatpush1.bf16.msra.mxu0 0
      %2450 = vmatprep.subr.bf16.mxu0 0
      %2451 = vmatpush1.bf16.msra.mxu0 0
      %2452 = vmatprep.subr.bf16.mxu0 0
      %2453 = vmatpush1.bf16.msra.mxu0 0
      %2454 = vmatprep.subr.bf16.mxu0 0
      %2455 = vmatpush1.bf16.msra.mxu0 0
      %2456 = vmatprep.subr.bf16.mxu0 0
      %2457 = vmatpush1.bf16.msra.mxu0 0
      %2458 = vmatprep.subr.bf16.mxu0 0
      %2459 = vmatpush1.bf16.msra.mxu0 0
      %2460 = vmatprep.subr.bf16.mxu0 0
      %2461 = vmatpush1.bf16.msra.mxu0 0
      %2462 = vmatprep.subr.bf16.mxu0 0
      %2463 = vmatpush1.bf16.msra.mxu0 0
      %2464 = vmatprep.subr.bf16.mxu0 0
      %2465 = vmatpush1.bf16.msra.mxu0 0
      %2466 = vmatprep.subr.bf16.mxu0 0
      %2467 = vmatpush1.bf16.msra.mxu0 0
      %2468 = vmatprep.subr.bf16.mxu0 0
      %2469 = vmatpush1.bf16.msra.mxu0 0
      %2470 = vmatprep.mubr.bf16.mxu0 0
      %2471 = vmatmul.mubr.bf16.gmra.mrb[0].mxu0 %v2412
      %v2472 = vpop.f32.mrb[0].mxu0
      %v2473 = vadd.f32 0.0, %v2472
      %v2474 = vpop.f32.mrb[0].mxu0
      %v2475 = vpop.f32.mrb[0].mxu0
      %v2476 = vadd.f32 0.0, %v2475
      %v2477 = vpop.f32.mrb[0].mxu0
      %2478 = vmatprep.mubr.bf16.mxu0 0
      %2479 = vmatmul.mubr.bf16.gmra.mrb[0].mxu0 %v2415
      %v2480 = vpop.f32.mrb[0].mxu0
      %v2481 = vadd.f32 0.0, %v2480
      %v2482 = vpop.f32.mrb[0].mxu0
      %v2483 = vpop.f32.mrb[0].mxu0
      %v2484 = vadd.f32 0.0, %v2483
      %v2485 = vpop.f32.mrb[0].mxu0
      %2486 = vmatprep.mubr.bf16.mxu0 0
      %2487 = vmatmul.mubr.bf16.gmra.mrb[0].mxu0 %v2418
      %v2488 = vpop.f32.mrb[0].mxu0
      %v2489 = vadd.f32 0.0, %v2488
      %v2490 = vpop.f32.mrb[0].mxu0
      %v2491 = vpop.f32.mrb[0].mxu0
      %v2492 = vadd.f32 0.0, %v2491
      %v2493 = vpop.f32.mrb[0].mxu0
      %2494 = vmatprep.mubr.bf16.mxu0 0
      %2495 = vmatmul.mubr.bf16.gmra.mrb[0].mxu0 %v2421
      %v2496 = vpop.f32.mrb[0].mxu0
      %v2497 = vadd.f32 0.0, %v2496
      %v2498 = vpop.f32.mrb[0].mxu0
      %v2499 = vpop.f32.mrb[0].mxu0
      %v2500 = vadd.f32 0.0, %v2499
      %v2501 = vpop.f32.mrb[0].mxu0
      %2502 = vmatprep.mubr.bf16.mxu0 0
      %2503 = vmatmul.mubr.bf16.gmra.mrb[0].mxu0 %v2424
      %v2504 = vpop.f32.mrb[0].mxu0
      %v2505 = vadd.f32 0.0, %v2504
      %v2506 = vpop.f32.mrb[0].mxu0
      %v2507 = vpop.f32.mrb[0].mxu0
      %v2508 = vadd.f32 0.0, %v2507
      %v2509 = vpop.f32.mrb[0].mxu0
      %2510 = vmatprep.mubr.bf16.mxu0 0
      %2511 = vmatmul.mubr.bf16.gmra.mrb[0].mxu0 %v2427
      %v2512 = vpop.f32.mrb[0].mxu0
      %v2513 = vadd.f32 0.0, %v2512
      %v2514 = vpop.f32.mrb[0].mxu0
      %v2515 = vpop.f32.mrb[0].mxu0
      %v2516 = vadd.f32 0.0, %v2515
      %v2517 = vpop.f32.mrb[0].mxu0
      %2518 = vmatprep.mubr.bf16.mxu0 0
      %2519 = vmatmul.mubr.bf16.gmra.mrb[0].mxu0 %v2430
      %v2520 = vpop.f32.mrb[0].mxu0
      %v2521 = vadd.f32 0.0, %v2520
      %v2522 = vpop.f32.mrb[0].mxu0
      %v2523 = vpop.f32.mrb[0].mxu0
      %v2524 = vadd.f32 0.0, %v2523
      %v2525 = vpop.f32.mrb[0].mxu0
      %2526 = vmatprep.mubr.bf16.mxu0 0
      %2527 = vmatmul.mubr.bf16.gmra.mrb[0].mxu0 %v2433
      %v2528 = vpop.f32.mrb[0].mxu0
      %v2529 = vadd.f32 0.0, %v2528
      %v2530 = vpop.f32.mrb[0].mxu0
      %v2531 = vpop.f32.mrb[0].mxu0
      %v2532 = vadd.f32 0.0, %v2531
      %v2533 = vpop.f32.mrb[0].mxu0
      %2534 = vdwg.mxu0
      %v2535 = vld [vmem:[#allocation3] sm:$0xff]
      %v2536 = vld [vmem:[#allocation3 + $0x8] sm:$0xff]
      %v2537 = vld [vmem:[#allocation3 + $0x10] sm:$0xff]
      %v2538 = vld [vmem:[#allocation3 + $0x18] sm:$0xff]
      %v2539 = vld [vmem:[#allocation3 + $0x20] sm:$0xff]
      %v2540 = vld [vmem:[#allocation3 + $0x28] sm:$0xff]
      %v2541 = vld [vmem:[#allocation3 + $0x30] sm:$0xff]
      %v2542 = vld [vmem:[#allocation3 + $0x38] sm:$0xff]
      %v2543 = vld [vmem:[#allocation3 + $0x40] sm:$0xff]
      %v2544 = vld [vmem:[#allocation3 + $0x48] sm:$0xff]
      %v2545 = vld [vmem:[#allocation3 + $0x50] sm:$0xff]
      %v2546 = vld [vmem:[#allocation3 + $0x58] sm:$0xff]
      %v2547 = vld [vmem:[#allocation3 + $0x60] sm:$0xff]
      %v2548 = vld [vmem:[#allocation3 + $0x68] sm:$0xff]
      %v2549 = vld [vmem:[#allocation3 + $0x70] sm:$0xff]
      %v2550 = vld [vmem:[#allocation3 + $0x78] sm:$0xff]
      %v2551 = vadd.f32 %v2535, %v2473
      %v2552 = vadd.f32 %v2536, %v2476
      %v2553 = vadd.f32 %v2537, %v2481
      %v2554 = vadd.f32 %v2538, %v2484
      %v2555 = vadd.f32 %v2539, %v2489
      %v2556 = vadd.f32 %v2540, %v2492
      %v2557 = vadd.f32 %v2541, %v2497
      %v2558 = vadd.f32 %v2542, %v2500
      %v2559 = vadd.f32 %v2543, %v2505
      %v2560 = vadd.f32 %v2544, %v2508
      %v2561 = vadd.f32 %v2545, %v2513
      %v2562 = vadd.f32 %v2546, %v2516
      %v2563 = vadd.f32 %v2547, %v2521
      %v2564 = vadd.f32 %v2548, %v2524
      %v2565 = vadd.f32 %v2549, %v2529
      %v2566 = vadd.f32 %v2550, %v2532
      %2567 = vst.msk [vmem:[#allocation3] sm:$0xff] %vm571, %v2551
      %2568 = vst.msk [vmem:[#allocation3 + $0x8] sm:$0xff] %vm571, %v2552
      %2569 = vst.msk [vmem:[#allocation3 + $0x10] sm:$0xff] %vm571, %v2553
      %2570 = vst.msk [vmem:[#allocation3 + $0x18] sm:$0xff] %vm571, %v2554
      %2571 = vst.msk [vmem:[#allocation3 + $0x20] sm:$0xff] %vm571, %v2555
      %2572 = vst.msk [vmem:[#allocation3 + $0x28] sm:$0xff] %vm571, %v2556
      %2573 = vst.msk [vmem:[#allocation3 + $0x30] sm:$0xff] %vm571, %v2557
      %2574 = vst.msk [vmem:[#allocation3 + $0x38] sm:$0xff] %vm571, %v2558
      %2575 = vst.msk [vmem:[#allocation3 + $0x40] sm:$0xff] %vm571, %v2559
      %2576 = vst.msk [vmem:[#allocation3 + $0x48] sm:$0xff] %vm571, %v2560
      %2577 = vst.msk [vmem:[#allocation3 + $0x50] sm:$0xff] %vm571, %v2561
      %2578 = vst.msk [vmem:[#allocation3 + $0x58] sm:$0xff] %vm571, %v2562
      %2579 = vst.msk [vmem:[#allocation3 + $0x60] sm:$0xff] %vm571, %v2563
      %2580 = vst.msk [vmem:[#allocation3 + $0x68] sm:$0xff] %vm571, %v2564
      %2581 = vst.msk [vmem:[#allocation3 + $0x70] sm:$0xff] %vm571, %v2565
      %2582 = vst.msk [vmem:[#allocation3 + $0x78] sm:$0xff] %vm571, %v2566
      %v2583 = vld [vmem:[#allocation2 + $0x10] sm:$0xe]
      %v2584 = vld [vmem:[#allocation2 + $0x14] sm:$0xf]
      %v2585 = vld [vmem:[#allocation2 + $0x18] sm:$0xf]
      %v2586 = vld [vmem:[#allocation2 + $0x1c] sm:$0xf]
      %v2587 = vld [vmem:[#allocation2 + $0x20] sm:$0xf]
      %v2588 = vld [vmem:[#allocation2 + $0x24] sm:$0xf]
      %v2589 = vld [vmem:[#allocation2 + $0x28] sm:$0xf]
      %v2590 = vld [vmem:[#allocation2 + $0x2c] sm:$0xf]
      %v2591 = vld [vmem:[#allocation2 + $0x30] sm:$0xf]
      %v2592 = vld [vmem:[#allocation2 + $0x34] sm:$0xf]
      %v2593 = vld [vmem:[#allocation2 + $0x38] sm:$0xf]
      %v2594 = vld [vmem:[#allocation2 + $0x3c] sm:$0xf]
      %v2595 = vld [vmem:[#allocation2 + $0x40] sm:$0xf]
      %v2596 = vld [vmem:[#allocation2 + $0x44] sm:$0xf]
      %v2597 = vld [vmem:[#allocation2 + $0x48] sm:$0xf]
      %v2598 = vld [vmem:[#allocation2 + $0x4c] sm:$0xf]
      %v2599 = vld [vmem:[#allocation2 + $0x50] sm:$0x1]
      %s2600 = scalar_lea.vmem %s3, 32
      %v2601 = vld [vmem:[%s2600] sm:$0xf]
      %v2619 = vunpack.c.l.b16 %v2583
      %v2620 = vunpack.c.l.b16 %v2584
      %v2621 = vunpack.c.l.b16 %v2585
      %v2622 = vunpack.c.l.b16 %v2586
      %v2623 = vunpack.c.l.b16 %v2587
      %v2624 = vunpack.c.l.b16 %v2588
      %v2625 = vunpack.c.l.b16 %v2589
      %v2626 = vunpack.c.l.b16 %v2590
      %v2627 = vunpack.c.l.b16 %v2591
      %v2628 = vunpack.c.l.b16 %v2592
      %v2629 = vunpack.c.l.b16 %v2593
      %v2630 = vunpack.c.l.b16 %v2594
      %v2631 = vunpack.c.l.b16 %v2595
      %v2632 = vunpack.c.l.b16 %v2596
      %v2633 = vunpack.c.l.b16 %v2597
      %v2634 = vunpack.c.l.b16 %v2598
      %v2635 = vunpack.c.l.b16 %v2599
      %v2636 = vpack.c.b16 %v2620, %v2619
      %v2637 = vpack.c.b16 %v2622, %v2621
      %v2638 = vpack.c.b16 %v2624, %v2623
      %v2639 = vpack.c.b16 %v2626, %v2625
      %v2640 = vpack.c.b16 %v2628, %v2627
      %v2641 = vpack.c.b16 %v2630, %v2629
      %v2642 = vpack.c.b16 %v2632, %v2631
      %v2643 = vpack.c.b16 %v2634, %v2633
      %v2644 = vpack.c.b16 %v2635, %v2635
      %v2645 = vrot.slane %v2636, 1
      %v2646 = vrot.slane %v2637, 1
      %v2647 = vsel %vm1078, %v2645, %v2646
      %v2648 = vrot.slane %v2638, 1
      %v2649 = vsel %vm1078, %v2646, %v2648
      %v2650 = vrot.slane %v2639, 1
      %v2651 = vsel %vm1078, %v2648, %v2650
      %v2652 = vrot.slane %v2640, 1
      %v2653 = vsel %vm1078, %v2650, %v2652
      %v2654 = vrot.slane %v2641, 1
      %v2655 = vsel %vm1078, %v2652, %v2654
      %v2656 = vrot.slane %v2642, 1
      %v2657 = vsel %vm1078, %v2654, %v2656
      %v2658 = vrot.slane %v2643, 1
      %v2659 = vsel %vm1078, %v2656, %v2658
      %v2660 = vrot.slane %v2644, 1
      %v2661 = vsel %vm1078, %v2658, %v2660
      %v2663 = vsel %vm571, %v2647, 0
      %v2666 = vsel %vm571, %v2649, 0
      %v2669 = vsel %vm571, %v2651, 0
      %v2672 = vsel %vm571, %v2653, 0
      %v2675 = vsel %vm571, %v2655, 0
      %v2678 = vsel %vm571, %v2657, 0
      %v2681 = vsel %vm571, %v2659, 0
      %v2684 = vsel %vm571, %v2661, 0
      %v2687 = vsel %vm596, %v2601, 0
      %2689 = vmatprep.subr.bf16.mxu0 0
      %2690 = vmatpush1.bf16.msra.mxu0 %v2687
      %2691 = vmatprep.subr.bf16.mxu0 0
      %2692 = vmatpush1.bf16.msra.mxu0 0
      %2693 = vmatprep.subr.bf16.mxu0 0
      %2694 = vmatpush1.bf16.msra.mxu0 0
      %2695 = vmatprep.subr.bf16.mxu0 0
      %2696 = vmatpush1.bf16.msra.mxu0 0
      %2697 = vmatprep.subr.bf16.mxu0 0
      %2698 = vmatpush1.bf16.msra.mxu0 0
      %2699 = vmatprep.subr.bf16.mxu0 0
      %2700 = vmatpush1.bf16.msra.mxu0 0
      %2701 = vmatprep.subr.bf16.mxu0 0
      %2702 = vmatpush1.bf16.msra.mxu0 0
      %2703 = vmatprep.subr.bf16.mxu0 0
      %2704 = vmatpush1.bf16.msra.mxu0 0
      %2705 = vmatprep.subr.bf16.mxu0 0
      %2706 = vmatpush1.bf16.msra.mxu0 0
      %2707 = vmatprep.subr.bf16.mxu0 0
      %2708 = vmatpush1.bf16.msra.mxu0 0
      %2709 = vmatprep.subr.bf16.mxu0 0
      %2710 = vmatpush1.bf16.msra.mxu0 0
      %2711 = vmatprep.subr.bf16.mxu0 0
      %2712 = vmatpush1.bf16.msra.mxu0 0
      %2713 = vmatprep.subr.bf16.mxu0 0
      %2714 = vmatpush1.bf16.msra.mxu0 0
      %2715 = vmatprep.subr.bf16.mxu0 0
      %2716 = vmatpush1.bf16.msra.mxu0 0
      %2717 = vmatprep.subr.bf16.mxu0 0
      %2718 = vmatpush1.bf16.msra.mxu0 0
      %2719 = vmatprep.subr.bf16.mxu0 0
      %2720 = vmatpush1.bf16.msra.mxu0 0
      %2721 = vmatprep.mubr.bf16.mxu0 0
      %2722 = vmatmul.mubr.bf16.gmra.mrb[0].mxu0 %v2663
      %v2723 = vpop.f32.mrb[0].mxu0
      %v2724 = vadd.f32 0.0, %v2723
      %v2725 = vpop.f32.mrb[0].mxu0
      %v2726 = vpop.f32.mrb[0].mxu0
      %v2727 = vadd.f32 0.0, %v2726
      %v2728 = vpop.f32.mrb[0].mxu0
      %2729 = vmatprep.mubr.bf16.mxu0 0
      %2730 = vmatmul.mubr.bf16.gmra.mrb[0].mxu0 %v2666
      %v2731 = vpop.f32.mrb[0].mxu0
      %v2732 = vadd.f32 0.0, %v2731
      %v2733 = vpop.f32.mrb[0].mxu0
      %v2734 = vpop.f32.mrb[0].mxu0
      %v2735 = vadd.f32 0.0, %v2734
      %v2736 = vpop.f32.mrb[0].mxu0
      %2737 = vmatprep.mubr.bf16.mxu0 0
      %2738 = vmatmul.mubr.bf16.gmra.mrb[0].mxu0 %v2669
      %v2739 = vpop.f32.mrb[0].mxu0
      %v2740 = vadd.f32 0.0, %v2739
      %v2741 = vpop.f32.mrb[0].mxu0
      %v2742 = vpop.f32.mrb[0].mxu0
      %v2743 = vadd.f32 0.0, %v2742
      %v2744 = vpop.f32.mrb[0].mxu0
      %2745 = vmatprep.mubr.bf16.mxu0 0
      %2746 = vmatmul.mubr.bf16.gmra.mrb[0].mxu0 %v2672
      %v2747 = vpop.f32.mrb[0].mxu0
      %v2748 = vadd.f32 0.0, %v2747
      %v2749 = vpop.f32.mrb[0].mxu0
      %v2750 = vpop.f32.mrb[0].mxu0
      %v2751 = vadd.f32 0.0, %v2750
      %v2752 = vpop.f32.mrb[0].mxu0
      %2753 = vmatprep.mubr.bf16.mxu0 0
      %2754 = vmatmul.mubr.bf16.gmra.mrb[0].mxu0 %v2675
      %v2755 = vpop.f32.mrb[0].mxu0
      %v2756 = vadd.f32 0.0, %v2755
      %v2757 = vpop.f32.mrb[0].mxu0
      %v2758 = vpop.f32.mrb[0].mxu0
      %v2759 = vadd.f32 0.0, %v2758
      %v2760 = vpop.f32.mrb[0].mxu0
      %2761 = vmatprep.mubr.bf16.mxu0 0
      %2762 = vmatmul.mubr.bf16.gmra.mrb[0].mxu0 %v2678
      %v2763 = vpop.f32.mrb[0].mxu0
      %v2764 = vadd.f32 0.0, %v2763
      %v2765 = vpop.f32.mrb[0].mxu0
      %v2766 = vpop.f32.mrb[0].mxu0
      %v2767 = vadd.f32 0.0, %v2766
      %v2768 = vpop.f32.mrb[0].mxu0
      %2769 = vmatprep.mubr.bf16.mxu0 0
      %2770 = vmatmul.mubr.bf16.gmra.mrb[0].mxu0 %v2681
      %v2771 = vpop.f32.mrb[0].mxu0
      %v2772 = vadd.f32 0.0, %v2771
      %v2773 = vpop.f32.mrb[0].mxu0
      %v2774 = vpop.f32.mrb[0].mxu0
      %v2775 = vadd.f32 0.0, %v2774
      %v2776 = vpop.f32.mrb[0].mxu0
      %2777 = vmatprep.mubr.bf16.mxu0 0
      %2778 = vmatmul.mubr.bf16.gmra.mrb[0].mxu0 %v2684
      %v2779 = vpop.f32.mrb[0].mxu0
      %v2780 = vadd.f32 0.0, %v2779
      %v2781 = vpop.f32.mrb[0].mxu0
      %v2782 = vpop.f32.mrb[0].mxu0
      %v2783 = vadd.f32 0.0, %v2782
      %v2784 = vpop.f32.mrb[0].mxu0
      %2785 = vdwg.mxu0
      %v2786 = vld [vmem:[#allocation3] sm:$0xff]
      %v2787 = vld [vmem:[#allocation3 + $0x8] sm:$0xff]
      %v2788 = vld [vmem:[#allocation3 + $0x10] sm:$0xff]
      %v2789 = vld [vmem:[#allocation3 + $0x18] sm:$0xff]
      %v2790 = vld [vmem:[#allocation3 + $0x20] sm:$0xff]
      %v2791 = vld [vmem:[#allocation3 + $0x28] sm:$0xff]
      %v2792 = vld [vmem:[#allocation3 + $0x30] sm:$0xff]
      %v2793 = vld [vmem:[#allocation3 + $0x38] sm:$0xff]
      %v2794 = vld [vmem:[#allocation3 + $0x40] sm:$0xff]
      %v2795 = vld [vmem:[#allocation3 + $0x48] sm:$0xff]
      %v2796 = vld [vmem:[#allocation3 + $0x50] sm:$0xff]
      %v2797 = vld [vmem:[#allocation3 + $0x58] sm:$0xff]
      %v2798 = vld [vmem:[#allocation3 + $0x60] sm:$0xff]
      %v2799 = vld [vmem:[#allocation3 + $0x68] sm:$0xff]
      %v2800 = vld [vmem:[#allocation3 + $0x70] sm:$0xff]
      %v2801 = vld [vmem:[#allocation3 + $0x78] sm:$0xff]
      %v2802 = vadd.f32 %v2786, %v2724
      %v2803 = vadd.f32 %v2787, %v2727
      %v2804 = vadd.f32 %v2788, %v2732
      %v2805 = vadd.f32 %v2789, %v2735
      %v2806 = vadd.f32 %v2790, %v2740
      %v2807 = vadd.f32 %v2791, %v2743
      %v2808 = vadd.f32 %v2792, %v2748
      %v2809 = vadd.f32 %v2793, %v2751
      %v2810 = vadd.f32 %v2794, %v2756
      %v2811 = vadd.f32 %v2795, %v2759
      %v2812 = vadd.f32 %v2796, %v2764
      %v2813 = vadd.f32 %v2797, %v2767
      %v2814 = vadd.f32 %v2798, %v2772
      %v2815 = vadd.f32 %v2799, %v2775
      %v2816 = vadd.f32 %v2800, %v2780
      %v2817 = vadd.f32 %v2801, %v2783
      %2818 = vst.msk [vmem:[#allocation3] sm:$0xff] %vm571, %v2802
      %2819 = vst.msk [vmem:[#allocation3 + $0x8] sm:$0xff] %vm571, %v2803
      %2820 = vst.msk [vmem:[#allocation3 + $0x10] sm:$0xff] %vm571, %v2804
      %2821 = vst.msk [vmem:[#allocation3 + $0x18] sm:$0xff] %vm571, %v2805
      %2822 = vst.msk [vmem:[#allocation3 + $0x20] sm:$0xff] %vm571, %v2806
      %2823 = vst.msk [vmem:[#allocation3 + $0x28] sm:$0xff] %vm571, %v2807
      %2824 = vst.msk [vmem:[#allocation3 + $0x30] sm:$0xff] %vm571, %v2808
      %2825 = vst.msk [vmem:[#allocation3 + $0x38] sm:$0xff] %vm571, %v2809
      %2826 = vst.msk [vmem:[#allocation3 + $0x40] sm:$0xff] %vm571, %v2810
      %2827 = vst.msk [vmem:[#allocation3 + $0x48] sm:$0xff] %vm571, %v2811
      %2828 = vst.msk [vmem:[#allocation3 + $0x50] sm:$0xff] %vm571, %v2812
      %2829 = vst.msk [vmem:[#allocation3 + $0x58] sm:$0xff] %vm571, %v2813
      %2830 = vst.msk [vmem:[#allocation3 + $0x60] sm:$0xff] %vm571, %v2814
      %2831 = vst.msk [vmem:[#allocation3 + $0x68] sm:$0xff] %vm571, %v2815
      %2832 = vst.msk [vmem:[#allocation3 + $0x70] sm:$0xff] %vm571, %v2816
      %2833 = vst.msk [vmem:[#allocation3 + $0x78] sm:$0xff] %vm571, %v2817
      %v2834 = vld [vmem:[#allocation3] sm:$0xff]
      %v2835 = vld [vmem:[#allocation3 + $0x10] sm:$0xff]
      %v2836 = vld [vmem:[#allocation3 + $0x20] sm:$0xff]
      %v2837 = vld [vmem:[#allocation3 + $0x30] sm:$0xff]
      %v2838 = vld [vmem:[#allocation3 + $0x40] sm:$0xff]
      %v2839 = vld [vmem:[#allocation3 + $0x50] sm:$0xff]
      %v2840 = vld [vmem:[#allocation3 + $0x60] sm:$0xff]
      %v2841 = vld [vmem:[#allocation3 + $0x70] sm:$0xff]
      %v2842 = vsel %vm571, %v2834, 0.0
      %v2843 = vsel %vm571, %v2835, 0.0
      %v2844 = vadd.f32 %v2842, %v2843
      %v2845 = vsel %vm571, %v2836, 0.0
      %v2846 = vadd.f32 %v2844, %v2845
      %v2847 = vsel %vm571, %v2837, 0.0
      %v2848 = vadd.f32 %v2846, %v2847
      %v2849 = vsel %vm571, %v2838, 0.0
      %v2850 = vadd.f32 %v2848, %v2849
      %v2851 = vsel %vm571, %v2839, 0.0
      %v2852 = vadd.f32 %v2850, %v2851
      %v2853 = vsel %vm571, %v2840, 0.0
      %v2854 = vadd.f32 %v2852, %v2853
      %v2855 = vsel %vm571, %v2841, 0.0
      %v2856 = vadd.f32 %v2854, %v2855
      %v2857 = vrot.slane %v2856, 4
      %v2858 = vadd.f32 %v2856, %v2857
      %v2859 = vrot.slane %v2858, 2
      %v2860 = vadd.f32 %v2858, %v2859
      %v2861 = vrot.slane %v2860, 1
      %v2862 = vadd.f32 %v2860, %v2861
      %vm2863 = vcmask 57344
      %2864 = vst.msk [vmem:[%s235] sm:$0x1] %vm2863, %v2862
      %v2865 = vmul.f32 %v2834, %v2834
      %v2866 = vmul.f32 %v2835, %v2835
      %v2867 = vmul.f32 %v2836, %v2836
      %v2868 = vmul.f32 %v2837, %v2837
      %v2869 = vmul.f32 %v2838, %v2838
      %v2870 = vmul.f32 %v2839, %v2839
      %v2871 = vmul.f32 %v2840, %v2840
      %v2872 = vmul.f32 %v2841, %v2841
      %v2873 = vsel %vm571, %v2865, 0.0
      %v2874 = vsel %vm571, %v2866, 0.0
      %v2875 = vadd.f32 %v2873, %v2874
      %v2876 = vsel %vm571, %v2867, 0.0
      %v2877 = vadd.f32 %v2875, %v2876
      %v2878 = vsel %vm571, %v2868, 0.0
      %v2879 = vadd.f32 %v2877, %v2878
      %v2880 = vsel %vm571, %v2869, 0.0
      %v2881 = vadd.f32 %v2879, %v2880
      %v2882 = vsel %vm571, %v2870, 0.0
      %v2883 = vadd.f32 %v2881, %v2882
      %v2884 = vsel %vm571, %v2871, 0.0
      %v2885 = vadd.f32 %v2883, %v2884
      %v2886 = vsel %vm571, %v2872, 0.0
      %v2887 = vadd.f32 %v2885, %v2886
      %v2888 = vrot.slane %v2887, 4
      %v2889 = vadd.f32 %v2887, %v2888
      %v2890 = vrot.slane %v2889, 2
      %v2891 = vadd.f32 %v2889, %v2890
      %v2892 = vrot.slane %v2891, 1
      %v2893 = vadd.f32 %v2891, %v2892
      %2894 = vst.msk [vmem:[%s235 + $0x1] sm:$0x1] %vm2863, %v2893
      %v2895 = vpack.c.bf16 %v2834, %v2834
      %v2896 = vpack.c.bf16 %v2835, %v2835
      %v2897 = vpack.c.bf16 %v2836, %v2836
      %v2898 = vpack.c.bf16 %v2837, %v2837
      %v2899 = vpack.c.bf16 %v2838, %v2838
      %v2900 = vpack.c.bf16 %v2839, %v2839
      %v2901 = vpack.c.bf16 %v2840, %v2840
      %v2902 = vpack.c.bf16 %v2841, %v2841
      %2903 = vst.msk [vmem:[%s231] sm:$0xf] %vm299, %v2895
      %2904 = vst.msk [vmem:[%s231 + $0x4] sm:$0xf] %vm299, %v2896
      %2905 = vst.msk [vmem:[%s231 + $0x8] sm:$0xf] %vm299, %v2897
      %2906 = vst.msk [vmem:[%s231 + $0xc] sm:$0xf] %vm299, %v2898
      %2907 = vst.msk [vmem:[%s231 + $0x10] sm:$0xf] %vm299, %v2899
      %2908 = vst.msk [vmem:[%s231 + $0x14] sm:$0xf] %vm299, %v2900
      %2909 = vst.msk [vmem:[%s231 + $0x18] sm:$0xf] %vm299, %v2901
      %2910 = vst.msk [vmem:[%s231 + $0x1c] sm:$0xf] %vm299, %v2902
      %p2911 = scmp.lt.s32.totalorder %s17, 1
      %s2912 = scalar_select %p2911, %s17, 1
      %s2913 = smul.addr %s2912, 8
      %s2914 = smul.addr %s2913, 4
      %s2915 = scalar_lea.vmem %s4, %s2914
      %p2916 = scmp.lt.s32.totalorder %s17, 1
      %s2917 = scalar_select %p2916, %s17, 1
      %s2918 = smul.addr %s2917, 2
      %s2919 = scalar_lea.vmem %s5, %s2918
      // Predicated region
      $region37: #{down_forward.4} parent=35 // pred_check
        %p2920 = pneg %p124
      $region38: #{down_forward.4} parent=35 // pred_check_branch
        %2922 = sbr.rel (%p2920) target = $region40
      $region39: #{down_forward.4} parent=35 // pred_region
        _
      $region40: #{down_forward.4} parent=35 // pred_fallthru
        _
      // Predicated region
      $region41: #{down_forward.4} parent=35 // pred_check
        %p2923 = pneg %p150
      $region42: #{down_forward.4} parent=35 // pred_check_branch
        %2925 = sbr.rel (%p2923) target = $region44
      $region43: #{down_forward.4} parent=35 // pred_region
        _
      $region44: #{down_forward.4} parent=35 // pred_fallthru
        _
    $region36: #{down_forward.4} parent=5 // pred_fallthru
      _
    %p2926 = scmp.le.s32.totalorder 2, %s12
    // Predicated region
    $region45: #{down_forward.4} parent=5 // pred_check
      %p2927 = pneg %p2926
    $region46: #{down_forward.4} parent=5 // pred_check_branch
      %2929 = sbr.rel (%p2927) target = $region48
    $region47: #{down_forward.4} parent=5 // pred_region
      %s2930 = ssub.s32 %s12, 2
      // Predicated region
      $region49: #{down_forward.4} parent=47 // pred_check
        %p2931 = pneg %p130
      $region50: #{down_forward.4} parent=47 // pred_check_branch
        %2933 = sbr.rel (%p2931) target = $region52
      $region51: #{down_forward.4} parent=47 // pred_region
        %p2934 = scmp.lt.s32.totalorder %s18, 1
        %s2935 = scalar_select %p2934, %s18, 1
        %s2936 = smul.addr %s2935, 8
        %s2937 = smul.addr %s2936, 4
        %s2938 = scalar_lea.vmem %s4, %s2937
      $region52: #{down_forward.4} parent=47 // pred_fallthru
        _
      // Predicated region
      $region53: #{down_forward.4} parent=47 // pred_check
        %p2939 = pneg %p156
      $region54: #{down_forward.4} parent=47 // pred_check_branch
        %2941 = sbr.rel (%p2939) target = $region56
      $region55: #{down_forward.4} parent=47 // pred_region
        %p2942 = scmp.lt.s32.totalorder %s18, 1
        %s2943 = scalar_select %p2942, %s18, 1
        %s2944 = smul.addr %s2943, 2
        %s2945 = scalar_lea.vmem %s5, %s2944
      $region56: #{down_forward.4} parent=47 // pred_fallthru
        _
    $region48: #{down_forward.4} parent=5 // pred_fallthru
      _
  $region6: #{down_forward.4} parent=0 // loop_footer
    %s16 = sadd.s32 1, %s12
  $region7: #{down_forward.4} parent=0 // loop_footer_branch
    %11 = sbr.rel target = $region3
  $region8: #{down_forward.4} parent=0 // loop_exit
    _

</llo_original>
